<compile_context>
chip_gen: v6e
topology: v6e:2x2x1
jax: 0.10.0
libtpu: 0.0.40
codegen_flags: <defaults>
</compile_context>

<pallas_src>
import functools

import jax
import jax.numpy as jnp
from jax.experimental import pallas as pl
from jax.experimental.pallas import tpu as pltpu

FEAT = 2048          # ResNet50 backbone feature width
LANE = 128           # TPU lane width
C_PAD = 8            # conv contraction dim padded 3 -> 8 (sublane aligned)
HW_TILE_CAP = 1024   # (HW_TILE, 2048) f32 intermediate = 8 MiB: sized for v7x's
                     # 64 MiB VMEM; v5e/v6e (128 MiB) could use 2048-4096.


def _round_up(x, m):
    return ((x + m - 1) // m) * m


def _pick_hw_tile(hw):
    """Largest HW tile <= cap that divides HW and is a multiple of 8."""
    if hw <= HW_TILE_CAP:
        return hw
    for t in range(HW_TILE_CAP, 7, -8):
        if hw % t == 0:
            return t
    return hw  # no nice divisor: fall back to a single (large) tile


# ----------------------------------------------------------------------------
# Kernel A: surrogate backbone (1x1 conv -> ReLU -> global average pool)
#   grid = (B_pad, n_hw), feat output block is resident across the hw axis and
#   accumulates the post-ReLU pooled sum (P3 accumulator pattern).
# ----------------------------------------------------------------------------
def _backbone_kernel(x_ref, wb_ref, bb_ref, feat_ref, *, inv_hw):
    h = pl.program_id(1)

    @pl.when(h == 0)
    def _():
        feat_ref[...] = jnp.zeros_like(feat_ref)

    # (HW_TILE, C_PAD) @ (C_PAD, FEAT) on the MXU (f32 accumulate).
    y = jnp.dot(x_ref[...], wb_ref[...], preferred_element_type=jnp.float32)
    y = jnp.maximum(y + bb_ref[...], 0.0)                    # bias + ReLU (VPU)
    feat_ref[...] += jnp.sum(y, axis=0, keepdims=True)       # pool over HW tile

    @pl.when(h == pl.num_programs(1) - 1)
    def _():
        feat_ref[...] *= inv_hw                               # mean over HW


def backbone_pallas(x, wb_pad, bb, hw_tile):
    b_pad, hw, _ = x.shape
    n_hw = hw // hw_tile
    kernel = functools.partial(_backbone_kernel, inv_hw=1.0 / float(hw))
    flops = 2 * b_pad * hw * C_PAD * FEAT
    bytes_accessed = (x.size * 4 + wb_pad.size * 4 + bb.size * 4
                      + b_pad * FEAT * 4)
    return pl.pallas_call(
        kernel,
        out_shape=jax.ShapeDtypeStruct((b_pad, 1, FEAT), jnp.float32),
        grid=(b_pad, n_hw),
        in_specs=[
            pl.BlockSpec((None, hw_tile, C_PAD), lambda b, h: (b, h, 0)),  # image
            pl.BlockSpec((C_PAD, FEAT), lambda b, h: (0, 0)),              # conv W
            pl.BlockSpec((1, FEAT), lambda b, h: (0, 0)),                  # conv b
        ],
        out_specs=pl.BlockSpec((None, 1, FEAT), lambda b, h: (b, 0, 0)),
        compiler_params=pltpu.CompilerParams(
            dimension_semantics=("parallel", "arbitrary"),
            # Explicit budget with headroom vs. v7x's 64 MiB per-core VMEM
            # (v5e/v6e have 128 MiB, so this is conservative there too).
            vmem_limit_bytes=48 * 1024 * 1024,
        ),
        cost_estimate=pl.CostEstimate(flops=flops, transcendentals=0,
                                      bytes_accessed=bytes_accessed),
    )(x, wb_pad, bb)


# ----------------------------------------------------------------------------
# Kernel B: batch-tiled head MLP (M = TILE_B matmuls, lane-dense output slab)
#   c1  = relu(feat @ W1 + b1)                  2048 -> 512   (MXU, bf16 W)
#   c2  = relu(pos0*Wp[0] + pos1*Wp[1] + bp)        2 -> 256  (2 VPU FMAs)
#   f   = relu(c1 @ W3a + c2 @ W3b + b3)          768 -> 256  (concat-free)
#   out = f @ Wdg + bdg                           256 -> 128  (lanes 0:2 dir,
#                                                              lane 2 gamma)
# ----------------------------------------------------------------------------
def _head_kernel(feat_ref, pos_ref, w1_ref, b1_ref, wp_ref, bp_ref,
                 w3a_ref, w3b_ref, b3_ref, wdg_ref, bdg_ref, out_ref):
    bf = jnp.bfloat16
    c1 = jnp.maximum(
        jnp.dot(feat_ref[...].astype(bf), w1_ref[...],
                preferred_element_type=jnp.float32) + b1_ref[...], 0.0)
    pos = pos_ref[...]
    c2 = jnp.maximum(
        pos[:, 0:1] * wp_ref[0:1, :] + pos[:, 1:2] * wp_ref[1:2, :]
        + bp_ref[...], 0.0)
    f = jnp.maximum(
        jnp.dot(c1.astype(bf), w3a_ref[...], preferred_element_type=jnp.float32)
        + jnp.dot(c2.astype(bf), w3b_ref[...], preferred_element_type=jnp.float32)
        + b3_ref[...], 0.0)
    out_ref[...] = (jnp.dot(f.astype(bf), wdg_ref[...],
                            preferred_element_type=jnp.float32) + bdg_ref[...])


def head_pallas(feat, pos, head_params, tile_b):
    (w1_bf, b1, wp, bp, w3a_bf, w3b_bf, b3, wdg_bf, bdg) = head_params
    b_pad = feat.shape[0]
    n_b = b_pad // tile_b
    flops = 2 * b_pad * (FEAT * 512 + 2 * 256 + 512 * 256 + 256 * 256
                         + 256 * LANE)
    bytes_accessed = (
        feat.size * 4 + pos.size * 4 + b_pad * LANE * 4
        + (w1_bf.size + w3a_bf.size + w3b_bf.size + wdg_bf.size) * 2
        + (b1.size + wp.size + bp.size + b3.size + bdg.size) * 4)
    # Weight BlockSpecs have constant index maps, so they are DMA'd once
    # (Mosaic does not re-issue DMAs while the block index is unchanged).
    return pl.pallas_call(
        _head_kernel,
        out_shape=jax.ShapeDtypeStruct((b_pad, LANE), jnp.float32),
        grid=(n_b,),
        in_specs=[
            pl.BlockSpec((tile_b, FEAT), lambda i: (i, 0)),   # feat
            pl.BlockSpec((tile_b, 2), lambda i: (i, 0)),      # pos
            pl.BlockSpec((FEAT, 512), lambda i: (0, 0)),      # w1 (bf16)
            pl.BlockSpec((1, 512), lambda i: (0, 0)),         # b1
            pl.BlockSpec((2, 256), lambda i: (0, 0)),         # wp (no padding)
            pl.BlockSpec((1, 256), lambda i: (0, 0)),         # bp
            pl.BlockSpec((512, 256), lambda i: (0, 0)),       # w3a (bf16)
            pl.BlockSpec((256, 256), lambda i: (0, 0)),       # w3b (bf16)
            pl.BlockSpec((1, 256), lambda i: (0, 0)),         # b3
            pl.BlockSpec((256, LANE), lambda i: (0, 0)),      # fused dir/gamma W
            pl.BlockSpec((1, LANE), lambda i: (0, 0)),        # fused dir/gamma b
        ],
        out_specs=pl.BlockSpec((tile_b, LANE), lambda i: (i, 0)),
        compiler_params=pltpu.CompilerParams(
            dimension_semantics=("parallel",),
            vmem_limit_bytes=32 * 1024 * 1024,
        ),
        cost_estimate=pl.CostEstimate(flops=flops, transcendentals=0,
                                      bytes_accessed=bytes_accessed),
    )(feat, pos, w1_bf, b1, wp, bp, w3a_bf, w3b_bf, b3, wdg_bf, bdg)


# ----------------------------------------------------------------------------
# End-to-end wrapper
# ----------------------------------------------------------------------------
@jax.jit
def direction_net(head_image, pos, *params):
    wb_pad, bb = params[:2]
    head_params = params[2:]
    B, C, H, W = head_image.shape
    HW = H * W
    tile_b = min(128, _round_up(B, 8))
    b_pad = _round_up(B, tile_b)
    hw_tile = _pick_hw_tile(HW)

    # NCHW -> (B, HW, C); pad channels to C_PAD and batch to b_pad.
    # (See TODO at top: this transpose is one extra HBM pass over the image.)
    x = jnp.transpose(head_image, (0, 2, 3, 1)).reshape(B, HW, C)
    x = jnp.pad(x, ((0, b_pad - B), (0, 0), (0, C_PAD - C)))
    pos_p = jnp.pad(pos, ((0, b_pad - B), (0, 0)))

    feat = backbone_pallas(x, wb_pad, bb, hw_tile).reshape(b_pad, FEAT)
    out = head_pallas(feat, pos_p, head_params, tile_b)
    return out[:B, :2], out[:B, 2:3]                      # (dir, gamma)


# ----------------------------------------------------------------------------
# Parameter packing: pad conv weight channels, bf16 big head weights,
# fuse dir/gamma regressors into one lane-dense (256, 128) weight.
# ----------------------------------------------------------------------------
def pack_params(wb, bb, w1, b1, wp, bp, w3, b3, wd, bd, wg, bg):
    bf = jnp.bfloat16
    wb_pad = jnp.zeros((C_PAD, FEAT), jnp.float32).at[:wb.shape[0]].set(wb)
    wdg_bf = (jnp.zeros((256, LANE), bf)
              .at[:, 0:2].set(wd.astype(bf))
              .at[:, 2:3].set(wg.astype(bf)))
    bdg = (jnp.zeros((1, LANE), jnp.float32)
           .at[:, 0:2].set(bd)
           .at[:, 2:3].set(bg))
    return (wb_pad, bb,
            w1.astype(bf), b1, wp, bp,
            w3[:512].astype(bf), w3[512:].astype(bf), b3,
            wdg_bf, bdg)


# PyTorch Linear-style init: uniform(+-1/sqrt(fan_in)).
def linear_init(key, fan_in, fan_out):
    k = 1.0 / float(fan_in) ** 0.5
    kw, kb = jax.random.split(key)
    w = jax.random.uniform(kw, (fan_in, fan_out), jnp.float32, -k, k)
    b = jax.random.uniform(kb, (1, fan_out), jnp.float32, -k, k)
    return w, b


# Pure-JAX reference mirroring the kernel math (same bf16 quantization points).
def reference(head_image, pos, wb, bb, w1, b1, wp, bp, w3, b3, wd, bd, wg, bg):
    B, C, H, W = head_image.shape
    x = jnp.transpose(head_image, (0, 2, 3, 1)).reshape(B, H * W, C)
    y = jax.nn.relu(jnp.einsum('bhc,cf->bhf', x, wb) + bb)
    feat = jnp.mean(y, axis=1)                               # (B, 2048) f32
    bf = jnp.bfloat16
    dot = lambda a, w: jnp.dot(a.astype(bf), w.astype(bf),
                               preferred_element_type=jnp.float32)
    c1 = jax.nn.relu(dot(feat, w1) + b1)
    c2 = jax.nn.relu(pos @ wp + bp)                          # f32, like kernel
    f = jax.nn.relu(dot(c1, w3[:512]) + dot(c2, w3[512:]) + b3)
    return dot(f, wd) + bd, dot(f, wg) + bg


if __name__ == "__main__":
    key = jax.random.PRNGKey(0)
    keys = jax.random.split(key, 8)

    B, C, H, W = 2, 3, 16, 16
    head_image = jax.random.normal(keys[0], (B, C, H, W), jnp.float32)
    pos = jax.random.normal(keys[1], (B, 2), jnp.float32)

    wb, bb = linear_init(keys[2], C, FEAT)      # surrogate backbone projection
    w1, b1 = linear_init(keys[3], FEAT, 512)    # resnet50_fc
    wp, bp = linear_init(keys[4], 2, 256)       # headpos
    w3, b3 = linear_init(keys[5], 768, 256)     # fc_last (cat order: c1 then c2)
    wd, bd = linear_init(keys[6], 256, 2)       # dir_regressor
    wg, bg = linear_init(keys[7], 256, 1)       # gamma_regressor

    params = pack_params(wb, bb, w1, b1, wp, bp, w3, b3, wd, bd, wg, bg)

    dir_out, gamma_out = direction_net(head_image, pos, *params)
    jax.block_until_ready((dir_out, gamma_out))

    dir_ref, gamma_ref = reference(
        head_image, pos, wb, bb, w1, b1, wp, bp, w3, b3, wd, bd, wg, bg)

    assert dir_out.shape == (B, 2) and gamma_out.shape == (B, 1)
    assert jnp.allclose(dir_out, dir_ref, rtol=2e-2, atol=2e-2)
    assert jnp.allclose(gamma_out, gamma_ref, rtol=2e-2, atol=2e-2)

    print("KERNEL_OK")
</pallas_src>

<mosaic_0001>
module attributes {stable_mosaic.version = 11 : i64} {
  func.func @_backbone_kernel(%arg0: i32, %arg1: i32, %arg2: memref<1x256x8xf32, #tpu.memory_space<vmem>>, %arg3: memref<8x2048xf32, #tpu.memory_space<vmem>>, %arg4: memref<1x2048xf32, #tpu.memory_space<vmem>>, %arg5: memref<1x1x2048xf32, #tpu.memory_space<vmem>>) attributes {dimension_semantics = [#tpu.dimension_semantics<parallel>, #tpu.dimension_semantics<arbitrary>], iteration_bounds = array<i64: 8, 1>, scalar_prefetch = 0 : i64, scratch_operands = 0 : i64, tpu.core_type = #tpu.core_type<tc>, window_params = [{transform_indices = @transform_0, window_bounds = array<i64: 1, 256, 8>}, {pipeline_mode = #tpu.pipeline_mode<synchronous>, transform_indices = @transform_1, window_bounds = array<i64: 8, 2048>}, {pipeline_mode = #tpu.pipeline_mode<synchronous>, transform_indices = @transform_2, window_bounds = array<i64: 1, 2048>}, {transform_indices = @transform_3, window_bounds = array<i64: 1, 1, 2048>}]} {
    %c0_i32 = arith.constant 0 : i32
    %0 = arith.cmpi eq, %arg1, %c0_i32 : i32
    %1 = arith.extui %0 : i1 to i32
    %c0_i32_0 = arith.constant 0 : i32
    %2 = arith.cmpi ne, %1, %c0_i32_0 : i32
    scf.if %2 {
      %cst_17 = arith.constant 0.000000e+00 : f32
      %23 = vector.broadcast %cst_17 : f32 to vector<1x2048xf32>
      %c0_18 = arith.constant 0 : index
      %c0_19 = arith.constant 0 : index
      %c0_20 = arith.constant 0 : index
      %24 = vector.load %arg5[%c0_18, %c0_19, %c0_20] : memref<1x1x2048xf32, #tpu.memory_space<vmem>>, vector<1x1x2048xf32>
      %25 = vector.shape_cast %24 : vector<1x1x2048xf32> to vector<1x2048xf32>
      %26 = vector.shape_cast %23 : vector<1x2048xf32> to vector<1x1x2048xf32>
      tpu.vector_store %arg5[%c0_18, %c0_19, %c0_20], %26 {strides = array<i32>} : memref<1x1x2048xf32, #tpu.memory_space<vmem>>, vector<1x1x2048xf32>,
    } else {
    }
    %c0 = arith.constant 0 : index
    %c0_1 = arith.constant 0 : index
    %c0_2 = arith.constant 0 : index
    %3 = vector.load %arg2[%c0, %c0_1, %c0_2] : memref<1x256x8xf32, #tpu.memory_space<vmem>>, vector<1x256x8xf32>
    %4 = vector.shape_cast %3 : vector<1x256x8xf32> to vector<256x8xf32>
    %c0_3 = arith.constant 0 : index
    %c0_4 = arith.constant 0 : index
    %5 = vector.load %arg3[%c0_3, %c0_4] : memref<8x2048xf32, #tpu.memory_space<vmem>>, vector<8x2048xf32>
    %cst = arith.constant dense<0.000000e+00> : vector<256x2048xf32>
    %6 = tpu.matmul %4, %5, %cst {dimension_numbers = #tpu.dot_dimension_numbers<[1], [0], [0], [1], [0, 0, 1, 1], [], []>} : vector<256x8xf32>, vector<8x2048xf32>, vector<256x2048xf32> -> vector<256x2048xf32>
    %c0_5 = arith.constant 0 : index
    %c0_6 = arith.constant 0 : index
    %7 = vector.load %arg4[%c0_5, %c0_6] : memref<1x2048xf32, #tpu.memory_space<vmem>>, vector<1x2048xf32>
    %8 = vector.broadcast %7 : vector<1x2048xf32> to vector<256x2048xf32>
    %9 = arith.addf %6, %8 : vector<256x2048xf32>
    %cst_7 = arith.constant 0.000000e+00 : f32
    %10 = vector.broadcast %cst_7 : f32 to vector<256x2048xf32>
    %11 = arith.maximumf %9, %10 : vector<256x2048xf32>
    %c0_8 = arith.constant 0 : index
    %c0_9 = arith.constant 0 : index
    %c0_10 = arith.constant 0 : index
    %12 = vector.load %arg5[%c0_8, %c0_9, %c0_10] : memref<1x1x2048xf32, #tpu.memory_space<vmem>>, vector<1x1x2048xf32>
    %13 = vector.shape_cast %12 : vector<1x1x2048xf32> to vector<1x2048xf32>
    %cst_11 = arith.constant dense<0.000000e+00> : vector<2048xf32>
    %14 = vector.multi_reduction <add>, %11, %cst_11 [0] : vector<256x2048xf32> to vector<2048xf32>
    %15 = vector.shape_cast %14 : vector<2048xf32> to vector<1x2048xf32>
    %16 = arith.addf %13, %15 : vector<1x2048xf32>
    %c0_12 = arith.constant 0 : index
    %c0_13 = arith.constant 0 : index
    %c0_14 = arith.constant 0 : index
    %17 = vector.load %arg5[%c0_12, %c0_13, %c0_14] : memref<1x1x2048xf32, #tpu.memory_space<vmem>>, vector<1x1x2048xf32>
    %18 = vector.shape_cast %17 : vector<1x1x2048xf32> to vector<1x2048xf32>
    %19 = vector.shape_cast %16 : vector<1x2048xf32> to vector<1x1x2048xf32>
    tpu.vector_store %arg5[%c0_12, %c0_13, %c0_14], %19 {strides = array<i32>} : memref<1x1x2048xf32, #tpu.memory_space<vmem>>, vector<1x1x2048xf32>,
    %c0_i32_15 = arith.constant 0 : i32
    %20 = arith.cmpi eq, %arg1, %c0_i32_15 : i32
    %21 = arith.extui %20 : i1 to i32
    %c0_i32_16 = arith.constant 0 : i32
    %22 = arith.cmpi ne, %21, %c0_i32_16 : i32
    scf.if %22 {
      %c0_17 = arith.constant 0 : index
      %c0_18 = arith.constant 0 : index
      %c0_19 = arith.constant 0 : index
      %23 = vector.load %arg5[%c0_17, %c0_18, %c0_19] : memref<1x1x2048xf32, #tpu.memory_space<vmem>>, vector<1x1x2048xf32>
      %24 = vector.shape_cast %23 : vector<1x1x2048xf32> to vector<1x2048xf32>
      %cst_20 = arith.constant 3.906250e-03 : f32
      %25 = vector.broadcast %cst_20 : f32 to vector<1x2048xf32>
      %26 = arith.mulf %24, %25 : vector<1x2048xf32>
      %c0_21 = arith.constant 0 : index
      %c0_22 = arith.constant 0 : index
      %c0_23 = arith.constant 0 : index
      %27 = vector.load %arg5[%c0_21, %c0_22, %c0_23] : memref<1x1x2048xf32, #tpu.memory_space<vmem>>, vector<1x1x2048xf32>
      %28 = vector.shape_cast %27 : vector<1x1x2048xf32> to vector<1x2048xf32>
      %29 = vector.shape_cast %26 : vector<1x2048xf32> to vector<1x1x2048xf32>
      tpu.vector_store %arg5[%c0_21, %c0_22, %c0_23], %29 {strides = array<i32>} : memref<1x1x2048xf32, #tpu.memory_space<vmem>>, vector<1x1x2048xf32>,
    } else {
    }
    return
  }
  func.func @transform_0(%arg0: i32, %arg1: i32) -> (i32, i32, i32) {
    %c0_i32 = arith.constant 0 : i32
    %c0_i32_0 = arith.constant 0 : i32
    return %arg0, %arg1, %c0_i32 : i32, i32, i32
  }
  func.func @transform_1(%arg0: i32, %arg1: i32) -> (i32, i32) {
    %c0_i32 = arith.constant 0 : i32
    %c0_i32_0 = arith.constant 0 : i32
    %c0_i32_1 = arith.constant 0 : i32
    return %c0_i32, %c0_i32_0 : i32, i32
  }
  func.func @transform_2(%arg0: i32, %arg1: i32) -> (i32, i32) {
    %c0_i32 = arith.constant 0 : i32
    %c0_i32_0 = arith.constant 0 : i32
    %c0_i32_1 = arith.constant 0 : i32
    return %c0_i32, %c0_i32_0 : i32, i32
  }
  func.func @transform_3(%arg0: i32, %arg1: i32) -> (i32, i32, i32) {
    %c0_i32 = arith.constant 0 : i32
    %c0_i32_0 = arith.constant 0 : i32
    %c0_i32_1 = arith.constant 0 : i32
    return %arg0, %c0_i32, %c0_i32_0 : i32, i32, i32
  }
}

module attributes {stable_mosaic.version = 11 : i64} {
  func.func @_head_kernel(%arg0: i32, %arg1: memref<8x2048xf32, #tpu.memory_space<vmem>>, %arg2: memref<8x2xf32, #tpu.memory_space<vmem>>, %arg3: memref<2048x512xbf16, #tpu.memory_space<vmem>>, %arg4: memref<1x512xf32, #tpu.memory_space<vmem>>, %arg5: memref<2x256xf32, #tpu.memory_space<vmem>>, %arg6: memref<1x256xf32, #tpu.memory_space<vmem>>, %arg7: memref<512x256xbf16, #tpu.memory_space<vmem>>, %arg8: memref<256x256xbf16, #tpu.memory_space<vmem>>, %arg9: memref<1x256xf32, #tpu.memory_space<vmem>>, %arg10: memref<256x128xbf16, #tpu.memory_space<vmem>>, %arg11: memref<1x128xf32, #tpu.memory_space<vmem>>, %arg12: memref<8x128xf32, #tpu.memory_space<vmem>>) attributes {dimension_semantics = [#tpu.dimension_semantics<parallel>], iteration_bounds = array<i64: 1>, scalar_prefetch = 0 : i64, scratch_operands = 0 : i64, tpu.core_type = #tpu.core_type<tc>, window_params = [{transform_indices = @transform_0, window_bounds = array<i64: 8, 2048>}, {transform_indices = @transform_1, window_bounds = array<i64: 8, 2>}, {pipeline_mode = #tpu.pipeline_mode<synchronous>, transform_indices = @transform_2, window_bounds = array<i64: 2048, 512>}, {pipeline_mode = #tpu.pipeline_mode<synchronous>, transform_indices = @transform_3, window_bounds = array<i64: 1, 512>}, {pipeline_mode = #tpu.pipeline_mode<synchronous>, transform_indices = @transform_4, window_bounds = array<i64: 2, 256>}, {pipeline_mode = #tpu.pipeline_mode<synchronous>, transform_indices = @transform_5, window_bounds = array<i64: 1, 256>}, {pipeline_mode = #tpu.pipeline_mode<synchronous>, transform_indices = @transform_6, window_bounds = array<i64: 512, 256>}, {pipeline_mode = #tpu.pipeline_mode<synchronous>, transform_indices = @transform_7, window_bounds = array<i64: 256, 256>}, {pipeline_mode = #tpu.pipeline_mode<synchronous>, transform_indices = @transform_8, window_bounds = array<i64: 1, 256>}, {pipeline_mode = #tpu.pipeline_mode<synchronous>, transform_indices = @transform_9, window_bounds = array<i64: 256, 128>}, {pipeline_mode = #tpu.pipeline_mode<synchronous>, transform_indices = @transform_10, window_bounds = array<i64: 1, 128>}, {transform_indices = @transform_11, window_bounds = array<i64: 8, 128>}]} {
    %c0 = arith.constant 0 : index
    %c0_0 = arith.constant 0 : index
    %0 = vector.load %arg1[%c0, %c0_0] : memref<8x2048xf32, #tpu.memory_space<vmem>>, vector<8x2048xf32>
    %1 = arith.truncf %0 : vector<8x2048xf32> to vector<8x2048xbf16>
    %c0_1 = arith.constant 0 : index
    %c0_2 = arith.constant 0 : index
    %2 = vector.load %arg3[%c0_1, %c0_2] : memref<2048x512xbf16, #tpu.memory_space<vmem>>, vector<2048x512xbf16>
    %cst = arith.constant dense<0.000000e+00> : vector<8x512xf32>
    %3 = tpu.matmul %1, %2, %cst {dimension_numbers = #tpu.dot_dimension_numbers<[1], [0], [0], [1], [0, 0, 1, 1], [], []>} : vector<8x2048xbf16>, vector<2048x512xbf16>, vector<8x512xf32> -> vector<8x512xf32>
    %c0_3 = arith.constant 0 : index
    %c0_4 = arith.constant 0 : index
    %4 = vector.load %arg4[%c0_3, %c0_4] : memref<1x512xf32, #tpu.memory_space<vmem>>, vector<1x512xf32>
    %5 = vector.broadcast %4 : vector<1x512xf32> to vector<8x512xf32>
    %6 = arith.addf %3, %5 : vector<8x512xf32>
    %cst_5 = arith.constant 0.000000e+00 : f32
    %7 = vector.broadcast %cst_5 : f32 to vector<8x512xf32>
    %8 = arith.maximumf %6, %7 : vector<8x512xf32>
    %c0_6 = arith.constant 0 : index
    %c0_7 = arith.constant 0 : index
    %9 = vector.load %arg2[%c0_6, %c0_7] : memref<8x2xf32, #tpu.memory_space<vmem>>, vector<8x2xf32>
    %10 = vector.extract_strided_slice %9 {offsets = [0, 0], sizes = [8, 1], strides = [1, 1]} : vector<8x2xf32> to vector<8x1xf32>
    %c0_8 = arith.constant 0 : index
    %c0_9 = arith.constant 0 : index
    %11 = vector.load %arg5[%c0_8, %c0_9] : memref<2x256xf32, #tpu.memory_space<vmem>>, vector<1x256xf32>
    %12 = vector.broadcast %10 : vector<8x1xf32> to vector<8x256xf32>
    %13 = vector.broadcast %11 : vector<1x256xf32> to vector<8x256xf32>
    %14 = arith.mulf %12, %13 : vector<8x256xf32>
    %15 = vector.extract_strided_slice %9 {offsets = [0, 1], sizes = [8, 1], strides = [1, 1]} : vector<8x2xf32> to vector<8x1xf32>
    %c1 = arith.constant 1 : index
    %c0_10 = arith.constant 0 : index
    %16 = vector.load %arg5[%c1, %c0_10] : memref<2x256xf32, #tpu.memory_space<vmem>>, vector<1x256xf32>
    %17 = vector.broadcast %15 : vector<8x1xf32> to vector<8x256xf32>
    %18 = vector.broadcast %16 : vector<1x256xf32> to vector<8x256xf32>
    %19 = arith.mulf %17, %18 : vector<8x256xf32>
    %20 = arith.addf %14, %19 : vector<8x256xf32>
    %c0_11 = arith.constant 0 : index
    %c0_12 = arith.constant 0 : index
    %21 = vector.load %arg6[%c0_11, %c0_12] : memref<1x256xf32, #tpu.memory_space<vmem>>, vector<1x256xf32>
    %22 = vector.broadcast %21 : vector<1x256xf32> to vector<8x256xf32>
    %23 = arith.addf %20, %22 : vector<8x256xf32>
    %cst_13 = arith.constant 0.000000e+00 : f32
    %24 = vector.broadcast %cst_13 : f32 to vector<8x256xf32>
    %25 = arith.maximumf %23, %24 : vector<8x256xf32>
    %26 = arith.truncf %8 : vector<8x512xf32> to vector<8x512xbf16>
    %c0_14 = arith.constant 0 : index
    %c0_15 = arith.constant 0 : index
    %27 = vector.load %arg7[%c0_14, %c0_15] : memref<512x256xbf16, #tpu.memory_space<vmem>>, vector<512x256xbf16>
    %cst_16 = arith.constant dense<0.000000e+00> : vector<8x256xf32>
    %28 = tpu.matmul %26, %27, %cst_16 {dimension_numbers = #tpu.dot_dimension_numbers<[1], [0], [0], [1], [0, 0, 1, 1], [], []>} : vector<8x512xbf16>, vector<512x256xbf16>, vector<8x256xf32> -> vector<8x256xf32>
    %29 = arith.truncf %25 : vector<8x256xf32> to vector<8x256xbf16>
    %c0_17 = arith.constant 0 : index
    %c0_18 = arith.constant 0 : index
    %30 = vector.load %arg8[%c0_17, %c0_18] : memref<256x256xbf16, #tpu.memory_space<vmem>>, vector<256x256xbf16>
    %cst_19 = arith.constant dense<0.000000e+00> : vector<8x256xf32>
    %31 = tpu.matmul %29, %30, %cst_19 {dimension_numbers = #tpu.dot_dimension_numbers<[1], [0], [0], [1], [0, 0, 1, 1], [], []>} : vector<8x256xbf16>, vector<256x256xbf16>, vector<8x256xf32> -> vector<8x256xf32>
    %32 = arith.addf %28, %31 : vector<8x256xf32>
    %c0_20 = arith.constant 0 : index
    %c0_21 = arith.constant 0 : index
    %33 = vector.load %arg9[%c0_20, %c0_21] : memref<1x256xf32, #tpu.memory_space<vmem>>, vector<1x256xf32>
    %34 = vector.broadcast %33 : vector<1x256xf32> to vector<8x256xf32>
    %35 = arith.addf %32, %34 : vector<8x256xf32>
    %cst_22 = arith.constant 0.000000e+00 : f32
    %36 = vector.broadcast %cst_22 : f32 to vector<8x256xf32>
    %37 = arith.maximumf %35, %36 : vector<8x256xf32>
    %38 = arith.truncf %37 : vector<8x256xf32> to vector<8x256xbf16>
    %c0_23 = arith.constant 0 : index
    %c0_24 = arith.constant 0 : index
    %39 = vector.load %arg10[%c0_23, %c0_24] : memref<256x128xbf16, #tpu.memory_space<vmem>>, vector<256x128xbf16>
    %cst_25 = arith.constant dense<0.000000e+00> : vector<8x128xf32>
    %40 = tpu.matmul %38, %39, %cst_25 {dimension_numbers = #tpu.dot_dimension_numbers<[1], [0], [0], [1], [0, 0, 1, 1], [], []>} : vector<8x256xbf16>, vector<256x128xbf16>, vector<8x128xf32> -> vector<8x128xf32>
    %c0_26 = arith.constant 0 : index
    %c0_27 = arith.constant 0 : index
    %41 = vector.load %arg11[%c0_26, %c0_27] : memref<1x128xf32, #tpu.memory_space<vmem>>, vector<1x128xf32>
    %42 = vector.broadcast %41 : vector<1x128xf32> to vector<8x128xf32>
    %43 = arith.addf %40, %42 : vector<8x128xf32>
    %c0_28 = arith.constant 0 : index
    %c0_29 = arith.constant 0 : index
    %44 = vector.load %arg12[%c0_28, %c0_29] : memref<8x128xf32, #tpu.memory_space<vmem>>, vector<8x128xf32>
    tpu.vector_store %arg12[%c0_28, %c0_29], %43 {strides = array<i32>} : memref<8x128xf32, #tpu.memory_space<vmem>>, vector<8x128xf32>,
    return
  }
  func.func @transform_0(%arg0: i32) -> (i32, i32) {
    %c0_i32 = arith.constant 0 : i32
    %c0_i32_0 = arith.constant 0 : i32
    return %arg0, %c0_i32 : i32, i32
  }
  func.func @transform_1(%arg0: i32) -> (i32, i32) {
    %c0_i32 = arith.constant 0 : i32
    %c0_i32_0 = arith.constant 0 : i32
    return %arg0, %c0_i32 : i32, i32
  }
  func.func @transform_2(%arg0: i32) -> (i32, i32) {
    %c0_i32 = arith.constant 0 : i32
    %c0_i32_0 = arith.constant 0 : i32
    %c0_i32_1 = arith.constant 0 : i32
    return %c0_i32, %c0_i32_0 : i32, i32
  }
  func.func @transform_3(%arg0: i32) -> (i32, i32) {
    %c0_i32 = arith.constant 0 : i32
    %c0_i32_0 = arith.constant 0 : i32
    %c0_i32_1 = arith.constant 0 : i32
    return %c0_i32, %c0_i32_0 : i32, i32
  }
  func.func @transform_4(%arg0: i32) -> (i32, i32) {
    %c0_i32 = arith.constant 0 : i32
    %c0_i32_0 = arith.constant 0 : i32
    %c0_i32_1 = arith.constant 0 : i32
    return %c0_i32, %c0_i32_0 : i32, i32
  }
  func.func @transform_5(%arg0: i32) -> (i32, i32) {
    %c0_i32 = arith.constant 0 : i32
    %c0_i32_0 = arith.constant 0 : i32
    %c0_i32_1 = arith.constant 0 : i32
    return %c0_i32, %c0_i32_0 : i32, i32
  }
  func.func @transform_6(%arg0: i32) -> (i32, i32) {
    %c0_i32 = arith.constant 0 : i32
    %c0_i32_0 = arith.constant 0 : i32
    %c0_i32_1 = arith.constant 0 : i32
    return %c0_i32, %c0_i32_0 : i32, i32
  }
  func.func @transform_7(%arg0: i32) -> (i32, i32) {
    %c0_i32 = arith.constant 0 : i32
    %c0_i32_0 = arith.constant 0 : i32
    %c0_i32_1 = arith.constant 0 : i32
    return %c0_i32, %c0_i32_0 : i32, i32
  }
  func.func @transform_8(%arg0: i32) -> (i32, i32) {
    %c0_i32 = arith.constant 0 : i32
    %c0_i32_0 = arith.constant 0 : i32
    %c0_i32_1 = arith.constant 0 : i32
    return %c0_i32, %c0_i32_0 : i32, i32
  }
  func.func @transform_9(%arg0: i32) -> (i32, i32) {
    %c0_i32 = arith.constant 0 : i32
    %c0_i32_0 = arith.constant 0 : i32
    %c0_i32_1 = arith.constant 0 : i32
    return %c0_i32, %c0_i32_0 : i32, i32
  }
  func.func @transform_10(%arg0: i32) -> (i32, i32) {
    %c0_i32 = arith.constant 0 : i32
    %c0_i32_0 = arith.constant 0 : i32
    %c0_i32_1 = arith.constant 0 : i32
    return %c0_i32, %c0_i32_0 : i32, i32
  }
  func.func @transform_11(%arg0: i32) -> (i32, i32) {
    %c0_i32 = arith.constant 0 : i32
    %c0_i32_0 = arith.constant 0 : i32
    return %arg0, %c0_i32 : i32, i32
  }
}

</mosaic_0001>

<llo_original>
// kernel: direction_net.2
$region0: #{direction_net.2}
  #allocation0 [shape = 'u32[]', space=smem, size = 0x4, offset = 0x4, fixed_abs, tag = 'smem constant byte address 0x4 - core index']
  #allocation1 [shape = 'u32[144,128]{1,0:T(1,128)}', space=vmem, size = 0x12000, scoped, tag = 'internal scratch']
  %s0 = inlined_call_operand.vmem [shape: f32[8,256,8], index: 0, kind: input, shape index: {}]
  %s1 = inlined_call_operand.hbm [shape: f32[8,2048], index: 1, kind: input, shape index: {}]
  %s2 = inlined_call_operand.hbm [shape: f32[1,2048], index: 2, kind: input, shape index: {}]
  %s3 = inlined_call_operand.vmem [shape: f32[8,1,2048], index: 3, kind: output, shape index: {}]
  %s4 = sld [smem:[#allocation0]]
  $region61: #{direction_net.2} parent=0
    _
  %s6 = ssub.s32 1, %s4
  %s7 = scalar_select 0, %s6, %s4
  $region1: #{direction_net.2} parent=0
    #allocation2 [shape = 'u8[65536]{0}', space=vmem, size = 0x10000, scoped, tag = 'input window, operand 1, single buffered']
    #allocation3 [shape = 's32[2]{0}', space=sflag, size = 0x8, scoped, tag = 'scoped memory for direction_net.2']
    #allocation4 [shape = 'u8[8192]{0}', space=vmem, size = 0x2000, scoped, tag = 'input window, operand 2, single buffered']
    #allocation5 [shape = 's32[1]{0}', space=sflag, size = 0x4, scoped, tag = 'scoped memory for direction_net.2']
    %8 = vsyncpa [#allocation3], 0
    %9 = vsyncpa [#allocation5], 0
    loop: start=0, step=1, limit=10
    $region2: #{direction_net.2} parent=1 // loop_pre_header
      _
    $region3: #{direction_net.2} parent=1 // loop_header
      %s11 = sphi 0, %s15
      %p12 = scmp.ge.s32.totalorder %s11, 10
      %s18 = sphi 0, %s30
      %s19 = sphi 0, %s26
      %s20 = sphi 0, %s18
      %s21 = sphi 0, %s19
      %s22 = sphi 0, %s20
      %s23 = sphi 0, %s21
      %s35 = sphi 0, %s37
      %s38 = sphi 0, %s35
      %s39 = sphi 0, %s38
      %s55 = sphi 0, %s39
      %s59 = sphi 0, %s59
      %s61 = sphi 0, %s59
      %s62 = sphi 0, %s61
      %s76 = sphi 0, %s62
      %s80 = sphi 0, %s80
      %s82 = sphi 0, %s80
      %s83 = sphi 0, %s82
      %s97 = sphi 0, %s83
      %s103 = sphi 0, %s105
      %s106 = sphi 0, %s103
      %s107 = sphi 0, %s106
      %s123 = sphi 0, %s107
    $region4: #{direction_net.2} parent=1 // loop_header_branch
      %14 = sbr.rel (%p12) target = $region8
    $region5: #{direction_net.2} parent=1 // loop_body
      %s16 = ssub.s32 %s11, 1
      %s17 = ssub.s32 %s11, 2
      %s24 = sadd.s32 1, %s19
      %p25 = scmp.ge.s32.totalorder %s24, 1
      %s26 = scalar_select %p25, 0, %s24
      %s27 = sadd.s32 1, %s18
      %s28 = scalar_select %p25, %s27, %s18
      %p29 = scmp.ge.s32.totalorder %s28, 8
      %s30 = scalar_select %p29, 0, %s28
      %s31 = ssub.s32 %s18, %s30
      %s32 = ssub.s32 %s19, %s26
      %s33 = sor.u32 %s31, %s32
      %p34 = scmp.eq.s32.totalorder %s33, 0
      %s36 = sadd.s32 %s35, 1
      %s37 = scalar_select %p34, %s35, %s36
      %p40 = pneg %p34
      %p41 = scmp.eq.s32.totalorder %s11, 7
      %p42 = por %p40, %p41
      %p43 = scmp.ne.s32.totalorder %s35, %s38
      %p44 = scmp.eq.s32.totalorder %s11, 0
      %p45 = por %p43, %p44
      %p46 = scmp.ne.s32.totalorder %s35, %s38
      %p47 = scmp.eq.s32.totalorder %s16, 7
      %p48 = por %p46, %p47
      %p49 = scmp.ne.s32.totalorder %s38, %s39
      %p50 = scmp.eq.s32.totalorder %s16, 0
      %p51 = por %p49, %p50
      %p52 = scmp.ne.s32.totalorder %s38, %s39
      %p53 = scmp.eq.s32.totalorder %s17, 7
      %p54 = por %p52, %p53
      %p56 = scmp.ne.s32.totalorder %s39, %s55
      %p57 = scmp.eq.s32.totalorder %s17, 0
      %p58 = por %p56, %p57
      %s60 = sadd.s32 %s59, 1
      %p63 = scmp.eq.s32.totalorder %s11, 7
      %p64 = scmp.ne.s32.totalorder %s59, %s61
      %p65 = scmp.eq.s32.totalorder %s11, 0
      %p66 = por %p64, %p65
      %p67 = scmp.ne.s32.totalorder %s59, %s61
      %p68 = scmp.eq.s32.totalorder %s16, 7
      %p69 = por %p67, %p68
      %p70 = scmp.ne.s32.totalorder %s61, %s62
      %p71 = scmp.eq.s32.totalorder %s16, 0
      %p72 = por %p70, %p71
      %p73 = scmp.ne.s32.totalorder %s61, %s62
      %p74 = scmp.eq.s32.totalorder %s17, 7
      %p75 = por %p73, %p74
      %p77 = scmp.ne.s32.totalorder %s62, %s76
      %p78 = scmp.eq.s32.totalorder %s17, 0
      %p79 = por %p77, %p78
      %s81 = sadd.s32 %s80, 1
      %p84 = scmp.eq.s32.totalorder %s11, 7
      %p85 = scmp.ne.s32.totalorder %s80, %s82
      %p86 = scmp.eq.s32.totalorder %s11, 0
      %p87 = por %p85, %p86
      %p88 = scmp.ne.s32.totalorder %s80, %s82
      %p89 = scmp.eq.s32.totalorder %s16, 7
      %p90 = por %p88, %p89
      %p91 = scmp.ne.s32.totalorder %s82, %s83
      %p92 = scmp.eq.s32.totalorder %s16, 0
      %p93 = por %p91, %p92
      %p94 = scmp.ne.s32.totalorder %s82, %s83
      %p95 = scmp.eq.s32.totalorder %s17, 7
      %p96 = por %p94, %p95
      %p98 = scmp.ne.s32.totalorder %s83, %s97
      %p99 = scmp.eq.s32.totalorder %s17, 0
      %p100 = por %p98, %p99
      %s101 = ssub.s32 %s18, %s30
      %p102 = scmp.eq.s32.totalorder %s101, 0
      %s104 = sadd.s32 %s103, 1
      %s105 = scalar_select %p102, %s103, %s104
      %p108 = pneg %p102
      %p109 = scmp.eq.s32.totalorder %s11, 7
      %p110 = por %p108, %p109
      %p111 = scmp.ne.s32.totalorder %s103, %s106
      %p112 = scmp.eq.s32.totalorder %s11, 0
      %p113 = por %p111, %p112
      %p114 = scmp.ne.s32.totalorder %s103, %s106
      %p115 = scmp.eq.s32.totalorder %s16, 7
      %p116 = por %p114, %p115
      %p117 = scmp.ne.s32.totalorder %s106, %s107
      %p118 = scmp.eq.s32.totalorder %s16, 0
      %p119 = por %p117, %p118
      %p120 = scmp.ne.s32.totalorder %s106, %s107
      %p121 = scmp.eq.s32.totalorder %s17, 7
      %p122 = por %p120, %p121
      %p124 = scmp.ne.s32.totalorder %s107, %s123
      %p125 = scmp.eq.s32.totalorder %s17, 0
      %p126 = por %p124, %p125
      %p127 = scmp.le.s32.totalorder 1, %s11
      %p128 = scmp.lt.s32.totalorder %s11, 9
      %p129 = pnand %p127, %p128
      %p130 = pneg %p129
      // Predicated region
      $region9: #{direction_net.2} parent=5 // pred_check
        _
      $region10: #{direction_net.2} parent=5 // pred_check_branch
        %132 = sbr.rel (%p129) target = $region12
      $region11: #{direction_net.2} parent=5 // pred_region
        %s133 = ssub.s32 %s11, 1
        // Predicated region
        $region13: #{direction_net.2} parent=11 // pred_check
          %p134 = pneg %p72
        $region14: #{direction_net.2} parent=11 // pred_check_branch
          %136 = sbr.rel (%p134) target = $region16
        $region15: #{direction_net.2} parent=11 // pred_region
          %s138 = ssub.s32 2048, 2048
          %139 = vsyncadd [#allocation3], %s138
          %s141 = sshll.u32 [#allocation2], 4
          %s142 = int_to_ptr.vmem [resolvable:$true] %s141
          %144 = dma.hbm_to_vmem [thread:$0]  %s1, 2048, %s142, [#allocation3]
        $region16: #{direction_net.2} parent=11 // pred_fallthru
          _
        // Predicated region
        $region17: #{direction_net.2} parent=11 // pred_check
          %p145 = pneg %p93
        $region18: #{direction_net.2} parent=11 // pred_check_branch
          %147 = sbr.rel (%p145) target = $region20
        $region19: #{direction_net.2} parent=11 // pred_region
          %s149 = ssub.s32 256, 256
          %150 = vsyncadd [#allocation5], %s149
          %s152 = sshll.u32 [#allocation4], 4
          %s153 = int_to_ptr.vmem [resolvable:$true] %s152
          %155 = dma.hbm_to_vmem [thread:$0]  %s2, 256, %s153, [#allocation5]
        $region20: #{direction_net.2} parent=11 // pred_fallthru
          _
      $region12: #{direction_net.2} parent=5 // pred_fallthru
        _
      %p156 = scmp.lt.s32.totalorder %s11, 8
      // Predicated region
      $region21: #{direction_net.2} parent=5 // pred_check
        %p157 = pneg %p156
      $region22: #{direction_net.2} parent=5 // pred_check_branch
        %159 = sbr.rel (%p157) target = $region24
      $region23: #{direction_net.2} parent=5 // pred_region
        // Predicated region
        $region25: #{direction_net.2} parent=23 // pred_check
          %p160 = pneg %p45
        $region26: #{direction_net.2} parent=23 // pred_check_branch
          %162 = sbr.rel (%p160) target = $region28
        $region27: #{direction_net.2} parent=23 // pred_region
          %s163 = smul.u32 32, %s19
          %p164 = scmp.lt.s32.totalorder %s18, 7
          %s165 = scalar_select %p164, %s18, 7
          %p166 = scmp.lt.s32.totalorder %s163, 31
          %s167 = scalar_select %p166, %s163, 31
          %s168 = smul.addr %s165, 32
          %s169 = sadd.s32 %s167, %s168
          %s170 = smul.addr %s169, 8
          %s171 = scalar_lea.vmem %s0, %s170
          %s172 = smul.u32 32, %s19
        $region28: #{direction_net.2} parent=23 // pred_fallthru
          _
      $region24: #{direction_net.2} parent=5 // pred_fallthru
        _
      %p173 = scmp.le.s32.totalorder 1, %s11
      %p174 = scmp.lt.s32.totalorder %s11, 9
      %p175 = pnand %p173, %p174
      %p176 = pneg %p175
      // Predicated region
      $region29: #{direction_net.2} parent=5 // pred_check
        _
      $region30: #{direction_net.2} parent=5 // pred_check_branch
        %178 = sbr.rel (%p175) target = $region32
      $region31: #{direction_net.2} parent=5 // pred_region
        %s179 = ssub.s32 %s11, 1
        // Predicated region
        $region33: #{direction_net.2} parent=31 // pred_check
          %p180 = pneg %p72
        $region34: #{direction_net.2} parent=31 // pred_check_branch
          %182 = sbr.rel (%p180) target = $region36
        $region35: #{direction_net.2} parent=31 // pred_region
          %183 = dma.done [#allocation3], 2048
        $region36: #{direction_net.2} parent=31 // pred_fallthru
          _
        // Predicated region
        $region37: #{direction_net.2} parent=31 // pred_check
          %p184 = pneg %p93
        $region38: #{direction_net.2} parent=31 // pred_check_branch
          %186 = sbr.rel (%p184) target = $region40
        $region39: #{direction_net.2} parent=31 // pred_region
          %187 = dma.done [#allocation5], 256
        $region40: #{direction_net.2} parent=31 // pred_fallthru
          _
        %s188 = smul.u32 32, %s21
        %p189 = scmp.lt.s32.totalorder %s20, 7
        %s190 = scalar_select %p189, %s20, 7
        %p191 = scmp.lt.s32.totalorder %s188, 31
        %s192 = scalar_select %p191, %s188, 31
        %s193 = smul.addr %s190, 32
        %s194 = sadd.s32 %s192, %s193
        %s195 = smul.addr %s194, 8
        %s196 = scalar_lea.vmem %s0, %s195
        %p197 = pneg %p51
        %p198 = pneg %p48
        %p199 = pneg %p72
        %p200 = pneg %p69
        %p201 = pneg %p93
        %p202 = pneg %p90
        %p203 = pneg %p119
        %p204 = pneg %p116
        %p205 = scmp.lt.s32.totalorder %s20, 7
        %s206 = scalar_select %p205, %s20, 7
        %s207 = smul.addr %s206, 16
        %s208 = scalar_lea.vmem %s3, %s207
        %s209 = smul.u32 32, %s21
        %p210 = scmp.lt.s32.totalorder %s20, 7
        %s211 = scalar_select %p210, %s20, 7
        %p212 = scmp.lt.s32.totalorder %s209, 31
        %s213 = scalar_select %p212, %s209, 31
        %s214 = smul.addr %s211, 32
        %s215 = sadd.s32 %s213, %s214
        %s216 = smul.addr %s215, 8
        %s217 = scalar_lea.vmem %s0, %s216
        %s218 = smul.u32 32, %s21
        %p219 = scmp.lt.s32.totalorder %s20, 7
        %s220 = scalar_select %p219, %s20, 7
        %s221 = smul.addr %s220, 16
        %s222 = scalar_lea.vmem %s3, %s221
        %p223 = scmp.eq.s32.totalorder %s21, 0
        // Predicated region
        $region41: #{direction_net.2} parent=31 // pred_check
          %p224 = pneg %p223
        $region42: #{direction_net.2} parent=31 // pred_check_branch
          %226 = sbr.rel (%p224) target = $region44
        $region43: #{direction_net.2} parent=31 // pred_region
          %227 = vst [vmem:[%s222] sm:$0xff] 0.0
          %228 = vst [vmem:[%s222 + $0x8] sm:$0xff] 0.0
        $region44: #{direction_net.2} parent=31 // pred_fallthru
          _
        %v229 = vld [vmem:[%s217] sm:$0xff]
        %v230 = vld [vmem:[%s217 + $0x8] sm:$0xff]
        %v231 = vld [vmem:[%s217 + $0x10] sm:$0xff]
        %v232 = vld [vmem:[%s217 + $0x18] sm:$0xff]
        %v233 = vld [vmem:[%s217 + $0x20] sm:$0xff]
        %v234 = vld [vmem:[%s217 + $0x28] sm:$0xff]
        %v235 = vld [vmem:[%s217 + $0x30] sm:$0xff]
        %v236 = vld [vmem:[%s217 + $0x38] sm:$0xff]
        %v237 = vld [vmem:[%s217 + $0x40] sm:$0xff]
        %v238 = vld [vmem:[%s217 + $0x48] sm:$0xff]
        %v239 = vld [vmem:[%s217 + $0x50] sm:$0xff]
        %v240 = vld [vmem:[%s217 + $0x58] sm:$0xff]
        %v241 = vld [vmem:[%s217 + $0x60] sm:$0xff]
        %v242 = vld [vmem:[%s217 + $0x68] sm:$0xff]
        %v243 = vld [vmem:[%s217 + $0x70] sm:$0xff]
        %v244 = vld [vmem:[%s217 + $0x78] sm:$0xff]
        %v245 = vld [vmem:[%s217 + $0x80] sm:$0xff]
        %v246 = vld [vmem:[%s217 + $0x88] sm:$0xff]
        %v247 = vld [vmem:[%s217 + $0x90] sm:$0xff]
        %v248 = vld [vmem:[%s217 + $0x98] sm:$0xff]
        %v249 = vld [vmem:[%s217 + $0xa0] sm:$0xff]
        %v250 = vld [vmem:[%s217 + $0xa8] sm:$0xff]
        %v251 = vld [vmem:[%s217 + $0xb0] sm:$0xff]
        %v252 = vld [vmem:[%s217 + $0xb8] sm:$0xff]
        %v253 = vld [vmem:[%s217 + $0xc0] sm:$0xff]
        %v254 = vld [vmem:[%s217 + $0xc8] sm:$0xff]
        %v255 = vld [vmem:[%s217 + $0xd0] sm:$0xff]
        %v256 = vld [vmem:[%s217 + $0xd8] sm:$0xff]
        %v257 = vld [vmem:[%s217 + $0xe0] sm:$0xff]
        %v258 = vld [vmem:[%s217 + $0xe8] sm:$0xff]
        %v259 = vld [vmem:[%s217 + $0xf0] sm:$0xff]
        %v260 = vld [vmem:[%s217 + $0xf8] sm:$0xff]
        %v261 = vld [vmem:[#allocation2] sm:$0xff]
        %v262 = vld [vmem:[#allocation2 + $0x8] sm:$0xff]
        %v263 = vld [vmem:[#allocation2 + $0x10] sm:$0xff]
        %v264 = vld [vmem:[#allocation2 + $0x18] sm:$0xff]
        %v265 = vld [vmem:[#allocation2 + $0x20] sm:$0xff]
        %v266 = vld [vmem:[#allocation2 + $0x28] sm:$0xff]
        %v267 = vld [vmem:[#allocation2 + $0x30] sm:$0xff]
        %v268 = vld [vmem:[#allocation2 + $0x38] sm:$0xff]
        %v269 = vld [vmem:[#allocation2 + $0x40] sm:$0xff]
        %v270 = vld [vmem:[#allocation2 + $0x48] sm:$0xff]
        %v271 = vld [vmem:[#allocation2 + $0x50] sm:$0xff]
        %v272 = vld [vmem:[#allocation2 + $0x58] sm:$0xff]
        %v273 = vld [vmem:[#allocation2 + $0x60] sm:$0xff]
        %v274 = vld [vmem:[#allocation2 + $0x68] sm:$0xff]
        %v275 = vld [vmem:[#allocation2 + $0x70] sm:$0xff]
        %v276 = vld [vmem:[#allocation2 + $0x78] sm:$0xff]
        %v277 = vld [vmem:[#allocation4] sm:$0xff]
        %v278 = vld [vmem:[#allocation4 + $0x8] sm:$0xff]
        %v281 = vlaneseq
        %v282 = vshrl.u32 %v281, 7
        %v283 = vsub.s32 0, %v282
        %v284 = vrot.slane %v277, %v283
        %v285 = vlaneseq
        %v286 = vshrl.u32 %v285, 7
        %v287 = vsub.s32 1, %v286
        %v288 = vrot.slane %v277, %v287
        %v289 = vlaneseq
        %v290 = vshrl.u32 %v289, 7
        %v291 = vsub.s32 2, %v290
        %v292 = vrot.slane %v277, %v291
        %v293 = vlaneseq
        %v294 = vshrl.u32 %v293, 7
        %v295 = vsub.s32 3, %v294
        %v296 = vrot.slane %v277, %v295
        %v297 = vlaneseq
        %v298 = vshrl.u32 %v297, 7
        %v299 = vsub.s32 4, %v298
        %v300 = vrot.slane %v277, %v299
        %v301 = vlaneseq
        %v302 = vshrl.u32 %v301, 7
        %v303 = vsub.s32 5, %v302
        %v304 = vrot.slane %v277, %v303
        %v305 = vlaneseq
        %v306 = vshrl.u32 %v305, 7
        %v307 = vsub.s32 6, %v306
        %v308 = vrot.slane %v277, %v307
        %v309 = vlaneseq
        %v310 = vshrl.u32 %v309, 7
        %v311 = vsub.s32 7, %v310
        %v312 = vrot.slane %v277, %v311
        %v313 = vlaneseq
        %v314 = vshrl.u32 %v313, 7
        %v315 = vsub.s32 0, %v314
        %v316 = vrot.slane %v278, %v315
        %v317 = vlaneseq
        %v318 = vshrl.u32 %v317, 7
        %v319 = vsub.s32 1, %v318
        %v320 = vrot.slane %v278, %v319
        %v321 = vlaneseq
        %v322 = vshrl.u32 %v321, 7
        %v323 = vsub.s32 2, %v322
        %v324 = vrot.slane %v278, %v323
        %v325 = vlaneseq
        %v326 = vshrl.u32 %v325, 7
        %v327 = vsub.s32 3, %v326
        %v328 = vrot.slane %v278, %v327
        %v329 = vlaneseq
        %v330 = vshrl.u32 %v329, 7
        %v331 = vsub.s32 4, %v330
        %v332 = vrot.slane %v278, %v331
        %v333 = vlaneseq
        %v334 = vshrl.u32 %v333, 7
        %v335 = vsub.s32 5, %v334
        %v336 = vrot.slane %v278, %v335
        %v337 = vlaneseq
        %v338 = vshrl.u32 %v337, 7
        %v339 = vsub.s32 6, %v338
        %v340 = vrot.slane %v278, %v339
        %v341 = vlaneseq
        %v342 = vshrl.u32 %v341, 7
        %v343 = vsub.s32 7, %v342
        %v344 = vrot.slane %v278, %v343
        %vm361 = vcmask 64512
        %v363 = vsel %vm361, %v229, 0
        %v366 = vsel %vm361, %v230, 0
        %v369 = vsel %vm361, %v231, 0
        %v372 = vsel %vm361, %v232, 0
        %v375 = vsel %vm361, %v233, 0
        %v378 = vsel %vm361, %v234, 0
        %v381 = vsel %vm361, %v235, 0
        %v384 = vsel %vm361, %v236, 0
        %v387 = vsel %vm361, %v237, 0
        %v390 = vsel %vm361, %v238, 0
        %v393 = vsel %vm361, %v239, 0
        %v396 = vsel %vm361, %v240, 0
        %v399 = vsel %vm361, %v241, 0
        %v402 = vsel %vm361, %v242, 0
        %v405 = vsel %vm361, %v243, 0
        %v408 = vsel %vm361, %v244, 0
        %v411 = vsel %vm361, %v245, 0
        %v414 = vsel %vm361, %v246, 0
        %v417 = vsel %vm361, %v247, 0
        %v420 = vsel %vm361, %v248, 0
        %v423 = vsel %vm361, %v249, 0
        %v426 = vsel %vm361, %v250, 0
        %v429 = vsel %vm361, %v251, 0
        %v432 = vsel %vm361, %v252, 0
        %v435 = vsel %vm361, %v253, 0
        %v438 = vsel %vm361, %v254, 0
        %v441 = vsel %vm361, %v255, 0
        %v444 = vsel %vm361, %v256, 0
        %v447 = vsel %vm361, %v257, 0
        %v450 = vsel %vm361, %v258, 0
        %v453 = vsel %vm361, %v259, 0
        %v456 = vsel %vm361, %v260, 0
        %458 = vmatprep.subr.mxu0 0.0
        %459 = vmatpush1.msra.mxu0 0.0
        %460 = vmatprep.subr.mxu0 0.0
        %461 = vmatpush1.msra.mxu0 0.0
        %462 = vmatprep.subr.mxu0 0.0
        %463 = vmatpush1.msra.mxu0 0.0
        %464 = vmatprep.subr.mxu0 0.0
        %465 = vmatpush1.msra.mxu0 0.0
        %466 = vmatprep.subr.mxu0 0.0
        %467 = vmatpush1.msra.mxu0 0.0
        %468 = vmatprep.subr.mxu0 0.0
        %469 = vmatpush1.msra.mxu0 0.0
        %470 = vmatprep.subr.mxu0 0.0
        %471 = vmatpush1.msra.mxu0 0.0
        %472 = vmatprep.subr.mxu0 0.0
        %473 = vmatpush1.msra.mxu0 0.0
        %474 = vmatprep.subr.mxu0 0.0
        %475 = vmatpush1.msra.mxu0 0.0
        %476 = vmatprep.subr.mxu0 0.0
        %477 = vmatpush1.msra.mxu0 0.0
        %478 = vmatprep.subr.mxu0 0.0
        %479 = vmatpush1.msra.mxu0 0.0
        %480 = vmatprep.subr.mxu0 0.0
        %481 = vmatpush1.msra.mxu0 0.0
        %482 = vmatprep.subr.mxu0 0.0
        %483 = vmatpush1.msra.mxu0 0.0
        %484 = vmatprep.subr.mxu0 0.0
        %485 = vmatpush1.msra.mxu0 0.0
        %486 = vmatprep.subr.mxu0 0.0
        %487 = vmatpush1.msra.mxu0 0.0
        %488 = vmatprep.subr.mxu0 %v262
        %489 = vmatpush1.msra.mxu0 %v261
        %490 = vmatprep.subr.mxu0 0.0
        %491 = vmatpush2.msra.mxu0 0.0
        %492 = vmatprep.subr.mxu0 0.0
        %493 = vmatpush2.msra.mxu0 0.0
        %494 = vmatprep.subr.mxu0 0.0
        %495 = vmatpush2.msra.mxu0 0.0
        %496 = vmatprep.subr.mxu0 0.0
        %497 = vmatpush2.msra.mxu0 0.0
        %498 = vmatprep.subr.mxu0 0.0
        %499 = vmatpush2.msra.mxu0 0.0
        %500 = vmatprep.subr.mxu0 0.0
        %501 = vmatpush2.msra.mxu0 0.0
        %502 = vmatprep.subr.mxu0 0.0
        %503 = vmatpush2.msra.mxu0 0.0
        %504 = vmatprep.subr.mxu0 0.0
        %505 = vmatpush2.msra.mxu0 0.0
        %506 = vmatprep.subr.mxu0 0.0
        %507 = vmatpush2.msra.mxu0 0.0
        %508 = vmatprep.subr.mxu0 0.0
        %509 = vmatpush2.msra.mxu0 0.0
        %510 = vmatprep.subr.mxu0 0.0
        %511 = vmatpush2.msra.mxu0 0.0
        %512 = vmatprep.subr.mxu0 0.0
        %513 = vmatpush2.msra.mxu0 0.0
        %514 = vmatprep.subr.mxu0 0.0
        %515 = vmatpush2.msra.mxu0 0.0
        %516 = vmatprep.subr.mxu0 0.0
        %517 = vmatpush2.msra.mxu0 0.0
        %518 = vmatprep.subr.mxu0 0.0
        %519 = vmatpush2.msra.mxu0 0.0
        %520 = vmatprep.subr.mxu0 0.0
        %521 = vmatpush2.msra.mxu0 0.0
        %522 = vmatprep.mubr.f32.mxu0 0.0
        %523 = vmatmul.mubr.f32.gmra.mxu0 %v363
        %v524 = vpop.f32.mrf.mxu0
        %v525 = vadd.f32 %v284, %v524
        %v526 = vpop.f32.mrf.mxu0
        %v527 = vadd.f32 %v288, %v526
        %528 = vmatprep.mubr.f32.mxu0 0.0
        %529 = vmatmul.mubr.f32.gmra.mxu0 %v366
        %v530 = vpop.f32.mrf.mxu0
        %v531 = vadd.f32 %v284, %v530
        %v532 = vpop.f32.mrf.mxu0
        %v533 = vadd.f32 %v288, %v532
        %534 = vmatprep.mubr.f32.mxu0 0.0
        %535 = vmatmul.mubr.f32.gmra.mxu0 %v369
        %v536 = vpop.f32.mrf.mxu0
        %v537 = vadd.f32 %v284, %v536
        %v538 = vpop.f32.mrf.mxu0
        %v539 = vadd.f32 %v288, %v538
        %540 = vmatprep.mubr.f32.mxu0 0.0
        %541 = vmatmul.mubr.f32.gmra.mxu0 %v372
        %v542 = vpop.f32.mrf.mxu0
        %v543 = vadd.f32 %v284, %v542
        %v544 = vpop.f32.mrf.mxu0
        %v545 = vadd.f32 %v288, %v544
        %546 = vmatprep.mubr.f32.mxu0 0.0
        %547 = vmatmul.mubr.f32.gmra.mxu0 %v375
        %v548 = vpop.f32.mrf.mxu0
        %v549 = vadd.f32 %v284, %v548
        %v550 = vpop.f32.mrf.mxu0
        %v551 = vadd.f32 %v288, %v550
        %552 = vmatprep.mubr.f32.mxu0 0.0
        %553 = vmatmul.mubr.f32.gmra.mxu0 %v378
        %v554 = vpop.f32.mrf.mxu0
        %v555 = vadd.f32 %v284, %v554
        %v556 = vpop.f32.mrf.mxu0
        %v557 = vadd.f32 %v288, %v556
        %558 = vmatprep.mubr.f32.mxu0 0.0
        %559 = vmatmul.mubr.f32.gmra.mxu0 %v381
        %v560 = vpop.f32.mrf.mxu0
        %v561 = vadd.f32 %v284, %v560
        %v562 = vpop.f32.mrf.mxu0
        %v563 = vadd.f32 %v288, %v562
        %564 = vmatprep.mubr.f32.mxu0 0.0
        %565 = vmatmul.mubr.f32.gmra.mxu0 %v384
        %v566 = vpop.f32.mrf.mxu0
        %v567 = vadd.f32 %v284, %v566
        %v568 = vpop.f32.mrf.mxu0
        %v569 = vadd.f32 %v288, %v568
        %570 = vmatprep.mubr.f32.mxu0 0.0
        %571 = vmatmul.mubr.f32.gmra.mxu0 %v387
        %v572 = vpop.f32.mrf.mxu0
        %v573 = vadd.f32 %v284, %v572
        %v574 = vpop.f32.mrf.mxu0
        %v575 = vadd.f32 %v288, %v574
        %576 = vmatprep.mubr.f32.mxu0 0.0
        %577 = vmatmul.mubr.f32.gmra.mxu0 %v390
        %v578 = vpop.f32.mrf.mxu0
        %v579 = vadd.f32 %v284, %v578
        %v580 = vpop.f32.mrf.mxu0
        %v581 = vadd.f32 %v288, %v580
        %582 = vmatprep.mubr.f32.mxu0 0.0
        %583 = vmatmul.mubr.f32.gmra.mxu0 %v393
        %v584 = vpop.f32.mrf.mxu0
        %v585 = vadd.f32 %v284, %v584
        %v586 = vpop.f32.mrf.mxu0
        %v587 = vadd.f32 %v288, %v586
        %588 = vmatprep.mubr.f32.mxu0 0.0
        %589 = vmatmul.mubr.f32.gmra.mxu0 %v396
        %v590 = vpop.f32.mrf.mxu0
        %v591 = vadd.f32 %v284, %v590
        %v592 = vpop.f32.mrf.mxu0
        %v593 = vadd.f32 %v288, %v592
        %594 = vmatprep.mubr.f32.mxu0 0.0
        %595 = vmatmul.mubr.f32.gmra.mxu0 %v399
        %v596 = vpop.f32.mrf.mxu0
        %v597 = vadd.f32 %v284, %v596
        %v598 = vpop.f32.mrf.mxu0
        %v599 = vadd.f32 %v288, %v598
        %600 = vmatprep.mubr.f32.mxu0 0.0
        %601 = vmatmul.mubr.f32.gmra.mxu0 %v402
        %v602 = vpop.f32.mrf.mxu0
        %v603 = vadd.f32 %v284, %v602
        %v604 = vpop.f32.mrf.mxu0
        %v605 = vadd.f32 %v288, %v604
        %606 = vmatprep.mubr.f32.mxu0 0.0
        %607 = vmatmul.mubr.f32.gmra.mxu0 %v405
        %v608 = vpop.f32.mrf.mxu0
        %v609 = vadd.f32 %v284, %v608
        %v610 = vpop.f32.mrf.mxu0
        %v611 = vadd.f32 %v288, %v610
        %612 = vmatprep.mubr.f32.mxu0 0.0
        %613 = vmatmul.mubr.f32.gmra.mxu0 %v408
        %v614 = vpop.f32.mrf.mxu0
        %v615 = vadd.f32 %v284, %v614
        %v616 = vpop.f32.mrf.mxu0
        %v617 = vadd.f32 %v288, %v616
        %618 = vmatprep.mubr.f32.mxu0 0.0
        %619 = vmatmul.mubr.f32.gmra.mxu0 %v411
        %v620 = vpop.f32.mrf.mxu0
        %v621 = vadd.f32 %v284, %v620
        %v622 = vpop.f32.mrf.mxu0
        %v623 = vadd.f32 %v288, %v622
        %624 = vmatprep.mubr.f32.mxu0 0.0
        %625 = vmatmul.mubr.f32.gmra.mxu0 %v414
        %v626 = vpop.f32.mrf.mxu0
        %v627 = vadd.f32 %v284, %v626
        %v628 = vpop.f32.mrf.mxu0
        %v629 = vadd.f32 %v288, %v628
        %630 = vmatprep.mubr.f32.mxu0 0.0
        %631 = vmatmul.mubr.f32.gmra.mxu0 %v417
        %v632 = vpop.f32.mrf.mxu0
        %v633 = vadd.f32 %v284, %v632
        %v634 = vpop.f32.mrf.mxu0
        %v635 = vadd.f32 %v288, %v634
        %636 = vmatprep.mubr.f32.mxu0 0.0
        %637 = vmatmul.mubr.f32.gmra.mxu0 %v420
        %v638 = vpop.f32.mrf.mxu0
        %v639 = vadd.f32 %v284, %v638
        %v640 = vpop.f32.mrf.mxu0
        %v641 = vadd.f32 %v288, %v640
        %642 = vmatprep.mubr.f32.mxu0 0.0
        %643 = vmatmul.mubr.f32.gmra.mxu0 %v423
        %v644 = vpop.f32.mrf.mxu0
        %v645 = vadd.f32 %v284, %v644
        %v646 = vpop.f32.mrf.mxu0
        %v647 = vadd.f32 %v288, %v646
        %648 = vmatprep.mubr.f32.mxu0 0.0
        %649 = vmatmul.mubr.f32.gmra.mxu0 %v426
        %v650 = vpop.f32.mrf.mxu0
        %v651 = vadd.f32 %v284, %v650
        %v652 = vpop.f32.mrf.mxu0
        %v653 = vadd.f32 %v288, %v652
        %654 = vmatprep.mubr.f32.mxu0 0.0
        %655 = vmatmul.mubr.f32.gmra.mxu0 %v429
        %v656 = vpop.f32.mrf.mxu0
        %v657 = vadd.f32 %v284, %v656
        %v658 = vpop.f32.mrf.mxu0
        %v659 = vadd.f32 %v288, %v658
        %660 = vmatprep.mubr.f32.mxu0 0.0
        %661 = vmatmul.mubr.f32.gmra.mxu0 %v432
        %v662 = vpop.f32.mrf.mxu0
        %v663 = vadd.f32 %v284, %v662
        %v664 = vpop.f32.mrf.mxu0
        %v665 = vadd.f32 %v288, %v664
        %666 = vmatprep.mubr.f32.mxu0 0.0
        %667 = vmatmul.mubr.f32.gmra.mxu0 %v435
        %v668 = vpop.f32.mrf.mxu0
        %v669 = vadd.f32 %v284, %v668
        %v670 = vpop.f32.mrf.mxu0
        %v671 = vadd.f32 %v288, %v670
        %672 = vmatprep.mubr.f32.mxu0 0.0
        %673 = vmatmul.mubr.f32.gmra.mxu0 %v438
        %v674 = vpop.f32.mrf.mxu0
        %v675 = vadd.f32 %v284, %v674
        %v676 = vpop.f32.mrf.mxu0
        %v677 = vadd.f32 %v288, %v676
        %678 = vmatprep.mubr.f32.mxu0 0.0
        %679 = vmatmul.mubr.f32.gmra.mxu0 %v441
        %v680 = vpop.f32.mrf.mxu0
        %v681 = vadd.f32 %v284, %v680
        %v682 = vpop.f32.mrf.mxu0
        %v683 = vadd.f32 %v288, %v682
        %684 = vmatprep.mubr.f32.mxu0 0.0
        %685 = vmatmul.mubr.f32.gmra.mxu0 %v444
        %v686 = vpop.f32.mrf.mxu0
        %v687 = vadd.f32 %v284, %v686
        %v688 = vpop.f32.mrf.mxu0
        %v689 = vadd.f32 %v288, %v688
        %690 = vmatprep.mubr.f32.mxu0 0.0
        %691 = vmatmul.mubr.f32.gmra.mxu0 %v447
        %v692 = vpop.f32.mrf.mxu0
        %v693 = vadd.f32 %v284, %v692
        %v694 = vpop.f32.mrf.mxu0
        %v695 = vadd.f32 %v288, %v694
        %696 = vmatprep.mubr.f32.mxu0 0.0
        %697 = vmatmul.mubr.f32.gmra.mxu0 %v450
        %v698 = vpop.f32.mrf.mxu0
        %v699 = vadd.f32 %v284, %v698
        %v700 = vpop.f32.mrf.mxu0
        %v701 = vadd.f32 %v288, %v700
        %702 = vmatprep.mubr.f32.mxu0 0.0
        %703 = vmatmul.mubr.f32.gmra.mxu0 %v453
        %v704 = vpop.f32.mrf.mxu0
        %v705 = vadd.f32 %v284, %v704
        %v706 = vpop.f32.mrf.mxu0
        %v707 = vadd.f32 %v288, %v706
        %708 = vmatprep.mubr.f32.mxu0 0.0
        %709 = vmatmul.mubr.f32.gmra.mxu0 %v456
        %v710 = vpop.f32.mrf.mxu0
        %v711 = vadd.f32 %v284, %v710
        %v712 = vpop.f32.mrf.mxu0
        %v713 = vadd.f32 %v288, %v712
        %714 = vdwg.mxu0
        %715 = vmatprep.subr.mxu0 0.0
        %716 = vmatpush1.msra.mxu0 0.0
        %717 = vmatprep.subr.mxu0 0.0
        %718 = vmatpush1.msra.mxu0 0.0
        %719 = vmatprep.subr.mxu0 0.0
        %720 = vmatpush1.msra.mxu0 0.0
        %721 = vmatprep.subr.mxu0 0.0
        %722 = vmatpush1.msra.mxu0 0.0
        %723 = vmatprep.subr.mxu0 0.0
        %724 = vmatpush1.msra.mxu0 0.0
        %725 = vmatprep.subr.mxu0 0.0
        %726 = vmatpush1.msra.mxu0 0.0
        %727 = vmatprep.subr.mxu0 0.0
        %728 = vmatpush1.msra.mxu0 0.0
        %729 = vmatprep.subr.mxu0 0.0
        %730 = vmatpush1.msra.mxu0 0.0
        %731 = vmatprep.subr.mxu0 0.0
        %732 = vmatpush1.msra.mxu0 0.0
        %733 = vmatprep.subr.mxu0 0.0
        %734 = vmatpush1.msra.mxu0 0.0
        %735 = vmatprep.subr.mxu0 0.0
        %736 = vmatpush1.msra.mxu0 0.0
        %737 = vmatprep.subr.mxu0 0.0
        %738 = vmatpush1.msra.mxu0 0.0
        %739 = vmatprep.subr.mxu0 0.0
        %740 = vmatpush1.msra.mxu0 0.0
        %741 = vmatprep.subr.mxu0 0.0
        %742 = vmatpush1.msra.mxu0 0.0
        %743 = vmatprep.subr.mxu0 0.0
        %744 = vmatpush1.msra.mxu0 0.0
        %745 = vmatprep.subr.mxu0 %v264
        %746 = vmatpush1.msra.mxu0 %v263
        %747 = vmatprep.subr.mxu0 0.0
        %748 = vmatpush2.msra.mxu0 0.0
        %749 = vmatprep.subr.mxu0 0.0
        %750 = vmatpush2.msra.mxu0 0.0
        %751 = vmatprep.subr.mxu0 0.0
        %752 = vmatpush2.msra.mxu0 0.0
        %753 = vmatprep.subr.mxu0 0.0
        %754 = vmatpush2.msra.mxu0 0.0
        %755 = vmatprep.subr.mxu0 0.0
        %756 = vmatpush2.msra.mxu0 0.0
        %757 = vmatprep.subr.mxu0 0.0
        %758 = vmatpush2.msra.mxu0 0.0
        %759 = vmatprep.subr.mxu0 0.0
        %760 = vmatpush2.msra.mxu0 0.0
        %761 = vmatprep.subr.mxu0 0.0
        %762 = vmatpush2.msra.mxu0 0.0
        %763 = vmatprep.subr.mxu0 0.0
        %764 = vmatpush2.msra.mxu0 0.0
        %765 = vmatprep.subr.mxu0 0.0
        %766 = vmatpush2.msra.mxu0 0.0
        %767 = vmatprep.subr.mxu0 0.0
        %768 = vmatpush2.msra.mxu0 0.0
        %769 = vmatprep.subr.mxu0 0.0
        %770 = vmatpush2.msra.mxu0 0.0
        %771 = vmatprep.subr.mxu0 0.0
        %772 = vmatpush2.msra.mxu0 0.0
        %773 = vmatprep.subr.mxu0 0.0
        %774 = vmatpush2.msra.mxu0 0.0
        %775 = vmatprep.subr.mxu0 0.0
        %776 = vmatpush2.msra.mxu0 0.0
        %777 = vmatprep.subr.mxu0 0.0
        %778 = vmatpush2.msra.mxu0 0.0
        %779 = vmatprep.mubr.f32.mxu0 0.0
        %780 = vmatmul.mubr.f32.gmra.mxu0 %v363
        %v781 = vpop.f32.mrf.mxu0
        %v782 = vadd.f32 %v292, %v781
        %v783 = vpop.f32.mrf.mxu0
        %v784 = vadd.f32 %v296, %v783
        %785 = vmatprep.mubr.f32.mxu0 0.0
        %786 = vmatmul.mubr.f32.gmra.mxu0 %v366
        %v787 = vpop.f32.mrf.mxu0
        %v788 = vadd.f32 %v292, %v787
        %v789 = vpop.f32.mrf.mxu0
        %v790 = vadd.f32 %v296, %v789
        %791 = vmatprep.mubr.f32.mxu0 0.0
        %792 = vmatmul.mubr.f32.gmra.mxu0 %v369
        %v793 = vpop.f32.mrf.mxu0
        %v794 = vadd.f32 %v292, %v793
        %v795 = vpop.f32.mrf.mxu0
        %v796 = vadd.f32 %v296, %v795
        %797 = vmatprep.mubr.f32.mxu0 0.0
        %798 = vmatmul.mubr.f32.gmra.mxu0 %v372
        %v799 = vpop.f32.mrf.mxu0
        %v800 = vadd.f32 %v292, %v799
        %v801 = vpop.f32.mrf.mxu0
        %v802 = vadd.f32 %v296, %v801
        %803 = vmatprep.mubr.f32.mxu0 0.0
        %804 = vmatmul.mubr.f32.gmra.mxu0 %v375
        %v805 = vpop.f32.mrf.mxu0
        %v806 = vadd.f32 %v292, %v805
        %v807 = vpop.f32.mrf.mxu0
        %v808 = vadd.f32 %v296, %v807
        %809 = vmatprep.mubr.f32.mxu0 0.0
        %810 = vmatmul.mubr.f32.gmra.mxu0 %v378
        %v811 = vpop.f32.mrf.mxu0
        %v812 = vadd.f32 %v292, %v811
        %v813 = vpop.f32.mrf.mxu0
        %v814 = vadd.f32 %v296, %v813
        %815 = vmatprep.mubr.f32.mxu0 0.0
        %816 = vmatmul.mubr.f32.gmra.mxu0 %v381
        %v817 = vpop.f32.mrf.mxu0
        %v818 = vadd.f32 %v292, %v817
        %v819 = vpop.f32.mrf.mxu0
        %v820 = vadd.f32 %v296, %v819
        %821 = vmatprep.mubr.f32.mxu0 0.0
        %822 = vmatmul.mubr.f32.gmra.mxu0 %v384
        %v823 = vpop.f32.mrf.mxu0
        %v824 = vadd.f32 %v292, %v823
        %v825 = vpop.f32.mrf.mxu0
        %v826 = vadd.f32 %v296, %v825
        %827 = vmatprep.mubr.f32.mxu0 0.0
        %828 = vmatmul.mubr.f32.gmra.mxu0 %v387
        %v829 = vpop.f32.mrf.mxu0
        %v830 = vadd.f32 %v292, %v829
        %v831 = vpop.f32.mrf.mxu0
        %v832 = vadd.f32 %v296, %v831
        %833 = vmatprep.mubr.f32.mxu0 0.0
        %834 = vmatmul.mubr.f32.gmra.mxu0 %v390
        %v835 = vpop.f32.mrf.mxu0
        %v836 = vadd.f32 %v292, %v835
        %v837 = vpop.f32.mrf.mxu0
        %v838 = vadd.f32 %v296, %v837
        %839 = vmatprep.mubr.f32.mxu0 0.0
        %840 = vmatmul.mubr.f32.gmra.mxu0 %v393
        %v841 = vpop.f32.mrf.mxu0
        %v842 = vadd.f32 %v292, %v841
        %v843 = vpop.f32.mrf.mxu0
        %v844 = vadd.f32 %v296, %v843
        %845 = vmatprep.mubr.f32.mxu0 0.0
        %846 = vmatmul.mubr.f32.gmra.mxu0 %v396
        %v847 = vpop.f32.mrf.mxu0
        %v848 = vadd.f32 %v292, %v847
        %v849 = vpop.f32.mrf.mxu0
        %v850 = vadd.f32 %v296, %v849
        %851 = vmatprep.mubr.f32.mxu0 0.0
        %852 = vmatmul.mubr.f32.gmra.mxu0 %v399
        %v853 = vpop.f32.mrf.mxu0
        %v854 = vadd.f32 %v292, %v853
        %v855 = vpop.f32.mrf.mxu0
        %v856 = vadd.f32 %v296, %v855
        %857 = vmatprep.mubr.f32.mxu0 0.0
        %858 = vmatmul.mubr.f32.gmra.mxu0 %v402
        %v859 = vpop.f32.mrf.mxu0
        %v860 = vadd.f32 %v292, %v859
        %v861 = vpop.f32.mrf.mxu0
        %v862 = vadd.f32 %v296, %v861
        %863 = vmatprep.mubr.f32.mxu0 0.0
        %864 = vmatmul.mubr.f32.gmra.mxu0 %v405
        %v865 = vpop.f32.mrf.mxu0
        %v866 = vadd.f32 %v292, %v865
        %v867 = vpop.f32.mrf.mxu0
        %v868 = vadd.f32 %v296, %v867
        %869 = vmatprep.mubr.f32.mxu0 0.0
        %870 = vmatmul.mubr.f32.gmra.mxu0 %v408
        %v871 = vpop.f32.mrf.mxu0
        %v872 = vadd.f32 %v292, %v871
        %v873 = vpop.f32.mrf.mxu0
        %v874 = vadd.f32 %v296, %v873
        %875 = vmatprep.mubr.f32.mxu0 0.0
        %876 = vmatmul.mubr.f32.gmra.mxu0 %v411
        %v877 = vpop.f32.mrf.mxu0
        %v878 = vadd.f32 %v292, %v877
        %v879 = vpop.f32.mrf.mxu0
        %v880 = vadd.f32 %v296, %v879
        %881 = vmatprep.mubr.f32.mxu0 0.0
        %882 = vmatmul.mubr.f32.gmra.mxu0 %v414
        %v883 = vpop.f32.mrf.mxu0
        %v884 = vadd.f32 %v292, %v883
        %v885 = vpop.f32.mrf.mxu0
        %v886 = vadd.f32 %v296, %v885
        %887 = vmatprep.mubr.f32.mxu0 0.0
        %888 = vmatmul.mubr.f32.gmra.mxu0 %v417
        %v889 = vpop.f32.mrf.mxu0
        %v890 = vadd.f32 %v292, %v889
        %v891 = vpop.f32.mrf.mxu0
        %v892 = vadd.f32 %v296, %v891
        %893 = vmatprep.mubr.f32.mxu0 0.0
        %894 = vmatmul.mubr.f32.gmra.mxu0 %v420
        %v895 = vpop.f32.mrf.mxu0
        %v896 = vadd.f32 %v292, %v895
        %v897 = vpop.f32.mrf.mxu0
        %v898 = vadd.f32 %v296, %v897
        %899 = vmatprep.mubr.f32.mxu0 0.0
        %900 = vmatmul.mubr.f32.gmra.mxu0 %v423
        %v901 = vpop.f32.mrf.mxu0
        %v902 = vadd.f32 %v292, %v901
        %v903 = vpop.f32.mrf.mxu0
        %v904 = vadd.f32 %v296, %v903
        %905 = vmatprep.mubr.f32.mxu0 0.0
        %906 = vmatmul.mubr.f32.gmra.mxu0 %v426
        %v907 = vpop.f32.mrf.mxu0
        %v908 = vadd.f32 %v292, %v907
        %v909 = vpop.f32.mrf.mxu0
        %v910 = vadd.f32 %v296, %v909
        %911 = vmatprep.mubr.f32.mxu0 0.0
        %912 = vmatmul.mubr.f32.gmra.mxu0 %v429
        %v913 = vpop.f32.mrf.mxu0
        %v914 = vadd.f32 %v292, %v913
        %v915 = vpop.f32.mrf.mxu0
        %v916 = vadd.f32 %v296, %v915
        %917 = vmatprep.mubr.f32.mxu0 0.0
        %918 = vmatmul.mubr.f32.gmra.mxu0 %v432
        %v919 = vpop.f32.mrf.mxu0
        %v920 = vadd.f32 %v292, %v919
        %v921 = vpop.f32.mrf.mxu0
        %v922 = vadd.f32 %v296, %v921
        %923 = vmatprep.mubr.f32.mxu0 0.0
        %924 = vmatmul.mubr.f32.gmra.mxu0 %v435
        %v925 = vpop.f32.mrf.mxu0
        %v926 = vadd.f32 %v292, %v925
        %v927 = vpop.f32.mrf.mxu0
        %v928 = vadd.f32 %v296, %v927
        %929 = vmatprep.mubr.f32.mxu0 0.0
        %930 = vmatmul.mubr.f32.gmra.mxu0 %v438
        %v931 = vpop.f32.mrf.mxu0
        %v932 = vadd.f32 %v292, %v931
        %v933 = vpop.f32.mrf.mxu0
        %v934 = vadd.f32 %v296, %v933
        %935 = vmatprep.mubr.f32.mxu0 0.0
        %936 = vmatmul.mubr.f32.gmra.mxu0 %v441
        %v937 = vpop.f32.mrf.mxu0
        %v938 = vadd.f32 %v292, %v937
        %v939 = vpop.f32.mrf.mxu0
        %v940 = vadd.f32 %v296, %v939
        %941 = vmatprep.mubr.f32.mxu0 0.0
        %942 = vmatmul.mubr.f32.gmra.mxu0 %v444
        %v943 = vpop.f32.mrf.mxu0
        %v944 = vadd.f32 %v292, %v943
        %v945 = vpop.f32.mrf.mxu0
        %v946 = vadd.f32 %v296, %v945
        %947 = vmatprep.mubr.f32.mxu0 0.0
        %948 = vmatmul.mubr.f32.gmra.mxu0 %v447
        %v949 = vpop.f32.mrf.mxu0
        %v950 = vadd.f32 %v292, %v949
        %v951 = vpop.f32.mrf.mxu0
        %v952 = vadd.f32 %v296, %v951
        %953 = vmatprep.mubr.f32.mxu0 0.0
        %954 = vmatmul.mubr.f32.gmra.mxu0 %v450
        %v955 = vpop.f32.mrf.mxu0
        %v956 = vadd.f32 %v292, %v955
        %v957 = vpop.f32.mrf.mxu0
        %v958 = vadd.f32 %v296, %v957
        %959 = vmatprep.mubr.f32.mxu0 0.0
        %960 = vmatmul.mubr.f32.gmra.mxu0 %v453
        %v961 = vpop.f32.mrf.mxu0
        %v962 = vadd.f32 %v292, %v961
        %v963 = vpop.f32.mrf.mxu0
        %v964 = vadd.f32 %v296, %v963
        %965 = vmatprep.mubr.f32.mxu0 0.0
        %966 = vmatmul.mubr.f32.gmra.mxu0 %v456
        %v967 = vpop.f32.mrf.mxu0
        %v968 = vadd.f32 %v292, %v967
        %v969 = vpop.f32.mrf.mxu0
        %v970 = vadd.f32 %v296, %v969
        %971 = vdwg.mxu0
        %972 = vmatprep.subr.mxu0 0.0
        %973 = vmatpush1.msra.mxu0 0.0
        %974 = vmatprep.subr.mxu0 0.0
        %975 = vmatpush1.msra.mxu0 0.0
        %976 = vmatprep.subr.mxu0 0.0
        %977 = vmatpush1.msra.mxu0 0.0
        %978 = vmatprep.subr.mxu0 0.0
        %979 = vmatpush1.msra.mxu0 0.0
        %980 = vmatprep.subr.mxu0 0.0
        %981 = vmatpush1.msra.mxu0 0.0
        %982 = vmatprep.subr.mxu0 0.0
        %983 = vmatpush1.msra.mxu0 0.0
        %984 = vmatprep.subr.mxu0 0.0
        %985 = vmatpush1.msra.mxu0 0.0
        %986 = vmatprep.subr.mxu0 0.0
        %987 = vmatpush1.msra.mxu0 0.0
        %988 = vmatprep.subr.mxu0 0.0
        %989 = vmatpush1.msra.mxu0 0.0
        %990 = vmatprep.subr.mxu0 0.0
        %991 = vmatpush1.msra.mxu0 0.0
        %992 = vmatprep.subr.mxu0 0.0
        %993 = vmatpush1.msra.mxu0 0.0
        %994 = vmatprep.subr.mxu0 0.0
        %995 = vmatpush1.msra.mxu0 0.0
        %996 = vmatprep.subr.mxu0 0.0
        %997 = vmatpush1.msra.mxu0 0.0
        %998 = vmatprep.subr.mxu0 0.0
        %999 = vmatpush1.msra.mxu0 0.0
        %1000 = vmatprep.subr.mxu0 0.0
        %1001 = vmatpush1.msra.mxu0 0.0
        %1002 = vmatprep.subr.mxu0 %v266
        %1003 = vmatpush1.msra.mxu0 %v265
        %1004 = vmatprep.subr.mxu0 0.0
        %1005 = vmatpush2.msra.mxu0 0.0
        %1006 = vmatprep.subr.mxu0 0.0
        %1007 = vmatpush2.msra.mxu0 0.0
        %1008 = vmatprep.subr.mxu0 0.0
        %1009 = vmatpush2.msra.mxu0 0.0
        %1010 = vmatprep.subr.mxu0 0.0
        %1011 = vmatpush2.msra.mxu0 0.0
        %1012 = vmatprep.subr.mxu0 0.0
        %1013 = vmatpush2.msra.mxu0 0.0
        %1014 = vmatprep.subr.mxu0 0.0
        %1015 = vmatpush2.msra.mxu0 0.0
        %1016 = vmatprep.subr.mxu0 0.0
        %1017 = vmatpush2.msra.mxu0 0.0
        %1018 = vmatprep.subr.mxu0 0.0
        %1019 = vmatpush2.msra.mxu0 0.0
        %1020 = vmatprep.subr.mxu0 0.0
        %1021 = vmatpush2.msra.mxu0 0.0
        %1022 = vmatprep.subr.mxu0 0.0
        %1023 = vmatpush2.msra.mxu0 0.0
        %1024 = vmatprep.subr.mxu0 0.0
        %1025 = vmatpush2.msra.mxu0 0.0
        %1026 = vmatprep.subr.mxu0 0.0
        %1027 = vmatpush2.msra.mxu0 0.0
        %1028 = vmatprep.subr.mxu0 0.0
        %1029 = vmatpush2.msra.mxu0 0.0
        %1030 = vmatprep.subr.mxu0 0.0
        %1031 = vmatpush2.msra.mxu0 0.0
        %1032 = vmatprep.subr.mxu0 0.0
        %1033 = vmatpush2.msra.mxu0 0.0
        %1034 = vmatprep.subr.mxu0 0.0
        %1035 = vmatpush2.msra.mxu0 0.0
        %1036 = vmatprep.mubr.f32.mxu0 0.0
        %1037 = vmatmul.mubr.f32.gmra.mxu0 %v363
        %v1038 = vpop.f32.mrf.mxu0
        %v1039 = vadd.f32 %v300, %v1038
        %v1040 = vpop.f32.mrf.mxu0
        %v1041 = vadd.f32 %v304, %v1040
        %1042 = vmatprep.mubr.f32.mxu0 0.0
        %1043 = vmatmul.mubr.f32.gmra.mxu0 %v366
        %v1044 = vpop.f32.mrf.mxu0
        %v1045 = vadd.f32 %v300, %v1044
        %v1046 = vpop.f32.mrf.mxu0
        %v1047 = vadd.f32 %v304, %v1046
        %1048 = vmatprep.mubr.f32.mxu0 0.0
        %1049 = vmatmul.mubr.f32.gmra.mxu0 %v369
        %v1050 = vpop.f32.mrf.mxu0
        %v1051 = vadd.f32 %v300, %v1050
        %v1052 = vpop.f32.mrf.mxu0
        %v1053 = vadd.f32 %v304, %v1052
        %1054 = vmatprep.mubr.f32.mxu0 0.0
        %1055 = vmatmul.mubr.f32.gmra.mxu0 %v372
        %v1056 = vpop.f32.mrf.mxu0
        %v1057 = vadd.f32 %v300, %v1056
        %v1058 = vpop.f32.mrf.mxu0
        %v1059 = vadd.f32 %v304, %v1058
        %1060 = vmatprep.mubr.f32.mxu0 0.0
        %1061 = vmatmul.mubr.f32.gmra.mxu0 %v375
        %v1062 = vpop.f32.mrf.mxu0
        %v1063 = vadd.f32 %v300, %v1062
        %v1064 = vpop.f32.mrf.mxu0
        %v1065 = vadd.f32 %v304, %v1064
        %1066 = vmatprep.mubr.f32.mxu0 0.0
        %1067 = vmatmul.mubr.f32.gmra.mxu0 %v378
        %v1068 = vpop.f32.mrf.mxu0
        %v1069 = vadd.f32 %v300, %v1068
        %v1070 = vpop.f32.mrf.mxu0
        %v1071 = vadd.f32 %v304, %v1070
        %1072 = vmatprep.mubr.f32.mxu0 0.0
        %1073 = vmatmul.mubr.f32.gmra.mxu0 %v381
        %v1074 = vpop.f32.mrf.mxu0
        %v1075 = vadd.f32 %v300, %v1074
        %v1076 = vpop.f32.mrf.mxu0
        %v1077 = vadd.f32 %v304, %v1076
        %1078 = vmatprep.mubr.f32.mxu0 0.0
        %1079 = vmatmul.mubr.f32.gmra.mxu0 %v384
        %v1080 = vpop.f32.mrf.mxu0
        %v1081 = vadd.f32 %v300, %v1080
        %v1082 = vpop.f32.mrf.mxu0
        %v1083 = vadd.f32 %v304, %v1082
        %1084 = vmatprep.mubr.f32.mxu0 0.0
        %1085 = vmatmul.mubr.f32.gmra.mxu0 %v387
        %v1086 = vpop.f32.mrf.mxu0
        %v1087 = vadd.f32 %v300, %v1086
        %v1088 = vpop.f32.mrf.mxu0
        %v1089 = vadd.f32 %v304, %v1088
        %1090 = vmatprep.mubr.f32.mxu0 0.0
        %1091 = vmatmul.mubr.f32.gmra.mxu0 %v390
        %v1092 = vpop.f32.mrf.mxu0
        %v1093 = vadd.f32 %v300, %v1092
        %v1094 = vpop.f32.mrf.mxu0
        %v1095 = vadd.f32 %v304, %v1094
        %1096 = vmatprep.mubr.f32.mxu0 0.0
        %1097 = vmatmul.mubr.f32.gmra.mxu0 %v393
        %v1098 = vpop.f32.mrf.mxu0
        %v1099 = vadd.f32 %v300, %v1098
        %v1100 = vpop.f32.mrf.mxu0
        %v1101 = vadd.f32 %v304, %v1100
        %1102 = vmatprep.mubr.f32.mxu0 0.0
        %1103 = vmatmul.mubr.f32.gmra.mxu0 %v396
        %v1104 = vpop.f32.mrf.mxu0
        %v1105 = vadd.f32 %v300, %v1104
        %v1106 = vpop.f32.mrf.mxu0
        %v1107 = vadd.f32 %v304, %v1106
        %1108 = vmatprep.mubr.f32.mxu0 0.0
        %1109 = vmatmul.mubr.f32.gmra.mxu0 %v399
        %v1110 = vpop.f32.mrf.mxu0
        %v1111 = vadd.f32 %v300, %v1110
        %v1112 = vpop.f32.mrf.mxu0
        %v1113 = vadd.f32 %v304, %v1112
        %1114 = vmatprep.mubr.f32.mxu0 0.0
        %1115 = vmatmul.mubr.f32.gmra.mxu0 %v402
        %v1116 = vpop.f32.mrf.mxu0
        %v1117 = vadd.f32 %v300, %v1116
        %v1118 = vpop.f32.mrf.mxu0
        %v1119 = vadd.f32 %v304, %v1118
        %1120 = vmatprep.mubr.f32.mxu0 0.0
        %1121 = vmatmul.mubr.f32.gmra.mxu0 %v405
        %v1122 = vpop.f32.mrf.mxu0
        %v1123 = vadd.f32 %v300, %v1122
        %v1124 = vpop.f32.mrf.mxu0
        %v1125 = vadd.f32 %v304, %v1124
        %1126 = vmatprep.mubr.f32.mxu0 0.0
        %1127 = vmatmul.mubr.f32.gmra.mxu0 %v408
        %v1128 = vpop.f32.mrf.mxu0
        %v1129 = vadd.f32 %v300, %v1128
        %v1130 = vpop.f32.mrf.mxu0
        %v1131 = vadd.f32 %v304, %v1130
        %1132 = vmatprep.mubr.f32.mxu0 0.0
        %1133 = vmatmul.mubr.f32.gmra.mxu0 %v411
        %v1134 = vpop.f32.mrf.mxu0
        %v1135 = vadd.f32 %v300, %v1134
        %v1136 = vpop.f32.mrf.mxu0
        %v1137 = vadd.f32 %v304, %v1136
        %1138 = vmatprep.mubr.f32.mxu0 0.0
        %1139 = vmatmul.mubr.f32.gmra.mxu0 %v414
        %v1140 = vpop.f32.mrf.mxu0
        %v1141 = vadd.f32 %v300, %v1140
        %v1142 = vpop.f32.mrf.mxu0
        %v1143 = vadd.f32 %v304, %v1142
        %1144 = vmatprep.mubr.f32.mxu0 0.0
        %1145 = vmatmul.mubr.f32.gmra.mxu0 %v417
        %v1146 = vpop.f32.mrf.mxu0
        %v1147 = vadd.f32 %v300, %v1146
        %v1148 = vpop.f32.mrf.mxu0
        %v1149 = vadd.f32 %v304, %v1148
        %1150 = vmatprep.mubr.f32.mxu0 0.0
        %1151 = vmatmul.mubr.f32.gmra.mxu0 %v420
        %v1152 = vpop.f32.mrf.mxu0
        %v1153 = vadd.f32 %v300, %v1152
        %v1154 = vpop.f32.mrf.mxu0
        %v1155 = vadd.f32 %v304, %v1154
        %1156 = vmatprep.mubr.f32.mxu0 0.0
        %1157 = vmatmul.mubr.f32.gmra.mxu0 %v423
        %v1158 = vpop.f32.mrf.mxu0
        %v1159 = vadd.f32 %v300, %v1158
        %v1160 = vpop.f32.mrf.mxu0
        %v1161 = vadd.f32 %v304, %v1160
        %1162 = vmatprep.mubr.f32.mxu0 0.0
        %1163 = vmatmul.mubr.f32.gmra.mxu0 %v426
        %v1164 = vpop.f32.mrf.mxu0
        %v1165 = vadd.f32 %v300, %v1164
        %v1166 = vpop.f32.mrf.mxu0
        %v1167 = vadd.f32 %v304, %v1166
        %1168 = vmatprep.mubr.f32.mxu0 0.0
        %1169 = vmatmul.mubr.f32.gmra.mxu0 %v429
        %v1170 = vpop.f32.mrf.mxu0
        %v1171 = vadd.f32 %v300, %v1170
        %v1172 = vpop.f32.mrf.mxu0
        %v1173 = vadd.f32 %v304, %v1172
        %1174 = vmatprep.mubr.f32.mxu0 0.0
        %1175 = vmatmul.mubr.f32.gmra.mxu0 %v432
        %v1176 = vpop.f32.mrf.mxu0
        %v1177 = vadd.f32 %v300, %v1176
        %v1178 = vpop.f32.mrf.mxu0
        %v1179 = vadd.f32 %v304, %v1178
        %1180 = vmatprep.mubr.f32.mxu0 0.0
        %1181 = vmatmul.mubr.f32.gmra.mxu0 %v435
        %v1182 = vpop.f32.mrf.mxu0
        %v1183 = vadd.f32 %v300, %v1182
        %v1184 = vpop.f32.mrf.mxu0
        %v1185 = vadd.f32 %v304, %v1184
        %1186 = vmatprep.mubr.f32.mxu0 0.0
        %1187 = vmatmul.mubr.f32.gmra.mxu0 %v438
        %v1188 = vpop.f32.mrf.mxu0
        %v1189 = vadd.f32 %v300, %v1188
        %v1190 = vpop.f32.mrf.mxu0
        %v1191 = vadd.f32 %v304, %v1190
        %1192 = vmatprep.mubr.f32.mxu0 0.0
        %1193 = vmatmul.mubr.f32.gmra.mxu0 %v441
        %v1194 = vpop.f32.mrf.mxu0
        %v1195 = vadd.f32 %v300, %v1194
        %v1196 = vpop.f32.mrf.mxu0
        %v1197 = vadd.f32 %v304, %v1196
        %1198 = vmatprep.mubr.f32.mxu0 0.0
        %1199 = vmatmul.mubr.f32.gmra.mxu0 %v444
        %v1200 = vpop.f32.mrf.mxu0
        %v1201 = vadd.f32 %v300, %v1200
        %v1202 = vpop.f32.mrf.mxu0
        %v1203 = vadd.f32 %v304, %v1202
        %1204 = vmatprep.mubr.f32.mxu0 0.0
        %1205 = vmatmul.mubr.f32.gmra.mxu0 %v447
        %v1206 = vpop.f32.mrf.mxu0
        %v1207 = vadd.f32 %v300, %v1206
        %v1208 = vpop.f32.mrf.mxu0
        %v1209 = vadd.f32 %v304, %v1208
        %1210 = vmatprep.mubr.f32.mxu0 0.0
        %1211 = vmatmul.mubr.f32.gmra.mxu0 %v450
        %v1212 = vpop.f32.mrf.mxu0
        %v1213 = vadd.f32 %v300, %v1212
        %v1214 = vpop.f32.mrf.mxu0
        %v1215 = vadd.f32 %v304, %v1214
        %1216 = vmatprep.mubr.f32.mxu0 0.0
        %1217 = vmatmul.mubr.f32.gmra.mxu0 %v453
        %v1218 = vpop.f32.mrf.mxu0
        %v1219 = vadd.f32 %v300, %v1218
        %v1220 = vpop.f32.mrf.mxu0
        %v1221 = vadd.f32 %v304, %v1220
        %1222 = vmatprep.mubr.f32.mxu0 0.0
        %1223 = vmatmul.mubr.f32.gmra.mxu0 %v456
        %v1224 = vpop.f32.mrf.mxu0
        %v1225 = vadd.f32 %v300, %v1224
        %v1226 = vpop.f32.mrf.mxu0
        %v1227 = vadd.f32 %v304, %v1226
        %1228 = vdwg.mxu0
        %1229 = vmatprep.subr.mxu0 0.0
        %1230 = vmatpush1.msra.mxu0 0.0
        %1231 = vmatprep.subr.mxu0 0.0
        %1232 = vmatpush1.msra.mxu0 0.0
        %1233 = vmatprep.subr.mxu0 0.0
        %1234 = vmatpush1.msra.mxu0 0.0
        %1235 = vmatprep.subr.mxu0 0.0
        %1236 = vmatpush1.msra.mxu0 0.0
        %1237 = vmatprep.subr.mxu0 0.0
        %1238 = vmatpush1.msra.mxu0 0.0
        %1239 = vmatprep.subr.mxu0 0.0
        %1240 = vmatpush1.msra.mxu0 0.0
        %1241 = vmatprep.subr.mxu0 0.0
        %1242 = vmatpush1.msra.mxu0 0.0
        %1243 = vmatprep.subr.mxu0 0.0
        %1244 = vmatpush1.msra.mxu0 0.0
        %1245 = vmatprep.subr.mxu0 0.0
        %1246 = vmatpush1.msra.mxu0 0.0
        %1247 = vmatprep.subr.mxu0 0.0
        %1248 = vmatpush1.msra.mxu0 0.0
        %1249 = vmatprep.subr.mxu0 0.0
        %1250 = vmatpush1.msra.mxu0 0.0
        %1251 = vmatprep.subr.mxu0 0.0
        %1252 = vmatpush1.msra.mxu0 0.0
        %1253 = vmatprep.subr.mxu0 0.0
        %1254 = vmatpush1.msra.mxu0 0.0
        %1255 = vmatprep.subr.mxu0 0.0
        %1256 = vmatpush1.msra.mxu0 0.0
        %1257 = vmatprep.subr.mxu0 0.0
        %1258 = vmatpush1.msra.mxu0 0.0
        %1259 = vmatprep.subr.mxu0 %v268
        %1260 = vmatpush1.msra.mxu0 %v267
        %1261 = vmatprep.subr.mxu0 0.0
        %1262 = vmatpush2.msra.mxu0 0.0
        %1263 = vmatprep.subr.mxu0 0.0
        %1264 = vmatpush2.msra.mxu0 0.0
        %1265 = vmatprep.subr.mxu0 0.0
        %1266 = vmatpush2.msra.mxu0 0.0
        %1267 = vmatprep.subr.mxu0 0.0
        %1268 = vmatpush2.msra.mxu0 0.0
        %1269 = vmatprep.subr.mxu0 0.0
        %1270 = vmatpush2.msra.mxu0 0.0
        %1271 = vmatprep.subr.mxu0 0.0
        %1272 = vmatpush2.msra.mxu0 0.0
        %1273 = vmatprep.subr.mxu0 0.0
        %1274 = vmatpush2.msra.mxu0 0.0
        %1275 = vmatprep.subr.mxu0 0.0
        %1276 = vmatpush2.msra.mxu0 0.0
        %1277 = vmatprep.subr.mxu0 0.0
        %1278 = vmatpush2.msra.mxu0 0.0
        %1279 = vmatprep.subr.mxu0 0.0
        %1280 = vmatpush2.msra.mxu0 0.0
        %1281 = vmatprep.subr.mxu0 0.0
        %1282 = vmatpush2.msra.mxu0 0.0
        %1283 = vmatprep.subr.mxu0 0.0
        %1284 = vmatpush2.msra.mxu0 0.0
        %1285 = vmatprep.subr.mxu0 0.0
        %1286 = vmatpush2.msra.mxu0 0.0
        %1287 = vmatprep.subr.mxu0 0.0
        %1288 = vmatpush2.msra.mxu0 0.0
        %1289 = vmatprep.subr.mxu0 0.0
        %1290 = vmatpush2.msra.mxu0 0.0
        %1291 = vmatprep.subr.mxu0 0.0
        %1292 = vmatpush2.msra.mxu0 0.0
        %1293 = vmatprep.mubr.f32.mxu0 0.0
        %1294 = vmatmul.mubr.f32.gmra.mxu0 %v363
        %v1295 = vpop.f32.mrf.mxu0
        %v1296 = vadd.f32 %v308, %v1295
        %v1297 = vpop.f32.mrf.mxu0
        %v1298 = vadd.f32 %v312, %v1297
        %1299 = vmatprep.mubr.f32.mxu0 0.0
        %1300 = vmatmul.mubr.f32.gmra.mxu0 %v366
        %v1301 = vpop.f32.mrf.mxu0
        %v1302 = vadd.f32 %v308, %v1301
        %v1303 = vpop.f32.mrf.mxu0
        %v1304 = vadd.f32 %v312, %v1303
        %1305 = vmatprep.mubr.f32.mxu0 0.0
        %1306 = vmatmul.mubr.f32.gmra.mxu0 %v369
        %v1307 = vpop.f32.mrf.mxu0
        %v1308 = vadd.f32 %v308, %v1307
        %v1309 = vpop.f32.mrf.mxu0
        %v1310 = vadd.f32 %v312, %v1309
        %1311 = vmatprep.mubr.f32.mxu0 0.0
        %1312 = vmatmul.mubr.f32.gmra.mxu0 %v372
        %v1313 = vpop.f32.mrf.mxu0
        %v1314 = vadd.f32 %v308, %v1313
        %v1315 = vpop.f32.mrf.mxu0
        %v1316 = vadd.f32 %v312, %v1315
        %1317 = vmatprep.mubr.f32.mxu0 0.0
        %1318 = vmatmul.mubr.f32.gmra.mxu0 %v375
        %v1319 = vpop.f32.mrf.mxu0
        %v1320 = vadd.f32 %v308, %v1319
        %v1321 = vpop.f32.mrf.mxu0
        %v1322 = vadd.f32 %v312, %v1321
        %1323 = vmatprep.mubr.f32.mxu0 0.0
        %1324 = vmatmul.mubr.f32.gmra.mxu0 %v378
        %v1325 = vpop.f32.mrf.mxu0
        %v1326 = vadd.f32 %v308, %v1325
        %v1327 = vpop.f32.mrf.mxu0
        %v1328 = vadd.f32 %v312, %v1327
        %1329 = vmatprep.mubr.f32.mxu0 0.0
        %1330 = vmatmul.mubr.f32.gmra.mxu0 %v381
        %v1331 = vpop.f32.mrf.mxu0
        %v1332 = vadd.f32 %v308, %v1331
        %v1333 = vpop.f32.mrf.mxu0
        %v1334 = vadd.f32 %v312, %v1333
        %1335 = vmatprep.mubr.f32.mxu0 0.0
        %1336 = vmatmul.mubr.f32.gmra.mxu0 %v384
        %v1337 = vpop.f32.mrf.mxu0
        %v1338 = vadd.f32 %v308, %v1337
        %v1339 = vpop.f32.mrf.mxu0
        %v1340 = vadd.f32 %v312, %v1339
        %1341 = vmatprep.mubr.f32.mxu0 0.0
        %1342 = vmatmul.mubr.f32.gmra.mxu0 %v387
        %v1343 = vpop.f32.mrf.mxu0
        %v1344 = vadd.f32 %v308, %v1343
        %v1345 = vpop.f32.mrf.mxu0
        %v1346 = vadd.f32 %v312, %v1345
        %1347 = vmatprep.mubr.f32.mxu0 0.0
        %1348 = vmatmul.mubr.f32.gmra.mxu0 %v390
        %v1349 = vpop.f32.mrf.mxu0
        %v1350 = vadd.f32 %v308, %v1349
        %v1351 = vpop.f32.mrf.mxu0
        %v1352 = vadd.f32 %v312, %v1351
        %1353 = vmatprep.mubr.f32.mxu0 0.0
        %1354 = vmatmul.mubr.f32.gmra.mxu0 %v393
        %v1355 = vpop.f32.mrf.mxu0
        %v1356 = vadd.f32 %v308, %v1355
        %v1357 = vpop.f32.mrf.mxu0
        %v1358 = vadd.f32 %v312, %v1357
        %1359 = vmatprep.mubr.f32.mxu0 0.0
        %1360 = vmatmul.mubr.f32.gmra.mxu0 %v396
        %v1361 = vpop.f32.mrf.mxu0
        %v1362 = vadd.f32 %v308, %v1361
        %v1363 = vpop.f32.mrf.mxu0
        %v1364 = vadd.f32 %v312, %v1363
        %1365 = vmatprep.mubr.f32.mxu0 0.0
        %1366 = vmatmul.mubr.f32.gmra.mxu0 %v399
        %v1367 = vpop.f32.mrf.mxu0
        %v1368 = vadd.f32 %v308, %v1367
        %v1369 = vpop.f32.mrf.mxu0
        %v1370 = vadd.f32 %v312, %v1369
        %1371 = vmatprep.mubr.f32.mxu0 0.0
        %1372 = vmatmul.mubr.f32.gmra.mxu0 %v402
        %v1373 = vpop.f32.mrf.mxu0
        %v1374 = vadd.f32 %v308, %v1373
        %v1375 = vpop.f32.mrf.mxu0
        %v1376 = vadd.f32 %v312, %v1375
        %1377 = vmatprep.mubr.f32.mxu0 0.0
        %1378 = vmatmul.mubr.f32.gmra.mxu0 %v405
        %v1379 = vpop.f32.mrf.mxu0
        %v1380 = vadd.f32 %v308, %v1379
        %v1381 = vpop.f32.mrf.mxu0
        %v1382 = vadd.f32 %v312, %v1381
        %1383 = vmatprep.mubr.f32.mxu0 0.0
        %1384 = vmatmul.mubr.f32.gmra.mxu0 %v408
        %v1385 = vpop.f32.mrf.mxu0
        %v1386 = vadd.f32 %v308, %v1385
        %v1387 = vpop.f32.mrf.mxu0
        %v1388 = vadd.f32 %v312, %v1387
        %1389 = vmatprep.mubr.f32.mxu0 0.0
        %1390 = vmatmul.mubr.f32.gmra.mxu0 %v411
        %v1391 = vpop.f32.mrf.mxu0
        %v1392 = vadd.f32 %v308, %v1391
        %v1393 = vpop.f32.mrf.mxu0
        %v1394 = vadd.f32 %v312, %v1393
        %1395 = vmatprep.mubr.f32.mxu0 0.0
        %1396 = vmatmul.mubr.f32.gmra.mxu0 %v414
        %v1397 = vpop.f32.mrf.mxu0
        %v1398 = vadd.f32 %v308, %v1397
        %v1399 = vpop.f32.mrf.mxu0
        %v1400 = vadd.f32 %v312, %v1399
        %1401 = vmatprep.mubr.f32.mxu0 0.0
        %1402 = vmatmul.mubr.f32.gmra.mxu0 %v417
        %v1403 = vpop.f32.mrf.mxu0
        %v1404 = vadd.f32 %v308, %v1403
        %v1405 = vpop.f32.mrf.mxu0
        %v1406 = vadd.f32 %v312, %v1405
        %1407 = vmatprep.mubr.f32.mxu0 0.0
        %1408 = vmatmul.mubr.f32.gmra.mxu0 %v420
        %v1409 = vpop.f32.mrf.mxu0
        %v1410 = vadd.f32 %v308, %v1409
        %v1411 = vpop.f32.mrf.mxu0
        %v1412 = vadd.f32 %v312, %v1411
        %1413 = vmatprep.mubr.f32.mxu0 0.0
        %1414 = vmatmul.mubr.f32.gmra.mxu0 %v423
        %v1415 = vpop.f32.mrf.mxu0
        %v1416 = vadd.f32 %v308, %v1415
        %v1417 = vpop.f32.mrf.mxu0
        %v1418 = vadd.f32 %v312, %v1417
        %1419 = vmatprep.mubr.f32.mxu0 0.0
        %1420 = vmatmul.mubr.f32.gmra.mxu0 %v426
        %v1421 = vpop.f32.mrf.mxu0
        %v1422 = vadd.f32 %v308, %v1421
        %v1423 = vpop.f32.mrf.mxu0
        %v1424 = vadd.f32 %v312, %v1423
        %1425 = vmatprep.mubr.f32.mxu0 0.0
        %1426 = vmatmul.mubr.f32.gmra.mxu0 %v429
        %v1427 = vpop.f32.mrf.mxu0
        %v1428 = vadd.f32 %v308, %v1427
        %v1429 = vpop.f32.mrf.mxu0
        %v1430 = vadd.f32 %v312, %v1429
        %1431 = vmatprep.mubr.f32.mxu0 0.0
        %1432 = vmatmul.mubr.f32.gmra.mxu0 %v432
        %v1433 = vpop.f32.mrf.mxu0
        %v1434 = vadd.f32 %v308, %v1433
        %v1435 = vpop.f32.mrf.mxu0
        %v1436 = vadd.f32 %v312, %v1435
        %1437 = vmatprep.mubr.f32.mxu0 0.0
        %1438 = vmatmul.mubr.f32.gmra.mxu0 %v435
        %v1439 = vpop.f32.mrf.mxu0
        %v1440 = vadd.f32 %v308, %v1439
        %v1441 = vpop.f32.mrf.mxu0
        %v1442 = vadd.f32 %v312, %v1441
        %1443 = vmatprep.mubr.f32.mxu0 0.0
        %1444 = vmatmul.mubr.f32.gmra.mxu0 %v438
        %v1445 = vpop.f32.mrf.mxu0
        %v1446 = vadd.f32 %v308, %v1445
        %v1447 = vpop.f32.mrf.mxu0
        %v1448 = vadd.f32 %v312, %v1447
        %1449 = vmatprep.mubr.f32.mxu0 0.0
        %1450 = vmatmul.mubr.f32.gmra.mxu0 %v441
        %v1451 = vpop.f32.mrf.mxu0
        %v1452 = vadd.f32 %v308, %v1451
        %v1453 = vpop.f32.mrf.mxu0
        %v1454 = vadd.f32 %v312, %v1453
        %1455 = vmatprep.mubr.f32.mxu0 0.0
        %1456 = vmatmul.mubr.f32.gmra.mxu0 %v444
        %v1457 = vpop.f32.mrf.mxu0
        %v1458 = vadd.f32 %v308, %v1457
        %v1459 = vpop.f32.mrf.mxu0
        %v1460 = vadd.f32 %v312, %v1459
        %1461 = vmatprep.mubr.f32.mxu0 0.0
        %1462 = vmatmul.mubr.f32.gmra.mxu0 %v447
        %v1463 = vpop.f32.mrf.mxu0
        %v1464 = vadd.f32 %v308, %v1463
        %v1465 = vpop.f32.mrf.mxu0
        %v1466 = vadd.f32 %v312, %v1465
        %1467 = vmatprep.mubr.f32.mxu0 0.0
        %1468 = vmatmul.mubr.f32.gmra.mxu0 %v450
        %v1469 = vpop.f32.mrf.mxu0
        %v1470 = vadd.f32 %v308, %v1469
        %v1471 = vpop.f32.mrf.mxu0
        %v1472 = vadd.f32 %v312, %v1471
        %1473 = vmatprep.mubr.f32.mxu0 0.0
        %1474 = vmatmul.mubr.f32.gmra.mxu0 %v453
        %v1475 = vpop.f32.mrf.mxu0
        %v1476 = vadd.f32 %v308, %v1475
        %v1477 = vpop.f32.mrf.mxu0
        %v1478 = vadd.f32 %v312, %v1477
        %1479 = vmatprep.mubr.f32.mxu0 0.0
        %1480 = vmatmul.mubr.f32.gmra.mxu0 %v456
        %v1481 = vpop.f32.mrf.mxu0
        %v1482 = vadd.f32 %v308, %v1481
        %v1483 = vpop.f32.mrf.mxu0
        %v1484 = vadd.f32 %v312, %v1483
        %1485 = vdwg.mxu0
        %1486 = vmatprep.subr.mxu0 0.0
        %1487 = vmatpush1.msra.mxu0 0.0
        %1488 = vmatprep.subr.mxu0 0.0
        %1489 = vmatpush1.msra.mxu0 0.0
        %1490 = vmatprep.subr.mxu0 0.0
        %1491 = vmatpush1.msra.mxu0 0.0
        %1492 = vmatprep.subr.mxu0 0.0
        %1493 = vmatpush1.msra.mxu0 0.0
        %1494 = vmatprep.subr.mxu0 0.0
        %1495 = vmatpush1.msra.mxu0 0.0
        %1496 = vmatprep.subr.mxu0 0.0
        %1497 = vmatpush1.msra.mxu0 0.0
        %1498 = vmatprep.subr.mxu0 0.0
        %1499 = vmatpush1.msra.mxu0 0.0
        %1500 = vmatprep.subr.mxu0 0.0
        %1501 = vmatpush1.msra.mxu0 0.0
        %1502 = vmatprep.subr.mxu0 0.0
        %1503 = vmatpush1.msra.mxu0 0.0
        %1504 = vmatprep.subr.mxu0 0.0
        %1505 = vmatpush1.msra.mxu0 0.0
        %1506 = vmatprep.subr.mxu0 0.0
        %1507 = vmatpush1.msra.mxu0 0.0
        %1508 = vmatprep.subr.mxu0 0.0
        %1509 = vmatpush1.msra.mxu0 0.0
        %1510 = vmatprep.subr.mxu0 0.0
        %1511 = vmatpush1.msra.mxu0 0.0
        %1512 = vmatprep.subr.mxu0 0.0
        %1513 = vmatpush1.msra.mxu0 0.0
        %1514 = vmatprep.subr.mxu0 0.0
        %1515 = vmatpush1.msra.mxu0 0.0
        %1516 = vmatprep.subr.mxu0 %v270
        %1517 = vmatpush1.msra.mxu0 %v269
        %1518 = vmatprep.subr.mxu0 0.0
        %1519 = vmatpush2.msra.mxu0 0.0
        %1520 = vmatprep.subr.mxu0 0.0
        %1521 = vmatpush2.msra.mxu0 0.0
        %1522 = vmatprep.subr.mxu0 0.0
        %1523 = vmatpush2.msra.mxu0 0.0
        %1524 = vmatprep.subr.mxu0 0.0
        %1525 = vmatpush2.msra.mxu0 0.0
        %1526 = vmatprep.subr.mxu0 0.0
        %1527 = vmatpush2.msra.mxu0 0.0
        %1528 = vmatprep.subr.mxu0 0.0
        %1529 = vmatpush2.msra.mxu0 0.0
        %1530 = vmatprep.subr.mxu0 0.0
        %1531 = vmatpush2.msra.mxu0 0.0
        %1532 = vmatprep.subr.mxu0 0.0
        %1533 = vmatpush2.msra.mxu0 0.0
        %1534 = vmatprep.subr.mxu0 0.0
        %1535 = vmatpush2.msra.mxu0 0.0
        %1536 = vmatprep.subr.mxu0 0.0
        %1537 = vmatpush2.msra.mxu0 0.0
        %1538 = vmatprep.subr.mxu0 0.0
        %1539 = vmatpush2.msra.mxu0 0.0
        %1540 = vmatprep.subr.mxu0 0.0
        %1541 = vmatpush2.msra.mxu0 0.0
        %1542 = vmatprep.subr.mxu0 0.0
        %1543 = vmatpush2.msra.mxu0 0.0
        %1544 = vmatprep.subr.mxu0 0.0
        %1545 = vmatpush2.msra.mxu0 0.0
        %1546 = vmatprep.subr.mxu0 0.0
        %1547 = vmatpush2.msra.mxu0 0.0
        %1548 = vmatprep.subr.mxu0 0.0
        %1549 = vmatpush2.msra.mxu0 0.0
        %1550 = vmatprep.mubr.f32.mxu0 0.0
        %1551 = vmatmul.mubr.f32.gmra.mxu0 %v363
        %v1552 = vpop.f32.mrf.mxu0
        %v1553 = vadd.f32 %v316, %v1552
        %v1554 = vpop.f32.mrf.mxu0
        %v1555 = vadd.f32 %v320, %v1554
        %1556 = vmatprep.mubr.f32.mxu0 0.0
        %1557 = vmatmul.mubr.f32.gmra.mxu0 %v366
        %v1558 = vpop.f32.mrf.mxu0
        %v1559 = vadd.f32 %v316, %v1558
        %v1560 = vpop.f32.mrf.mxu0
        %v1561 = vadd.f32 %v320, %v1560
        %1562 = vmatprep.mubr.f32.mxu0 0.0
        %1563 = vmatmul.mubr.f32.gmra.mxu0 %v369
        %v1564 = vpop.f32.mrf.mxu0
        %v1565 = vadd.f32 %v316, %v1564
        %v1566 = vpop.f32.mrf.mxu0
        %v1567 = vadd.f32 %v320, %v1566
        %1568 = vmatprep.mubr.f32.mxu0 0.0
        %1569 = vmatmul.mubr.f32.gmra.mxu0 %v372
        %v1570 = vpop.f32.mrf.mxu0
        %v1571 = vadd.f32 %v316, %v1570
        %v1572 = vpop.f32.mrf.mxu0
        %v1573 = vadd.f32 %v320, %v1572
        %1574 = vmatprep.mubr.f32.mxu0 0.0
        %1575 = vmatmul.mubr.f32.gmra.mxu0 %v375
        %v1576 = vpop.f32.mrf.mxu0
        %v1577 = vadd.f32 %v316, %v1576
        %v1578 = vpop.f32.mrf.mxu0
        %v1579 = vadd.f32 %v320, %v1578
        %1580 = vmatprep.mubr.f32.mxu0 0.0
        %1581 = vmatmul.mubr.f32.gmra.mxu0 %v378
        %v1582 = vpop.f32.mrf.mxu0
        %v1583 = vadd.f32 %v316, %v1582
        %v1584 = vpop.f32.mrf.mxu0
        %v1585 = vadd.f32 %v320, %v1584
        %1586 = vmatprep.mubr.f32.mxu0 0.0
        %1587 = vmatmul.mubr.f32.gmra.mxu0 %v381
        %v1588 = vpop.f32.mrf.mxu0
        %v1589 = vadd.f32 %v316, %v1588
        %v1590 = vpop.f32.mrf.mxu0
        %v1591 = vadd.f32 %v320, %v1590
        %1592 = vmatprep.mubr.f32.mxu0 0.0
        %1593 = vmatmul.mubr.f32.gmra.mxu0 %v384
        %v1594 = vpop.f32.mrf.mxu0
        %v1595 = vadd.f32 %v316, %v1594
        %v1596 = vpop.f32.mrf.mxu0
        %v1597 = vadd.f32 %v320, %v1596
        %1598 = vmatprep.mubr.f32.mxu0 0.0
        %1599 = vmatmul.mubr.f32.gmra.mxu0 %v387
        %v1600 = vpop.f32.mrf.mxu0
        %v1601 = vadd.f32 %v316, %v1600
        %v1602 = vpop.f32.mrf.mxu0
        %v1603 = vadd.f32 %v320, %v1602
        %1604 = vmatprep.mubr.f32.mxu0 0.0
        %1605 = vmatmul.mubr.f32.gmra.mxu0 %v390
        %v1606 = vpop.f32.mrf.mxu0
        %v1607 = vadd.f32 %v316, %v1606
        %v1608 = vpop.f32.mrf.mxu0
        %v1609 = vadd.f32 %v320, %v1608
        %1610 = vmatprep.mubr.f32.mxu0 0.0
        %1611 = vmatmul.mubr.f32.gmra.mxu0 %v393
        %v1612 = vpop.f32.mrf.mxu0
        %v1613 = vadd.f32 %v316, %v1612
        %v1614 = vpop.f32.mrf.mxu0
        %v1615 = vadd.f32 %v320, %v1614
        %1616 = vmatprep.mubr.f32.mxu0 0.0
        %1617 = vmatmul.mubr.f32.gmra.mxu0 %v396
        %v1618 = vpop.f32.mrf.mxu0
        %v1619 = vadd.f32 %v316, %v1618
        %v1620 = vpop.f32.mrf.mxu0
        %v1621 = vadd.f32 %v320, %v1620
        %1622 = vmatprep.mubr.f32.mxu0 0.0
        %1623 = vmatmul.mubr.f32.gmra.mxu0 %v399
        %v1624 = vpop.f32.mrf.mxu0
        %v1625 = vadd.f32 %v316, %v1624
        %v1626 = vpop.f32.mrf.mxu0
        %v1627 = vadd.f32 %v320, %v1626
        %1628 = vmatprep.mubr.f32.mxu0 0.0
        %1629 = vmatmul.mubr.f32.gmra.mxu0 %v402
        %v1630 = vpop.f32.mrf.mxu0
        %v1631 = vadd.f32 %v316, %v1630
        %v1632 = vpop.f32.mrf.mxu0
        %v1633 = vadd.f32 %v320, %v1632
        %1634 = vmatprep.mubr.f32.mxu0 0.0
        %1635 = vmatmul.mubr.f32.gmra.mxu0 %v405
        %v1636 = vpop.f32.mrf.mxu0
        %v1637 = vadd.f32 %v316, %v1636
        %v1638 = vpop.f32.mrf.mxu0
        %v1639 = vadd.f32 %v320, %v1638
        %1640 = vmatprep.mubr.f32.mxu0 0.0
        %1641 = vmatmul.mubr.f32.gmra.mxu0 %v408
        %v1642 = vpop.f32.mrf.mxu0
        %v1643 = vadd.f32 %v316, %v1642
        %v1644 = vpop.f32.mrf.mxu0
        %v1645 = vadd.f32 %v320, %v1644
        %1646 = vmatprep.mubr.f32.mxu0 0.0
        %1647 = vmatmul.mubr.f32.gmra.mxu0 %v411
        %v1648 = vpop.f32.mrf.mxu0
        %v1649 = vadd.f32 %v316, %v1648
        %v1650 = vpop.f32.mrf.mxu0
        %v1651 = vadd.f32 %v320, %v1650
        %1652 = vmatprep.mubr.f32.mxu0 0.0
        %1653 = vmatmul.mubr.f32.gmra.mxu0 %v414
        %v1654 = vpop.f32.mrf.mxu0
        %v1655 = vadd.f32 %v316, %v1654
        %v1656 = vpop.f32.mrf.mxu0
        %v1657 = vadd.f32 %v320, %v1656
        %1658 = vmatprep.mubr.f32.mxu0 0.0
        %1659 = vmatmul.mubr.f32.gmra.mxu0 %v417
        %v1660 = vpop.f32.mrf.mxu0
        %v1661 = vadd.f32 %v316, %v1660
        %v1662 = vpop.f32.mrf.mxu0
        %v1663 = vadd.f32 %v320, %v1662
        %1664 = vmatprep.mubr.f32.mxu0 0.0
        %1665 = vmatmul.mubr.f32.gmra.mxu0 %v420
        %v1666 = vpop.f32.mrf.mxu0
        %v1667 = vadd.f32 %v316, %v1666
        %v1668 = vpop.f32.mrf.mxu0
        %v1669 = vadd.f32 %v320, %v1668
        %1670 = vmatprep.mubr.f32.mxu0 0.0
        %1671 = vmatmul.mubr.f32.gmra.mxu0 %v423
        %v1672 = vpop.f32.mrf.mxu0
        %v1673 = vadd.f32 %v316, %v1672
        %v1674 = vpop.f32.mrf.mxu0
        %v1675 = vadd.f32 %v320, %v1674
        %1676 = vmatprep.mubr.f32.mxu0 0.0
        %1677 = vmatmul.mubr.f32.gmra.mxu0 %v426
        %v1678 = vpop.f32.mrf.mxu0
        %v1679 = vadd.f32 %v316, %v1678
        %v1680 = vpop.f32.mrf.mxu0
        %v1681 = vadd.f32 %v320, %v1680
        %1682 = vmatprep.mubr.f32.mxu0 0.0
        %1683 = vmatmul.mubr.f32.gmra.mxu0 %v429
        %v1684 = vpop.f32.mrf.mxu0
        %v1685 = vadd.f32 %v316, %v1684
        %v1686 = vpop.f32.mrf.mxu0
        %v1687 = vadd.f32 %v320, %v1686
        %1688 = vmatprep.mubr.f32.mxu0 0.0
        %1689 = vmatmul.mubr.f32.gmra.mxu0 %v432
        %v1690 = vpop.f32.mrf.mxu0
        %v1691 = vadd.f32 %v316, %v1690
        %v1692 = vpop.f32.mrf.mxu0
        %v1693 = vadd.f32 %v320, %v1692
        %1694 = vmatprep.mubr.f32.mxu0 0.0
        %1695 = vmatmul.mubr.f32.gmra.mxu0 %v435
        %v1696 = vpop.f32.mrf.mxu0
        %v1697 = vadd.f32 %v316, %v1696
        %v1698 = vpop.f32.mrf.mxu0
        %v1699 = vadd.f32 %v320, %v1698
        %1700 = vmatprep.mubr.f32.mxu0 0.0
        %1701 = vmatmul.mubr.f32.gmra.mxu0 %v438
        %v1702 = vpop.f32.mrf.mxu0
        %v1703 = vadd.f32 %v316, %v1702
        %v1704 = vpop.f32.mrf.mxu0
        %v1705 = vadd.f32 %v320, %v1704
        %1706 = vmatprep.mubr.f32.mxu0 0.0
        %1707 = vmatmul.mubr.f32.gmra.mxu0 %v441
        %v1708 = vpop.f32.mrf.mxu0
        %v1709 = vadd.f32 %v316, %v1708
        %v1710 = vpop.f32.mrf.mxu0
        %v1711 = vadd.f32 %v320, %v1710
        %1712 = vmatprep.mubr.f32.mxu0 0.0
        %1713 = vmatmul.mubr.f32.gmra.mxu0 %v444
        %v1714 = vpop.f32.mrf.mxu0
        %v1715 = vadd.f32 %v316, %v1714
        %v1716 = vpop.f32.mrf.mxu0
        %v1717 = vadd.f32 %v320, %v1716
        %1718 = vmatprep.mubr.f32.mxu0 0.0
        %1719 = vmatmul.mubr.f32.gmra.mxu0 %v447
        %v1720 = vpop.f32.mrf.mxu0
        %v1721 = vadd.f32 %v316, %v1720
        %v1722 = vpop.f32.mrf.mxu0
        %v1723 = vadd.f32 %v320, %v1722
        %1724 = vmatprep.mubr.f32.mxu0 0.0
        %1725 = vmatmul.mubr.f32.gmra.mxu0 %v450
        %v1726 = vpop.f32.mrf.mxu0
        %v1727 = vadd.f32 %v316, %v1726
        %v1728 = vpop.f32.mrf.mxu0
        %v1729 = vadd.f32 %v320, %v1728
        %1730 = vmatprep.mubr.f32.mxu0 0.0
        %1731 = vmatmul.mubr.f32.gmra.mxu0 %v453
        %v1732 = vpop.f32.mrf.mxu0
        %v1733 = vadd.f32 %v316, %v1732
        %v1734 = vpop.f32.mrf.mxu0
        %v1735 = vadd.f32 %v320, %v1734
        %1736 = vmatprep.mubr.f32.mxu0 0.0
        %1737 = vmatmul.mubr.f32.gmra.mxu0 %v456
        %v1738 = vpop.f32.mrf.mxu0
        %v1739 = vadd.f32 %v316, %v1738
        %v1740 = vpop.f32.mrf.mxu0
        %v1741 = vadd.f32 %v320, %v1740
        %1742 = vdwg.mxu0
        %1743 = vmatprep.subr.mxu0 0.0
        %1744 = vmatpush1.msra.mxu0 0.0
        %1745 = vmatprep.subr.mxu0 0.0
        %1746 = vmatpush1.msra.mxu0 0.0
        %1747 = vmatprep.subr.mxu0 0.0
        %1748 = vmatpush1.msra.mxu0 0.0
        %1749 = vmatprep.subr.mxu0 0.0
        %1750 = vmatpush1.msra.mxu0 0.0
        %1751 = vmatprep.subr.mxu0 0.0
        %1752 = vmatpush1.msra.mxu0 0.0
        %1753 = vmatprep.subr.mxu0 0.0
        %1754 = vmatpush1.msra.mxu0 0.0
        %1755 = vmatprep.subr.mxu0 0.0
        %1756 = vmatpush1.msra.mxu0 0.0
        %1757 = vmatprep.subr.mxu0 0.0
        %1758 = vmatpush1.msra.mxu0 0.0
        %1759 = vmatprep.subr.mxu0 0.0
        %1760 = vmatpush1.msra.mxu0 0.0
        %1761 = vmatprep.subr.mxu0 0.0
        %1762 = vmatpush1.msra.mxu0 0.0
        %1763 = vmatprep.subr.mxu0 0.0
        %1764 = vmatpush1.msra.mxu0 0.0
        %1765 = vmatprep.subr.mxu0 0.0
        %1766 = vmatpush1.msra.mxu0 0.0
        %1767 = vmatprep.subr.mxu0 0.0
        %1768 = vmatpush1.msra.mxu0 0.0
        %1769 = vmatprep.subr.mxu0 0.0
        %1770 = vmatpush1.msra.mxu0 0.0
        %1771 = vmatprep.subr.mxu0 0.0
        %1772 = vmatpush1.msra.mxu0 0.0
        %1773 = vmatprep.subr.mxu0 %v272
        %1774 = vmatpush1.msra.mxu0 %v271
        %1775 = vmatprep.subr.mxu0 0.0
        %1776 = vmatpush2.msra.mxu0 0.0
        %1777 = vmatprep.subr.mxu0 0.0
        %1778 = vmatpush2.msra.mxu0 0.0
        %1779 = vmatprep.subr.mxu0 0.0
        %1780 = vmatpush2.msra.mxu0 0.0
        %1781 = vmatprep.subr.mxu0 0.0
        %1782 = vmatpush2.msra.mxu0 0.0
        %1783 = vmatprep.subr.mxu0 0.0
        %1784 = vmatpush2.msra.mxu0 0.0
        %1785 = vmatprep.subr.mxu0 0.0
        %1786 = vmatpush2.msra.mxu0 0.0
        %1787 = vmatprep.subr.mxu0 0.0
        %1788 = vmatpush2.msra.mxu0 0.0
        %1789 = vmatprep.subr.mxu0 0.0
        %1790 = vmatpush2.msra.mxu0 0.0
        %1791 = vmatprep.subr.mxu0 0.0
        %1792 = vmatpush2.msra.mxu0 0.0
        %1793 = vmatprep.subr.mxu0 0.0
        %1794 = vmatpush2.msra.mxu0 0.0
        %1795 = vmatprep.subr.mxu0 0.0
        %1796 = vmatpush2.msra.mxu0 0.0
        %1797 = vmatprep.subr.mxu0 0.0
        %1798 = vmatpush2.msra.mxu0 0.0
        %1799 = vmatprep.subr.mxu0 0.0
        %1800 = vmatpush2.msra.mxu0 0.0
        %1801 = vmatprep.subr.mxu0 0.0
        %1802 = vmatpush2.msra.mxu0 0.0
        %1803 = vmatprep.subr.mxu0 0.0
        %1804 = vmatpush2.msra.mxu0 0.0
        %1805 = vmatprep.subr.mxu0 0.0
        %1806 = vmatpush2.msra.mxu0 0.0
        %1807 = vmatprep.mubr.f32.mxu0 0.0
        %1808 = vmatmul.mubr.f32.gmra.mxu0 %v363
        %v1809 = vpop.f32.mrf.mxu0
        %v1810 = vadd.f32 %v324, %v1809
        %v1811 = vpop.f32.mrf.mxu0
        %v1812 = vadd.f32 %v328, %v1811
        %1813 = vmatprep.mubr.f32.mxu0 0.0
        %1814 = vmatmul.mubr.f32.gmra.mxu0 %v366
        %v1815 = vpop.f32.mrf.mxu0
        %v1816 = vadd.f32 %v324, %v1815
        %v1817 = vpop.f32.mrf.mxu0
        %v1818 = vadd.f32 %v328, %v1817
        %1819 = vmatprep.mubr.f32.mxu0 0.0
        %1820 = vmatmul.mubr.f32.gmra.mxu0 %v369
        %v1821 = vpop.f32.mrf.mxu0
        %v1822 = vadd.f32 %v324, %v1821
        %v1823 = vpop.f32.mrf.mxu0
        %v1824 = vadd.f32 %v328, %v1823
        %1825 = vmatprep.mubr.f32.mxu0 0.0
        %1826 = vmatmul.mubr.f32.gmra.mxu0 %v372
        %v1827 = vpop.f32.mrf.mxu0
        %v1828 = vadd.f32 %v324, %v1827
        %v1829 = vpop.f32.mrf.mxu0
        %v1830 = vadd.f32 %v328, %v1829
        %1831 = vmatprep.mubr.f32.mxu0 0.0
        %1832 = vmatmul.mubr.f32.gmra.mxu0 %v375
        %v1833 = vpop.f32.mrf.mxu0
        %v1834 = vadd.f32 %v324, %v1833
        %v1835 = vpop.f32.mrf.mxu0
        %v1836 = vadd.f32 %v328, %v1835
        %1837 = vmatprep.mubr.f32.mxu0 0.0
        %1838 = vmatmul.mubr.f32.gmra.mxu0 %v378
        %v1839 = vpop.f32.mrf.mxu0
        %v1840 = vadd.f32 %v324, %v1839
        %v1841 = vpop.f32.mrf.mxu0
        %v1842 = vadd.f32 %v328, %v1841
        %1843 = vmatprep.mubr.f32.mxu0 0.0
        %1844 = vmatmul.mubr.f32.gmra.mxu0 %v381
        %v1845 = vpop.f32.mrf.mxu0
        %v1846 = vadd.f32 %v324, %v1845
        %v1847 = vpop.f32.mrf.mxu0
        %v1848 = vadd.f32 %v328, %v1847
        %1849 = vmatprep.mubr.f32.mxu0 0.0
        %1850 = vmatmul.mubr.f32.gmra.mxu0 %v384
        %v1851 = vpop.f32.mrf.mxu0
        %v1852 = vadd.f32 %v324, %v1851
        %v1853 = vpop.f32.mrf.mxu0
        %v1854 = vadd.f32 %v328, %v1853
        %1855 = vmatprep.mubr.f32.mxu0 0.0
        %1856 = vmatmul.mubr.f32.gmra.mxu0 %v387
        %v1857 = vpop.f32.mrf.mxu0
        %v1858 = vadd.f32 %v324, %v1857
        %v1859 = vpop.f32.mrf.mxu0
        %v1860 = vadd.f32 %v328, %v1859
        %1861 = vmatprep.mubr.f32.mxu0 0.0
        %1862 = vmatmul.mubr.f32.gmra.mxu0 %v390
        %v1863 = vpop.f32.mrf.mxu0
        %v1864 = vadd.f32 %v324, %v1863
        %v1865 = vpop.f32.mrf.mxu0
        %v1866 = vadd.f32 %v328, %v1865
        %1867 = vmatprep.mubr.f32.mxu0 0.0
        %1868 = vmatmul.mubr.f32.gmra.mxu0 %v393
        %v1869 = vpop.f32.mrf.mxu0
        %v1870 = vadd.f32 %v324, %v1869
        %v1871 = vpop.f32.mrf.mxu0
        %v1872 = vadd.f32 %v328, %v1871
        %1873 = vmatprep.mubr.f32.mxu0 0.0
        %1874 = vmatmul.mubr.f32.gmra.mxu0 %v396
        %v1875 = vpop.f32.mrf.mxu0
        %v1876 = vadd.f32 %v324, %v1875
        %v1877 = vpop.f32.mrf.mxu0
        %v1878 = vadd.f32 %v328, %v1877
        %1879 = vmatprep.mubr.f32.mxu0 0.0
        %1880 = vmatmul.mubr.f32.gmra.mxu0 %v399
        %v1881 = vpop.f32.mrf.mxu0
        %v1882 = vadd.f32 %v324, %v1881
        %v1883 = vpop.f32.mrf.mxu0
        %v1884 = vadd.f32 %v328, %v1883
        %1885 = vmatprep.mubr.f32.mxu0 0.0
        %1886 = vmatmul.mubr.f32.gmra.mxu0 %v402
        %v1887 = vpop.f32.mrf.mxu0
        %v1888 = vadd.f32 %v324, %v1887
        %v1889 = vpop.f32.mrf.mxu0
        %v1890 = vadd.f32 %v328, %v1889
        %1891 = vmatprep.mubr.f32.mxu0 0.0
        %1892 = vmatmul.mubr.f32.gmra.mxu0 %v405
        %v1893 = vpop.f32.mrf.mxu0
        %v1894 = vadd.f32 %v324, %v1893
        %v1895 = vpop.f32.mrf.mxu0
        %v1896 = vadd.f32 %v328, %v1895
        %1897 = vmatprep.mubr.f32.mxu0 0.0
        %1898 = vmatmul.mubr.f32.gmra.mxu0 %v408
        %v1899 = vpop.f32.mrf.mxu0
        %v1900 = vadd.f32 %v324, %v1899
        %v1901 = vpop.f32.mrf.mxu0
        %v1902 = vadd.f32 %v328, %v1901
        %1903 = vmatprep.mubr.f32.mxu0 0.0
        %1904 = vmatmul.mubr.f32.gmra.mxu0 %v411
        %v1905 = vpop.f32.mrf.mxu0
        %v1906 = vadd.f32 %v324, %v1905
        %v1907 = vpop.f32.mrf.mxu0
        %v1908 = vadd.f32 %v328, %v1907
        %1909 = vmatprep.mubr.f32.mxu0 0.0
        %1910 = vmatmul.mubr.f32.gmra.mxu0 %v414
        %v1911 = vpop.f32.mrf.mxu0
        %v1912 = vadd.f32 %v324, %v1911
        %v1913 = vpop.f32.mrf.mxu0
        %v1914 = vadd.f32 %v328, %v1913
        %1915 = vmatprep.mubr.f32.mxu0 0.0
        %1916 = vmatmul.mubr.f32.gmra.mxu0 %v417
        %v1917 = vpop.f32.mrf.mxu0
        %v1918 = vadd.f32 %v324, %v1917
        %v1919 = vpop.f32.mrf.mxu0
        %v1920 = vadd.f32 %v328, %v1919
        %1921 = vmatprep.mubr.f32.mxu0 0.0
        %1922 = vmatmul.mubr.f32.gmra.mxu0 %v420
        %v1923 = vpop.f32.mrf.mxu0
        %v1924 = vadd.f32 %v324, %v1923
        %v1925 = vpop.f32.mrf.mxu0
        %v1926 = vadd.f32 %v328, %v1925
        %1927 = vmatprep.mubr.f32.mxu0 0.0
        %1928 = vmatmul.mubr.f32.gmra.mxu0 %v423
        %v1929 = vpop.f32.mrf.mxu0
        %v1930 = vadd.f32 %v324, %v1929
        %v1931 = vpop.f32.mrf.mxu0
        %v1932 = vadd.f32 %v328, %v1931
        %1933 = vmatprep.mubr.f32.mxu0 0.0
        %1934 = vmatmul.mubr.f32.gmra.mxu0 %v426
        %v1935 = vpop.f32.mrf.mxu0
        %v1936 = vadd.f32 %v324, %v1935
        %v1937 = vpop.f32.mrf.mxu0
        %v1938 = vadd.f32 %v328, %v1937
        %1939 = vmatprep.mubr.f32.mxu0 0.0
        %1940 = vmatmul.mubr.f32.gmra.mxu0 %v429
        %v1941 = vpop.f32.mrf.mxu0
        %v1942 = vadd.f32 %v324, %v1941
        %v1943 = vpop.f32.mrf.mxu0
        %v1944 = vadd.f32 %v328, %v1943
        %1945 = vmatprep.mubr.f32.mxu0 0.0
        %1946 = vmatmul.mubr.f32.gmra.mxu0 %v432
        %v1947 = vpop.f32.mrf.mxu0
        %v1948 = vadd.f32 %v324, %v1947
        %v1949 = vpop.f32.mrf.mxu0
        %v1950 = vadd.f32 %v328, %v1949
        %1951 = vmatprep.mubr.f32.mxu0 0.0
        %1952 = vmatmul.mubr.f32.gmra.mxu0 %v435
        %v1953 = vpop.f32.mrf.mxu0
        %v1954 = vadd.f32 %v324, %v1953
        %v1955 = vpop.f32.mrf.mxu0
        %v1956 = vadd.f32 %v328, %v1955
        %1957 = vmatprep.mubr.f32.mxu0 0.0
        %1958 = vmatmul.mubr.f32.gmra.mxu0 %v438
        %v1959 = vpop.f32.mrf.mxu0
        %v1960 = vadd.f32 %v324, %v1959
        %v1961 = vpop.f32.mrf.mxu0
        %v1962 = vadd.f32 %v328, %v1961
        %1963 = vmatprep.mubr.f32.mxu0 0.0
        %1964 = vmatmul.mubr.f32.gmra.mxu0 %v441
        %v1965 = vpop.f32.mrf.mxu0
        %v1966 = vadd.f32 %v324, %v1965
        %v1967 = vpop.f32.mrf.mxu0
        %v1968 = vadd.f32 %v328, %v1967
        %1969 = vmatprep.mubr.f32.mxu0 0.0
        %1970 = vmatmul.mubr.f32.gmra.mxu0 %v444
        %v1971 = vpop.f32.mrf.mxu0
        %v1972 = vadd.f32 %v324, %v1971
        %v1973 = vpop.f32.mrf.mxu0
        %v1974 = vadd.f32 %v328, %v1973
        %1975 = vmatprep.mubr.f32.mxu0 0.0
        %1976 = vmatmul.mubr.f32.gmra.mxu0 %v447
        %v1977 = vpop.f32.mrf.mxu0
        %v1978 = vadd.f32 %v324, %v1977
        %v1979 = vpop.f32.mrf.mxu0
        %v1980 = vadd.f32 %v328, %v1979
        %1981 = vmatprep.mubr.f32.mxu0 0.0
        %1982 = vmatmul.mubr.f32.gmra.mxu0 %v450
        %v1983 = vpop.f32.mrf.mxu0
        %v1984 = vadd.f32 %v324, %v1983
        %v1985 = vpop.f32.mrf.mxu0
        %v1986 = vadd.f32 %v328, %v1985
        %1987 = vmatprep.mubr.f32.mxu0 0.0
        %1988 = vmatmul.mubr.f32.gmra.mxu0 %v453
        %v1989 = vpop.f32.mrf.mxu0
        %v1990 = vadd.f32 %v324, %v1989
        %v1991 = vpop.f32.mrf.mxu0
        %v1992 = vadd.f32 %v328, %v1991
        %1993 = vmatprep.mubr.f32.mxu0 0.0
        %1994 = vmatmul.mubr.f32.gmra.mxu0 %v456
        %v1995 = vpop.f32.mrf.mxu0
        %v1996 = vadd.f32 %v324, %v1995
        %v1997 = vpop.f32.mrf.mxu0
        %v1998 = vadd.f32 %v328, %v1997
        %1999 = vdwg.mxu0
        %2000 = vmatprep.subr.mxu0 0.0
        %2001 = vmatpush1.msra.mxu0 0.0
        %2002 = vmatprep.subr.mxu0 0.0
        %2003 = vmatpush1.msra.mxu0 0.0
        %2004 = vmatprep.subr.mxu0 0.0
        %2005 = vmatpush1.msra.mxu0 0.0
        %2006 = vmatprep.subr.mxu0 0.0
        %2007 = vmatpush1.msra.mxu0 0.0
        %2008 = vmatprep.subr.mxu0 0.0
        %2009 = vmatpush1.msra.mxu0 0.0
        %2010 = vmatprep.subr.mxu0 0.0
        %2011 = vmatpush1.msra.mxu0 0.0
        %2012 = vmatprep.subr.mxu0 0.0
        %2013 = vmatpush1.msra.mxu0 0.0
        %2014 = vmatprep.subr.mxu0 0.0
        %2015 = vmatpush1.msra.mxu0 0.0
        %2016 = vmatprep.subr.mxu0 0.0
        %2017 = vmatpush1.msra.mxu0 0.0
        %2018 = vmatprep.subr.mxu0 0.0
        %2019 = vmatpush1.msra.mxu0 0.0
        %2020 = vmatprep.subr.mxu0 0.0
        %2021 = vmatpush1.msra.mxu0 0.0
        %2022 = vmatprep.subr.mxu0 0.0
        %2023 = vmatpush1.msra.mxu0 0.0
        %2024 = vmatprep.subr.mxu0 0.0
        %2025 = vmatpush1.msra.mxu0 0.0
        %2026 = vmatprep.subr.mxu0 0.0
        %2027 = vmatpush1.msra.mxu0 0.0
        %2028 = vmatprep.subr.mxu0 0.0
        %2029 = vmatpush1.msra.mxu0 0.0
        %2030 = vmatprep.subr.mxu0 %v274
        %2031 = vmatpush1.msra.mxu0 %v273
        %2032 = vmatprep.subr.mxu0 0.0
        %2033 = vmatpush2.msra.mxu0 0.0
        %2034 = vmatprep.subr.mxu0 0.0
        %2035 = vmatpush2.msra.mxu0 0.0
        %2036 = vmatprep.subr.mxu0 0.0
        %2037 = vmatpush2.msra.mxu0 0.0
        %2038 = vmatprep.subr.mxu0 0.0
        %2039 = vmatpush2.msra.mxu0 0.0
        %2040 = vmatprep.subr.mxu0 0.0
        %2041 = vmatpush2.msra.mxu0 0.0
        %2042 = vmatprep.subr.mxu0 0.0
        %2043 = vmatpush2.msra.mxu0 0.0
        %2044 = vmatprep.subr.mxu0 0.0
        %2045 = vmatpush2.msra.mxu0 0.0
        %2046 = vmatprep.subr.mxu0 0.0
        %2047 = vmatpush2.msra.mxu0 0.0
        %2048 = vmatprep.subr.mxu0 0.0
        %2049 = vmatpush2.msra.mxu0 0.0
        %2050 = vmatprep.subr.mxu0 0.0
        %2051 = vmatpush2.msra.mxu0 0.0
        %2052 = vmatprep.subr.mxu0 0.0
        %2053 = vmatpush2.msra.mxu0 0.0
        %2054 = vmatprep.subr.mxu0 0.0
        %2055 = vmatpush2.msra.mxu0 0.0
        %2056 = vmatprep.subr.mxu0 0.0
        %2057 = vmatpush2.msra.mxu0 0.0
        %2058 = vmatprep.subr.mxu0 0.0
        %2059 = vmatpush2.msra.mxu0 0.0
        %2060 = vmatprep.subr.mxu0 0.0
        %2061 = vmatpush2.msra.mxu0 0.0
        %2062 = vmatprep.subr.mxu0 0.0
        %2063 = vmatpush2.msra.mxu0 0.0
        %2064 = vmatprep.mubr.f32.mxu0 0.0
        %2065 = vmatmul.mubr.f32.gmra.mxu0 %v363
        %v2066 = vpop.f32.mrf.mxu0
        %v2067 = vadd.f32 %v332, %v2066
        %v2068 = vpop.f32.mrf.mxu0
        %v2069 = vadd.f32 %v336, %v2068
        %2070 = vmatprep.mubr.f32.mxu0 0.0
        %2071 = vmatmul.mubr.f32.gmra.mxu0 %v366
        %v2072 = vpop.f32.mrf.mxu0
        %v2073 = vadd.f32 %v332, %v2072
        %v2074 = vpop.f32.mrf.mxu0
        %v2075 = vadd.f32 %v336, %v2074
        %2076 = vmatprep.mubr.f32.mxu0 0.0
        %2077 = vmatmul.mubr.f32.gmra.mxu0 %v369
        %v2078 = vpop.f32.mrf.mxu0
        %v2079 = vadd.f32 %v332, %v2078
        %v2080 = vpop.f32.mrf.mxu0
        %v2081 = vadd.f32 %v336, %v2080
        %2082 = vmatprep.mubr.f32.mxu0 0.0
        %2083 = vmatmul.mubr.f32.gmra.mxu0 %v372
        %v2084 = vpop.f32.mrf.mxu0
        %v2085 = vadd.f32 %v332, %v2084
        %v2086 = vpop.f32.mrf.mxu0
        %v2087 = vadd.f32 %v336, %v2086
        %2088 = vmatprep.mubr.f32.mxu0 0.0
        %2089 = vmatmul.mubr.f32.gmra.mxu0 %v375
        %v2090 = vpop.f32.mrf.mxu0
        %v2091 = vadd.f32 %v332, %v2090
        %v2092 = vpop.f32.mrf.mxu0
        %v2093 = vadd.f32 %v336, %v2092
        %2094 = vmatprep.mubr.f32.mxu0 0.0
        %2095 = vmatmul.mubr.f32.gmra.mxu0 %v378
        %v2096 = vpop.f32.mrf.mxu0
        %v2097 = vadd.f32 %v332, %v2096
        %v2098 = vpop.f32.mrf.mxu0
        %v2099 = vadd.f32 %v336, %v2098
        %2100 = vmatprep.mubr.f32.mxu0 0.0
        %2101 = vmatmul.mubr.f32.gmra.mxu0 %v381
        %v2102 = vpop.f32.mrf.mxu0
        %v2103 = vadd.f32 %v332, %v2102
        %v2104 = vpop.f32.mrf.mxu0
        %v2105 = vadd.f32 %v336, %v2104
        %2106 = vmatprep.mubr.f32.mxu0 0.0
        %2107 = vmatmul.mubr.f32.gmra.mxu0 %v384
        %v2108 = vpop.f32.mrf.mxu0
        %v2109 = vadd.f32 %v332, %v2108
        %v2110 = vpop.f32.mrf.mxu0
        %v2111 = vadd.f32 %v336, %v2110
        %2112 = vmatprep.mubr.f32.mxu0 0.0
        %2113 = vmatmul.mubr.f32.gmra.mxu0 %v387
        %v2114 = vpop.f32.mrf.mxu0
        %v2115 = vadd.f32 %v332, %v2114
        %v2116 = vpop.f32.mrf.mxu0
        %v2117 = vadd.f32 %v336, %v2116
        %2118 = vmatprep.mubr.f32.mxu0 0.0
        %2119 = vmatmul.mubr.f32.gmra.mxu0 %v390
        %v2120 = vpop.f32.mrf.mxu0
        %v2121 = vadd.f32 %v332, %v2120
        %v2122 = vpop.f32.mrf.mxu0
        %v2123 = vadd.f32 %v336, %v2122
        %2124 = vmatprep.mubr.f32.mxu0 0.0
        %2125 = vmatmul.mubr.f32.gmra.mxu0 %v393
        %v2126 = vpop.f32.mrf.mxu0
        %v2127 = vadd.f32 %v332, %v2126
        %v2128 = vpop.f32.mrf.mxu0
        %v2129 = vadd.f32 %v336, %v2128
        %2130 = vmatprep.mubr.f32.mxu0 0.0
        %2131 = vmatmul.mubr.f32.gmra.mxu0 %v396
        %v2132 = vpop.f32.mrf.mxu0
        %v2133 = vadd.f32 %v332, %v2132
        %v2134 = vpop.f32.mrf.mxu0
        %v2135 = vadd.f32 %v336, %v2134
        %2136 = vmatprep.mubr.f32.mxu0 0.0
        %2137 = vmatmul.mubr.f32.gmra.mxu0 %v399
        %v2138 = vpop.f32.mrf.mxu0
        %v2139 = vadd.f32 %v332, %v2138
        %v2140 = vpop.f32.mrf.mxu0
        %v2141 = vadd.f32 %v336, %v2140
        %2142 = vmatprep.mubr.f32.mxu0 0.0
        %2143 = vmatmul.mubr.f32.gmra.mxu0 %v402
        %v2144 = vpop.f32.mrf.mxu0
        %v2145 = vadd.f32 %v332, %v2144
        %v2146 = vpop.f32.mrf.mxu0
        %v2147 = vadd.f32 %v336, %v2146
        %2148 = vmatprep.mubr.f32.mxu0 0.0
        %2149 = vmatmul.mubr.f32.gmra.mxu0 %v405
        %v2150 = vpop.f32.mrf.mxu0
        %v2151 = vadd.f32 %v332, %v2150
        %v2152 = vpop.f32.mrf.mxu0
        %v2153 = vadd.f32 %v336, %v2152
        %2154 = vmatprep.mubr.f32.mxu0 0.0
        %2155 = vmatmul.mubr.f32.gmra.mxu0 %v408
        %v2156 = vpop.f32.mrf.mxu0
        %v2157 = vadd.f32 %v332, %v2156
        %v2158 = vpop.f32.mrf.mxu0
        %v2159 = vadd.f32 %v336, %v2158
        %2160 = vmatprep.mubr.f32.mxu0 0.0
        %2161 = vmatmul.mubr.f32.gmra.mxu0 %v411
        %v2162 = vpop.f32.mrf.mxu0
        %v2163 = vadd.f32 %v332, %v2162
        %v2164 = vpop.f32.mrf.mxu0
        %v2165 = vadd.f32 %v336, %v2164
        %2166 = vmatprep.mubr.f32.mxu0 0.0
        %2167 = vmatmul.mubr.f32.gmra.mxu0 %v414
        %v2168 = vpop.f32.mrf.mxu0
        %v2169 = vadd.f32 %v332, %v2168
        %v2170 = vpop.f32.mrf.mxu0
        %v2171 = vadd.f32 %v336, %v2170
        %2172 = vmatprep.mubr.f32.mxu0 0.0
        %2173 = vmatmul.mubr.f32.gmra.mxu0 %v417
        %v2174 = vpop.f32.mrf.mxu0
        %v2175 = vadd.f32 %v332, %v2174
        %v2176 = vpop.f32.mrf.mxu0
        %v2177 = vadd.f32 %v336, %v2176
        %2178 = vmatprep.mubr.f32.mxu0 0.0
        %2179 = vmatmul.mubr.f32.gmra.mxu0 %v420
        %v2180 = vpop.f32.mrf.mxu0
        %v2181 = vadd.f32 %v332, %v2180
        %v2182 = vpop.f32.mrf.mxu0
        %v2183 = vadd.f32 %v336, %v2182
        %2184 = vmatprep.mubr.f32.mxu0 0.0
        %2185 = vmatmul.mubr.f32.gmra.mxu0 %v423
        %v2186 = vpop.f32.mrf.mxu0
        %v2187 = vadd.f32 %v332, %v2186
        %v2188 = vpop.f32.mrf.mxu0
        %v2189 = vadd.f32 %v336, %v2188
        %2190 = vmatprep.mubr.f32.mxu0 0.0
        %2191 = vmatmul.mubr.f32.gmra.mxu0 %v426
        %v2192 = vpop.f32.mrf.mxu0
        %v2193 = vadd.f32 %v332, %v2192
        %v2194 = vpop.f32.mrf.mxu0
        %v2195 = vadd.f32 %v336, %v2194
        %2196 = vmatprep.mubr.f32.mxu0 0.0
        %2197 = vmatmul.mubr.f32.gmra.mxu0 %v429
        %v2198 = vpop.f32.mrf.mxu0
        %v2199 = vadd.f32 %v332, %v2198
        %v2200 = vpop.f32.mrf.mxu0
        %v2201 = vadd.f32 %v336, %v2200
        %2202 = vmatprep.mubr.f32.mxu0 0.0
        %2203 = vmatmul.mubr.f32.gmra.mxu0 %v432
        %v2204 = vpop.f32.mrf.mxu0
        %v2205 = vadd.f32 %v332, %v2204
        %v2206 = vpop.f32.mrf.mxu0
        %v2207 = vadd.f32 %v336, %v2206
        %2208 = vmatprep.mubr.f32.mxu0 0.0
        %2209 = vmatmul.mubr.f32.gmra.mxu0 %v435
        %v2210 = vpop.f32.mrf.mxu0
        %v2211 = vadd.f32 %v332, %v2210
        %v2212 = vpop.f32.mrf.mxu0
        %v2213 = vadd.f32 %v336, %v2212
        %2214 = vmatprep.mubr.f32.mxu0 0.0
        %2215 = vmatmul.mubr.f32.gmra.mxu0 %v438
        %v2216 = vpop.f32.mrf.mxu0
        %v2217 = vadd.f32 %v332, %v2216
        %v2218 = vpop.f32.mrf.mxu0
        %v2219 = vadd.f32 %v336, %v2218
        %2220 = vmatprep.mubr.f32.mxu0 0.0
        %2221 = vmatmul.mubr.f32.gmra.mxu0 %v441
        %v2222 = vpop.f32.mrf.mxu0
        %v2223 = vadd.f32 %v332, %v2222
        %v2224 = vpop.f32.mrf.mxu0
        %v2225 = vadd.f32 %v336, %v2224
        %2226 = vmatprep.mubr.f32.mxu0 0.0
        %2227 = vmatmul.mubr.f32.gmra.mxu0 %v444
        %v2228 = vpop.f32.mrf.mxu0
        %v2229 = vadd.f32 %v332, %v2228
        %v2230 = vpop.f32.mrf.mxu0
        %v2231 = vadd.f32 %v336, %v2230
        %2232 = vmatprep.mubr.f32.mxu0 0.0
        %2233 = vmatmul.mubr.f32.gmra.mxu0 %v447
        %v2234 = vpop.f32.mrf.mxu0
        %v2235 = vadd.f32 %v332, %v2234
        %v2236 = vpop.f32.mrf.mxu0
        %v2237 = vadd.f32 %v336, %v2236
        %2238 = vmatprep.mubr.f32.mxu0 0.0
        %2239 = vmatmul.mubr.f32.gmra.mxu0 %v450
        %v2240 = vpop.f32.mrf.mxu0
        %v2241 = vadd.f32 %v332, %v2240
        %v2242 = vpop.f32.mrf.mxu0
        %v2243 = vadd.f32 %v336, %v2242
        %2244 = vmatprep.mubr.f32.mxu0 0.0
        %2245 = vmatmul.mubr.f32.gmra.mxu0 %v453
        %v2246 = vpop.f32.mrf.mxu0
        %v2247 = vadd.f32 %v332, %v2246
        %v2248 = vpop.f32.mrf.mxu0
        %v2249 = vadd.f32 %v336, %v2248
        %2250 = vmatprep.mubr.f32.mxu0 0.0
        %2251 = vmatmul.mubr.f32.gmra.mxu0 %v456
        %v2252 = vpop.f32.mrf.mxu0
        %v2253 = vadd.f32 %v332, %v2252
        %v2254 = vpop.f32.mrf.mxu0
        %v2255 = vadd.f32 %v336, %v2254
        %2256 = vdwg.mxu0
        %2257 = vmatprep.subr.mxu0 0.0
        %2258 = vmatpush1.msra.mxu0 0.0
        %2259 = vmatprep.subr.mxu0 0.0
        %2260 = vmatpush1.msra.mxu0 0.0
        %2261 = vmatprep.subr.mxu0 0.0
        %2262 = vmatpush1.msra.mxu0 0.0
        %2263 = vmatprep.subr.mxu0 0.0
        %2264 = vmatpush1.msra.mxu0 0.0
        %2265 = vmatprep.subr.mxu0 0.0
        %2266 = vmatpush1.msra.mxu0 0.0
        %2267 = vmatprep.subr.mxu0 0.0
        %2268 = vmatpush1.msra.mxu0 0.0
        %2269 = vmatprep.subr.mxu0 0.0
        %2270 = vmatpush1.msra.mxu0 0.0
        %2271 = vmatprep.subr.mxu0 0.0
        %2272 = vmatpush1.msra.mxu0 0.0
        %2273 = vmatprep.subr.mxu0 0.0
        %2274 = vmatpush1.msra.mxu0 0.0
        %2275 = vmatprep.subr.mxu0 0.0
        %2276 = vmatpush1.msra.mxu0 0.0
        %2277 = vmatprep.subr.mxu0 0.0
        %2278 = vmatpush1.msra.mxu0 0.0
        %2279 = vmatprep.subr.mxu0 0.0
        %2280 = vmatpush1.msra.mxu0 0.0
        %2281 = vmatprep.subr.mxu0 0.0
        %2282 = vmatpush1.msra.mxu0 0.0
        %2283 = vmatprep.subr.mxu0 0.0
        %2284 = vmatpush1.msra.mxu0 0.0
        %2285 = vmatprep.subr.mxu0 0.0
        %2286 = vmatpush1.msra.mxu0 0.0
        %2287 = vmatprep.subr.mxu0 %v276
        %2288 = vmatpush1.msra.mxu0 %v275
        %2289 = vmatprep.subr.mxu0 0.0
        %2290 = vmatpush2.msra.mxu0 0.0
        %2291 = vmatprep.subr.mxu0 0.0
        %2292 = vmatpush2.msra.mxu0 0.0
        %2293 = vmatprep.subr.mxu0 0.0
        %2294 = vmatpush2.msra.mxu0 0.0
        %2295 = vmatprep.subr.mxu0 0.0
        %2296 = vmatpush2.msra.mxu0 0.0
        %2297 = vmatprep.subr.mxu0 0.0
        %2298 = vmatpush2.msra.mxu0 0.0
        %2299 = vmatprep.subr.mxu0 0.0
        %2300 = vmatpush2.msra.mxu0 0.0
        %2301 = vmatprep.subr.mxu0 0.0
        %2302 = vmatpush2.msra.mxu0 0.0
        %2303 = vmatprep.subr.mxu0 0.0
        %2304 = vmatpush2.msra.mxu0 0.0
        %2305 = vmatprep.subr.mxu0 0.0
        %2306 = vmatpush2.msra.mxu0 0.0
        %2307 = vmatprep.subr.mxu0 0.0
        %2308 = vmatpush2.msra.mxu0 0.0
        %2309 = vmatprep.subr.mxu0 0.0
        %2310 = vmatpush2.msra.mxu0 0.0
        %2311 = vmatprep.subr.mxu0 0.0
        %2312 = vmatpush2.msra.mxu0 0.0
        %2313 = vmatprep.subr.mxu0 0.0
        %2314 = vmatpush2.msra.mxu0 0.0
        %2315 = vmatprep.subr.mxu0 0.0
        %2316 = vmatpush2.msra.mxu0 0.0
        %2317 = vmatprep.subr.mxu0 0.0
        %2318 = vmatpush2.msra.mxu0 0.0
        %2319 = vmatprep.subr.mxu0 0.0
        %2320 = vmatpush2.msra.mxu0 0.0
        %2321 = vmatprep.mubr.f32.mxu0 0.0
        %2322 = vmatmul.mubr.f32.gmra.mxu0 %v363
        %v2323 = vpop.f32.mrf.mxu0
        %v2324 = vadd.f32 %v340, %v2323
        %v2325 = vpop.f32.mrf.mxu0
        %v2326 = vadd.f32 %v344, %v2325
        %2327 = vmatprep.mubr.f32.mxu0 0.0
        %2328 = vmatmul.mubr.f32.gmra.mxu0 %v366
        %v2329 = vpop.f32.mrf.mxu0
        %v2330 = vadd.f32 %v340, %v2329
        %v2331 = vpop.f32.mrf.mxu0
        %v2332 = vadd.f32 %v344, %v2331
        %2333 = vmatprep.mubr.f32.mxu0 0.0
        %2334 = vmatmul.mubr.f32.gmra.mxu0 %v369
        %v2335 = vpop.f32.mrf.mxu0
        %v2336 = vadd.f32 %v340, %v2335
        %v2337 = vpop.f32.mrf.mxu0
        %v2338 = vadd.f32 %v344, %v2337
        %2339 = vmatprep.mubr.f32.mxu0 0.0
        %2340 = vmatmul.mubr.f32.gmra.mxu0 %v372
        %v2341 = vpop.f32.mrf.mxu0
        %v2342 = vadd.f32 %v340, %v2341
        %v2343 = vpop.f32.mrf.mxu0
        %v2344 = vadd.f32 %v344, %v2343
        %2345 = vmatprep.mubr.f32.mxu0 0.0
        %2346 = vmatmul.mubr.f32.gmra.mxu0 %v375
        %v2347 = vpop.f32.mrf.mxu0
        %v2348 = vadd.f32 %v340, %v2347
        %v2349 = vpop.f32.mrf.mxu0
        %v2350 = vadd.f32 %v344, %v2349
        %2351 = vmatprep.mubr.f32.mxu0 0.0
        %2352 = vmatmul.mubr.f32.gmra.mxu0 %v378
        %v2353 = vpop.f32.mrf.mxu0
        %v2354 = vadd.f32 %v340, %v2353
        %v2355 = vpop.f32.mrf.mxu0
        %v2356 = vadd.f32 %v344, %v2355
        %2357 = vmatprep.mubr.f32.mxu0 0.0
        %2358 = vmatmul.mubr.f32.gmra.mxu0 %v381
        %v2359 = vpop.f32.mrf.mxu0
        %v2360 = vadd.f32 %v340, %v2359
        %v2361 = vpop.f32.mrf.mxu0
        %v2362 = vadd.f32 %v344, %v2361
        %2363 = vmatprep.mubr.f32.mxu0 0.0
        %2364 = vmatmul.mubr.f32.gmra.mxu0 %v384
        %v2365 = vpop.f32.mrf.mxu0
        %v2366 = vadd.f32 %v340, %v2365
        %v2367 = vpop.f32.mrf.mxu0
        %v2368 = vadd.f32 %v344, %v2367
        %2369 = vmatprep.mubr.f32.mxu0 0.0
        %2370 = vmatmul.mubr.f32.gmra.mxu0 %v387
        %v2371 = vpop.f32.mrf.mxu0
        %v2372 = vadd.f32 %v340, %v2371
        %v2373 = vpop.f32.mrf.mxu0
        %v2374 = vadd.f32 %v344, %v2373
        %2375 = vmatprep.mubr.f32.mxu0 0.0
        %2376 = vmatmul.mubr.f32.gmra.mxu0 %v390
        %v2377 = vpop.f32.mrf.mxu0
        %v2378 = vadd.f32 %v340, %v2377
        %v2379 = vpop.f32.mrf.mxu0
        %v2380 = vadd.f32 %v344, %v2379
        %2381 = vmatprep.mubr.f32.mxu0 0.0
        %2382 = vmatmul.mubr.f32.gmra.mxu0 %v393
        %v2383 = vpop.f32.mrf.mxu0
        %v2384 = vadd.f32 %v340, %v2383
        %v2385 = vpop.f32.mrf.mxu0
        %v2386 = vadd.f32 %v344, %v2385
        %2387 = vmatprep.mubr.f32.mxu0 0.0
        %2388 = vmatmul.mubr.f32.gmra.mxu0 %v396
        %v2389 = vpop.f32.mrf.mxu0
        %v2390 = vadd.f32 %v340, %v2389
        %v2391 = vpop.f32.mrf.mxu0
        %v2392 = vadd.f32 %v344, %v2391
        %2393 = vmatprep.mubr.f32.mxu0 0.0
        %2394 = vmatmul.mubr.f32.gmra.mxu0 %v399
        %v2395 = vpop.f32.mrf.mxu0
        %v2396 = vadd.f32 %v340, %v2395
        %v2397 = vpop.f32.mrf.mxu0
        %v2398 = vadd.f32 %v344, %v2397
        %2399 = vmatprep.mubr.f32.mxu0 0.0
        %2400 = vmatmul.mubr.f32.gmra.mxu0 %v402
        %v2401 = vpop.f32.mrf.mxu0
        %v2402 = vadd.f32 %v340, %v2401
        %v2403 = vpop.f32.mrf.mxu0
        %v2404 = vadd.f32 %v344, %v2403
        %2405 = vmatprep.mubr.f32.mxu0 0.0
        %2406 = vmatmul.mubr.f32.gmra.mxu0 %v405
        %v2407 = vpop.f32.mrf.mxu0
        %v2408 = vadd.f32 %v340, %v2407
        %v2409 = vpop.f32.mrf.mxu0
        %v2410 = vadd.f32 %v344, %v2409
        %2411 = vmatprep.mubr.f32.mxu0 0.0
        %2412 = vmatmul.mubr.f32.gmra.mxu0 %v408
        %v2413 = vpop.f32.mrf.mxu0
        %v2414 = vadd.f32 %v340, %v2413
        %v2415 = vpop.f32.mrf.mxu0
        %v2416 = vadd.f32 %v344, %v2415
        %2417 = vmatprep.mubr.f32.mxu0 0.0
        %2418 = vmatmul.mubr.f32.gmra.mxu0 %v411
        %v2419 = vpop.f32.mrf.mxu0
        %v2420 = vadd.f32 %v340, %v2419
        %v2421 = vpop.f32.mrf.mxu0
        %v2422 = vadd.f32 %v344, %v2421
        %2423 = vmatprep.mubr.f32.mxu0 0.0
        %2424 = vmatmul.mubr.f32.gmra.mxu0 %v414
        %v2425 = vpop.f32.mrf.mxu0
        %v2426 = vadd.f32 %v340, %v2425
        %v2427 = vpop.f32.mrf.mxu0
        %v2428 = vadd.f32 %v344, %v2427
        %2429 = vmatprep.mubr.f32.mxu0 0.0
        %2430 = vmatmul.mubr.f32.gmra.mxu0 %v417
        %v2431 = vpop.f32.mrf.mxu0
        %v2432 = vadd.f32 %v340, %v2431
        %v2433 = vpop.f32.mrf.mxu0
        %v2434 = vadd.f32 %v344, %v2433
        %2435 = vmatprep.mubr.f32.mxu0 0.0
        %2436 = vmatmul.mubr.f32.gmra.mxu0 %v420
        %v2437 = vpop.f32.mrf.mxu0
        %v2438 = vadd.f32 %v340, %v2437
        %v2439 = vpop.f32.mrf.mxu0
        %v2440 = vadd.f32 %v344, %v2439
        %2441 = vmatprep.mubr.f32.mxu0 0.0
        %2442 = vmatmul.mubr.f32.gmra.mxu0 %v423
        %v2443 = vpop.f32.mrf.mxu0
        %v2444 = vadd.f32 %v340, %v2443
        %v2445 = vpop.f32.mrf.mxu0
        %v2446 = vadd.f32 %v344, %v2445
        %2447 = vmatprep.mubr.f32.mxu0 0.0
        %2448 = vmatmul.mubr.f32.gmra.mxu0 %v426
        %v2449 = vpop.f32.mrf.mxu0
        %v2450 = vadd.f32 %v340, %v2449
        %v2451 = vpop.f32.mrf.mxu0
        %v2452 = vadd.f32 %v344, %v2451
        %2453 = vmatprep.mubr.f32.mxu0 0.0
        %2454 = vmatmul.mubr.f32.gmra.mxu0 %v429
        %v2455 = vpop.f32.mrf.mxu0
        %v2456 = vadd.f32 %v340, %v2455
        %v2457 = vpop.f32.mrf.mxu0
        %v2458 = vadd.f32 %v344, %v2457
        %2459 = vmatprep.mubr.f32.mxu0 0.0
        %2460 = vmatmul.mubr.f32.gmra.mxu0 %v432
        %v2461 = vpop.f32.mrf.mxu0
        %v2462 = vadd.f32 %v340, %v2461
        %v2463 = vpop.f32.mrf.mxu0
        %v2464 = vadd.f32 %v344, %v2463
        %2465 = vmatprep.mubr.f32.mxu0 0.0
        %2466 = vmatmul.mubr.f32.gmra.mxu0 %v435
        %v2467 = vpop.f32.mrf.mxu0
        %v2468 = vadd.f32 %v340, %v2467
        %v2469 = vpop.f32.mrf.mxu0
        %v2470 = vadd.f32 %v344, %v2469
        %2471 = vmatprep.mubr.f32.mxu0 0.0
        %2472 = vmatmul.mubr.f32.gmra.mxu0 %v438
        %v2473 = vpop.f32.mrf.mxu0
        %v2474 = vadd.f32 %v340, %v2473
        %v2475 = vpop.f32.mrf.mxu0
        %v2476 = vadd.f32 %v344, %v2475
        %2477 = vmatprep.mubr.f32.mxu0 0.0
        %2478 = vmatmul.mubr.f32.gmra.mxu0 %v441
        %v2479 = vpop.f32.mrf.mxu0
        %v2480 = vadd.f32 %v340, %v2479
        %v2481 = vpop.f32.mrf.mxu0
        %v2482 = vadd.f32 %v344, %v2481
        %2483 = vmatprep.mubr.f32.mxu0 0.0
        %2484 = vmatmul.mubr.f32.gmra.mxu0 %v444
        %v2485 = vpop.f32.mrf.mxu0
        %v2486 = vadd.f32 %v340, %v2485
        %v2487 = vpop.f32.mrf.mxu0
        %v2488 = vadd.f32 %v344, %v2487
        %2489 = vmatprep.mubr.f32.mxu0 0.0
        %2490 = vmatmul.mubr.f32.gmra.mxu0 %v447
        %v2491 = vpop.f32.mrf.mxu0
        %v2492 = vadd.f32 %v340, %v2491
        %v2493 = vpop.f32.mrf.mxu0
        %v2494 = vadd.f32 %v344, %v2493
        %2495 = vmatprep.mubr.f32.mxu0 0.0
        %2496 = vmatmul.mubr.f32.gmra.mxu0 %v450
        %v2497 = vpop.f32.mrf.mxu0
        %v2498 = vadd.f32 %v340, %v2497
        %v2499 = vpop.f32.mrf.mxu0
        %v2500 = vadd.f32 %v344, %v2499
        %2501 = vmatprep.mubr.f32.mxu0 0.0
        %2502 = vmatmul.mubr.f32.gmra.mxu0 %v453
        %v2503 = vpop.f32.mrf.mxu0
        %v2504 = vadd.f32 %v340, %v2503
        %v2505 = vpop.f32.mrf.mxu0
        %v2506 = vadd.f32 %v344, %v2505
        %2507 = vmatprep.mubr.f32.mxu0 0.0
        %2508 = vmatmul.mubr.f32.gmra.mxu0 %v456
        %v2509 = vpop.f32.mrf.mxu0
        %v2510 = vadd.f32 %v340, %v2509
        %v2511 = vpop.f32.mrf.mxu0
        %v2512 = vadd.f32 %v344, %v2511
        %2513 = vdwg.mxu0
        %v2514 = vmax.f32 %v525, 0.0
        %v2515 = vmax.f32 %v527, 0.0
        %v2516 = vmax.f32 %v782, 0.0
        %v2517 = vmax.f32 %v784, 0.0
        %v2518 = vmax.f32 %v1039, 0.0
        %v2519 = vmax.f32 %v1041, 0.0
        %v2520 = vmax.f32 %v1296, 0.0
        %v2521 = vmax.f32 %v1298, 0.0
        %v2522 = vmax.f32 %v1553, 0.0
        %v2523 = vmax.f32 %v1555, 0.0
        %v2524 = vmax.f32 %v1810, 0.0
        %v2525 = vmax.f32 %v1812, 0.0
        %v2526 = vmax.f32 %v2067, 0.0
        %v2527 = vmax.f32 %v2069, 0.0
        %v2528 = vmax.f32 %v2324, 0.0
        %v2529 = vmax.f32 %v2326, 0.0
        %v2530 = vmax.f32 %v531, 0.0
        %v2531 = vmax.f32 %v533, 0.0
        %v2532 = vmax.f32 %v788, 0.0
        %v2533 = vmax.f32 %v790, 0.0
        %v2534 = vmax.f32 %v1045, 0.0
        %v2535 = vmax.f32 %v1047, 0.0
        %v2536 = vmax.f32 %v1302, 0.0
        %v2537 = vmax.f32 %v1304, 0.0
        %v2538 = vmax.f32 %v1559, 0.0
        %v2539 = vmax.f32 %v1561, 0.0
        %v2540 = vmax.f32 %v1816, 0.0
        %v2541 = vmax.f32 %v1818, 0.0
        %v2542 = vmax.f32 %v2073, 0.0
        %v2543 = vmax.f32 %v2075, 0.0
        %v2544 = vmax.f32 %v2330, 0.0
        %v2545 = vmax.f32 %v2332, 0.0
        %v2546 = vmax.f32 %v537, 0.0
        %v2547 = vmax.f32 %v539, 0.0
        %v2548 = vmax.f32 %v794, 0.0
        %v2549 = vmax.f32 %v796, 0.0
        %v2550 = vmax.f32 %v1051, 0.0
        %v2551 = vmax.f32 %v1053, 0.0
        %v2552 = vmax.f32 %v1308, 0.0
        %v2553 = vmax.f32 %v1310, 0.0
        %v2554 = vmax.f32 %v1565, 0.0
        %v2555 = vmax.f32 %v1567, 0.0
        %v2556 = vmax.f32 %v1822, 0.0
        %v2557 = vmax.f32 %v1824, 0.0
        %v2558 = vmax.f32 %v2079, 0.0
        %v2559 = vmax.f32 %v2081, 0.0
        %v2560 = vmax.f32 %v2336, 0.0
        %v2561 = vmax.f32 %v2338, 0.0
        %v2562 = vmax.f32 %v543, 0.0
        %v2563 = vmax.f32 %v545, 0.0
        %v2564 = vmax.f32 %v800, 0.0
        %v2565 = vmax.f32 %v802, 0.0
        %v2566 = vmax.f32 %v1057, 0.0
        %v2567 = vmax.f32 %v1059, 0.0
        %v2568 = vmax.f32 %v1314, 0.0
        %v2569 = vmax.f32 %v1316, 0.0
        %v2570 = vmax.f32 %v1571, 0.0
        %v2571 = vmax.f32 %v1573, 0.0
        %v2572 = vmax.f32 %v1828, 0.0
        %v2573 = vmax.f32 %v1830, 0.0
        %v2574 = vmax.f32 %v2085, 0.0
        %v2575 = vmax.f32 %v2087, 0.0
        %v2576 = vmax.f32 %v2342, 0.0
        %v2577 = vmax.f32 %v2344, 0.0
        %v2578 = vmax.f32 %v549, 0.0
        %v2579 = vmax.f32 %v551, 0.0
        %v2580 = vmax.f32 %v806, 0.0
        %v2581 = vmax.f32 %v808, 0.0
        %v2582 = vmax.f32 %v1063, 0.0
        %v2583 = vmax.f32 %v1065, 0.0
        %v2584 = vmax.f32 %v1320, 0.0
        %v2585 = vmax.f32 %v1322, 0.0
        %v2586 = vmax.f32 %v1577, 0.0
        %v2587 = vmax.f32 %v1579, 0.0
        %v2588 = vmax.f32 %v1834, 0.0
        %v2589 = vmax.f32 %v1836, 0.0
        %v2590 = vmax.f32 %v2091, 0.0
        %v2591 = vmax.f32 %v2093, 0.0
        %v2592 = vmax.f32 %v2348, 0.0
        %v2593 = vmax.f32 %v2350, 0.0
        %v2594 = vmax.f32 %v555, 0.0
        %v2595 = vmax.f32 %v557, 0.0
        %v2596 = vmax.f32 %v812, 0.0
        %v2597 = vmax.f32 %v814, 0.0
        %v2598 = vmax.f32 %v1069, 0.0
        %v2599 = vmax.f32 %v1071, 0.0
        %v2600 = vmax.f32 %v1326, 0.0
        %v2601 = vmax.f32 %v1328, 0.0
        %v2602 = vmax.f32 %v1583, 0.0
        %v2603 = vmax.f32 %v1585, 0.0
        %v2604 = vmax.f32 %v1840, 0.0
        %v2605 = vmax.f32 %v1842, 0.0
        %v2606 = vmax.f32 %v2097, 0.0
        %v2607 = vmax.f32 %v2099, 0.0
        %v2608 = vmax.f32 %v2354, 0.0
        %v2609 = vmax.f32 %v2356, 0.0
        %v2610 = vmax.f32 %v561, 0.0
        %v2611 = vmax.f32 %v563, 0.0
        %v2612 = vmax.f32 %v818, 0.0
        %v2613 = vmax.f32 %v820, 0.0
        %v2614 = vmax.f32 %v1075, 0.0
        %v2615 = vmax.f32 %v1077, 0.0
        %v2616 = vmax.f32 %v1332, 0.0
        %v2617 = vmax.f32 %v1334, 0.0
        %v2618 = vmax.f32 %v1589, 0.0
        %v2619 = vmax.f32 %v1591, 0.0
        %v2620 = vmax.f32 %v1846, 0.0
        %v2621 = vmax.f32 %v1848, 0.0
        %v2622 = vmax.f32 %v2103, 0.0
        %v2623 = vmax.f32 %v2105, 0.0
        %v2624 = vmax.f32 %v2360, 0.0
        %v2625 = vmax.f32 %v2362, 0.0
        %v2626 = vmax.f32 %v567, 0.0
        %v2627 = vmax.f32 %v569, 0.0
        %v2628 = vmax.f32 %v824, 0.0
        %v2629 = vmax.f32 %v826, 0.0
        %v2630 = vmax.f32 %v1081, 0.0
        %v2631 = vmax.f32 %v1083, 0.0
        %v2632 = vmax.f32 %v1338, 0.0
        %v2633 = vmax.f32 %v1340, 0.0
        %v2634 = vmax.f32 %v1595, 0.0
        %v2635 = vmax.f32 %v1597, 0.0
        %v2636 = vmax.f32 %v1852, 0.0
        %v2637 = vmax.f32 %v1854, 0.0
        %v2638 = vmax.f32 %v2109, 0.0
        %v2639 = vmax.f32 %v2111, 0.0
        %v2640 = vmax.f32 %v2366, 0.0
        %v2641 = vmax.f32 %v2368, 0.0
        %v2642 = vmax.f32 %v573, 0.0
        %v2643 = vmax.f32 %v575, 0.0
        %v2644 = vmax.f32 %v830, 0.0
        %v2645 = vmax.f32 %v832, 0.0
        %v2646 = vmax.f32 %v1087, 0.0
        %v2647 = vmax.f32 %v1089, 0.0
        %v2648 = vmax.f32 %v1344, 0.0
        %v2649 = vmax.f32 %v1346, 0.0
        %v2650 = vmax.f32 %v1601, 0.0
        %v2651 = vmax.f32 %v1603, 0.0
        %v2652 = vmax.f32 %v1858, 0.0
        %v2653 = vmax.f32 %v1860, 0.0
        %v2654 = vmax.f32 %v2115, 0.0
        %v2655 = vmax.f32 %v2117, 0.0
        %v2656 = vmax.f32 %v2372, 0.0
        %v2657 = vmax.f32 %v2374, 0.0
        %v2658 = vmax.f32 %v579, 0.0
        %v2659 = vmax.f32 %v581, 0.0
        %v2660 = vmax.f32 %v836, 0.0
        %v2661 = vmax.f32 %v838, 0.0
        %v2662 = vmax.f32 %v1093, 0.0
        %v2663 = vmax.f32 %v1095, 0.0
        %v2664 = vmax.f32 %v1350, 0.0
        %v2665 = vmax.f32 %v1352, 0.0
        %v2666 = vmax.f32 %v1607, 0.0
        %v2667 = vmax.f32 %v1609, 0.0
        %v2668 = vmax.f32 %v1864, 0.0
        %v2669 = vmax.f32 %v1866, 0.0
        %v2670 = vmax.f32 %v2121, 0.0
        %v2671 = vmax.f32 %v2123, 0.0
        %v2672 = vmax.f32 %v2378, 0.0
        %v2673 = vmax.f32 %v2380, 0.0
        %v2674 = vmax.f32 %v585, 0.0
        %v2675 = vmax.f32 %v587, 0.0
        %v2676 = vmax.f32 %v842, 0.0
        %v2677 = vmax.f32 %v844, 0.0
        %v2678 = vmax.f32 %v1099, 0.0
        %v2679 = vmax.f32 %v1101, 0.0
        %v2680 = vmax.f32 %v1356, 0.0
        %v2681 = vmax.f32 %v1358, 0.0
        %v2682 = vmax.f32 %v1613, 0.0
        %v2683 = vmax.f32 %v1615, 0.0
        %v2684 = vmax.f32 %v1870, 0.0
        %v2685 = vmax.f32 %v1872, 0.0
        %v2686 = vmax.f32 %v2127, 0.0
        %v2687 = vmax.f32 %v2129, 0.0
        %v2688 = vmax.f32 %v2384, 0.0
        %v2689 = vmax.f32 %v2386, 0.0
        %v2690 = vmax.f32 %v591, 0.0
        %v2691 = vmax.f32 %v593, 0.0
        %v2692 = vmax.f32 %v848, 0.0
        %v2693 = vmax.f32 %v850, 0.0
        %v2694 = vmax.f32 %v1105, 0.0
        %v2695 = vmax.f32 %v1107, 0.0
        %v2696 = vmax.f32 %v1362, 0.0
        %v2697 = vmax.f32 %v1364, 0.0
        %v2698 = vmax.f32 %v1619, 0.0
        %v2699 = vmax.f32 %v1621, 0.0
        %v2700 = vmax.f32 %v1876, 0.0
        %v2701 = vmax.f32 %v1878, 0.0
        %v2702 = vmax.f32 %v2133, 0.0
        %v2703 = vmax.f32 %v2135, 0.0
        %v2704 = vmax.f32 %v2390, 0.0
        %v2705 = vmax.f32 %v2392, 0.0
        %v2706 = vmax.f32 %v597, 0.0
        %v2707 = vmax.f32 %v599, 0.0
        %v2708 = vmax.f32 %v854, 0.0
        %v2709 = vmax.f32 %v856, 0.0
        %v2710 = vmax.f32 %v1111, 0.0
        %v2711 = vmax.f32 %v1113, 0.0
        %v2712 = vmax.f32 %v1368, 0.0
        %v2713 = vmax.f32 %v1370, 0.0
        %v2714 = vmax.f32 %v1625, 0.0
        %v2715 = vmax.f32 %v1627, 0.0
        %v2716 = vmax.f32 %v1882, 0.0
        %v2717 = vmax.f32 %v1884, 0.0
        %v2718 = vmax.f32 %v2139, 0.0
        %v2719 = vmax.f32 %v2141, 0.0
        %v2720 = vmax.f32 %v2396, 0.0
        %v2721 = vmax.f32 %v2398, 0.0
        %v2722 = vmax.f32 %v603, 0.0
        %v2723 = vmax.f32 %v605, 0.0
        %v2724 = vmax.f32 %v860, 0.0
        %v2725 = vmax.f32 %v862, 0.0
        %v2726 = vmax.f32 %v1117, 0.0
        %v2727 = vmax.f32 %v1119, 0.0
        %v2728 = vmax.f32 %v1374, 0.0
        %v2729 = vmax.f32 %v1376, 0.0
        %v2730 = vmax.f32 %v1631, 0.0
        %v2731 = vmax.f32 %v1633, 0.0
        %v2732 = vmax.f32 %v1888, 0.0
        %v2733 = vmax.f32 %v1890, 0.0
        %v2734 = vmax.f32 %v2145, 0.0
        %v2735 = vmax.f32 %v2147, 0.0
        %v2736 = vmax.f32 %v2402, 0.0
        %v2737 = vmax.f32 %v2404, 0.0
        %v2738 = vmax.f32 %v609, 0.0
        %v2739 = vmax.f32 %v611, 0.0
        %v2740 = vmax.f32 %v866, 0.0
        %v2741 = vmax.f32 %v868, 0.0
        %v2742 = vmax.f32 %v1123, 0.0
        %v2743 = vmax.f32 %v1125, 0.0
        %v2744 = vmax.f32 %v1380, 0.0
        %v2745 = vmax.f32 %v1382, 0.0
        %v2746 = vmax.f32 %v1637, 0.0
        %v2747 = vmax.f32 %v1639, 0.0
        %v2748 = vmax.f32 %v1894, 0.0
        %v2749 = vmax.f32 %v1896, 0.0
        %v2750 = vmax.f32 %v2151, 0.0
        %v2751 = vmax.f32 %v2153, 0.0
        %v2752 = vmax.f32 %v2408, 0.0
        %v2753 = vmax.f32 %v2410, 0.0
        %v2754 = vmax.f32 %v615, 0.0
        %v2755 = vmax.f32 %v617, 0.0
        %v2756 = vmax.f32 %v872, 0.0
        %v2757 = vmax.f32 %v874, 0.0
        %v2758 = vmax.f32 %v1129, 0.0
        %v2759 = vmax.f32 %v1131, 0.0
        %v2760 = vmax.f32 %v1386, 0.0
        %v2761 = vmax.f32 %v1388, 0.0
        %v2762 = vmax.f32 %v1643, 0.0
        %v2763 = vmax.f32 %v1645, 0.0
        %v2764 = vmax.f32 %v1900, 0.0
        %v2765 = vmax.f32 %v1902, 0.0
        %v2766 = vmax.f32 %v2157, 0.0
        %v2767 = vmax.f32 %v2159, 0.0
        %v2768 = vmax.f32 %v2414, 0.0
        %v2769 = vmax.f32 %v2416, 0.0
        %v2770 = vmax.f32 %v621, 0.0
        %v2771 = vmax.f32 %v623, 0.0
        %v2772 = vmax.f32 %v878, 0.0
        %v2773 = vmax.f32 %v880, 0.0
        %v2774 = vmax.f32 %v1135, 0.0
        %v2775 = vmax.f32 %v1137, 0.0
        %v2776 = vmax.f32 %v1392, 0.0
        %v2777 = vmax.f32 %v1394, 0.0
        %v2778 = vmax.f32 %v1649, 0.0
        %v2779 = vmax.f32 %v1651, 0.0
        %v2780 = vmax.f32 %v1906, 0.0
        %v2781 = vmax.f32 %v1908, 0.0
        %v2782 = vmax.f32 %v2163, 0.0
        %v2783 = vmax.f32 %v2165, 0.0
        %v2784 = vmax.f32 %v2420, 0.0
        %v2785 = vmax.f32 %v2422, 0.0
        %v2786 = vmax.f32 %v627, 0.0
        %v2787 = vmax.f32 %v629, 0.0
        %v2788 = vmax.f32 %v884, 0.0
        %v2789 = vmax.f32 %v886, 0.0
        %v2790 = vmax.f32 %v1141, 0.0
        %v2791 = vmax.f32 %v1143, 0.0
        %v2792 = vmax.f32 %v1398, 0.0
        %v2793 = vmax.f32 %v1400, 0.0
        %v2794 = vmax.f32 %v1655, 0.0
        %v2795 = vmax.f32 %v1657, 0.0
        %v2796 = vmax.f32 %v1912, 0.0
        %v2797 = vmax.f32 %v1914, 0.0
        %v2798 = vmax.f32 %v2169, 0.0
        %v2799 = vmax.f32 %v2171, 0.0
        %v2800 = vmax.f32 %v2426, 0.0
        %v2801 = vmax.f32 %v2428, 0.0
        %v2802 = vmax.f32 %v633, 0.0
        %v2803 = vmax.f32 %v635, 0.0
        %v2804 = vmax.f32 %v890, 0.0
        %v2805 = vmax.f32 %v892, 0.0
        %v2806 = vmax.f32 %v1147, 0.0
        %v2807 = vmax.f32 %v1149, 0.0
        %v2808 = vmax.f32 %v1404, 0.0
        %v2809 = vmax.f32 %v1406, 0.0
        %v2810 = vmax.f32 %v1661, 0.0
        %v2811 = vmax.f32 %v1663, 0.0
        %v2812 = vmax.f32 %v1918, 0.0
        %v2813 = vmax.f32 %v1920, 0.0
        %v2814 = vmax.f32 %v2175, 0.0
        %v2815 = vmax.f32 %v2177, 0.0
        %v2816 = vmax.f32 %v2432, 0.0
        %v2817 = vmax.f32 %v2434, 0.0
        %v2818 = vmax.f32 %v639, 0.0
        %v2819 = vmax.f32 %v641, 0.0
        %v2820 = vmax.f32 %v896, 0.0
        %v2821 = vmax.f32 %v898, 0.0
        %v2822 = vmax.f32 %v1153, 0.0
        %v2823 = vmax.f32 %v1155, 0.0
        %v2824 = vmax.f32 %v1410, 0.0
        %v2825 = vmax.f32 %v1412, 0.0
        %v2826 = vmax.f32 %v1667, 0.0
        %v2827 = vmax.f32 %v1669, 0.0
        %v2828 = vmax.f32 %v1924, 0.0
        %v2829 = vmax.f32 %v1926, 0.0
        %v2830 = vmax.f32 %v2181, 0.0
        %v2831 = vmax.f32 %v2183, 0.0
        %v2832 = vmax.f32 %v2438, 0.0
        %v2833 = vmax.f32 %v2440, 0.0
        %v2834 = vmax.f32 %v645, 0.0
        %v2835 = vmax.f32 %v647, 0.0
        %v2836 = vmax.f32 %v902, 0.0
        %v2837 = vmax.f32 %v904, 0.0
        %v2838 = vmax.f32 %v1159, 0.0
        %v2839 = vmax.f32 %v1161, 0.0
        %v2840 = vmax.f32 %v1416, 0.0
        %v2841 = vmax.f32 %v1418, 0.0
        %v2842 = vmax.f32 %v1673, 0.0
        %v2843 = vmax.f32 %v1675, 0.0
        %v2844 = vmax.f32 %v1930, 0.0
        %v2845 = vmax.f32 %v1932, 0.0
        %v2846 = vmax.f32 %v2187, 0.0
        %v2847 = vmax.f32 %v2189, 0.0
        %v2848 = vmax.f32 %v2444, 0.0
        %v2849 = vmax.f32 %v2446, 0.0
        %v2850 = vmax.f32 %v651, 0.0
        %v2851 = vmax.f32 %v653, 0.0
        %v2852 = vmax.f32 %v908, 0.0
        %v2853 = vmax.f32 %v910, 0.0
        %v2854 = vmax.f32 %v1165, 0.0
        %v2855 = vmax.f32 %v1167, 0.0
        %v2856 = vmax.f32 %v1422, 0.0
        %v2857 = vmax.f32 %v1424, 0.0
        %v2858 = vmax.f32 %v1679, 0.0
        %v2859 = vmax.f32 %v1681, 0.0
        %v2860 = vmax.f32 %v1936, 0.0
        %v2861 = vmax.f32 %v1938, 0.0
        %v2862 = vmax.f32 %v2193, 0.0
        %v2863 = vmax.f32 %v2195, 0.0
        %v2864 = vmax.f32 %v2450, 0.0
        %v2865 = vmax.f32 %v2452, 0.0
        %v2866 = vmax.f32 %v657, 0.0
        %v2867 = vmax.f32 %v659, 0.0
        %v2868 = vmax.f32 %v914, 0.0
        %v2869 = vmax.f32 %v916, 0.0
        %v2870 = vmax.f32 %v1171, 0.0
        %v2871 = vmax.f32 %v1173, 0.0
        %v2872 = vmax.f32 %v1428, 0.0
        %v2873 = vmax.f32 %v1430, 0.0
        %v2874 = vmax.f32 %v1685, 0.0
        %v2875 = vmax.f32 %v1687, 0.0
        %v2876 = vmax.f32 %v1942, 0.0
        %v2877 = vmax.f32 %v1944, 0.0
        %v2878 = vmax.f32 %v2199, 0.0
        %v2879 = vmax.f32 %v2201, 0.0
        %v2880 = vmax.f32 %v2456, 0.0
        %v2881 = vmax.f32 %v2458, 0.0
        %v2882 = vmax.f32 %v663, 0.0
        %v2883 = vmax.f32 %v665, 0.0
        %v2884 = vmax.f32 %v920, 0.0
        %v2885 = vmax.f32 %v922, 0.0
        %v2886 = vmax.f32 %v1177, 0.0
        %v2887 = vmax.f32 %v1179, 0.0
        %v2888 = vmax.f32 %v1434, 0.0
        %v2889 = vmax.f32 %v1436, 0.0
        %v2890 = vmax.f32 %v1691, 0.0
        %v2891 = vmax.f32 %v1693, 0.0
        %v2892 = vmax.f32 %v1948, 0.0
        %v2893 = vmax.f32 %v1950, 0.0
        %v2894 = vmax.f32 %v2205, 0.0
        %v2895 = vmax.f32 %v2207, 0.0
        %v2896 = vmax.f32 %v2462, 0.0
        %v2897 = vmax.f32 %v2464, 0.0
        %v2898 = vmax.f32 %v669, 0.0
        %v2899 = vmax.f32 %v671, 0.0
        %v2900 = vmax.f32 %v926, 0.0
        %v2901 = vmax.f32 %v928, 0.0
        %v2902 = vmax.f32 %v1183, 0.0
        %v2903 = vmax.f32 %v1185, 0.0
        %v2904 = vmax.f32 %v1440, 0.0
        %v2905 = vmax.f32 %v1442, 0.0
        %v2906 = vmax.f32 %v1697, 0.0
        %v2907 = vmax.f32 %v1699, 0.0
        %v2908 = vmax.f32 %v1954, 0.0
        %v2909 = vmax.f32 %v1956, 0.0
        %v2910 = vmax.f32 %v2211, 0.0
        %v2911 = vmax.f32 %v2213, 0.0
        %v2912 = vmax.f32 %v2468, 0.0
        %v2913 = vmax.f32 %v2470, 0.0
        %v2914 = vmax.f32 %v675, 0.0
        %v2915 = vmax.f32 %v677, 0.0
        %v2916 = vmax.f32 %v932, 0.0
        %v2917 = vmax.f32 %v934, 0.0
        %v2918 = vmax.f32 %v1189, 0.0
        %v2919 = vmax.f32 %v1191, 0.0
        %v2920 = vmax.f32 %v1446, 0.0
        %v2921 = vmax.f32 %v1448, 0.0
        %v2922 = vmax.f32 %v1703, 0.0
        %v2923 = vmax.f32 %v1705, 0.0
        %v2924 = vmax.f32 %v1960, 0.0
        %v2925 = vmax.f32 %v1962, 0.0
        %v2926 = vmax.f32 %v2217, 0.0
        %v2927 = vmax.f32 %v2219, 0.0
        %v2928 = vmax.f32 %v2474, 0.0
        %v2929 = vmax.f32 %v2476, 0.0
        %v2930 = vmax.f32 %v681, 0.0
        %v2931 = vmax.f32 %v683, 0.0
        %v2932 = vmax.f32 %v938, 0.0
        %v2933 = vmax.f32 %v940, 0.0
        %v2934 = vmax.f32 %v1195, 0.0
        %v2935 = vmax.f32 %v1197, 0.0
        %v2936 = vmax.f32 %v1452, 0.0
        %v2937 = vmax.f32 %v1454, 0.0
        %v2938 = vmax.f32 %v1709, 0.0
        %v2939 = vmax.f32 %v1711, 0.0
        %v2940 = vmax.f32 %v1966, 0.0
        %v2941 = vmax.f32 %v1968, 0.0
        %v2942 = vmax.f32 %v2223, 0.0
        %v2943 = vmax.f32 %v2225, 0.0
        %v2944 = vmax.f32 %v2480, 0.0
        %v2945 = vmax.f32 %v2482, 0.0
        %v2946 = vmax.f32 %v687, 0.0
        %v2947 = vmax.f32 %v689, 0.0
        %v2948 = vmax.f32 %v944, 0.0
        %v2949 = vmax.f32 %v946, 0.0
        %v2950 = vmax.f32 %v1201, 0.0
        %v2951 = vmax.f32 %v1203, 0.0
        %v2952 = vmax.f32 %v1458, 0.0
        %v2953 = vmax.f32 %v1460, 0.0
        %v2954 = vmax.f32 %v1715, 0.0
        %v2955 = vmax.f32 %v1717, 0.0
        %v2956 = vmax.f32 %v1972, 0.0
        %v2957 = vmax.f32 %v1974, 0.0
        %v2958 = vmax.f32 %v2229, 0.0
        %v2959 = vmax.f32 %v2231, 0.0
        %v2960 = vmax.f32 %v2486, 0.0
        %v2961 = vmax.f32 %v2488, 0.0
        %v2962 = vmax.f32 %v693, 0.0
        %v2963 = vmax.f32 %v695, 0.0
        %v2964 = vmax.f32 %v950, 0.0
        %v2965 = vmax.f32 %v952, 0.0
        %v2966 = vmax.f32 %v1207, 0.0
        %v2967 = vmax.f32 %v1209, 0.0
        %v2968 = vmax.f32 %v1464, 0.0
        %v2969 = vmax.f32 %v1466, 0.0
        %v2970 = vmax.f32 %v1721, 0.0
        %v2971 = vmax.f32 %v1723, 0.0
        %v2972 = vmax.f32 %v1978, 0.0
        %v2973 = vmax.f32 %v1980, 0.0
        %v2974 = vmax.f32 %v2235, 0.0
        %v2975 = vmax.f32 %v2237, 0.0
        %v2976 = vmax.f32 %v2492, 0.0
        %v2977 = vmax.f32 %v2494, 0.0
        %v2978 = vmax.f32 %v699, 0.0
        %v2979 = vmax.f32 %v701, 0.0
        %v2980 = vmax.f32 %v956, 0.0
        %v2981 = vmax.f32 %v958, 0.0
        %v2982 = vmax.f32 %v1213, 0.0
        %v2983 = vmax.f32 %v1215, 0.0
        %v2984 = vmax.f32 %v1470, 0.0
        %v2985 = vmax.f32 %v1472, 0.0
        %v2986 = vmax.f32 %v1727, 0.0
        %v2987 = vmax.f32 %v1729, 0.0
        %v2988 = vmax.f32 %v1984, 0.0
        %v2989 = vmax.f32 %v1986, 0.0
        %v2990 = vmax.f32 %v2241, 0.0
        %v2991 = vmax.f32 %v2243, 0.0
        %v2992 = vmax.f32 %v2498, 0.0
        %v2993 = vmax.f32 %v2500, 0.0
        %v2994 = vmax.f32 %v705, 0.0
        %v2995 = vmax.f32 %v707, 0.0
        %v2996 = vmax.f32 %v962, 0.0
        %v2997 = vmax.f32 %v964, 0.0
        %v2998 = vmax.f32 %v1219, 0.0
        %v2999 = vmax.f32 %v1221, 0.0
        %v3000 = vmax.f32 %v1476, 0.0
        %v3001 = vmax.f32 %v1478, 0.0
        %v3002 = vmax.f32 %v1733, 0.0
        %v3003 = vmax.f32 %v1735, 0.0
        %v3004 = vmax.f32 %v1990, 0.0
        %v3005 = vmax.f32 %v1992, 0.0
        %v3006 = vmax.f32 %v2247, 0.0
        %v3007 = vmax.f32 %v2249, 0.0
        %v3008 = vmax.f32 %v2504, 0.0
        %v3009 = vmax.f32 %v2506, 0.0
        %v3010 = vmax.f32 %v711, 0.0
        %v3011 = vmax.f32 %v713, 0.0
        %v3012 = vmax.f32 %v968, 0.0
        %v3013 = vmax.f32 %v970, 0.0
        %v3014 = vmax.f32 %v1225, 0.0
        %v3015 = vmax.f32 %v1227, 0.0
        %v3016 = vmax.f32 %v1482, 0.0
        %v3017 = vmax.f32 %v1484, 0.0
        %v3018 = vmax.f32 %v1739, 0.0
        %v3019 = vmax.f32 %v1741, 0.0
        %v3020 = vmax.f32 %v1996, 0.0
        %v3021 = vmax.f32 %v1998, 0.0
        %v3022 = vmax.f32 %v2253, 0.0
        %v3023 = vmax.f32 %v2255, 0.0
        %v3024 = vmax.f32 %v2510, 0.0
        %v3025 = vmax.f32 %v2512, 0.0
        %v3026 = vld [vmem:[%s222] sm:$0xff]
        %v3027 = vld [vmem:[%s222 + $0x8] sm:$0xff]
        %v3028 = vadd.f32 %v2514, %v2530
        %v3029 = vadd.f32 %v3028, %v2546
        %v3030 = vadd.f32 %v3029, %v2562
        %v3031 = vadd.f32 %v3030, %v2578
        %v3032 = vadd.f32 %v3031, %v2594
        %v3033 = vadd.f32 %v3032, %v2610
        %v3034 = vadd.f32 %v3033, %v2626
        %v3035 = vadd.f32 %v3034, %v2642
        %v3036 = vadd.f32 %v3035, %v2658
        %v3037 = vadd.f32 %v3036, %v2674
        %v3038 = vadd.f32 %v3037, %v2690
        %v3039 = vadd.f32 %v3038, %v2706
        %v3040 = vadd.f32 %v3039, %v2722
        %v3041 = vadd.f32 %v3040, %v2738
        %v3042 = vadd.f32 %v3041, %v2754
        %v3043 = vadd.f32 %v3042, %v2770
        %v3044 = vadd.f32 %v3043, %v2786
        %v3045 = vadd.f32 %v3044, %v2802
        %v3046 = vadd.f32 %v3045, %v2818
        %v3047 = vadd.f32 %v3046, %v2834
        %v3048 = vadd.f32 %v3047, %v2850
        %v3049 = vadd.f32 %v3048, %v2866
        %v3050 = vadd.f32 %v3049, %v2882
        %v3051 = vadd.f32 %v3050, %v2898
        %v3052 = vadd.f32 %v3051, %v2914
        %v3053 = vadd.f32 %v3052, %v2930
        %v3054 = vadd.f32 %v3053, %v2946
        %v3055 = vadd.f32 %v3054, %v2962
        %v3056 = vadd.f32 %v3055, %v2978
        %v3057 = vadd.f32 %v3056, %v2994
        %v3058 = vadd.f32 %v3057, %v3010
        %v3059 = vrot.slane %v3058, 4
        %v3060 = vadd.f32 %v3058, %v3059
        %v3061 = vrot.slane %v3060, 2
        %v3062 = vadd.f32 %v3060, %v3061
        %v3063 = vrot.slane %v3062, 1
        %v3064 = vadd.f32 %v3062, %v3063
        %v3065 = vadd.f32 %v2515, %v2531
        %v3066 = vadd.f32 %v3065, %v2547
        %v3067 = vadd.f32 %v3066, %v2563
        %v3068 = vadd.f32 %v3067, %v2579
        %v3069 = vadd.f32 %v3068, %v2595
        %v3070 = vadd.f32 %v3069, %v2611
        %v3071 = vadd.f32 %v3070, %v2627
        %v3072 = vadd.f32 %v3071, %v2643
        %v3073 = vadd.f32 %v3072, %v2659
        %v3074 = vadd.f32 %v3073, %v2675
        %v3075 = vadd.f32 %v3074, %v2691
        %v3076 = vadd.f32 %v3075, %v2707
        %v3077 = vadd.f32 %v3076, %v2723
        %v3078 = vadd.f32 %v3077, %v2739
        %v3079 = vadd.f32 %v3078, %v2755
        %v3080 = vadd.f32 %v3079, %v2771
        %v3081 = vadd.f32 %v3080, %v2787
        %v3082 = vadd.f32 %v3081, %v2803
        %v3083 = vadd.f32 %v3082, %v2819
        %v3084 = vadd.f32 %v3083, %v2835
        %v3085 = vadd.f32 %v3084, %v2851
        %v3086 = vadd.f32 %v3085, %v2867
        %v3087 = vadd.f32 %v3086, %v2883
        %v3088 = vadd.f32 %v3087, %v2899
        %v3089 = vadd.f32 %v3088, %v2915
        %v3090 = vadd.f32 %v3089, %v2931
        %v3091 = vadd.f32 %v3090, %v2947
        %v3092 = vadd.f32 %v3091, %v2963
        %v3093 = vadd.f32 %v3092, %v2979
        %v3094 = vadd.f32 %v3093, %v2995
        %v3095 = vadd.f32 %v3094, %v3011
        %v3096 = vrot.slane %v3095, 4
        %v3097 = vadd.f32 %v3095, %v3096
        %v3098 = vrot.slane %v3097, 2
        %v3099 = vadd.f32 %v3097, %v3098
        %v3100 = vrot.slane %v3099, 1
        %v3101 = vadd.f32 %v3099, %v3100
        %v3102 = vadd.f32 %v2516, %v2532
        %v3103 = vadd.f32 %v3102, %v2548
        %v3104 = vadd.f32 %v3103, %v2564
        %v3105 = vadd.f32 %v3104, %v2580
        %v3106 = vadd.f32 %v3105, %v2596
        %v3107 = vadd.f32 %v3106, %v2612
        %v3108 = vadd.f32 %v3107, %v2628
        %v3109 = vadd.f32 %v3108, %v2644
        %v3110 = vadd.f32 %v3109, %v2660
        %v3111 = vadd.f32 %v3110, %v2676
        %v3112 = vadd.f32 %v3111, %v2692
        %v3113 = vadd.f32 %v3112, %v2708
        %v3114 = vadd.f32 %v3113, %v2724
        %v3115 = vadd.f32 %v3114, %v2740
        %v3116 = vadd.f32 %v3115, %v2756
        %v3117 = vadd.f32 %v3116, %v2772
        %v3118 = vadd.f32 %v3117, %v2788
        %v3119 = vadd.f32 %v3118, %v2804
        %v3120 = vadd.f32 %v3119, %v2820
        %v3121 = vadd.f32 %v3120, %v2836
        %v3122 = vadd.f32 %v3121, %v2852
        %v3123 = vadd.f32 %v3122, %v2868
        %v3124 = vadd.f32 %v3123, %v2884
        %v3125 = vadd.f32 %v3124, %v2900
        %v3126 = vadd.f32 %v3125, %v2916
        %v3127 = vadd.f32 %v3126, %v2932
        %v3128 = vadd.f32 %v3127, %v2948
        %v3129 = vadd.f32 %v3128, %v2964
        %v3130 = vadd.f32 %v3129, %v2980
        %v3131 = vadd.f32 %v3130, %v2996
        %v3132 = vadd.f32 %v3131, %v3012
        %v3133 = vrot.slane %v3132, 4
        %v3134 = vadd.f32 %v3132, %v3133
        %v3135 = vrot.slane %v3134, 2
        %v3136 = vadd.f32 %v3134, %v3135
        %v3137 = vrot.slane %v3136, 1
        %v3138 = vadd.f32 %v3136, %v3137
        %v3139 = vadd.f32 %v2517, %v2533
        %v3140 = vadd.f32 %v3139, %v2549
        %v3141 = vadd.f32 %v3140, %v2565
        %v3142 = vadd.f32 %v3141, %v2581
        %v3143 = vadd.f32 %v3142, %v2597
        %v3144 = vadd.f32 %v3143, %v2613
        %v3145 = vadd.f32 %v3144, %v2629
        %v3146 = vadd.f32 %v3145, %v2645
        %v3147 = vadd.f32 %v3146, %v2661
        %v3148 = vadd.f32 %v3147, %v2677
        %v3149 = vadd.f32 %v3148, %v2693
        %v3150 = vadd.f32 %v3149, %v2709
        %v3151 = vadd.f32 %v3150, %v2725
        %v3152 = vadd.f32 %v3151, %v2741
        %v3153 = vadd.f32 %v3152, %v2757
        %v3154 = vadd.f32 %v3153, %v2773
        %v3155 = vadd.f32 %v3154, %v2789
        %v3156 = vadd.f32 %v3155, %v2805
        %v3157 = vadd.f32 %v3156, %v2821
        %v3158 = vadd.f32 %v3157, %v2837
        %v3159 = vadd.f32 %v3158, %v2853
        %v3160 = vadd.f32 %v3159, %v2869
        %v3161 = vadd.f32 %v3160, %v2885
        %v3162 = vadd.f32 %v3161, %v2901
        %v3163 = vadd.f32 %v3162, %v2917
        %v3164 = vadd.f32 %v3163, %v2933
        %v3165 = vadd.f32 %v3164, %v2949
        %v3166 = vadd.f32 %v3165, %v2965
        %v3167 = vadd.f32 %v3166, %v2981
        %v3168 = vadd.f32 %v3167, %v2997
        %v3169 = vadd.f32 %v3168, %v3013
        %v3170 = vrot.slane %v3169, 4
        %v3171 = vadd.f32 %v3169, %v3170
        %v3172 = vrot.slane %v3171, 2
        %v3173 = vadd.f32 %v3171, %v3172
        %v3174 = vrot.slane %v3173, 1
        %v3175 = vadd.f32 %v3173, %v3174
        %v3176 = vadd.f32 %v2518, %v2534
        %v3177 = vadd.f32 %v3176, %v2550
        %v3178 = vadd.f32 %v3177, %v2566
        %v3179 = vadd.f32 %v3178, %v2582
        %v3180 = vadd.f32 %v3179, %v2598
        %v3181 = vadd.f32 %v3180, %v2614
        %v3182 = vadd.f32 %v3181, %v2630
        %v3183 = vadd.f32 %v3182, %v2646
        %v3184 = vadd.f32 %v3183, %v2662
        %v3185 = vadd.f32 %v3184, %v2678
        %v3186 = vadd.f32 %v3185, %v2694
        %v3187 = vadd.f32 %v3186, %v2710
        %v3188 = vadd.f32 %v3187, %v2726
        %v3189 = vadd.f32 %v3188, %v2742
        %v3190 = vadd.f32 %v3189, %v2758
        %v3191 = vadd.f32 %v3190, %v2774
        %v3192 = vadd.f32 %v3191, %v2790
        %v3193 = vadd.f32 %v3192, %v2806
        %v3194 = vadd.f32 %v3193, %v2822
        %v3195 = vadd.f32 %v3194, %v2838
        %v3196 = vadd.f32 %v3195, %v2854
        %v3197 = vadd.f32 %v3196, %v2870
        %v3198 = vadd.f32 %v3197, %v2886
        %v3199 = vadd.f32 %v3198, %v2902
        %v3200 = vadd.f32 %v3199, %v2918
        %v3201 = vadd.f32 %v3200, %v2934
        %v3202 = vadd.f32 %v3201, %v2950
        %v3203 = vadd.f32 %v3202, %v2966
        %v3204 = vadd.f32 %v3203, %v2982
        %v3205 = vadd.f32 %v3204, %v2998
        %v3206 = vadd.f32 %v3205, %v3014
        %v3207 = vrot.slane %v3206, 4
        %v3208 = vadd.f32 %v3206, %v3207
        %v3209 = vrot.slane %v3208, 2
        %v3210 = vadd.f32 %v3208, %v3209
        %v3211 = vrot.slane %v3210, 1
        %v3212 = vadd.f32 %v3210, %v3211
        %v3213 = vadd.f32 %v2519, %v2535
        %v3214 = vadd.f32 %v3213, %v2551
        %v3215 = vadd.f32 %v3214, %v2567
        %v3216 = vadd.f32 %v3215, %v2583
        %v3217 = vadd.f32 %v3216, %v2599
        %v3218 = vadd.f32 %v3217, %v2615
        %v3219 = vadd.f32 %v3218, %v2631
        %v3220 = vadd.f32 %v3219, %v2647
        %v3221 = vadd.f32 %v3220, %v2663
        %v3222 = vadd.f32 %v3221, %v2679
        %v3223 = vadd.f32 %v3222, %v2695
        %v3224 = vadd.f32 %v3223, %v2711
        %v3225 = vadd.f32 %v3224, %v2727
        %v3226 = vadd.f32 %v3225, %v2743
        %v3227 = vadd.f32 %v3226, %v2759
        %v3228 = vadd.f32 %v3227, %v2775
        %v3229 = vadd.f32 %v3228, %v2791
        %v3230 = vadd.f32 %v3229, %v2807
        %v3231 = vadd.f32 %v3230, %v2823
        %v3232 = vadd.f32 %v3231, %v2839
        %v3233 = vadd.f32 %v3232, %v2855
        %v3234 = vadd.f32 %v3233, %v2871
        %v3235 = vadd.f32 %v3234, %v2887
        %v3236 = vadd.f32 %v3235, %v2903
        %v3237 = vadd.f32 %v3236, %v2919
        %v3238 = vadd.f32 %v3237, %v2935
        %v3239 = vadd.f32 %v3238, %v2951
        %v3240 = vadd.f32 %v3239, %v2967
        %v3241 = vadd.f32 %v3240, %v2983
        %v3242 = vadd.f32 %v3241, %v2999
        %v3243 = vadd.f32 %v3242, %v3015
        %v3244 = vrot.slane %v3243, 4
        %v3245 = vadd.f32 %v3243, %v3244
        %v3246 = vrot.slane %v3245, 2
        %v3247 = vadd.f32 %v3245, %v3246
        %v3248 = vrot.slane %v3247, 1
        %v3249 = vadd.f32 %v3247, %v3248
        %v3250 = vadd.f32 %v2520, %v2536
        %v3251 = vadd.f32 %v3250, %v2552
        %v3252 = vadd.f32 %v3251, %v2568
        %v3253 = vadd.f32 %v3252, %v2584
        %v3254 = vadd.f32 %v3253, %v2600
        %v3255 = vadd.f32 %v3254, %v2616
        %v3256 = vadd.f32 %v3255, %v2632
        %v3257 = vadd.f32 %v3256, %v2648
        %v3258 = vadd.f32 %v3257, %v2664
        %v3259 = vadd.f32 %v3258, %v2680
        %v3260 = vadd.f32 %v3259, %v2696
        %v3261 = vadd.f32 %v3260, %v2712
        %v3262 = vadd.f32 %v3261, %v2728
        %v3263 = vadd.f32 %v3262, %v2744
        %v3264 = vadd.f32 %v3263, %v2760
        %v3265 = vadd.f32 %v3264, %v2776
        %v3266 = vadd.f32 %v3265, %v2792
        %v3267 = vadd.f32 %v3266, %v2808
        %v3268 = vadd.f32 %v3267, %v2824
        %v3269 = vadd.f32 %v3268, %v2840
        %v3270 = vadd.f32 %v3269, %v2856
        %v3271 = vadd.f32 %v3270, %v2872
        %v3272 = vadd.f32 %v3271, %v2888
        %v3273 = vadd.f32 %v3272, %v2904
        %v3274 = vadd.f32 %v3273, %v2920
        %v3275 = vadd.f32 %v3274, %v2936
        %v3276 = vadd.f32 %v3275, %v2952
        %v3277 = vadd.f32 %v3276, %v2968
        %v3278 = vadd.f32 %v3277, %v2984
        %v3279 = vadd.f32 %v3278, %v3000
        %v3280 = vadd.f32 %v3279, %v3016
        %v3281 = vrot.slane %v3280, 4
        %v3282 = vadd.f32 %v3280, %v3281
        %v3283 = vrot.slane %v3282, 2
        %v3284 = vadd.f32 %v3282, %v3283
        %v3285 = vrot.slane %v3284, 1
        %v3286 = vadd.f32 %v3284, %v3285
        %v3287 = vadd.f32 %v2521, %v2537
        %v3288 = vadd.f32 %v3287, %v2553
        %v3289 = vadd.f32 %v3288, %v2569
        %v3290 = vadd.f32 %v3289, %v2585
        %v3291 = vadd.f32 %v3290, %v2601
        %v3292 = vadd.f32 %v3291, %v2617
        %v3293 = vadd.f32 %v3292, %v2633
        %v3294 = vadd.f32 %v3293, %v2649
        %v3295 = vadd.f32 %v3294, %v2665
        %v3296 = vadd.f32 %v3295, %v2681
        %v3297 = vadd.f32 %v3296, %v2697
        %v3298 = vadd.f32 %v3297, %v2713
        %v3299 = vadd.f32 %v3298, %v2729
        %v3300 = vadd.f32 %v3299, %v2745
        %v3301 = vadd.f32 %v3300, %v2761
        %v3302 = vadd.f32 %v3301, %v2777
        %v3303 = vadd.f32 %v3302, %v2793
        %v3304 = vadd.f32 %v3303, %v2809
        %v3305 = vadd.f32 %v3304, %v2825
        %v3306 = vadd.f32 %v3305, %v2841
        %v3307 = vadd.f32 %v3306, %v2857
        %v3308 = vadd.f32 %v3307, %v2873
        %v3309 = vadd.f32 %v3308, %v2889
        %v3310 = vadd.f32 %v3309, %v2905
        %v3311 = vadd.f32 %v3310, %v2921
        %v3312 = vadd.f32 %v3311, %v2937
        %v3313 = vadd.f32 %v3312, %v2953
        %v3314 = vadd.f32 %v3313, %v2969
        %v3315 = vadd.f32 %v3314, %v2985
        %v3316 = vadd.f32 %v3315, %v3001
        %v3317 = vadd.f32 %v3316, %v3017
        %v3318 = vrot.slane %v3317, 4
        %v3319 = vadd.f32 %v3317, %v3318
        %v3320 = vrot.slane %v3319, 2
        %v3321 = vadd.f32 %v3319, %v3320
        %v3322 = vrot.slane %v3321, 1
        %v3323 = vadd.f32 %v3321, %v3322
        %v3324 = vadd.f32 %v2522, %v2538
        %v3325 = vadd.f32 %v3324, %v2554
        %v3326 = vadd.f32 %v3325, %v2570
        %v3327 = vadd.f32 %v3326, %v2586
        %v3328 = vadd.f32 %v3327, %v2602
        %v3329 = vadd.f32 %v3328, %v2618
        %v3330 = vadd.f32 %v3329, %v2634
        %v3331 = vadd.f32 %v3330, %v2650
        %v3332 = vadd.f32 %v3331, %v2666
        %v3333 = vadd.f32 %v3332, %v2682
        %v3334 = vadd.f32 %v3333, %v2698
        %v3335 = vadd.f32 %v3334, %v2714
        %v3336 = vadd.f32 %v3335, %v2730
        %v3337 = vadd.f32 %v3336, %v2746
        %v3338 = vadd.f32 %v3337, %v2762
        %v3339 = vadd.f32 %v3338, %v2778
        %v3340 = vadd.f32 %v3339, %v2794
        %v3341 = vadd.f32 %v3340, %v2810
        %v3342 = vadd.f32 %v3341, %v2826
        %v3343 = vadd.f32 %v3342, %v2842
        %v3344 = vadd.f32 %v3343, %v2858
        %v3345 = vadd.f32 %v3344, %v2874
        %v3346 = vadd.f32 %v3345, %v2890
        %v3347 = vadd.f32 %v3346, %v2906
        %v3348 = vadd.f32 %v3347, %v2922
        %v3349 = vadd.f32 %v3348, %v2938
        %v3350 = vadd.f32 %v3349, %v2954
        %v3351 = vadd.f32 %v3350, %v2970
        %v3352 = vadd.f32 %v3351, %v2986
        %v3353 = vadd.f32 %v3352, %v3002
        %v3354 = vadd.f32 %v3353, %v3018
        %v3355 = vrot.slane %v3354, 4
        %v3356 = vadd.f32 %v3354, %v3355
        %v3357 = vrot.slane %v3356, 2
        %v3358 = vadd.f32 %v3356, %v3357
        %v3359 = vrot.slane %v3358, 1
        %v3360 = vadd.f32 %v3358, %v3359
        %v3361 = vadd.f32 %v2523, %v2539
        %v3362 = vadd.f32 %v3361, %v2555
        %v3363 = vadd.f32 %v3362, %v2571
        %v3364 = vadd.f32 %v3363, %v2587
        %v3365 = vadd.f32 %v3364, %v2603
        %v3366 = vadd.f32 %v3365, %v2619
        %v3367 = vadd.f32 %v3366, %v2635
        %v3368 = vadd.f32 %v3367, %v2651
        %v3369 = vadd.f32 %v3368, %v2667
        %v3370 = vadd.f32 %v3369, %v2683
        %v3371 = vadd.f32 %v3370, %v2699
        %v3372 = vadd.f32 %v3371, %v2715
        %v3373 = vadd.f32 %v3372, %v2731
        %v3374 = vadd.f32 %v3373, %v2747
        %v3375 = vadd.f32 %v3374, %v2763
        %v3376 = vadd.f32 %v3375, %v2779
        %v3377 = vadd.f32 %v3376, %v2795
        %v3378 = vadd.f32 %v3377, %v2811
        %v3379 = vadd.f32 %v3378, %v2827
        %v3380 = vadd.f32 %v3379, %v2843
        %v3381 = vadd.f32 %v3380, %v2859
        %v3382 = vadd.f32 %v3381, %v2875
        %v3383 = vadd.f32 %v3382, %v2891
        %v3384 = vadd.f32 %v3383, %v2907
        %v3385 = vadd.f32 %v3384, %v2923
        %v3386 = vadd.f32 %v3385, %v2939
        %v3387 = vadd.f32 %v3386, %v2955
        %v3388 = vadd.f32 %v3387, %v2971
        %v3389 = vadd.f32 %v3388, %v2987
        %v3390 = vadd.f32 %v3389, %v3003
        %v3391 = vadd.f32 %v3390, %v3019
        %v3392 = vrot.slane %v3391, 4
        %v3393 = vadd.f32 %v3391, %v3392
        %v3394 = vrot.slane %v3393, 2
        %v3395 = vadd.f32 %v3393, %v3394
        %v3396 = vrot.slane %v3395, 1
        %v3397 = vadd.f32 %v3395, %v3396
        %v3398 = vadd.f32 %v2524, %v2540
        %v3399 = vadd.f32 %v3398, %v2556
        %v3400 = vadd.f32 %v3399, %v2572
        %v3401 = vadd.f32 %v3400, %v2588
        %v3402 = vadd.f32 %v3401, %v2604
        %v3403 = vadd.f32 %v3402, %v2620
        %v3404 = vadd.f32 %v3403, %v2636
        %v3405 = vadd.f32 %v3404, %v2652
        %v3406 = vadd.f32 %v3405, %v2668
        %v3407 = vadd.f32 %v3406, %v2684
        %v3408 = vadd.f32 %v3407, %v2700
        %v3409 = vadd.f32 %v3408, %v2716
        %v3410 = vadd.f32 %v3409, %v2732
        %v3411 = vadd.f32 %v3410, %v2748
        %v3412 = vadd.f32 %v3411, %v2764
        %v3413 = vadd.f32 %v3412, %v2780
        %v3414 = vadd.f32 %v3413, %v2796
        %v3415 = vadd.f32 %v3414, %v2812
        %v3416 = vadd.f32 %v3415, %v2828
        %v3417 = vadd.f32 %v3416, %v2844
        %v3418 = vadd.f32 %v3417, %v2860
        %v3419 = vadd.f32 %v3418, %v2876
        %v3420 = vadd.f32 %v3419, %v2892
        %v3421 = vadd.f32 %v3420, %v2908
        %v3422 = vadd.f32 %v3421, %v2924
        %v3423 = vadd.f32 %v3422, %v2940
        %v3424 = vadd.f32 %v3423, %v2956
        %v3425 = vadd.f32 %v3424, %v2972
        %v3426 = vadd.f32 %v3425, %v2988
        %v3427 = vadd.f32 %v3426, %v3004
        %v3428 = vadd.f32 %v3427, %v3020
        %v3429 = vrot.slane %v3428, 4
        %v3430 = vadd.f32 %v3428, %v3429
        %v3431 = vrot.slane %v3430, 2
        %v3432 = vadd.f32 %v3430, %v3431
        %v3433 = vrot.slane %v3432, 1
        %v3434 = vadd.f32 %v3432, %v3433
        %v3435 = vadd.f32 %v2525, %v2541
        %v3436 = vadd.f32 %v3435, %v2557
        %v3437 = vadd.f32 %v3436, %v2573
        %v3438 = vadd.f32 %v3437, %v2589
        %v3439 = vadd.f32 %v3438, %v2605
        %v3440 = vadd.f32 %v3439, %v2621
        %v3441 = vadd.f32 %v3440, %v2637
        %v3442 = vadd.f32 %v3441, %v2653
        %v3443 = vadd.f32 %v3442, %v2669
        %v3444 = vadd.f32 %v3443, %v2685
        %v3445 = vadd.f32 %v3444, %v2701
        %v3446 = vadd.f32 %v3445, %v2717
        %v3447 = vadd.f32 %v3446, %v2733
        %v3448 = vadd.f32 %v3447, %v2749
        %v3449 = vadd.f32 %v3448, %v2765
        %v3450 = vadd.f32 %v3449, %v2781
        %v3451 = vadd.f32 %v3450, %v2797
        %v3452 = vadd.f32 %v3451, %v2813
        %v3453 = vadd.f32 %v3452, %v2829
        %v3454 = vadd.f32 %v3453, %v2845
        %v3455 = vadd.f32 %v3454, %v2861
        %v3456 = vadd.f32 %v3455, %v2877
        %v3457 = vadd.f32 %v3456, %v2893
        %v3458 = vadd.f32 %v3457, %v2909
        %v3459 = vadd.f32 %v3458, %v2925
        %v3460 = vadd.f32 %v3459, %v2941
        %v3461 = vadd.f32 %v3460, %v2957
        %v3462 = vadd.f32 %v3461, %v2973
        %v3463 = vadd.f32 %v3462, %v2989
        %v3464 = vadd.f32 %v3463, %v3005
        %v3465 = vadd.f32 %v3464, %v3021
        %v3466 = vrot.slane %v3465, 4
        %v3467 = vadd.f32 %v3465, %v3466
        %v3468 = vrot.slane %v3467, 2
        %v3469 = vadd.f32 %v3467, %v3468
        %v3470 = vrot.slane %v3469, 1
        %v3471 = vadd.f32 %v3469, %v3470
        %v3472 = vadd.f32 %v2526, %v2542
        %v3473 = vadd.f32 %v3472, %v2558
        %v3474 = vadd.f32 %v3473, %v2574
        %v3475 = vadd.f32 %v3474, %v2590
        %v3476 = vadd.f32 %v3475, %v2606
        %v3477 = vadd.f32 %v3476, %v2622
        %v3478 = vadd.f32 %v3477, %v2638
        %v3479 = vadd.f32 %v3478, %v2654
        %v3480 = vadd.f32 %v3479, %v2670
        %v3481 = vadd.f32 %v3480, %v2686
        %v3482 = vadd.f32 %v3481, %v2702
        %v3483 = vadd.f32 %v3482, %v2718
        %v3484 = vadd.f32 %v3483, %v2734
        %v3485 = vadd.f32 %v3484, %v2750
        %v3486 = vadd.f32 %v3485, %v2766
        %v3487 = vadd.f32 %v3486, %v2782
        %v3488 = vadd.f32 %v3487, %v2798
        %v3489 = vadd.f32 %v3488, %v2814
        %v3490 = vadd.f32 %v3489, %v2830
        %v3491 = vadd.f32 %v3490, %v2846
        %v3492 = vadd.f32 %v3491, %v2862
        %v3493 = vadd.f32 %v3492, %v2878
        %v3494 = vadd.f32 %v3493, %v2894
        %v3495 = vadd.f32 %v3494, %v2910
        %v3496 = vadd.f32 %v3495, %v2926
        %v3497 = vadd.f32 %v3496, %v2942
        %v3498 = vadd.f32 %v3497, %v2958
        %v3499 = vadd.f32 %v3498, %v2974
        %v3500 = vadd.f32 %v3499, %v2990
        %v3501 = vadd.f32 %v3500, %v3006
        %v3502 = vadd.f32 %v3501, %v3022
        %v3503 = vrot.slane %v3502, 4
        %v3504 = vadd.f32 %v3502, %v3503
        %v3505 = vrot.slane %v3504, 2
        %v3506 = vadd.f32 %v3504, %v3505
        %v3507 = vrot.slane %v3506, 1
        %v3508 = vadd.f32 %v3506, %v3507
        %v3509 = vadd.f32 %v2527, %v2543
        %v3510 = vadd.f32 %v3509, %v2559
        %v3511 = vadd.f32 %v3510, %v2575
        %v3512 = vadd.f32 %v3511, %v2591
        %v3513 = vadd.f32 %v3512, %v2607
        %v3514 = vadd.f32 %v3513, %v2623
        %v3515 = vadd.f32 %v3514, %v2639
        %v3516 = vadd.f32 %v3515, %v2655
        %v3517 = vadd.f32 %v3516, %v2671
        %v3518 = vadd.f32 %v3517, %v2687
        %v3519 = vadd.f32 %v3518, %v2703
        %v3520 = vadd.f32 %v3519, %v2719
        %v3521 = vadd.f32 %v3520, %v2735
        %v3522 = vadd.f32 %v3521, %v2751
        %v3523 = vadd.f32 %v3522, %v2767
        %v3524 = vadd.f32 %v3523, %v2783
        %v3525 = vadd.f32 %v3524, %v2799
        %v3526 = vadd.f32 %v3525, %v2815
        %v3527 = vadd.f32 %v3526, %v2831
        %v3528 = vadd.f32 %v3527, %v2847
        %v3529 = vadd.f32 %v3528, %v2863
        %v3530 = vadd.f32 %v3529, %v2879
        %v3531 = vadd.f32 %v3530, %v2895
        %v3532 = vadd.f32 %v3531, %v2911
        %v3533 = vadd.f32 %v3532, %v2927
        %v3534 = vadd.f32 %v3533, %v2943
        %v3535 = vadd.f32 %v3534, %v2959
        %v3536 = vadd.f32 %v3535, %v2975
        %v3537 = vadd.f32 %v3536, %v2991
        %v3538 = vadd.f32 %v3537, %v3007
        %v3539 = vadd.f32 %v3538, %v3023
        %v3540 = vrot.slane %v3539, 4
        %v3541 = vadd.f32 %v3539, %v3540
        %v3542 = vrot.slane %v3541, 2
        %v3543 = vadd.f32 %v3541, %v3542
        %v3544 = vrot.slane %v3543, 1
        %v3545 = vadd.f32 %v3543, %v3544
        %v3546 = vadd.f32 %v2528, %v2544
        %v3547 = vadd.f32 %v3546, %v2560
        %v3548 = vadd.f32 %v3547, %v2576
        %v3549 = vadd.f32 %v3548, %v2592
        %v3550 = vadd.f32 %v3549, %v2608
        %v3551 = vadd.f32 %v3550, %v2624
        %v3552 = vadd.f32 %v3551, %v2640
        %v3553 = vadd.f32 %v3552, %v2656
        %v3554 = vadd.f32 %v3553, %v2672
        %v3555 = vadd.f32 %v3554, %v2688
        %v3556 = vadd.f32 %v3555, %v2704
        %v3557 = vadd.f32 %v3556, %v2720
        %v3558 = vadd.f32 %v3557, %v2736
        %v3559 = vadd.f32 %v3558, %v2752
        %v3560 = vadd.f32 %v3559, %v2768
        %v3561 = vadd.f32 %v3560, %v2784
        %v3562 = vadd.f32 %v3561, %v2800
        %v3563 = vadd.f32 %v3562, %v2816
        %v3564 = vadd.f32 %v3563, %v2832
        %v3565 = vadd.f32 %v3564, %v2848
        %v3566 = vadd.f32 %v3565, %v2864
        %v3567 = vadd.f32 %v3566, %v2880
        %v3568 = vadd.f32 %v3567, %v2896
        %v3569 = vadd.f32 %v3568, %v2912
        %v3570 = vadd.f32 %v3569, %v2928
        %v3571 = vadd.f32 %v3570, %v2944
        %v3572 = vadd.f32 %v3571, %v2960
        %v3573 = vadd.f32 %v3572, %v2976
        %v3574 = vadd.f32 %v3573, %v2992
        %v3575 = vadd.f32 %v3574, %v3008
        %v3576 = vadd.f32 %v3575, %v3024
        %v3577 = vrot.slane %v3576, 4
        %v3578 = vadd.f32 %v3576, %v3577
        %v3579 = vrot.slane %v3578, 2
        %v3580 = vadd.f32 %v3578, %v3579
        %v3581 = vrot.slane %v3580, 1
        %v3582 = vadd.f32 %v3580, %v3581
        %v3583 = vadd.f32 %v2529, %v2545
        %v3584 = vadd.f32 %v3583, %v2561
        %v3585 = vadd.f32 %v3584, %v2577
        %v3586 = vadd.f32 %v3585, %v2593
        %v3587 = vadd.f32 %v3586, %v2609
        %v3588 = vadd.f32 %v3587, %v2625
        %v3589 = vadd.f32 %v3588, %v2641
        %v3590 = vadd.f32 %v3589, %v2657
        %v3591 = vadd.f32 %v3590, %v2673
        %v3592 = vadd.f32 %v3591, %v2689
        %v3593 = vadd.f32 %v3592, %v2705
        %v3594 = vadd.f32 %v3593, %v2721
        %v3595 = vadd.f32 %v3594, %v2737
        %v3596 = vadd.f32 %v3595, %v2753
        %v3597 = vadd.f32 %v3596, %v2769
        %v3598 = vadd.f32 %v3597, %v2785
        %v3599 = vadd.f32 %v3598, %v2801
        %v3600 = vadd.f32 %v3599, %v2817
        %v3601 = vadd.f32 %v3600, %v2833
        %v3602 = vadd.f32 %v3601, %v2849
        %v3603 = vadd.f32 %v3602, %v2865
        %v3604 = vadd.f32 %v3603, %v2881
        %v3605 = vadd.f32 %v3604, %v2897
        %v3606 = vadd.f32 %v3605, %v2913
        %v3607 = vadd.f32 %v3606, %v2929
        %v3608 = vadd.f32 %v3607, %v2945
        %v3609 = vadd.f32 %v3608, %v2961
        %v3610 = vadd.f32 %v3609, %v2977
        %v3611 = vadd.f32 %v3610, %v2993
        %v3612 = vadd.f32 %v3611, %v3009
        %v3613 = vadd.f32 %v3612, %v3025
        %v3614 = vrot.slane %v3613, 4
        %v3615 = vadd.f32 %v3613, %v3614
        %v3616 = vrot.slane %v3615, 2
        %v3617 = vadd.f32 %v3615, %v3616
        %v3618 = vrot.slane %v3617, 1
        %v3619 = vadd.f32 %v3617, %v3618
        %v3636 = vcombine.low %v3064, %v3101
        %v3637 = vcombine.low %v3138, %v3175
        %v3638 = vcombine.low %v3212, %v3249
        %v3639 = vcombine.low %v3286, %v3323
        %v3641 = vunpack.c.l.s4 1966171168
        %v3642 = vunpack.c.0.s8 %v3641
        %v3643 = vlaneseq
        %v3644 = vshrl.u32 %v3643, 7
        %v3645 = vsub.s32 %v3642, %v3644
        %v3646 = vrot.slane %v3636, %v3645
        %v3648 = vunpack.c.l.s4 1966171168
        %v3649 = vunpack.c.0.s8 %v3648
        %v3650 = vlaneseq
        %v3651 = vshrl.u32 %v3650, 7
        %v3652 = vsub.s32 %v3649, %v3651
        %v3653 = vrot.slane %v3637, %v3652
        %v3655 = vunpack.c.l.s4 1966171168
        %v3656 = vunpack.c.0.s8 %v3655
        %v3657 = vlaneseq
        %v3658 = vshrl.u32 %v3657, 7
        %v3659 = vsub.s32 %v3656, %v3658
        %v3660 = vrot.slane %v3638, %v3659
        %v3662 = vunpack.c.l.s4 1966171168
        %v3663 = vunpack.c.0.s8 %v3662
        %v3664 = vlaneseq
        %v3665 = vshrl.u32 %v3664, 7
        %v3666 = vsub.s32 %v3663, %v3665
        %v3667 = vrot.slane %v3639, %v3666
        %v3668 = vcombine.low %v3646, %v3653
        %v3669 = vcombine.low %v3660, %v3667
        %v3671 = vunpack.c.l.s4 1966171168
        %v3672 = vunpack.c.0.s8 %v3671
        %v3673 = vlaneseq
        %v3674 = vshrl.u32 %v3673, 7
        %v3675 = vsub.s32 %v3672, %v3674
        %v3676 = vrot.slane %v3668, %v3675
        %v3678 = vunpack.c.l.s4 1966171168
        %v3679 = vunpack.c.0.s8 %v3678
        %v3680 = vlaneseq
        %v3681 = vshrl.u32 %v3680, 7
        %v3682 = vsub.s32 %v3679, %v3681
        %v3683 = vrot.slane %v3669, %v3682
        %v3684 = vcombine.low %v3676, %v3683
        %v3685 = vcombine.low %v3360, %v3397
        %v3686 = vcombine.low %v3434, %v3471
        %v3687 = vcombine.low %v3508, %v3545
        %v3688 = vcombine.low %v3582, %v3619
        %v3690 = vunpack.c.l.s4 1966171168
        %v3691 = vunpack.c.0.s8 %v3690
        %v3692 = vlaneseq
        %v3693 = vshrl.u32 %v3692, 7
        %v3694 = vsub.s32 %v3691, %v3693
        %v3695 = vrot.slane %v3685, %v3694
        %v3697 = vunpack.c.l.s4 1966171168
        %v3698 = vunpack.c.0.s8 %v3697
        %v3699 = vlaneseq
        %v3700 = vshrl.u32 %v3699, 7
        %v3701 = vsub.s32 %v3698, %v3700
        %v3702 = vrot.slane %v3686, %v3701
        %v3704 = vunpack.c.l.s4 1966171168
        %v3705 = vunpack.c.0.s8 %v3704
        %v3706 = vlaneseq
        %v3707 = vshrl.u32 %v3706, 7
        %v3708 = vsub.s32 %v3705, %v3707
        %v3709 = vrot.slane %v3687, %v3708
        %v3711 = vunpack.c.l.s4 1966171168
        %v3712 = vunpack.c.0.s8 %v3711
        %v3713 = vlaneseq
        %v3714 = vshrl.u32 %v3713, 7
        %v3715 = vsub.s32 %v3712, %v3714
        %v3716 = vrot.slane %v3688, %v3715
        %v3717 = vcombine.low %v3695, %v3702
        %v3718 = vcombine.low %v3709, %v3716
        %v3720 = vunpack.c.l.s4 1966171168
        %v3721 = vunpack.c.0.s8 %v3720
        %v3722 = vlaneseq
        %v3723 = vshrl.u32 %v3722, 7
        %v3724 = vsub.s32 %v3721, %v3723
        %v3725 = vrot.slane %v3717, %v3724
        %v3727 = vunpack.c.l.s4 1966171168
        %v3728 = vunpack.c.0.s8 %v3727
        %v3729 = vlaneseq
        %v3730 = vshrl.u32 %v3729, 7
        %v3731 = vsub.s32 %v3728, %v3730
        %v3732 = vrot.slane %v3718, %v3731
        %v3733 = vcombine.low %v3725, %v3732
        %v3736 = vadd.f32 %v3026, %v3684
        %v3737 = vadd.f32 %v3027, %v3733
        %3738 = vst [vmem:[%s222] sm:$0xff] %v3736
        %3739 = vst [vmem:[%s222 + $0x8] sm:$0xff] %v3737
        // Predicated region
        $region45: #{direction_net.2} parent=31 // pred_check
          %p3740 = pneg %p223
        $region46: #{direction_net.2} parent=31 // pred_check_branch
          %3742 = sbr.rel (%p3740) target = $region48
        $region47: #{direction_net.2} parent=31 // pred_region
          %v3743 = vld [vmem:[%s222] sm:$0xff]
          %v3744 = vld [vmem:[%s222 + $0x8] sm:$0xff]
          %v3745 = vmul.f32 %v3743, 0.00390625
          %v3746 = vmul.f32 %v3744, 0.00390625
          %3747 = vst [vmem:[%s222] sm:$0xff] %v3745
          %3748 = vst [vmem:[%s222 + $0x8] sm:$0xff] %v3746
        $region48: #{direction_net.2} parent=31 // pred_fallthru
          _
        %p3749 = scmp.lt.s32.totalorder %s20, 7
        %s3750 = scalar_select %p3749, %s20, 7
        %s3751 = smul.addr %s3750, 16
        %s3752 = scalar_lea.vmem %s3, %s3751
        // Predicated region
        $region49: #{direction_net.2} parent=31 // pred_check
          %p3753 = pneg %p116
        $region50: #{direction_net.2} parent=31 // pred_check_branch
          %3755 = sbr.rel (%p3753) target = $region52
        $region51: #{direction_net.2} parent=31 // pred_region
          _
        $region52: #{direction_net.2} parent=31 // pred_fallthru
          _
      $region32: #{direction_net.2} parent=5 // pred_fallthru
        _
      %p3756 = scmp.le.s32.totalorder 2, %s11
      // Predicated region
      $region53: #{direction_net.2} parent=5 // pred_check
        %p3757 = pneg %p3756
      $region54: #{direction_net.2} parent=5 // pred_check_branch
        %3759 = sbr.rel (%p3757) target = $region56
      $region55: #{direction_net.2} parent=5 // pred_region
        %s3760 = ssub.s32 %s11, 2
        // Predicated region
        $region57: #{direction_net.2} parent=55 // pred_check
          %p3761 = pneg %p122
        $region58: #{direction_net.2} parent=55 // pred_check_branch
          %3763 = sbr.rel (%p3761) target = $region60
        $region59: #{direction_net.2} parent=55 // pred_region
          %p3764 = scmp.lt.s32.totalorder %s22, 7
          %s3765 = scalar_select %p3764, %s22, 7
          %s3766 = smul.addr %s3765, 16
          %s3767 = scalar_lea.vmem %s3, %s3766
        $region60: #{direction_net.2} parent=55 // pred_fallthru
          _
      $region56: #{direction_net.2} parent=5 // pred_fallthru
        _
    $region6: #{direction_net.2} parent=1 // loop_footer
      %s15 = sadd.s32 1, %s11
    $region7: #{direction_net.2} parent=1 // loop_footer_branch
      %10 = sbr.rel target = $region3
    $region8: #{direction_net.2} parent=1 // loop_exit
      _
    %3768 = vsyncpa [#allocation3], 1
    %s3769 = scalar_lea.sflag [#allocation3], 1
    %3770 = vsyncpa %s3769, 1
    %3771 = vsyncpa [#allocation5], 1

// kernel: direction_net.3
$region0: #{direction_net.3}
  #allocation0 [shape = 'u32[]', space=smem, size = 0x4, offset = 0x4, fixed_abs, tag = 'smem constant byte address 0x4 - core index']
  #allocation1 [shape = 'u32[144,128]{1,0:T(1,128)}', space=vmem, size = 0x12000, scoped, tag = 'internal scratch']
  %s0 = inlined_call_operand.vmem [shape: f32[8,2048], index: 0, kind: input, shape index: {}]
  %s1 = inlined_call_operand.vmem [shape: f32[8,2], index: 1, kind: input, shape index: {}]
  %s2 = inlined_call_operand.vmem [shape: bf16[2048,512], index: 2, kind: input, shape index: {}]
  %s3 = inlined_call_operand.vmem [shape: f32[1,512], index: 3, kind: input, shape index: {}]
  %s4 = inlined_call_operand.vmem [shape: f32[2,256], index: 4, kind: input, shape index: {}]
  %s5 = inlined_call_operand.vmem [shape: f32[1,256], index: 5, kind: input, shape index: {}]
  %s6 = inlined_call_operand.vmem [shape: bf16[512,256], index: 6, kind: input, shape index: {}]
  %s7 = inlined_call_operand.vmem [shape: bf16[256,256], index: 7, kind: input, shape index: {}]
  %s8 = inlined_call_operand.vmem [shape: f32[1,256], index: 8, kind: input, shape index: {}]
  %s9 = inlined_call_operand.vmem [shape: bf16[256,128], index: 9, kind: input, shape index: {}]
  %s10 = inlined_call_operand.vmem [shape: f32[1,128], index: 10, kind: input, shape index: {}]
  %s11 = inlined_call_operand.vmem [shape: f32[8,128], index: 11, kind: output, shape index: {}]
  %s12 = sld [smem:[#allocation0]]
  $region54: #{direction_net.3} parent=0
    _
  %s14 = ssub.s32 1, %s12
  %s15 = scalar_select 0, %s14, %s12
  // Predicated region
  $region2: #{direction_net.3} parent=0 // pred_check
    _
  $region3: #{direction_net.3} parent=0 // pred_check_branch
    %17 = sbr.rel (0) target = $region5
  $region4: #{direction_net.3} parent=0 // pred_region
    _
  $region5: #{direction_net.3} parent=0 // pred_fallthru
    _
  // Predicated region
  $region6: #{direction_net.3} parent=0 // pred_check
    _
  $region7: #{direction_net.3} parent=0 // pred_check_branch
    %19 = sbr.rel (0) target = $region9
  $region8: #{direction_net.3} parent=0 // pred_region
    _
  $region9: #{direction_net.3} parent=0 // pred_fallthru
    _
  // Predicated region
  $region10: #{direction_net.3} parent=0 // pred_check
    _
  $region11: #{direction_net.3} parent=0 // pred_check_branch
    %21 = sbr.rel (0) target = $region13
  $region12: #{direction_net.3} parent=0 // pred_region
    _
  $region13: #{direction_net.3} parent=0 // pred_fallthru
    _
  // Predicated region
  $region14: #{direction_net.3} parent=0 // pred_check
    _
  $region15: #{direction_net.3} parent=0 // pred_check_branch
    %23 = sbr.rel (0) target = $region17
  $region16: #{direction_net.3} parent=0 // pred_region
    _
  $region17: #{direction_net.3} parent=0 // pred_fallthru
    _
  // Predicated region
  $region18: #{direction_net.3} parent=0 // pred_check
    _
  $region19: #{direction_net.3} parent=0 // pred_check_branch
    %25 = sbr.rel (0) target = $region21
  $region20: #{direction_net.3} parent=0 // pred_region
    _
  $region21: #{direction_net.3} parent=0 // pred_fallthru
    _
  // Predicated region
  $region22: #{direction_net.3} parent=0 // pred_check
    _
  $region23: #{direction_net.3} parent=0 // pred_check_branch
    %27 = sbr.rel (0) target = $region25
  $region24: #{direction_net.3} parent=0 // pred_region
    _
  $region25: #{direction_net.3} parent=0 // pred_fallthru
    _
  // Predicated region
  $region26: #{direction_net.3} parent=0 // pred_check
    _
  $region27: #{direction_net.3} parent=0 // pred_check_branch
    %29 = sbr.rel (0) target = $region29
  $region28: #{direction_net.3} parent=0 // pred_region
    _
  $region29: #{direction_net.3} parent=0 // pred_fallthru
    _
  // Predicated region
  $region30: #{direction_net.3} parent=0 // pred_check
    _
  $region31: #{direction_net.3} parent=0 // pred_check_branch
    %31 = sbr.rel (0) target = $region33
  $region32: #{direction_net.3} parent=0 // pred_region
    _
  $region33: #{direction_net.3} parent=0 // pred_fallthru
    _
  // Predicated region
  $region34: #{direction_net.3} parent=0 // pred_check
    _
  $region35: #{direction_net.3} parent=0 // pred_check_branch
    %33 = sbr.rel (0) target = $region37
  $region36: #{direction_net.3} parent=0 // pred_region
    _
  $region37: #{direction_net.3} parent=0 // pred_fallthru
    _
  // Predicated region
  $region38: #{direction_net.3} parent=0 // pred_check
    _
  $region39: #{direction_net.3} parent=0 // pred_check_branch
    %35 = sbr.rel (0) target = $region41
  $region40: #{direction_net.3} parent=0 // pred_region
    _
  $region41: #{direction_net.3} parent=0 // pred_fallthru
    _
  // Predicated region
  $region42: #{direction_net.3} parent=0 // pred_check
    _
  $region43: #{direction_net.3} parent=0 // pred_check_branch
    %37 = sbr.rel (0) target = $region45
  $region44: #{direction_net.3} parent=0 // pred_region
    _
  $region45: #{direction_net.3} parent=0 // pred_fallthru
    _
  %v39 = vld [vmem:[%s0] sm:$0xff]
  %v40 = vld [vmem:[%s0 + $0x8] sm:$0xff]
  %v41 = vld [vmem:[%s0 + $0x10] sm:$0xff]
  %v42 = vld [vmem:[%s0 + $0x18] sm:$0xff]
  %v43 = vld [vmem:[%s0 + $0x20] sm:$0xff]
  %v44 = vld [vmem:[%s0 + $0x28] sm:$0xff]
  %v45 = vld [vmem:[%s0 + $0x30] sm:$0xff]
  %v46 = vld [vmem:[%s0 + $0x38] sm:$0xff]
  %v47 = vld [vmem:[%s0 + $0x40] sm:$0xff]
  %v48 = vld [vmem:[%s0 + $0x48] sm:$0xff]
  %v49 = vld [vmem:[%s0 + $0x50] sm:$0xff]
  %v50 = vld [vmem:[%s0 + $0x58] sm:$0xff]
  %v51 = vld [vmem:[%s0 + $0x60] sm:$0xff]
  %v52 = vld [vmem:[%s0 + $0x68] sm:$0xff]
  %v53 = vld [vmem:[%s0 + $0x70] sm:$0xff]
  %v54 = vld [vmem:[%s0 + $0x78] sm:$0xff]
  %v55 = vpack.c.bf16 %v39, %v39
  %v56 = vpack.c.bf16 %v40, %v40
  %v57 = vpack.c.bf16 %v41, %v41
  %v58 = vpack.c.bf16 %v42, %v42
  %v59 = vpack.c.bf16 %v43, %v43
  %v60 = vpack.c.bf16 %v44, %v44
  %v61 = vpack.c.bf16 %v45, %v45
  %v62 = vpack.c.bf16 %v46, %v46
  %v63 = vpack.c.bf16 %v47, %v47
  %v64 = vpack.c.bf16 %v48, %v48
  %v65 = vpack.c.bf16 %v49, %v49
  %v66 = vpack.c.bf16 %v50, %v50
  %v67 = vpack.c.bf16 %v51, %v51
  %v68 = vpack.c.bf16 %v52, %v52
  %v69 = vpack.c.bf16 %v53, %v53
  %v70 = vpack.c.bf16 %v54, %v54
  %v71 = vld [vmem:[%s2] sm:$0xff]
  %v72 = vld [vmem:[%s2 + $0x8] sm:$0xff]
  %v73 = vld [vmem:[%s2 + $0x10] sm:$0xff]
  %v74 = vld [vmem:[%s2 + $0x18] sm:$0xff]
  %v75 = vld [vmem:[%s2 + $0x20] sm:$0xff]
  %v76 = vld [vmem:[%s2 + $0x28] sm:$0xff]
  %v77 = vld [vmem:[%s2 + $0x30] sm:$0xff]
  %v78 = vld [vmem:[%s2 + $0x38] sm:$0xff]
  %v79 = vld [vmem:[%s2 + $0x40] sm:$0xff]
  %v80 = vld [vmem:[%s2 + $0x48] sm:$0xff]
  %v81 = vld [vmem:[%s2 + $0x50] sm:$0xff]
  %v82 = vld [vmem:[%s2 + $0x58] sm:$0xff]
  %v83 = vld [vmem:[%s2 + $0x60] sm:$0xff]
  %v84 = vld [vmem:[%s2 + $0x68] sm:$0xff]
  %v85 = vld [vmem:[%s2 + $0x70] sm:$0xff]
  %v86 = vld [vmem:[%s2 + $0x78] sm:$0xff]
  %v87 = vld [vmem:[%s2 + $0x80] sm:$0xff]
  %v88 = vld [vmem:[%s2 + $0x88] sm:$0xff]
  %v89 = vld [vmem:[%s2 + $0x90] sm:$0xff]
  %v90 = vld [vmem:[%s2 + $0x98] sm:$0xff]
  %v91 = vld [vmem:[%s2 + $0xa0] sm:$0xff]
  %v92 = vld [vmem:[%s2 + $0xa8] sm:$0xff]
  %v93 = vld [vmem:[%s2 + $0xb0] sm:$0xff]
  %v94 = vld [vmem:[%s2 + $0xb8] sm:$0xff]
  %v95 = vld [vmem:[%s2 + $0xc0] sm:$0xff]
  %v96 = vld [vmem:[%s2 + $0xc8] sm:$0xff]
  %v97 = vld [vmem:[%s2 + $0xd0] sm:$0xff]
  %v98 = vld [vmem:[%s2 + $0xd8] sm:$0xff]
  %v99 = vld [vmem:[%s2 + $0xe0] sm:$0xff]
  %v100 = vld [vmem:[%s2 + $0xe8] sm:$0xff]
  %v101 = vld [vmem:[%s2 + $0xf0] sm:$0xff]
  %v102 = vld [vmem:[%s2 + $0xf8] sm:$0xff]
  %v103 = vld [vmem:[%s2 + $0x100] sm:$0xff]
  %v104 = vld [vmem:[%s2 + $0x108] sm:$0xff]
  %v105 = vld [vmem:[%s2 + $0x110] sm:$0xff]
  %v106 = vld [vmem:[%s2 + $0x118] sm:$0xff]
  %v107 = vld [vmem:[%s2 + $0x120] sm:$0xff]
  %v108 = vld [vmem:[%s2 + $0x128] sm:$0xff]
  %v109 = vld [vmem:[%s2 + $0x130] sm:$0xff]
  %v110 = vld [vmem:[%s2 + $0x138] sm:$0xff]
  %v111 = vld [vmem:[%s2 + $0x140] sm:$0xff]
  %v112 = vld [vmem:[%s2 + $0x148] sm:$0xff]
  %v113 = vld [vmem:[%s2 + $0x150] sm:$0xff]
  %v114 = vld [vmem:[%s2 + $0x158] sm:$0xff]
  %v115 = vld [vmem:[%s2 + $0x160] sm:$0xff]
  %v116 = vld [vmem:[%s2 + $0x168] sm:$0xff]
  %v117 = vld [vmem:[%s2 + $0x170] sm:$0xff]
  %v118 = vld [vmem:[%s2 + $0x178] sm:$0xff]
  %v119 = vld [vmem:[%s2 + $0x180] sm:$0xff]
  %v120 = vld [vmem:[%s2 + $0x188] sm:$0xff]
  %v121 = vld [vmem:[%s2 + $0x190] sm:$0xff]
  %v122 = vld [vmem:[%s2 + $0x198] sm:$0xff]
  %v123 = vld [vmem:[%s2 + $0x1a0] sm:$0xff]
  %v124 = vld [vmem:[%s2 + $0x1a8] sm:$0xff]
  %v125 = vld [vmem:[%s2 + $0x1b0] sm:$0xff]
  %v126 = vld [vmem:[%s2 + $0x1b8] sm:$0xff]
  %v127 = vld [vmem:[%s2 + $0x1c0] sm:$0xff]
  %v128 = vld [vmem:[%s2 + $0x1c8] sm:$0xff]
  %v129 = vld [vmem:[%s2 + $0x1d0] sm:$0xff]
  %v130 = vld [vmem:[%s2 + $0x1d8] sm:$0xff]
  %v131 = vld [vmem:[%s2 + $0x1e0] sm:$0xff]
  %v132 = vld [vmem:[%s2 + $0x1e8] sm:$0xff]
  %v133 = vld [vmem:[%s2 + $0x1f0] sm:$0xff]
  %v134 = vld [vmem:[%s2 + $0x1f8] sm:$0xff]
  %v135 = vld [vmem:[%s2 + $0x200] sm:$0xff]
  %v136 = vld [vmem:[%s2 + $0x208] sm:$0xff]
  %v137 = vld [vmem:[%s2 + $0x210] sm:$0xff]
  %v138 = vld [vmem:[%s2 + $0x218] sm:$0xff]
  %v139 = vld [vmem:[%s2 + $0x220] sm:$0xff]
  %v140 = vld [vmem:[%s2 + $0x228] sm:$0xff]
  %v141 = vld [vmem:[%s2 + $0x230] sm:$0xff]
  %v142 = vld [vmem:[%s2 + $0x238] sm:$0xff]
  %v143 = vld [vmem:[%s2 + $0x240] sm:$0xff]
  %v144 = vld [vmem:[%s2 + $0x248] sm:$0xff]
  %v145 = vld [vmem:[%s2 + $0x250] sm:$0xff]
  %v146 = vld [vmem:[%s2 + $0x258] sm:$0xff]
  %v147 = vld [vmem:[%s2 + $0x260] sm:$0xff]
  %v148 = vld [vmem:[%s2 + $0x268] sm:$0xff]
  %v149 = vld [vmem:[%s2 + $0x270] sm:$0xff]
  %v150 = vld [vmem:[%s2 + $0x278] sm:$0xff]
  %v151 = vld [vmem:[%s2 + $0x280] sm:$0xff]
  %v152 = vld [vmem:[%s2 + $0x288] sm:$0xff]
  %v153 = vld [vmem:[%s2 + $0x290] sm:$0xff]
  %v154 = vld [vmem:[%s2 + $0x298] sm:$0xff]
  %v155 = vld [vmem:[%s2 + $0x2a0] sm:$0xff]
  %v156 = vld [vmem:[%s2 + $0x2a8] sm:$0xff]
  %v157 = vld [vmem:[%s2 + $0x2b0] sm:$0xff]
  %v158 = vld [vmem:[%s2 + $0x2b8] sm:$0xff]
  %v159 = vld [vmem:[%s2 + $0x2c0] sm:$0xff]
  %v160 = vld [vmem:[%s2 + $0x2c8] sm:$0xff]
  %v161 = vld [vmem:[%s2 + $0x2d0] sm:$0xff]
  %v162 = vld [vmem:[%s2 + $0x2d8] sm:$0xff]
  %v163 = vld [vmem:[%s2 + $0x2e0] sm:$0xff]
  %v164 = vld [vmem:[%s2 + $0x2e8] sm:$0xff]
  %v165 = vld [vmem:[%s2 + $0x2f0] sm:$0xff]
  %v166 = vld [vmem:[%s2 + $0x2f8] sm:$0xff]
  %v167 = vld [vmem:[%s2 + $0x300] sm:$0xff]
  %v168 = vld [vmem:[%s2 + $0x308] sm:$0xff]
  %v169 = vld [vmem:[%s2 + $0x310] sm:$0xff]
  %v170 = vld [vmem:[%s2 + $0x318] sm:$0xff]
  %v171 = vld [vmem:[%s2 + $0x320] sm:$0xff]
  %v172 = vld [vmem:[%s2 + $0x328] sm:$0xff]
  %v173 = vld [vmem:[%s2 + $0x330] sm:$0xff]
  %v174 = vld [vmem:[%s2 + $0x338] sm:$0xff]
  %v175 = vld [vmem:[%s2 + $0x340] sm:$0xff]
  %v176 = vld [vmem:[%s2 + $0x348] sm:$0xff]
  %v177 = vld [vmem:[%s2 + $0x350] sm:$0xff]
  %v178 = vld [vmem:[%s2 + $0x358] sm:$0xff]
  %v179 = vld [vmem:[%s2 + $0x360] sm:$0xff]
  %v180 = vld [vmem:[%s2 + $0x368] sm:$0xff]
  %v181 = vld [vmem:[%s2 + $0x370] sm:$0xff]
  %v182 = vld [vmem:[%s2 + $0x378] sm:$0xff]
  %v183 = vld [vmem:[%s2 + $0x380] sm:$0xff]
  %v184 = vld [vmem:[%s2 + $0x388] sm:$0xff]
  %v185 = vld [vmem:[%s2 + $0x390] sm:$0xff]
  %v186 = vld [vmem:[%s2 + $0x398] sm:$0xff]
  %v187 = vld [vmem:[%s2 + $0x3a0] sm:$0xff]
  %v188 = vld [vmem:[%s2 + $0x3a8] sm:$0xff]
  %v189 = vld [vmem:[%s2 + $0x3b0] sm:$0xff]
  %v190 = vld [vmem:[%s2 + $0x3b8] sm:$0xff]
  %v191 = vld [vmem:[%s2 + $0x3c0] sm:$0xff]
  %v192 = vld [vmem:[%s2 + $0x3c8] sm:$0xff]
  %v193 = vld [vmem:[%s2 + $0x3d0] sm:$0xff]
  %v194 = vld [vmem:[%s2 + $0x3d8] sm:$0xff]
  %v195 = vld [vmem:[%s2 + $0x3e0] sm:$0xff]
  %v196 = vld [vmem:[%s2 + $0x3e8] sm:$0xff]
  %v197 = vld [vmem:[%s2 + $0x3f0] sm:$0xff]
  %v198 = vld [vmem:[%s2 + $0x3f8] sm:$0xff]
  %v199 = vld [vmem:[%s2 + $0x400] sm:$0xff]
  %v200 = vld [vmem:[%s2 + $0x408] sm:$0xff]
  %v201 = vld [vmem:[%s2 + $0x410] sm:$0xff]
  %v202 = vld [vmem:[%s2 + $0x418] sm:$0xff]
  %v203 = vld [vmem:[%s2 + $0x420] sm:$0xff]
  %v204 = vld [vmem:[%s2 + $0x428] sm:$0xff]
  %v205 = vld [vmem:[%s2 + $0x430] sm:$0xff]
  %v206 = vld [vmem:[%s2 + $0x438] sm:$0xff]
  %v207 = vld [vmem:[%s2 + $0x440] sm:$0xff]
  %v208 = vld [vmem:[%s2 + $0x448] sm:$0xff]
  %v209 = vld [vmem:[%s2 + $0x450] sm:$0xff]
  %v210 = vld [vmem:[%s2 + $0x458] sm:$0xff]
  %v211 = vld [vmem:[%s2 + $0x460] sm:$0xff]
  %v212 = vld [vmem:[%s2 + $0x468] sm:$0xff]
  %v213 = vld [vmem:[%s2 + $0x470] sm:$0xff]
  %v214 = vld [vmem:[%s2 + $0x478] sm:$0xff]
  %v215 = vld [vmem:[%s2 + $0x480] sm:$0xff]
  %v216 = vld [vmem:[%s2 + $0x488] sm:$0xff]
  %v217 = vld [vmem:[%s2 + $0x490] sm:$0xff]
  %v218 = vld [vmem:[%s2 + $0x498] sm:$0xff]
  %v219 = vld [vmem:[%s2 + $0x4a0] sm:$0xff]
  %v220 = vld [vmem:[%s2 + $0x4a8] sm:$0xff]
  %v221 = vld [vmem:[%s2 + $0x4b0] sm:$0xff]
  %v222 = vld [vmem:[%s2 + $0x4b8] sm:$0xff]
  %v223 = vld [vmem:[%s2 + $0x4c0] sm:$0xff]
  %v224 = vld [vmem:[%s2 + $0x4c8] sm:$0xff]
  %v225 = vld [vmem:[%s2 + $0x4d0] sm:$0xff]
  %v226 = vld [vmem:[%s2 + $0x4d8] sm:$0xff]
  %v227 = vld [vmem:[%s2 + $0x4e0] sm:$0xff]
  %v228 = vld [vmem:[%s2 + $0x4e8] sm:$0xff]
  %v229 = vld [vmem:[%s2 + $0x4f0] sm:$0xff]
  %v230 = vld [vmem:[%s2 + $0x4f8] sm:$0xff]
  %v231 = vld [vmem:[%s2 + $0x500] sm:$0xff]
  %v232 = vld [vmem:[%s2 + $0x508] sm:$0xff]
  %v233 = vld [vmem:[%s2 + $0x510] sm:$0xff]
  %v234 = vld [vmem:[%s2 + $0x518] sm:$0xff]
  %v235 = vld [vmem:[%s2 + $0x520] sm:$0xff]
  %v236 = vld [vmem:[%s2 + $0x528] sm:$0xff]
  %v237 = vld [vmem:[%s2 + $0x530] sm:$0xff]
  %v238 = vld [vmem:[%s2 + $0x538] sm:$0xff]
  %v239 = vld [vmem:[%s2 + $0x540] sm:$0xff]
  %v240 = vld [vmem:[%s2 + $0x548] sm:$0xff]
  %v241 = vld [vmem:[%s2 + $0x550] sm:$0xff]
  %v242 = vld [vmem:[%s2 + $0x558] sm:$0xff]
  %v243 = vld [vmem:[%s2 + $0x560] sm:$0xff]
  %v244 = vld [vmem:[%s2 + $0x568] sm:$0xff]
  %v245 = vld [vmem:[%s2 + $0x570] sm:$0xff]
  %v246 = vld [vmem:[%s2 + $0x578] sm:$0xff]
  %v247 = vld [vmem:[%s2 + $0x580] sm:$0xff]
  %v248 = vld [vmem:[%s2 + $0x588] sm:$0xff]
  %v249 = vld [vmem:[%s2 + $0x590] sm:$0xff]
  %v250 = vld [vmem:[%s2 + $0x598] sm:$0xff]
  %v251 = vld [vmem:[%s2 + $0x5a0] sm:$0xff]
  %v252 = vld [vmem:[%s2 + $0x5a8] sm:$0xff]
  %v253 = vld [vmem:[%s2 + $0x5b0] sm:$0xff]
  %v254 = vld [vmem:[%s2 + $0x5b8] sm:$0xff]
  %v255 = vld [vmem:[%s2 + $0x5c0] sm:$0xff]
  %v256 = vld [vmem:[%s2 + $0x5c8] sm:$0xff]
  %v257 = vld [vmem:[%s2 + $0x5d0] sm:$0xff]
  %v258 = vld [vmem:[%s2 + $0x5d8] sm:$0xff]
  %v259 = vld [vmem:[%s2 + $0x5e0] sm:$0xff]
  %v260 = vld [vmem:[%s2 + $0x5e8] sm:$0xff]
  %v261 = vld [vmem:[%s2 + $0x5f0] sm:$0xff]
  %v262 = vld [vmem:[%s2 + $0x5f8] sm:$0xff]
  %v263 = vld [vmem:[%s2 + $0x600] sm:$0xff]
  %v264 = vld [vmem:[%s2 + $0x608] sm:$0xff]
  %v265 = vld [vmem:[%s2 + $0x610] sm:$0xff]
  %v266 = vld [vmem:[%s2 + $0x618] sm:$0xff]
  %v267 = vld [vmem:[%s2 + $0x620] sm:$0xff]
  %v268 = vld [vmem:[%s2 + $0x628] sm:$0xff]
  %v269 = vld [vmem:[%s2 + $0x630] sm:$0xff]
  %v270 = vld [vmem:[%s2 + $0x638] sm:$0xff]
  %v271 = vld [vmem:[%s2 + $0x640] sm:$0xff]
  %v272 = vld [vmem:[%s2 + $0x648] sm:$0xff]
  %v273 = vld [vmem:[%s2 + $0x650] sm:$0xff]
  %v274 = vld [vmem:[%s2 + $0x658] sm:$0xff]
  %v275 = vld [vmem:[%s2 + $0x660] sm:$0xff]
  %v276 = vld [vmem:[%s2 + $0x668] sm:$0xff]
  %v277 = vld [vmem:[%s2 + $0x670] sm:$0xff]
  %v278 = vld [vmem:[%s2 + $0x678] sm:$0xff]
  %v279 = vld [vmem:[%s2 + $0x680] sm:$0xff]
  %v280 = vld [vmem:[%s2 + $0x688] sm:$0xff]
  %v281 = vld [vmem:[%s2 + $0x690] sm:$0xff]
  %v282 = vld [vmem:[%s2 + $0x698] sm:$0xff]
  %v283 = vld [vmem:[%s2 + $0x6a0] sm:$0xff]
  %v284 = vld [vmem:[%s2 + $0x6a8] sm:$0xff]
  %v285 = vld [vmem:[%s2 + $0x6b0] sm:$0xff]
  %v286 = vld [vmem:[%s2 + $0x6b8] sm:$0xff]
  %v287 = vld [vmem:[%s2 + $0x6c0] sm:$0xff]
  %v288 = vld [vmem:[%s2 + $0x6c8] sm:$0xff]
  %v289 = vld [vmem:[%s2 + $0x6d0] sm:$0xff]
  %v290 = vld [vmem:[%s2 + $0x6d8] sm:$0xff]
  %v291 = vld [vmem:[%s2 + $0x6e0] sm:$0xff]
  %v292 = vld [vmem:[%s2 + $0x6e8] sm:$0xff]
  %v293 = vld [vmem:[%s2 + $0x6f0] sm:$0xff]
  %v294 = vld [vmem:[%s2 + $0x6f8] sm:$0xff]
  %v295 = vld [vmem:[%s2 + $0x700] sm:$0xff]
  %v296 = vld [vmem:[%s2 + $0x708] sm:$0xff]
  %v297 = vld [vmem:[%s2 + $0x710] sm:$0xff]
  %v298 = vld [vmem:[%s2 + $0x718] sm:$0xff]
  %v299 = vld [vmem:[%s2 + $0x720] sm:$0xff]
  %v300 = vld [vmem:[%s2 + $0x728] sm:$0xff]
  %v301 = vld [vmem:[%s2 + $0x730] sm:$0xff]
  %v302 = vld [vmem:[%s2 + $0x738] sm:$0xff]
  %v303 = vld [vmem:[%s2 + $0x740] sm:$0xff]
  %v304 = vld [vmem:[%s2 + $0x748] sm:$0xff]
  %v305 = vld [vmem:[%s2 + $0x750] sm:$0xff]
  %v306 = vld [vmem:[%s2 + $0x758] sm:$0xff]
  %v307 = vld [vmem:[%s2 + $0x760] sm:$0xff]
  %v308 = vld [vmem:[%s2 + $0x768] sm:$0xff]
  %v309 = vld [vmem:[%s2 + $0x770] sm:$0xff]
  %v310 = vld [vmem:[%s2 + $0x778] sm:$0xff]
  %v311 = vld [vmem:[%s2 + $0x780] sm:$0xff]
  %v312 = vld [vmem:[%s2 + $0x788] sm:$0xff]
  %v313 = vld [vmem:[%s2 + $0x790] sm:$0xff]
  %v314 = vld [vmem:[%s2 + $0x798] sm:$0xff]
  %v315 = vld [vmem:[%s2 + $0x7a0] sm:$0xff]
  %v316 = vld [vmem:[%s2 + $0x7a8] sm:$0xff]
  %v317 = vld [vmem:[%s2 + $0x7b0] sm:$0xff]
  %v318 = vld [vmem:[%s2 + $0x7b8] sm:$0xff]
  %v319 = vld [vmem:[%s2 + $0x7c0] sm:$0xff]
  %v320 = vld [vmem:[%s2 + $0x7c8] sm:$0xff]
  %v321 = vld [vmem:[%s2 + $0x7d0] sm:$0xff]
  %v322 = vld [vmem:[%s2 + $0x7d8] sm:$0xff]
  %v323 = vld [vmem:[%s2 + $0x7e0] sm:$0xff]
  %v324 = vld [vmem:[%s2 + $0x7e8] sm:$0xff]
  %v325 = vld [vmem:[%s2 + $0x7f0] sm:$0xff]
  %v326 = vld [vmem:[%s2 + $0x7f8] sm:$0xff]
  %v327 = vld [vmem:[%s2 + $0x800] sm:$0xff]
  %v328 = vld [vmem:[%s2 + $0x808] sm:$0xff]
  %v329 = vld [vmem:[%s2 + $0x810] sm:$0xff]
  %v330 = vld [vmem:[%s2 + $0x818] sm:$0xff]
  %v331 = vld [vmem:[%s2 + $0x820] sm:$0xff]
  %v332 = vld [vmem:[%s2 + $0x828] sm:$0xff]
  %v333 = vld [vmem:[%s2 + $0x830] sm:$0xff]
  %v334 = vld [vmem:[%s2 + $0x838] sm:$0xff]
  %v335 = vld [vmem:[%s2 + $0x840] sm:$0xff]
  %v336 = vld [vmem:[%s2 + $0x848] sm:$0xff]
  %v337 = vld [vmem:[%s2 + $0x850] sm:$0xff]
  %v338 = vld [vmem:[%s2 + $0x858] sm:$0xff]
  %v339 = vld [vmem:[%s2 + $0x860] sm:$0xff]
  %v340 = vld [vmem:[%s2 + $0x868] sm:$0xff]
  %v341 = vld [vmem:[%s2 + $0x870] sm:$0xff]
  %v342 = vld [vmem:[%s2 + $0x878] sm:$0xff]
  %v343 = vld [vmem:[%s2 + $0x880] sm:$0xff]
  %v344 = vld [vmem:[%s2 + $0x888] sm:$0xff]
  %v345 = vld [vmem:[%s2 + $0x890] sm:$0xff]
  %v346 = vld [vmem:[%s2 + $0x898] sm:$0xff]
  %v347 = vld [vmem:[%s2 + $0x8a0] sm:$0xff]
  %v348 = vld [vmem:[%s2 + $0x8a8] sm:$0xff]
  %v349 = vld [vmem:[%s2 + $0x8b0] sm:$0xff]
  %v350 = vld [vmem:[%s2 + $0x8b8] sm:$0xff]
  %v351 = vld [vmem:[%s2 + $0x8c0] sm:$0xff]
  %v352 = vld [vmem:[%s2 + $0x8c8] sm:$0xff]
  %v353 = vld [vmem:[%s2 + $0x8d0] sm:$0xff]
  %v354 = vld [vmem:[%s2 + $0x8d8] sm:$0xff]
  %v355 = vld [vmem:[%s2 + $0x8e0] sm:$0xff]
  %v356 = vld [vmem:[%s2 + $0x8e8] sm:$0xff]
  %v357 = vld [vmem:[%s2 + $0x8f0] sm:$0xff]
  %v358 = vld [vmem:[%s2 + $0x8f8] sm:$0xff]
  %v359 = vld [vmem:[%s2 + $0x900] sm:$0xff]
  %v360 = vld [vmem:[%s2 + $0x908] sm:$0xff]
  %v361 = vld [vmem:[%s2 + $0x910] sm:$0xff]
  %v362 = vld [vmem:[%s2 + $0x918] sm:$0xff]
  %v363 = vld [vmem:[%s2 + $0x920] sm:$0xff]
  %v364 = vld [vmem:[%s2 + $0x928] sm:$0xff]
  %v365 = vld [vmem:[%s2 + $0x930] sm:$0xff]
  %v366 = vld [vmem:[%s2 + $0x938] sm:$0xff]
  %v367 = vld [vmem:[%s2 + $0x940] sm:$0xff]
  %v368 = vld [vmem:[%s2 + $0x948] sm:$0xff]
  %v369 = vld [vmem:[%s2 + $0x950] sm:$0xff]
  %v370 = vld [vmem:[%s2 + $0x958] sm:$0xff]
  %v371 = vld [vmem:[%s2 + $0x960] sm:$0xff]
  %v372 = vld [vmem:[%s2 + $0x968] sm:$0xff]
  %v373 = vld [vmem:[%s2 + $0x970] sm:$0xff]
  %v374 = vld [vmem:[%s2 + $0x978] sm:$0xff]
  %v375 = vld [vmem:[%s2 + $0x980] sm:$0xff]
  %v376 = vld [vmem:[%s2 + $0x988] sm:$0xff]
  %v377 = vld [vmem:[%s2 + $0x990] sm:$0xff]
  %v378 = vld [vmem:[%s2 + $0x998] sm:$0xff]
  %v379 = vld [vmem:[%s2 + $0x9a0] sm:$0xff]
  %v380 = vld [vmem:[%s2 + $0x9a8] sm:$0xff]
  %v381 = vld [vmem:[%s2 + $0x9b0] sm:$0xff]
  %v382 = vld [vmem:[%s2 + $0x9b8] sm:$0xff]
  %v383 = vld [vmem:[%s2 + $0x9c0] sm:$0xff]
  %v384 = vld [vmem:[%s2 + $0x9c8] sm:$0xff]
  %v385 = vld [vmem:[%s2 + $0x9d0] sm:$0xff]
  %v386 = vld [vmem:[%s2 + $0x9d8] sm:$0xff]
  %v387 = vld [vmem:[%s2 + $0x9e0] sm:$0xff]
  %v388 = vld [vmem:[%s2 + $0x9e8] sm:$0xff]
  %v389 = vld [vmem:[%s2 + $0x9f0] sm:$0xff]
  %v390 = vld [vmem:[%s2 + $0x9f8] sm:$0xff]
  %v391 = vld [vmem:[%s2 + $0xa00] sm:$0xff]
  %v392 = vld [vmem:[%s2 + $0xa08] sm:$0xff]
  %v393 = vld [vmem:[%s2 + $0xa10] sm:$0xff]
  %v394 = vld [vmem:[%s2 + $0xa18] sm:$0xff]
  %v395 = vld [vmem:[%s2 + $0xa20] sm:$0xff]
  %v396 = vld [vmem:[%s2 + $0xa28] sm:$0xff]
  %v397 = vld [vmem:[%s2 + $0xa30] sm:$0xff]
  %v398 = vld [vmem:[%s2 + $0xa38] sm:$0xff]
  %v399 = vld [vmem:[%s2 + $0xa40] sm:$0xff]
  %v400 = vld [vmem:[%s2 + $0xa48] sm:$0xff]
  %v401 = vld [vmem:[%s2 + $0xa50] sm:$0xff]
  %v402 = vld [vmem:[%s2 + $0xa58] sm:$0xff]
  %v403 = vld [vmem:[%s2 + $0xa60] sm:$0xff]
  %v404 = vld [vmem:[%s2 + $0xa68] sm:$0xff]
  %v405 = vld [vmem:[%s2 + $0xa70] sm:$0xff]
  %v406 = vld [vmem:[%s2 + $0xa78] sm:$0xff]
  %v407 = vld [vmem:[%s2 + $0xa80] sm:$0xff]
  %v408 = vld [vmem:[%s2 + $0xa88] sm:$0xff]
  %v409 = vld [vmem:[%s2 + $0xa90] sm:$0xff]
  %v410 = vld [vmem:[%s2 + $0xa98] sm:$0xff]
  %v411 = vld [vmem:[%s2 + $0xaa0] sm:$0xff]
  %v412 = vld [vmem:[%s2 + $0xaa8] sm:$0xff]
  %v413 = vld [vmem:[%s2 + $0xab0] sm:$0xff]
  %v414 = vld [vmem:[%s2 + $0xab8] sm:$0xff]
  %v415 = vld [vmem:[%s2 + $0xac0] sm:$0xff]
  %v416 = vld [vmem:[%s2 + $0xac8] sm:$0xff]
  %v417 = vld [vmem:[%s2 + $0xad0] sm:$0xff]
  %v418 = vld [vmem:[%s2 + $0xad8] sm:$0xff]
  %v419 = vld [vmem:[%s2 + $0xae0] sm:$0xff]
  %v420 = vld [vmem:[%s2 + $0xae8] sm:$0xff]
  %v421 = vld [vmem:[%s2 + $0xaf0] sm:$0xff]
  %v422 = vld [vmem:[%s2 + $0xaf8] sm:$0xff]
  %v423 = vld [vmem:[%s2 + $0xb00] sm:$0xff]
  %v424 = vld [vmem:[%s2 + $0xb08] sm:$0xff]
  %v425 = vld [vmem:[%s2 + $0xb10] sm:$0xff]
  %v426 = vld [vmem:[%s2 + $0xb18] sm:$0xff]
  %v427 = vld [vmem:[%s2 + $0xb20] sm:$0xff]
  %v428 = vld [vmem:[%s2 + $0xb28] sm:$0xff]
  %v429 = vld [vmem:[%s2 + $0xb30] sm:$0xff]
  %v430 = vld [vmem:[%s2 + $0xb38] sm:$0xff]
  %v431 = vld [vmem:[%s2 + $0xb40] sm:$0xff]
  %v432 = vld [vmem:[%s2 + $0xb48] sm:$0xff]
  %v433 = vld [vmem:[%s2 + $0xb50] sm:$0xff]
  %v434 = vld [vmem:[%s2 + $0xb58] sm:$0xff]
  %v435 = vld [vmem:[%s2 + $0xb60] sm:$0xff]
  %v436 = vld [vmem:[%s2 + $0xb68] sm:$0xff]
  %v437 = vld [vmem:[%s2 + $0xb70] sm:$0xff]
  %v438 = vld [vmem:[%s2 + $0xb78] sm:$0xff]
  %v439 = vld [vmem:[%s2 + $0xb80] sm:$0xff]
  %v440 = vld [vmem:[%s2 + $0xb88] sm:$0xff]
  %v441 = vld [vmem:[%s2 + $0xb90] sm:$0xff]
  %v442 = vld [vmem:[%s2 + $0xb98] sm:$0xff]
  %v443 = vld [vmem:[%s2 + $0xba0] sm:$0xff]
  %v444 = vld [vmem:[%s2 + $0xba8] sm:$0xff]
  %v445 = vld [vmem:[%s2 + $0xbb0] sm:$0xff]
  %v446 = vld [vmem:[%s2 + $0xbb8] sm:$0xff]
  %v447 = vld [vmem:[%s2 + $0xbc0] sm:$0xff]
  %v448 = vld [vmem:[%s2 + $0xbc8] sm:$0xff]
  %v449 = vld [vmem:[%s2 + $0xbd0] sm:$0xff]
  %v450 = vld [vmem:[%s2 + $0xbd8] sm:$0xff]
  %v451 = vld [vmem:[%s2 + $0xbe0] sm:$0xff]
  %v452 = vld [vmem:[%s2 + $0xbe8] sm:$0xff]
  %v453 = vld [vmem:[%s2 + $0xbf0] sm:$0xff]
  %v454 = vld [vmem:[%s2 + $0xbf8] sm:$0xff]
  %v455 = vld [vmem:[%s2 + $0xc00] sm:$0xff]
  %v456 = vld [vmem:[%s2 + $0xc08] sm:$0xff]
  %v457 = vld [vmem:[%s2 + $0xc10] sm:$0xff]
  %v458 = vld [vmem:[%s2 + $0xc18] sm:$0xff]
  %v459 = vld [vmem:[%s2 + $0xc20] sm:$0xff]
  %v460 = vld [vmem:[%s2 + $0xc28] sm:$0xff]
  %v461 = vld [vmem:[%s2 + $0xc30] sm:$0xff]
  %v462 = vld [vmem:[%s2 + $0xc38] sm:$0xff]
  %v463 = vld [vmem:[%s2 + $0xc40] sm:$0xff]
  %v464 = vld [vmem:[%s2 + $0xc48] sm:$0xff]
  %v465 = vld [vmem:[%s2 + $0xc50] sm:$0xff]
  %v466 = vld [vmem:[%s2 + $0xc58] sm:$0xff]
  %v467 = vld [vmem:[%s2 + $0xc60] sm:$0xff]
  %v468 = vld [vmem:[%s2 + $0xc68] sm:$0xff]
  %v469 = vld [vmem:[%s2 + $0xc70] sm:$0xff]
  %v470 = vld [vmem:[%s2 + $0xc78] sm:$0xff]
  %v471 = vld [vmem:[%s2 + $0xc80] sm:$0xff]
  %v472 = vld [vmem:[%s2 + $0xc88] sm:$0xff]
  %v473 = vld [vmem:[%s2 + $0xc90] sm:$0xff]
  %v474 = vld [vmem:[%s2 + $0xc98] sm:$0xff]
  %v475 = vld [vmem:[%s2 + $0xca0] sm:$0xff]
  %v476 = vld [vmem:[%s2 + $0xca8] sm:$0xff]
  %v477 = vld [vmem:[%s2 + $0xcb0] sm:$0xff]
  %v478 = vld [vmem:[%s2 + $0xcb8] sm:$0xff]
  %v479 = vld [vmem:[%s2 + $0xcc0] sm:$0xff]
  %v480 = vld [vmem:[%s2 + $0xcc8] sm:$0xff]
  %v481 = vld [vmem:[%s2 + $0xcd0] sm:$0xff]
  %v482 = vld [vmem:[%s2 + $0xcd8] sm:$0xff]
  %v483 = vld [vmem:[%s2 + $0xce0] sm:$0xff]
  %v484 = vld [vmem:[%s2 + $0xce8] sm:$0xff]
  %v485 = vld [vmem:[%s2 + $0xcf0] sm:$0xff]
  %v486 = vld [vmem:[%s2 + $0xcf8] sm:$0xff]
  %v487 = vld [vmem:[%s2 + $0xd00] sm:$0xff]
  %v488 = vld [vmem:[%s2 + $0xd08] sm:$0xff]
  %v489 = vld [vmem:[%s2 + $0xd10] sm:$0xff]
  %v490 = vld [vmem:[%s2 + $0xd18] sm:$0xff]
  %v491 = vld [vmem:[%s2 + $0xd20] sm:$0xff]
  %v492 = vld [vmem:[%s2 + $0xd28] sm:$0xff]
  %v493 = vld [vmem:[%s2 + $0xd30] sm:$0xff]
  %v494 = vld [vmem:[%s2 + $0xd38] sm:$0xff]
  %v495 = vld [vmem:[%s2 + $0xd40] sm:$0xff]
  %v496 = vld [vmem:[%s2 + $0xd48] sm:$0xff]
  %v497 = vld [vmem:[%s2 + $0xd50] sm:$0xff]
  %v498 = vld [vmem:[%s2 + $0xd58] sm:$0xff]
  %v499 = vld [vmem:[%s2 + $0xd60] sm:$0xff]
  %v500 = vld [vmem:[%s2 + $0xd68] sm:$0xff]
  %v501 = vld [vmem:[%s2 + $0xd70] sm:$0xff]
  %v502 = vld [vmem:[%s2 + $0xd78] sm:$0xff]
  %v503 = vld [vmem:[%s2 + $0xd80] sm:$0xff]
  %v504 = vld [vmem:[%s2 + $0xd88] sm:$0xff]
  %v505 = vld [vmem:[%s2 + $0xd90] sm:$0xff]
  %v506 = vld [vmem:[%s2 + $0xd98] sm:$0xff]
  %v507 = vld [vmem:[%s2 + $0xda0] sm:$0xff]
  %v508 = vld [vmem:[%s2 + $0xda8] sm:$0xff]
  %v509 = vld [vmem:[%s2 + $0xdb0] sm:$0xff]
  %v510 = vld [vmem:[%s2 + $0xdb8] sm:$0xff]
  %v511 = vld [vmem:[%s2 + $0xdc0] sm:$0xff]
  %v512 = vld [vmem:[%s2 + $0xdc8] sm:$0xff]
  %v513 = vld [vmem:[%s2 + $0xdd0] sm:$0xff]
  %v514 = vld [vmem:[%s2 + $0xdd8] sm:$0xff]
  %v515 = vld [vmem:[%s2 + $0xde0] sm:$0xff]
  %v516 = vld [vmem:[%s2 + $0xde8] sm:$0xff]
  %v517 = vld [vmem:[%s2 + $0xdf0] sm:$0xff]
  %v518 = vld [vmem:[%s2 + $0xdf8] sm:$0xff]
  %v519 = vld [vmem:[%s2 + $0xe00] sm:$0xff]
  %v520 = vld [vmem:[%s2 + $0xe08] sm:$0xff]
  %v521 = vld [vmem:[%s2 + $0xe10] sm:$0xff]
  %v522 = vld [vmem:[%s2 + $0xe18] sm:$0xff]
  %v523 = vld [vmem:[%s2 + $0xe20] sm:$0xff]
  %v524 = vld [vmem:[%s2 + $0xe28] sm:$0xff]
  %v525 = vld [vmem:[%s2 + $0xe30] sm:$0xff]
  %v526 = vld [vmem:[%s2 + $0xe38] sm:$0xff]
  %v527 = vld [vmem:[%s2 + $0xe40] sm:$0xff]
  %v528 = vld [vmem:[%s2 + $0xe48] sm:$0xff]
  %v529 = vld [vmem:[%s2 + $0xe50] sm:$0xff]
  %v530 = vld [vmem:[%s2 + $0xe58] sm:$0xff]
  %v531 = vld [vmem:[%s2 + $0xe60] sm:$0xff]
  %v532 = vld [vmem:[%s2 + $0xe68] sm:$0xff]
  %v533 = vld [vmem:[%s2 + $0xe70] sm:$0xff]
  %v534 = vld [vmem:[%s2 + $0xe78] sm:$0xff]
  %v535 = vld [vmem:[%s2 + $0xe80] sm:$0xff]
  %v536 = vld [vmem:[%s2 + $0xe88] sm:$0xff]
  %v537 = vld [vmem:[%s2 + $0xe90] sm:$0xff]
  %v538 = vld [vmem:[%s2 + $0xe98] sm:$0xff]
  %v539 = vld [vmem:[%s2 + $0xea0] sm:$0xff]
  %v540 = vld [vmem:[%s2 + $0xea8] sm:$0xff]
  %v541 = vld [vmem:[%s2 + $0xeb0] sm:$0xff]
  %v542 = vld [vmem:[%s2 + $0xeb8] sm:$0xff]
  %v543 = vld [vmem:[%s2 + $0xec0] sm:$0xff]
  %v544 = vld [vmem:[%s2 + $0xec8] sm:$0xff]
  %v545 = vld [vmem:[%s2 + $0xed0] sm:$0xff]
  %v546 = vld [vmem:[%s2 + $0xed8] sm:$0xff]
  %v547 = vld [vmem:[%s2 + $0xee0] sm:$0xff]
  %v548 = vld [vmem:[%s2 + $0xee8] sm:$0xff]
  %v549 = vld [vmem:[%s2 + $0xef0] sm:$0xff]
  %v550 = vld [vmem:[%s2 + $0xef8] sm:$0xff]
  %v551 = vld [vmem:[%s2 + $0xf00] sm:$0xff]
  %v552 = vld [vmem:[%s2 + $0xf08] sm:$0xff]
  %v553 = vld [vmem:[%s2 + $0xf10] sm:$0xff]
  %v554 = vld [vmem:[%s2 + $0xf18] sm:$0xff]
  %v555 = vld [vmem:[%s2 + $0xf20] sm:$0xff]
  %v556 = vld [vmem:[%s2 + $0xf28] sm:$0xff]
  %v557 = vld [vmem:[%s2 + $0xf30] sm:$0xff]
  %v558 = vld [vmem:[%s2 + $0xf38] sm:$0xff]
  %v559 = vld [vmem:[%s2 + $0xf40] sm:$0xff]
  %v560 = vld [vmem:[%s2 + $0xf48] sm:$0xff]
  %v561 = vld [vmem:[%s2 + $0xf50] sm:$0xff]
  %v562 = vld [vmem:[%s2 + $0xf58] sm:$0xff]
  %v563 = vld [vmem:[%s2 + $0xf60] sm:$0xff]
  %v564 = vld [vmem:[%s2 + $0xf68] sm:$0xff]
  %v565 = vld [vmem:[%s2 + $0xf70] sm:$0xff]
  %v566 = vld [vmem:[%s2 + $0xf78] sm:$0xff]
  %v567 = vld [vmem:[%s2 + $0xf80] sm:$0xff]
  %v568 = vld [vmem:[%s2 + $0xf88] sm:$0xff]
  %v569 = vld [vmem:[%s2 + $0xf90] sm:$0xff]
  %v570 = vld [vmem:[%s2 + $0xf98] sm:$0xff]
  %v571 = vld [vmem:[%s2 + $0xfa0] sm:$0xff]
  %v572 = vld [vmem:[%s2 + $0xfa8] sm:$0xff]
  %v573 = vld [vmem:[%s2 + $0xfb0] sm:$0xff]
  %v574 = vld [vmem:[%s2 + $0xfb8] sm:$0xff]
  %v575 = vld [vmem:[%s2 + $0xfc0] sm:$0xff]
  %v576 = vld [vmem:[%s2 + $0xfc8] sm:$0xff]
  %v577 = vld [vmem:[%s2 + $0xfd0] sm:$0xff]
  %v578 = vld [vmem:[%s2 + $0xfd8] sm:$0xff]
  %v579 = vld [vmem:[%s2 + $0xfe0] sm:$0xff]
  %v580 = vld [vmem:[%s2 + $0xfe8] sm:$0xff]
  %v581 = vld [vmem:[%s2 + $0xff0] sm:$0xff]
  %v582 = vld [vmem:[%s2 + $0xff8] sm:$0xff]
  %v583 = vld [vmem:[%s3] sm:$0xf]
  %v585 = vlaneseq
  %v586 = vshrl.u32 %v585, 7
  %v587 = vsub.s32 0, %v586
  %v588 = vrot.slane %v583, %v587
  %v589 = vlaneseq
  %v590 = vshrl.u32 %v589, 7
  %v591 = vsub.s32 1, %v590
  %v592 = vrot.slane %v583, %v591
  %v593 = vlaneseq
  %v594 = vshrl.u32 %v593, 7
  %v595 = vsub.s32 2, %v594
  %v596 = vrot.slane %v583, %v595
  %v597 = vlaneseq
  %v598 = vshrl.u32 %v597, 7
  %v599 = vsub.s32 3, %v598
  %v600 = vrot.slane %v583, %v599
  %v1117 = vunpack.c.l.b16 %v71
  %v1118 = vunpack.c.h.b16 %v71
  %v1119 = vunpack.c.l.b16 %v72
  %v1120 = vunpack.c.h.b16 %v72
  %v1121 = vunpack.c.l.b16 %v73
  %v1122 = vunpack.c.h.b16 %v73
  %v1123 = vunpack.c.l.b16 %v74
  %v1124 = vunpack.c.h.b16 %v74
  %v1125 = vunpack.c.l.b16 %v75
  %v1126 = vunpack.c.h.b16 %v75
  %v1127 = vunpack.c.l.b16 %v76
  %v1128 = vunpack.c.h.b16 %v76
  %v1129 = vunpack.c.l.b16 %v77
  %v1130 = vunpack.c.h.b16 %v77
  %v1131 = vunpack.c.l.b16 %v78
  %v1132 = vunpack.c.h.b16 %v78
  %v1133 = vunpack.c.l.b16 %v79
  %v1134 = vunpack.c.h.b16 %v79
  %v1135 = vunpack.c.l.b16 %v80
  %v1136 = vunpack.c.h.b16 %v80
  %v1137 = vunpack.c.l.b16 %v81
  %v1138 = vunpack.c.h.b16 %v81
  %v1139 = vunpack.c.l.b16 %v82
  %v1140 = vunpack.c.h.b16 %v82
  %v1141 = vunpack.c.l.b16 %v83
  %v1142 = vunpack.c.h.b16 %v83
  %v1143 = vunpack.c.l.b16 %v84
  %v1144 = vunpack.c.h.b16 %v84
  %v1145 = vunpack.c.l.b16 %v85
  %v1146 = vunpack.c.h.b16 %v85
  %v1147 = vunpack.c.l.b16 %v86
  %v1148 = vunpack.c.h.b16 %v86
  %v1149 = vunpack.c.l.b16 %v87
  %v1150 = vunpack.c.h.b16 %v87
  %v1151 = vunpack.c.l.b16 %v88
  %v1152 = vunpack.c.h.b16 %v88
  %v1153 = vunpack.c.l.b16 %v89
  %v1154 = vunpack.c.h.b16 %v89
  %v1155 = vunpack.c.l.b16 %v90
  %v1156 = vunpack.c.h.b16 %v90
  %v1157 = vunpack.c.l.b16 %v91
  %v1158 = vunpack.c.h.b16 %v91
  %v1159 = vunpack.c.l.b16 %v92
  %v1160 = vunpack.c.h.b16 %v92
  %v1161 = vunpack.c.l.b16 %v93
  %v1162 = vunpack.c.h.b16 %v93
  %v1163 = vunpack.c.l.b16 %v94
  %v1164 = vunpack.c.h.b16 %v94
  %v1165 = vunpack.c.l.b16 %v95
  %v1166 = vunpack.c.h.b16 %v95
  %v1167 = vunpack.c.l.b16 %v96
  %v1168 = vunpack.c.h.b16 %v96
  %v1169 = vunpack.c.l.b16 %v97
  %v1170 = vunpack.c.h.b16 %v97
  %v1171 = vunpack.c.l.b16 %v98
  %v1172 = vunpack.c.h.b16 %v98
  %v1173 = vunpack.c.l.b16 %v99
  %v1174 = vunpack.c.h.b16 %v99
  %v1175 = vunpack.c.l.b16 %v100
  %v1176 = vunpack.c.h.b16 %v100
  %v1177 = vunpack.c.l.b16 %v101
  %v1178 = vunpack.c.h.b16 %v101
  %v1179 = vunpack.c.l.b16 %v102
  %v1180 = vunpack.c.h.b16 %v102
  %v1181 = vunpack.c.l.b16 %v103
  %v1182 = vunpack.c.h.b16 %v103
  %v1183 = vunpack.c.l.b16 %v104
  %v1184 = vunpack.c.h.b16 %v104
  %v1185 = vunpack.c.l.b16 %v105
  %v1186 = vunpack.c.h.b16 %v105
  %v1187 = vunpack.c.l.b16 %v106
  %v1188 = vunpack.c.h.b16 %v106
  %v1189 = vunpack.c.l.b16 %v107
  %v1190 = vunpack.c.h.b16 %v107
  %v1191 = vunpack.c.l.b16 %v108
  %v1192 = vunpack.c.h.b16 %v108
  %v1193 = vunpack.c.l.b16 %v109
  %v1194 = vunpack.c.h.b16 %v109
  %v1195 = vunpack.c.l.b16 %v110
  %v1196 = vunpack.c.h.b16 %v110
  %v1197 = vunpack.c.l.b16 %v111
  %v1198 = vunpack.c.h.b16 %v111
  %v1199 = vunpack.c.l.b16 %v112
  %v1200 = vunpack.c.h.b16 %v112
  %v1201 = vunpack.c.l.b16 %v113
  %v1202 = vunpack.c.h.b16 %v113
  %v1203 = vunpack.c.l.b16 %v114
  %v1204 = vunpack.c.h.b16 %v114
  %v1205 = vunpack.c.l.b16 %v115
  %v1206 = vunpack.c.h.b16 %v115
  %v1207 = vunpack.c.l.b16 %v116
  %v1208 = vunpack.c.h.b16 %v116
  %v1209 = vunpack.c.l.b16 %v117
  %v1210 = vunpack.c.h.b16 %v117
  %v1211 = vunpack.c.l.b16 %v118
  %v1212 = vunpack.c.h.b16 %v118
  %v1213 = vunpack.c.l.b16 %v119
  %v1214 = vunpack.c.h.b16 %v119
  %v1215 = vunpack.c.l.b16 %v120
  %v1216 = vunpack.c.h.b16 %v120
  %v1217 = vunpack.c.l.b16 %v121
  %v1218 = vunpack.c.h.b16 %v121
  %v1219 = vunpack.c.l.b16 %v122
  %v1220 = vunpack.c.h.b16 %v122
  %v1221 = vunpack.c.l.b16 %v123
  %v1222 = vunpack.c.h.b16 %v123
  %v1223 = vunpack.c.l.b16 %v124
  %v1224 = vunpack.c.h.b16 %v124
  %v1225 = vunpack.c.l.b16 %v125
  %v1226 = vunpack.c.h.b16 %v125
  %v1227 = vunpack.c.l.b16 %v126
  %v1228 = vunpack.c.h.b16 %v126
  %v1229 = vunpack.c.l.b16 %v127
  %v1230 = vunpack.c.h.b16 %v127
  %v1231 = vunpack.c.l.b16 %v128
  %v1232 = vunpack.c.h.b16 %v128
  %v1233 = vunpack.c.l.b16 %v129
  %v1234 = vunpack.c.h.b16 %v129
  %v1235 = vunpack.c.l.b16 %v130
  %v1236 = vunpack.c.h.b16 %v130
  %v1237 = vunpack.c.l.b16 %v131
  %v1238 = vunpack.c.h.b16 %v131
  %v1239 = vunpack.c.l.b16 %v132
  %v1240 = vunpack.c.h.b16 %v132
  %v1241 = vunpack.c.l.b16 %v133
  %v1242 = vunpack.c.h.b16 %v133
  %v1243 = vunpack.c.l.b16 %v134
  %v1244 = vunpack.c.h.b16 %v134
  %v1245 = vunpack.c.l.b16 %v135
  %v1246 = vunpack.c.h.b16 %v135
  %v1247 = vunpack.c.l.b16 %v136
  %v1248 = vunpack.c.h.b16 %v136
  %v1249 = vunpack.c.l.b16 %v137
  %v1250 = vunpack.c.h.b16 %v137
  %v1251 = vunpack.c.l.b16 %v138
  %v1252 = vunpack.c.h.b16 %v138
  %v1253 = vunpack.c.l.b16 %v139
  %v1254 = vunpack.c.h.b16 %v139
  %v1255 = vunpack.c.l.b16 %v140
  %v1256 = vunpack.c.h.b16 %v140
  %v1257 = vunpack.c.l.b16 %v141
  %v1258 = vunpack.c.h.b16 %v141
  %v1259 = vunpack.c.l.b16 %v142
  %v1260 = vunpack.c.h.b16 %v142
  %v1261 = vunpack.c.l.b16 %v143
  %v1262 = vunpack.c.h.b16 %v143
  %v1263 = vunpack.c.l.b16 %v144
  %v1264 = vunpack.c.h.b16 %v144
  %v1265 = vunpack.c.l.b16 %v145
  %v1266 = vunpack.c.h.b16 %v145
  %v1267 = vunpack.c.l.b16 %v146
  %v1268 = vunpack.c.h.b16 %v146
  %v1269 = vunpack.c.l.b16 %v147
  %v1270 = vunpack.c.h.b16 %v147
  %v1271 = vunpack.c.l.b16 %v148
  %v1272 = vunpack.c.h.b16 %v148
  %v1273 = vunpack.c.l.b16 %v149
  %v1274 = vunpack.c.h.b16 %v149
  %v1275 = vunpack.c.l.b16 %v150
  %v1276 = vunpack.c.h.b16 %v150
  %v1277 = vunpack.c.l.b16 %v151
  %v1278 = vunpack.c.h.b16 %v151
  %v1279 = vunpack.c.l.b16 %v152
  %v1280 = vunpack.c.h.b16 %v152
  %v1281 = vunpack.c.l.b16 %v153
  %v1282 = vunpack.c.h.b16 %v153
  %v1283 = vunpack.c.l.b16 %v154
  %v1284 = vunpack.c.h.b16 %v154
  %v1285 = vunpack.c.l.b16 %v155
  %v1286 = vunpack.c.h.b16 %v155
  %v1287 = vunpack.c.l.b16 %v156
  %v1288 = vunpack.c.h.b16 %v156
  %v1289 = vunpack.c.l.b16 %v157
  %v1290 = vunpack.c.h.b16 %v157
  %v1291 = vunpack.c.l.b16 %v158
  %v1292 = vunpack.c.h.b16 %v158
  %v1293 = vunpack.c.l.b16 %v159
  %v1294 = vunpack.c.h.b16 %v159
  %v1295 = vunpack.c.l.b16 %v160
  %v1296 = vunpack.c.h.b16 %v160
  %v1297 = vunpack.c.l.b16 %v161
  %v1298 = vunpack.c.h.b16 %v161
  %v1299 = vunpack.c.l.b16 %v162
  %v1300 = vunpack.c.h.b16 %v162
  %v1301 = vunpack.c.l.b16 %v163
  %v1302 = vunpack.c.h.b16 %v163
  %v1303 = vunpack.c.l.b16 %v164
  %v1304 = vunpack.c.h.b16 %v164
  %v1305 = vunpack.c.l.b16 %v165
  %v1306 = vunpack.c.h.b16 %v165
  %v1307 = vunpack.c.l.b16 %v166
  %v1308 = vunpack.c.h.b16 %v166
  %v1309 = vunpack.c.l.b16 %v167
  %v1310 = vunpack.c.h.b16 %v167
  %v1311 = vunpack.c.l.b16 %v168
  %v1312 = vunpack.c.h.b16 %v168
  %v1313 = vunpack.c.l.b16 %v169
  %v1314 = vunpack.c.h.b16 %v169
  %v1315 = vunpack.c.l.b16 %v170
  %v1316 = vunpack.c.h.b16 %v170
  %v1317 = vunpack.c.l.b16 %v171
  %v1318 = vunpack.c.h.b16 %v171
  %v1319 = vunpack.c.l.b16 %v172
  %v1320 = vunpack.c.h.b16 %v172
  %v1321 = vunpack.c.l.b16 %v173
  %v1322 = vunpack.c.h.b16 %v173
  %v1323 = vunpack.c.l.b16 %v174
  %v1324 = vunpack.c.h.b16 %v174
  %v1325 = vunpack.c.l.b16 %v175
  %v1326 = vunpack.c.h.b16 %v175
  %v1327 = vunpack.c.l.b16 %v176
  %v1328 = vunpack.c.h.b16 %v176
  %v1329 = vunpack.c.l.b16 %v177
  %v1330 = vunpack.c.h.b16 %v177
  %v1331 = vunpack.c.l.b16 %v178
  %v1332 = vunpack.c.h.b16 %v178
  %v1333 = vunpack.c.l.b16 %v179
  %v1334 = vunpack.c.h.b16 %v179
  %v1335 = vunpack.c.l.b16 %v180
  %v1336 = vunpack.c.h.b16 %v180
  %v1337 = vunpack.c.l.b16 %v181
  %v1338 = vunpack.c.h.b16 %v181
  %v1339 = vunpack.c.l.b16 %v182
  %v1340 = vunpack.c.h.b16 %v182
  %v1341 = vunpack.c.l.b16 %v183
  %v1342 = vunpack.c.h.b16 %v183
  %v1343 = vunpack.c.l.b16 %v184
  %v1344 = vunpack.c.h.b16 %v184
  %v1345 = vunpack.c.l.b16 %v185
  %v1346 = vunpack.c.h.b16 %v185
  %v1347 = vunpack.c.l.b16 %v186
  %v1348 = vunpack.c.h.b16 %v186
  %v1349 = vunpack.c.l.b16 %v187
  %v1350 = vunpack.c.h.b16 %v187
  %v1351 = vunpack.c.l.b16 %v188
  %v1352 = vunpack.c.h.b16 %v188
  %v1353 = vunpack.c.l.b16 %v189
  %v1354 = vunpack.c.h.b16 %v189
  %v1355 = vunpack.c.l.b16 %v190
  %v1356 = vunpack.c.h.b16 %v190
  %v1357 = vunpack.c.l.b16 %v191
  %v1358 = vunpack.c.h.b16 %v191
  %v1359 = vunpack.c.l.b16 %v192
  %v1360 = vunpack.c.h.b16 %v192
  %v1361 = vunpack.c.l.b16 %v193
  %v1362 = vunpack.c.h.b16 %v193
  %v1363 = vunpack.c.l.b16 %v194
  %v1364 = vunpack.c.h.b16 %v194
  %v1365 = vunpack.c.l.b16 %v195
  %v1366 = vunpack.c.h.b16 %v195
  %v1367 = vunpack.c.l.b16 %v196
  %v1368 = vunpack.c.h.b16 %v196
  %v1369 = vunpack.c.l.b16 %v197
  %v1370 = vunpack.c.h.b16 %v197
  %v1371 = vunpack.c.l.b16 %v198
  %v1372 = vunpack.c.h.b16 %v198
  %v1373 = vunpack.c.l.b16 %v199
  %v1374 = vunpack.c.h.b16 %v199
  %v1375 = vunpack.c.l.b16 %v200
  %v1376 = vunpack.c.h.b16 %v200
  %v1377 = vunpack.c.l.b16 %v201
  %v1378 = vunpack.c.h.b16 %v201
  %v1379 = vunpack.c.l.b16 %v202
  %v1380 = vunpack.c.h.b16 %v202
  %v1381 = vunpack.c.l.b16 %v203
  %v1382 = vunpack.c.h.b16 %v203
  %v1383 = vunpack.c.l.b16 %v204
  %v1384 = vunpack.c.h.b16 %v204
  %v1385 = vunpack.c.l.b16 %v205
  %v1386 = vunpack.c.h.b16 %v205
  %v1387 = vunpack.c.l.b16 %v206
  %v1388 = vunpack.c.h.b16 %v206
  %v1389 = vunpack.c.l.b16 %v207
  %v1390 = vunpack.c.h.b16 %v207
  %v1391 = vunpack.c.l.b16 %v208
  %v1392 = vunpack.c.h.b16 %v208
  %v1393 = vunpack.c.l.b16 %v209
  %v1394 = vunpack.c.h.b16 %v209
  %v1395 = vunpack.c.l.b16 %v210
  %v1396 = vunpack.c.h.b16 %v210
  %v1397 = vunpack.c.l.b16 %v211
  %v1398 = vunpack.c.h.b16 %v211
  %v1399 = vunpack.c.l.b16 %v212
  %v1400 = vunpack.c.h.b16 %v212
  %v1401 = vunpack.c.l.b16 %v213
  %v1402 = vunpack.c.h.b16 %v213
  %v1403 = vunpack.c.l.b16 %v214
  %v1404 = vunpack.c.h.b16 %v214
  %v1405 = vunpack.c.l.b16 %v215
  %v1406 = vunpack.c.h.b16 %v215
  %v1407 = vunpack.c.l.b16 %v216
  %v1408 = vunpack.c.h.b16 %v216
  %v1409 = vunpack.c.l.b16 %v217
  %v1410 = vunpack.c.h.b16 %v217
  %v1411 = vunpack.c.l.b16 %v218
  %v1412 = vunpack.c.h.b16 %v218
  %v1413 = vunpack.c.l.b16 %v219
  %v1414 = vunpack.c.h.b16 %v219
  %v1415 = vunpack.c.l.b16 %v220
  %v1416 = vunpack.c.h.b16 %v220
  %v1417 = vunpack.c.l.b16 %v221
  %v1418 = vunpack.c.h.b16 %v221
  %v1419 = vunpack.c.l.b16 %v222
  %v1420 = vunpack.c.h.b16 %v222
  %v1421 = vunpack.c.l.b16 %v223
  %v1422 = vunpack.c.h.b16 %v223
  %v1423 = vunpack.c.l.b16 %v224
  %v1424 = vunpack.c.h.b16 %v224
  %v1425 = vunpack.c.l.b16 %v225
  %v1426 = vunpack.c.h.b16 %v225
  %v1427 = vunpack.c.l.b16 %v226
  %v1428 = vunpack.c.h.b16 %v226
  %v1429 = vunpack.c.l.b16 %v227
  %v1430 = vunpack.c.h.b16 %v227
  %v1431 = vunpack.c.l.b16 %v228
  %v1432 = vunpack.c.h.b16 %v228
  %v1433 = vunpack.c.l.b16 %v229
  %v1434 = vunpack.c.h.b16 %v229
  %v1435 = vunpack.c.l.b16 %v230
  %v1436 = vunpack.c.h.b16 %v230
  %v1437 = vunpack.c.l.b16 %v231
  %v1438 = vunpack.c.h.b16 %v231
  %v1439 = vunpack.c.l.b16 %v232
  %v1440 = vunpack.c.h.b16 %v232
  %v1441 = vunpack.c.l.b16 %v233
  %v1442 = vunpack.c.h.b16 %v233
  %v1443 = vunpack.c.l.b16 %v234
  %v1444 = vunpack.c.h.b16 %v234
  %v1445 = vunpack.c.l.b16 %v235
  %v1446 = vunpack.c.h.b16 %v235
  %v1447 = vunpack.c.l.b16 %v236
  %v1448 = vunpack.c.h.b16 %v236
  %v1449 = vunpack.c.l.b16 %v237
  %v1450 = vunpack.c.h.b16 %v237
  %v1451 = vunpack.c.l.b16 %v238
  %v1452 = vunpack.c.h.b16 %v238
  %v1453 = vunpack.c.l.b16 %v239
  %v1454 = vunpack.c.h.b16 %v239
  %v1455 = vunpack.c.l.b16 %v240
  %v1456 = vunpack.c.h.b16 %v240
  %v1457 = vunpack.c.l.b16 %v241
  %v1458 = vunpack.c.h.b16 %v241
  %v1459 = vunpack.c.l.b16 %v242
  %v1460 = vunpack.c.h.b16 %v242
  %v1461 = vunpack.c.l.b16 %v243
  %v1462 = vunpack.c.h.b16 %v243
  %v1463 = vunpack.c.l.b16 %v244
  %v1464 = vunpack.c.h.b16 %v244
  %v1465 = vunpack.c.l.b16 %v245
  %v1466 = vunpack.c.h.b16 %v245
  %v1467 = vunpack.c.l.b16 %v246
  %v1468 = vunpack.c.h.b16 %v246
  %v1469 = vunpack.c.l.b16 %v247
  %v1470 = vunpack.c.h.b16 %v247
  %v1471 = vunpack.c.l.b16 %v248
  %v1472 = vunpack.c.h.b16 %v248
  %v1473 = vunpack.c.l.b16 %v249
  %v1474 = vunpack.c.h.b16 %v249
  %v1475 = vunpack.c.l.b16 %v250
  %v1476 = vunpack.c.h.b16 %v250
  %v1477 = vunpack.c.l.b16 %v251
  %v1478 = vunpack.c.h.b16 %v251
  %v1479 = vunpack.c.l.b16 %v252
  %v1480 = vunpack.c.h.b16 %v252
  %v1481 = vunpack.c.l.b16 %v253
  %v1482 = vunpack.c.h.b16 %v253
  %v1483 = vunpack.c.l.b16 %v254
  %v1484 = vunpack.c.h.b16 %v254
  %v1485 = vunpack.c.l.b16 %v255
  %v1486 = vunpack.c.h.b16 %v255
  %v1487 = vunpack.c.l.b16 %v256
  %v1488 = vunpack.c.h.b16 %v256
  %v1489 = vunpack.c.l.b16 %v257
  %v1490 = vunpack.c.h.b16 %v257
  %v1491 = vunpack.c.l.b16 %v258
  %v1492 = vunpack.c.h.b16 %v258
  %v1493 = vunpack.c.l.b16 %v259
  %v1494 = vunpack.c.h.b16 %v259
  %v1495 = vunpack.c.l.b16 %v260
  %v1496 = vunpack.c.h.b16 %v260
  %v1497 = vunpack.c.l.b16 %v261
  %v1498 = vunpack.c.h.b16 %v261
  %v1499 = vunpack.c.l.b16 %v262
  %v1500 = vunpack.c.h.b16 %v262
  %v1501 = vunpack.c.l.b16 %v263
  %v1502 = vunpack.c.h.b16 %v263
  %v1503 = vunpack.c.l.b16 %v264
  %v1504 = vunpack.c.h.b16 %v264
  %v1505 = vunpack.c.l.b16 %v265
  %v1506 = vunpack.c.h.b16 %v265
  %v1507 = vunpack.c.l.b16 %v266
  %v1508 = vunpack.c.h.b16 %v266
  %v1509 = vunpack.c.l.b16 %v267
  %v1510 = vunpack.c.h.b16 %v267
  %v1511 = vunpack.c.l.b16 %v268
  %v1512 = vunpack.c.h.b16 %v268
  %v1513 = vunpack.c.l.b16 %v269
  %v1514 = vunpack.c.h.b16 %v269
  %v1515 = vunpack.c.l.b16 %v270
  %v1516 = vunpack.c.h.b16 %v270
  %v1517 = vunpack.c.l.b16 %v271
  %v1518 = vunpack.c.h.b16 %v271
  %v1519 = vunpack.c.l.b16 %v272
  %v1520 = vunpack.c.h.b16 %v272
  %v1521 = vunpack.c.l.b16 %v273
  %v1522 = vunpack.c.h.b16 %v273
  %v1523 = vunpack.c.l.b16 %v274
  %v1524 = vunpack.c.h.b16 %v274
  %v1525 = vunpack.c.l.b16 %v275
  %v1526 = vunpack.c.h.b16 %v275
  %v1527 = vunpack.c.l.b16 %v276
  %v1528 = vunpack.c.h.b16 %v276
  %v1529 = vunpack.c.l.b16 %v277
  %v1530 = vunpack.c.h.b16 %v277
  %v1531 = vunpack.c.l.b16 %v278
  %v1532 = vunpack.c.h.b16 %v278
  %v1533 = vunpack.c.l.b16 %v279
  %v1534 = vunpack.c.h.b16 %v279
  %v1535 = vunpack.c.l.b16 %v280
  %v1536 = vunpack.c.h.b16 %v280
  %v1537 = vunpack.c.l.b16 %v281
  %v1538 = vunpack.c.h.b16 %v281
  %v1539 = vunpack.c.l.b16 %v282
  %v1540 = vunpack.c.h.b16 %v282
  %v1541 = vunpack.c.l.b16 %v283
  %v1542 = vunpack.c.h.b16 %v283
  %v1543 = vunpack.c.l.b16 %v284
  %v1544 = vunpack.c.h.b16 %v284
  %v1545 = vunpack.c.l.b16 %v285
  %v1546 = vunpack.c.h.b16 %v285
  %v1547 = vunpack.c.l.b16 %v286
  %v1548 = vunpack.c.h.b16 %v286
  %v1549 = vunpack.c.l.b16 %v287
  %v1550 = vunpack.c.h.b16 %v287
  %v1551 = vunpack.c.l.b16 %v288
  %v1552 = vunpack.c.h.b16 %v288
  %v1553 = vunpack.c.l.b16 %v289
  %v1554 = vunpack.c.h.b16 %v289
  %v1555 = vunpack.c.l.b16 %v290
  %v1556 = vunpack.c.h.b16 %v290
  %v1557 = vunpack.c.l.b16 %v291
  %v1558 = vunpack.c.h.b16 %v291
  %v1559 = vunpack.c.l.b16 %v292
  %v1560 = vunpack.c.h.b16 %v292
  %v1561 = vunpack.c.l.b16 %v293
  %v1562 = vunpack.c.h.b16 %v293
  %v1563 = vunpack.c.l.b16 %v294
  %v1564 = vunpack.c.h.b16 %v294
  %v1565 = vunpack.c.l.b16 %v295
  %v1566 = vunpack.c.h.b16 %v295
  %v1567 = vunpack.c.l.b16 %v296
  %v1568 = vunpack.c.h.b16 %v296
  %v1569 = vunpack.c.l.b16 %v297
  %v1570 = vunpack.c.h.b16 %v297
  %v1571 = vunpack.c.l.b16 %v298
  %v1572 = vunpack.c.h.b16 %v298
  %v1573 = vunpack.c.l.b16 %v299
  %v1574 = vunpack.c.h.b16 %v299
  %v1575 = vunpack.c.l.b16 %v300
  %v1576 = vunpack.c.h.b16 %v300
  %v1577 = vunpack.c.l.b16 %v301
  %v1578 = vunpack.c.h.b16 %v301
  %v1579 = vunpack.c.l.b16 %v302
  %v1580 = vunpack.c.h.b16 %v302
  %v1581 = vunpack.c.l.b16 %v303
  %v1582 = vunpack.c.h.b16 %v303
  %v1583 = vunpack.c.l.b16 %v304
  %v1584 = vunpack.c.h.b16 %v304
  %v1585 = vunpack.c.l.b16 %v305
  %v1586 = vunpack.c.h.b16 %v305
  %v1587 = vunpack.c.l.b16 %v306
  %v1588 = vunpack.c.h.b16 %v306
  %v1589 = vunpack.c.l.b16 %v307
  %v1590 = vunpack.c.h.b16 %v307
  %v1591 = vunpack.c.l.b16 %v308
  %v1592 = vunpack.c.h.b16 %v308
  %v1593 = vunpack.c.l.b16 %v309
  %v1594 = vunpack.c.h.b16 %v309
  %v1595 = vunpack.c.l.b16 %v310
  %v1596 = vunpack.c.h.b16 %v310
  %v1597 = vunpack.c.l.b16 %v311
  %v1598 = vunpack.c.h.b16 %v311
  %v1599 = vunpack.c.l.b16 %v312
  %v1600 = vunpack.c.h.b16 %v312
  %v1601 = vunpack.c.l.b16 %v313
  %v1602 = vunpack.c.h.b16 %v313
  %v1603 = vunpack.c.l.b16 %v314
  %v1604 = vunpack.c.h.b16 %v314
  %v1605 = vunpack.c.l.b16 %v315
  %v1606 = vunpack.c.h.b16 %v315
  %v1607 = vunpack.c.l.b16 %v316
  %v1608 = vunpack.c.h.b16 %v316
  %v1609 = vunpack.c.l.b16 %v317
  %v1610 = vunpack.c.h.b16 %v317
  %v1611 = vunpack.c.l.b16 %v318
  %v1612 = vunpack.c.h.b16 %v318
  %v1613 = vunpack.c.l.b16 %v319
  %v1614 = vunpack.c.h.b16 %v319
  %v1615 = vunpack.c.l.b16 %v320
  %v1616 = vunpack.c.h.b16 %v320
  %v1617 = vunpack.c.l.b16 %v321
  %v1618 = vunpack.c.h.b16 %v321
  %v1619 = vunpack.c.l.b16 %v322
  %v1620 = vunpack.c.h.b16 %v322
  %v1621 = vunpack.c.l.b16 %v323
  %v1622 = vunpack.c.h.b16 %v323
  %v1623 = vunpack.c.l.b16 %v324
  %v1624 = vunpack.c.h.b16 %v324
  %v1625 = vunpack.c.l.b16 %v325
  %v1626 = vunpack.c.h.b16 %v325
  %v1627 = vunpack.c.l.b16 %v326
  %v1628 = vunpack.c.h.b16 %v326
  %v1629 = vunpack.c.l.b16 %v327
  %v1630 = vunpack.c.h.b16 %v327
  %v1631 = vunpack.c.l.b16 %v328
  %v1632 = vunpack.c.h.b16 %v328
  %v1633 = vunpack.c.l.b16 %v329
  %v1634 = vunpack.c.h.b16 %v329
  %v1635 = vunpack.c.l.b16 %v330
  %v1636 = vunpack.c.h.b16 %v330
  %v1637 = vunpack.c.l.b16 %v331
  %v1638 = vunpack.c.h.b16 %v331
  %v1639 = vunpack.c.l.b16 %v332
  %v1640 = vunpack.c.h.b16 %v332
  %v1641 = vunpack.c.l.b16 %v333
  %v1642 = vunpack.c.h.b16 %v333
  %v1643 = vunpack.c.l.b16 %v334
  %v1644 = vunpack.c.h.b16 %v334
  %v1645 = vunpack.c.l.b16 %v335
  %v1646 = vunpack.c.h.b16 %v335
  %v1647 = vunpack.c.l.b16 %v336
  %v1648 = vunpack.c.h.b16 %v336
  %v1649 = vunpack.c.l.b16 %v337
  %v1650 = vunpack.c.h.b16 %v337
  %v1651 = vunpack.c.l.b16 %v338
  %v1652 = vunpack.c.h.b16 %v338
  %v1653 = vunpack.c.l.b16 %v339
  %v1654 = vunpack.c.h.b16 %v339
  %v1655 = vunpack.c.l.b16 %v340
  %v1656 = vunpack.c.h.b16 %v340
  %v1657 = vunpack.c.l.b16 %v341
  %v1658 = vunpack.c.h.b16 %v341
  %v1659 = vunpack.c.l.b16 %v342
  %v1660 = vunpack.c.h.b16 %v342
  %v1661 = vunpack.c.l.b16 %v343
  %v1662 = vunpack.c.h.b16 %v343
  %v1663 = vunpack.c.l.b16 %v344
  %v1664 = vunpack.c.h.b16 %v344
  %v1665 = vunpack.c.l.b16 %v345
  %v1666 = vunpack.c.h.b16 %v345
  %v1667 = vunpack.c.l.b16 %v346
  %v1668 = vunpack.c.h.b16 %v346
  %v1669 = vunpack.c.l.b16 %v347
  %v1670 = vunpack.c.h.b16 %v347
  %v1671 = vunpack.c.l.b16 %v348
  %v1672 = vunpack.c.h.b16 %v348
  %v1673 = vunpack.c.l.b16 %v349
  %v1674 = vunpack.c.h.b16 %v349
  %v1675 = vunpack.c.l.b16 %v350
  %v1676 = vunpack.c.h.b16 %v350
  %v1677 = vunpack.c.l.b16 %v351
  %v1678 = vunpack.c.h.b16 %v351
  %v1679 = vunpack.c.l.b16 %v352
  %v1680 = vunpack.c.h.b16 %v352
  %v1681 = vunpack.c.l.b16 %v353
  %v1682 = vunpack.c.h.b16 %v353
  %v1683 = vunpack.c.l.b16 %v354
  %v1684 = vunpack.c.h.b16 %v354
  %v1685 = vunpack.c.l.b16 %v355
  %v1686 = vunpack.c.h.b16 %v355
  %v1687 = vunpack.c.l.b16 %v356
  %v1688 = vunpack.c.h.b16 %v356
  %v1689 = vunpack.c.l.b16 %v357
  %v1690 = vunpack.c.h.b16 %v357
  %v1691 = vunpack.c.l.b16 %v358
  %v1692 = vunpack.c.h.b16 %v358
  %v1693 = vunpack.c.l.b16 %v359
  %v1694 = vunpack.c.h.b16 %v359
  %v1695 = vunpack.c.l.b16 %v360
  %v1696 = vunpack.c.h.b16 %v360
  %v1697 = vunpack.c.l.b16 %v361
  %v1698 = vunpack.c.h.b16 %v361
  %v1699 = vunpack.c.l.b16 %v362
  %v1700 = vunpack.c.h.b16 %v362
  %v1701 = vunpack.c.l.b16 %v363
  %v1702 = vunpack.c.h.b16 %v363
  %v1703 = vunpack.c.l.b16 %v364
  %v1704 = vunpack.c.h.b16 %v364
  %v1705 = vunpack.c.l.b16 %v365
  %v1706 = vunpack.c.h.b16 %v365
  %v1707 = vunpack.c.l.b16 %v366
  %v1708 = vunpack.c.h.b16 %v366
  %v1709 = vunpack.c.l.b16 %v367
  %v1710 = vunpack.c.h.b16 %v367
  %v1711 = vunpack.c.l.b16 %v368
  %v1712 = vunpack.c.h.b16 %v368
  %v1713 = vunpack.c.l.b16 %v369
  %v1714 = vunpack.c.h.b16 %v369
  %v1715 = vunpack.c.l.b16 %v370
  %v1716 = vunpack.c.h.b16 %v370
  %v1717 = vunpack.c.l.b16 %v371
  %v1718 = vunpack.c.h.b16 %v371
  %v1719 = vunpack.c.l.b16 %v372
  %v1720 = vunpack.c.h.b16 %v372
  %v1721 = vunpack.c.l.b16 %v373
  %v1722 = vunpack.c.h.b16 %v373
  %v1723 = vunpack.c.l.b16 %v374
  %v1724 = vunpack.c.h.b16 %v374
  %v1725 = vunpack.c.l.b16 %v375
  %v1726 = vunpack.c.h.b16 %v375
  %v1727 = vunpack.c.l.b16 %v376
  %v1728 = vunpack.c.h.b16 %v376
  %v1729 = vunpack.c.l.b16 %v377
  %v1730 = vunpack.c.h.b16 %v377
  %v1731 = vunpack.c.l.b16 %v378
  %v1732 = vunpack.c.h.b16 %v378
  %v1733 = vunpack.c.l.b16 %v379
  %v1734 = vunpack.c.h.b16 %v379
  %v1735 = vunpack.c.l.b16 %v380
  %v1736 = vunpack.c.h.b16 %v380
  %v1737 = vunpack.c.l.b16 %v381
  %v1738 = vunpack.c.h.b16 %v381
  %v1739 = vunpack.c.l.b16 %v382
  %v1740 = vunpack.c.h.b16 %v382
  %v1741 = vunpack.c.l.b16 %v383
  %v1742 = vunpack.c.h.b16 %v383
  %v1743 = vunpack.c.l.b16 %v384
  %v1744 = vunpack.c.h.b16 %v384
  %v1745 = vunpack.c.l.b16 %v385
  %v1746 = vunpack.c.h.b16 %v385
  %v1747 = vunpack.c.l.b16 %v386
  %v1748 = vunpack.c.h.b16 %v386
  %v1749 = vunpack.c.l.b16 %v387
  %v1750 = vunpack.c.h.b16 %v387
  %v1751 = vunpack.c.l.b16 %v388
  %v1752 = vunpack.c.h.b16 %v388
  %v1753 = vunpack.c.l.b16 %v389
  %v1754 = vunpack.c.h.b16 %v389
  %v1755 = vunpack.c.l.b16 %v390
  %v1756 = vunpack.c.h.b16 %v390
  %v1757 = vunpack.c.l.b16 %v391
  %v1758 = vunpack.c.h.b16 %v391
  %v1759 = vunpack.c.l.b16 %v392
  %v1760 = vunpack.c.h.b16 %v392
  %v1761 = vunpack.c.l.b16 %v393
  %v1762 = vunpack.c.h.b16 %v393
  %v1763 = vunpack.c.l.b16 %v394
  %v1764 = vunpack.c.h.b16 %v394
  %v1765 = vunpack.c.l.b16 %v395
  %v1766 = vunpack.c.h.b16 %v395
  %v1767 = vunpack.c.l.b16 %v396
  %v1768 = vunpack.c.h.b16 %v396
  %v1769 = vunpack.c.l.b16 %v397
  %v1770 = vunpack.c.h.b16 %v397
  %v1771 = vunpack.c.l.b16 %v398
  %v1772 = vunpack.c.h.b16 %v398
  %v1773 = vunpack.c.l.b16 %v399
  %v1774 = vunpack.c.h.b16 %v399
  %v1775 = vunpack.c.l.b16 %v400
  %v1776 = vunpack.c.h.b16 %v400
  %v1777 = vunpack.c.l.b16 %v401
  %v1778 = vunpack.c.h.b16 %v401
  %v1779 = vunpack.c.l.b16 %v402
  %v1780 = vunpack.c.h.b16 %v402
  %v1781 = vunpack.c.l.b16 %v403
  %v1782 = vunpack.c.h.b16 %v403
  %v1783 = vunpack.c.l.b16 %v404
  %v1784 = vunpack.c.h.b16 %v404
  %v1785 = vunpack.c.l.b16 %v405
  %v1786 = vunpack.c.h.b16 %v405
  %v1787 = vunpack.c.l.b16 %v406
  %v1788 = vunpack.c.h.b16 %v406
  %v1789 = vunpack.c.l.b16 %v407
  %v1790 = vunpack.c.h.b16 %v407
  %v1791 = vunpack.c.l.b16 %v408
  %v1792 = vunpack.c.h.b16 %v408
  %v1793 = vunpack.c.l.b16 %v409
  %v1794 = vunpack.c.h.b16 %v409
  %v1795 = vunpack.c.l.b16 %v410
  %v1796 = vunpack.c.h.b16 %v410
  %v1797 = vunpack.c.l.b16 %v411
  %v1798 = vunpack.c.h.b16 %v411
  %v1799 = vunpack.c.l.b16 %v412
  %v1800 = vunpack.c.h.b16 %v412
  %v1801 = vunpack.c.l.b16 %v413
  %v1802 = vunpack.c.h.b16 %v413
  %v1803 = vunpack.c.l.b16 %v414
  %v1804 = vunpack.c.h.b16 %v414
  %v1805 = vunpack.c.l.b16 %v415
  %v1806 = vunpack.c.h.b16 %v415
  %v1807 = vunpack.c.l.b16 %v416
  %v1808 = vunpack.c.h.b16 %v416
  %v1809 = vunpack.c.l.b16 %v417
  %v1810 = vunpack.c.h.b16 %v417
  %v1811 = vunpack.c.l.b16 %v418
  %v1812 = vunpack.c.h.b16 %v418
  %v1813 = vunpack.c.l.b16 %v419
  %v1814 = vunpack.c.h.b16 %v419
  %v1815 = vunpack.c.l.b16 %v420
  %v1816 = vunpack.c.h.b16 %v420
  %v1817 = vunpack.c.l.b16 %v421
  %v1818 = vunpack.c.h.b16 %v421
  %v1819 = vunpack.c.l.b16 %v422
  %v1820 = vunpack.c.h.b16 %v422
  %v1821 = vunpack.c.l.b16 %v423
  %v1822 = vunpack.c.h.b16 %v423
  %v1823 = vunpack.c.l.b16 %v424
  %v1824 = vunpack.c.h.b16 %v424
  %v1825 = vunpack.c.l.b16 %v425
  %v1826 = vunpack.c.h.b16 %v425
  %v1827 = vunpack.c.l.b16 %v426
  %v1828 = vunpack.c.h.b16 %v426
  %v1829 = vunpack.c.l.b16 %v427
  %v1830 = vunpack.c.h.b16 %v427
  %v1831 = vunpack.c.l.b16 %v428
  %v1832 = vunpack.c.h.b16 %v428
  %v1833 = vunpack.c.l.b16 %v429
  %v1834 = vunpack.c.h.b16 %v429
  %v1835 = vunpack.c.l.b16 %v430
  %v1836 = vunpack.c.h.b16 %v430
  %v1837 = vunpack.c.l.b16 %v431
  %v1838 = vunpack.c.h.b16 %v431
  %v1839 = vunpack.c.l.b16 %v432
  %v1840 = vunpack.c.h.b16 %v432
  %v1841 = vunpack.c.l.b16 %v433
  %v1842 = vunpack.c.h.b16 %v433
  %v1843 = vunpack.c.l.b16 %v434
  %v1844 = vunpack.c.h.b16 %v434
  %v1845 = vunpack.c.l.b16 %v435
  %v1846 = vunpack.c.h.b16 %v435
  %v1847 = vunpack.c.l.b16 %v436
  %v1848 = vunpack.c.h.b16 %v436
  %v1849 = vunpack.c.l.b16 %v437
  %v1850 = vunpack.c.h.b16 %v437
  %v1851 = vunpack.c.l.b16 %v438
  %v1852 = vunpack.c.h.b16 %v438
  %v1853 = vunpack.c.l.b16 %v439
  %v1854 = vunpack.c.h.b16 %v439
  %v1855 = vunpack.c.l.b16 %v440
  %v1856 = vunpack.c.h.b16 %v440
  %v1857 = vunpack.c.l.b16 %v441
  %v1858 = vunpack.c.h.b16 %v441
  %v1859 = vunpack.c.l.b16 %v442
  %v1860 = vunpack.c.h.b16 %v442
  %v1861 = vunpack.c.l.b16 %v443
  %v1862 = vunpack.c.h.b16 %v443
  %v1863 = vunpack.c.l.b16 %v444
  %v1864 = vunpack.c.h.b16 %v444
  %v1865 = vunpack.c.l.b16 %v445
  %v1866 = vunpack.c.h.b16 %v445
  %v1867 = vunpack.c.l.b16 %v446
  %v1868 = vunpack.c.h.b16 %v446
  %v1869 = vunpack.c.l.b16 %v447
  %v1870 = vunpack.c.h.b16 %v447
  %v1871 = vunpack.c.l.b16 %v448
  %v1872 = vunpack.c.h.b16 %v448
  %v1873 = vunpack.c.l.b16 %v449
  %v1874 = vunpack.c.h.b16 %v449
  %v1875 = vunpack.c.l.b16 %v450
  %v1876 = vunpack.c.h.b16 %v450
  %v1877 = vunpack.c.l.b16 %v451
  %v1878 = vunpack.c.h.b16 %v451
  %v1879 = vunpack.c.l.b16 %v452
  %v1880 = vunpack.c.h.b16 %v452
  %v1881 = vunpack.c.l.b16 %v453
  %v1882 = vunpack.c.h.b16 %v453
  %v1883 = vunpack.c.l.b16 %v454
  %v1884 = vunpack.c.h.b16 %v454
  %v1885 = vunpack.c.l.b16 %v455
  %v1886 = vunpack.c.h.b16 %v455
  %v1887 = vunpack.c.l.b16 %v456
  %v1888 = vunpack.c.h.b16 %v456
  %v1889 = vunpack.c.l.b16 %v457
  %v1890 = vunpack.c.h.b16 %v457
  %v1891 = vunpack.c.l.b16 %v458
  %v1892 = vunpack.c.h.b16 %v458
  %v1893 = vunpack.c.l.b16 %v459
  %v1894 = vunpack.c.h.b16 %v459
  %v1895 = vunpack.c.l.b16 %v460
  %v1896 = vunpack.c.h.b16 %v460
  %v1897 = vunpack.c.l.b16 %v461
  %v1898 = vunpack.c.h.b16 %v461
  %v1899 = vunpack.c.l.b16 %v462
  %v1900 = vunpack.c.h.b16 %v462
  %v1901 = vunpack.c.l.b16 %v463
  %v1902 = vunpack.c.h.b16 %v463
  %v1903 = vunpack.c.l.b16 %v464
  %v1904 = vunpack.c.h.b16 %v464
  %v1905 = vunpack.c.l.b16 %v465
  %v1906 = vunpack.c.h.b16 %v465
  %v1907 = vunpack.c.l.b16 %v466
  %v1908 = vunpack.c.h.b16 %v466
  %v1909 = vunpack.c.l.b16 %v467
  %v1910 = vunpack.c.h.b16 %v467
  %v1911 = vunpack.c.l.b16 %v468
  %v1912 = vunpack.c.h.b16 %v468
  %v1913 = vunpack.c.l.b16 %v469
  %v1914 = vunpack.c.h.b16 %v469
  %v1915 = vunpack.c.l.b16 %v470
  %v1916 = vunpack.c.h.b16 %v470
  %v1917 = vunpack.c.l.b16 %v471
  %v1918 = vunpack.c.h.b16 %v471
  %v1919 = vunpack.c.l.b16 %v472
  %v1920 = vunpack.c.h.b16 %v472
  %v1921 = vunpack.c.l.b16 %v473
  %v1922 = vunpack.c.h.b16 %v473
  %v1923 = vunpack.c.l.b16 %v474
  %v1924 = vunpack.c.h.b16 %v474
  %v1925 = vunpack.c.l.b16 %v475
  %v1926 = vunpack.c.h.b16 %v475
  %v1927 = vunpack.c.l.b16 %v476
  %v1928 = vunpack.c.h.b16 %v476
  %v1929 = vunpack.c.l.b16 %v477
  %v1930 = vunpack.c.h.b16 %v477
  %v1931 = vunpack.c.l.b16 %v478
  %v1932 = vunpack.c.h.b16 %v478
  %v1933 = vunpack.c.l.b16 %v479
  %v1934 = vunpack.c.h.b16 %v479
  %v1935 = vunpack.c.l.b16 %v480
  %v1936 = vunpack.c.h.b16 %v480
  %v1937 = vunpack.c.l.b16 %v481
  %v1938 = vunpack.c.h.b16 %v481
  %v1939 = vunpack.c.l.b16 %v482
  %v1940 = vunpack.c.h.b16 %v482
  %v1941 = vunpack.c.l.b16 %v483
  %v1942 = vunpack.c.h.b16 %v483
  %v1943 = vunpack.c.l.b16 %v484
  %v1944 = vunpack.c.h.b16 %v484
  %v1945 = vunpack.c.l.b16 %v485
  %v1946 = vunpack.c.h.b16 %v485
  %v1947 = vunpack.c.l.b16 %v486
  %v1948 = vunpack.c.h.b16 %v486
  %v1949 = vunpack.c.l.b16 %v487
  %v1950 = vunpack.c.h.b16 %v487
  %v1951 = vunpack.c.l.b16 %v488
  %v1952 = vunpack.c.h.b16 %v488
  %v1953 = vunpack.c.l.b16 %v489
  %v1954 = vunpack.c.h.b16 %v489
  %v1955 = vunpack.c.l.b16 %v490
  %v1956 = vunpack.c.h.b16 %v490
  %v1957 = vunpack.c.l.b16 %v491
  %v1958 = vunpack.c.h.b16 %v491
  %v1959 = vunpack.c.l.b16 %v492
  %v1960 = vunpack.c.h.b16 %v492
  %v1961 = vunpack.c.l.b16 %v493
  %v1962 = vunpack.c.h.b16 %v493
  %v1963 = vunpack.c.l.b16 %v494
  %v1964 = vunpack.c.h.b16 %v494
  %v1965 = vunpack.c.l.b16 %v495
  %v1966 = vunpack.c.h.b16 %v495
  %v1967 = vunpack.c.l.b16 %v496
  %v1968 = vunpack.c.h.b16 %v496
  %v1969 = vunpack.c.l.b16 %v497
  %v1970 = vunpack.c.h.b16 %v497
  %v1971 = vunpack.c.l.b16 %v498
  %v1972 = vunpack.c.h.b16 %v498
  %v1973 = vunpack.c.l.b16 %v499
  %v1974 = vunpack.c.h.b16 %v499
  %v1975 = vunpack.c.l.b16 %v500
  %v1976 = vunpack.c.h.b16 %v500
  %v1977 = vunpack.c.l.b16 %v501
  %v1978 = vunpack.c.h.b16 %v501
  %v1979 = vunpack.c.l.b16 %v502
  %v1980 = vunpack.c.h.b16 %v502
  %v1981 = vunpack.c.l.b16 %v503
  %v1982 = vunpack.c.h.b16 %v503
  %v1983 = vunpack.c.l.b16 %v504
  %v1984 = vunpack.c.h.b16 %v504
  %v1985 = vunpack.c.l.b16 %v505
  %v1986 = vunpack.c.h.b16 %v505
  %v1987 = vunpack.c.l.b16 %v506
  %v1988 = vunpack.c.h.b16 %v506
  %v1989 = vunpack.c.l.b16 %v507
  %v1990 = vunpack.c.h.b16 %v507
  %v1991 = vunpack.c.l.b16 %v508
  %v1992 = vunpack.c.h.b16 %v508
  %v1993 = vunpack.c.l.b16 %v509
  %v1994 = vunpack.c.h.b16 %v509
  %v1995 = vunpack.c.l.b16 %v510
  %v1996 = vunpack.c.h.b16 %v510
  %v1997 = vunpack.c.l.b16 %v511
  %v1998 = vunpack.c.h.b16 %v511
  %v1999 = vunpack.c.l.b16 %v512
  %v2000 = vunpack.c.h.b16 %v512
  %v2001 = vunpack.c.l.b16 %v513
  %v2002 = vunpack.c.h.b16 %v513
  %v2003 = vunpack.c.l.b16 %v514
  %v2004 = vunpack.c.h.b16 %v514
  %v2005 = vunpack.c.l.b16 %v515
  %v2006 = vunpack.c.h.b16 %v515
  %v2007 = vunpack.c.l.b16 %v516
  %v2008 = vunpack.c.h.b16 %v516
  %v2009 = vunpack.c.l.b16 %v517
  %v2010 = vunpack.c.h.b16 %v517
  %v2011 = vunpack.c.l.b16 %v518
  %v2012 = vunpack.c.h.b16 %v518
  %v2013 = vunpack.c.l.b16 %v519
  %v2014 = vunpack.c.h.b16 %v519
  %v2015 = vunpack.c.l.b16 %v520
  %v2016 = vunpack.c.h.b16 %v520
  %v2017 = vunpack.c.l.b16 %v521
  %v2018 = vunpack.c.h.b16 %v521
  %v2019 = vunpack.c.l.b16 %v522
  %v2020 = vunpack.c.h.b16 %v522
  %v2021 = vunpack.c.l.b16 %v523
  %v2022 = vunpack.c.h.b16 %v523
  %v2023 = vunpack.c.l.b16 %v524
  %v2024 = vunpack.c.h.b16 %v524
  %v2025 = vunpack.c.l.b16 %v525
  %v2026 = vunpack.c.h.b16 %v525
  %v2027 = vunpack.c.l.b16 %v526
  %v2028 = vunpack.c.h.b16 %v526
  %v2029 = vunpack.c.l.b16 %v527
  %v2030 = vunpack.c.h.b16 %v527
  %v2031 = vunpack.c.l.b16 %v528
  %v2032 = vunpack.c.h.b16 %v528
  %v2033 = vunpack.c.l.b16 %v529
  %v2034 = vunpack.c.h.b16 %v529
  %v2035 = vunpack.c.l.b16 %v530
  %v2036 = vunpack.c.h.b16 %v530
  %v2037 = vunpack.c.l.b16 %v531
  %v2038 = vunpack.c.h.b16 %v531
  %v2039 = vunpack.c.l.b16 %v532
  %v2040 = vunpack.c.h.b16 %v532
  %v2041 = vunpack.c.l.b16 %v533
  %v2042 = vunpack.c.h.b16 %v533
  %v2043 = vunpack.c.l.b16 %v534
  %v2044 = vunpack.c.h.b16 %v534
  %v2045 = vunpack.c.l.b16 %v535
  %v2046 = vunpack.c.h.b16 %v535
  %v2047 = vunpack.c.l.b16 %v536
  %v2048 = vunpack.c.h.b16 %v536
  %v2049 = vunpack.c.l.b16 %v537
  %v2050 = vunpack.c.h.b16 %v537
  %v2051 = vunpack.c.l.b16 %v538
  %v2052 = vunpack.c.h.b16 %v538
  %v2053 = vunpack.c.l.b16 %v539
  %v2054 = vunpack.c.h.b16 %v539
  %v2055 = vunpack.c.l.b16 %v540
  %v2056 = vunpack.c.h.b16 %v540
  %v2057 = vunpack.c.l.b16 %v541
  %v2058 = vunpack.c.h.b16 %v541
  %v2059 = vunpack.c.l.b16 %v542
  %v2060 = vunpack.c.h.b16 %v542
  %v2061 = vunpack.c.l.b16 %v543
  %v2062 = vunpack.c.h.b16 %v543
  %v2063 = vunpack.c.l.b16 %v544
  %v2064 = vunpack.c.h.b16 %v544
  %v2065 = vunpack.c.l.b16 %v545
  %v2066 = vunpack.c.h.b16 %v545
  %v2067 = vunpack.c.l.b16 %v546
  %v2068 = vunpack.c.h.b16 %v546
  %v2069 = vunpack.c.l.b16 %v547
  %v2070 = vunpack.c.h.b16 %v547
  %v2071 = vunpack.c.l.b16 %v548
  %v2072 = vunpack.c.h.b16 %v548
  %v2073 = vunpack.c.l.b16 %v549
  %v2074 = vunpack.c.h.b16 %v549
  %v2075 = vunpack.c.l.b16 %v550
  %v2076 = vunpack.c.h.b16 %v550
  %v2077 = vunpack.c.l.b16 %v551
  %v2078 = vunpack.c.h.b16 %v551
  %v2079 = vunpack.c.l.b16 %v552
  %v2080 = vunpack.c.h.b16 %v552
  %v2081 = vunpack.c.l.b16 %v553
  %v2082 = vunpack.c.h.b16 %v553
  %v2083 = vunpack.c.l.b16 %v554
  %v2084 = vunpack.c.h.b16 %v554
  %v2085 = vunpack.c.l.b16 %v555
  %v2086 = vunpack.c.h.b16 %v555
  %v2087 = vunpack.c.l.b16 %v556
  %v2088 = vunpack.c.h.b16 %v556
  %v2089 = vunpack.c.l.b16 %v557
  %v2090 = vunpack.c.h.b16 %v557
  %v2091 = vunpack.c.l.b16 %v558
  %v2092 = vunpack.c.h.b16 %v558
  %v2093 = vunpack.c.l.b16 %v559
  %v2094 = vunpack.c.h.b16 %v559
  %v2095 = vunpack.c.l.b16 %v560
  %v2096 = vunpack.c.h.b16 %v560
  %v2097 = vunpack.c.l.b16 %v561
  %v2098 = vunpack.c.h.b16 %v561
  %v2099 = vunpack.c.l.b16 %v562
  %v2100 = vunpack.c.h.b16 %v562
  %v2101 = vunpack.c.l.b16 %v563
  %v2102 = vunpack.c.h.b16 %v563
  %v2103 = vunpack.c.l.b16 %v564
  %v2104 = vunpack.c.h.b16 %v564
  %v2105 = vunpack.c.l.b16 %v565
  %v2106 = vunpack.c.h.b16 %v565
  %v2107 = vunpack.c.l.b16 %v566
  %v2108 = vunpack.c.h.b16 %v566
  %v2109 = vunpack.c.l.b16 %v567
  %v2110 = vunpack.c.h.b16 %v567
  %v2111 = vunpack.c.l.b16 %v568
  %v2112 = vunpack.c.h.b16 %v568
  %v2113 = vunpack.c.l.b16 %v569
  %v2114 = vunpack.c.h.b16 %v569
  %v2115 = vunpack.c.l.b16 %v570
  %v2116 = vunpack.c.h.b16 %v570
  %v2117 = vunpack.c.l.b16 %v571
  %v2118 = vunpack.c.h.b16 %v571
  %v2119 = vunpack.c.l.b16 %v572
  %v2120 = vunpack.c.h.b16 %v572
  %v2121 = vunpack.c.l.b16 %v573
  %v2122 = vunpack.c.h.b16 %v573
  %v2123 = vunpack.c.l.b16 %v574
  %v2124 = vunpack.c.h.b16 %v574
  %v2125 = vunpack.c.l.b16 %v575
  %v2126 = vunpack.c.h.b16 %v575
  %v2127 = vunpack.c.l.b16 %v576
  %v2128 = vunpack.c.h.b16 %v576
  %v2129 = vunpack.c.l.b16 %v577
  %v2130 = vunpack.c.h.b16 %v577
  %v2131 = vunpack.c.l.b16 %v578
  %v2132 = vunpack.c.h.b16 %v578
  %v2133 = vunpack.c.l.b16 %v579
  %v2134 = vunpack.c.h.b16 %v579
  %v2135 = vunpack.c.l.b16 %v580
  %v2136 = vunpack.c.h.b16 %v580
  %v2137 = vunpack.c.l.b16 %v581
  %v2138 = vunpack.c.h.b16 %v581
  %v2139 = vunpack.c.l.b16 %v582
  %v2140 = vunpack.c.h.b16 %v582
  %v2141 = vpack.c.b16 %v1121, %v1117
  %v2142 = vpack.c.b16 %v1122, %v1118
  %v2143 = vpack.c.b16 %v1123, %v1119
  %v2144 = vpack.c.b16 %v1124, %v1120
  %v2145 = vpack.c.b16 %v1129, %v1125
  %v2146 = vpack.c.b16 %v1130, %v1126
  %v2147 = vpack.c.b16 %v1131, %v1127
  %v2148 = vpack.c.b16 %v1132, %v1128
  %v2149 = vpack.c.b16 %v1137, %v1133
  %v2150 = vpack.c.b16 %v1138, %v1134
  %v2151 = vpack.c.b16 %v1139, %v1135
  %v2152 = vpack.c.b16 %v1140, %v1136
  %v2153 = vpack.c.b16 %v1145, %v1141
  %v2154 = vpack.c.b16 %v1146, %v1142
  %v2155 = vpack.c.b16 %v1147, %v1143
  %v2156 = vpack.c.b16 %v1148, %v1144
  %v2157 = vpack.c.b16 %v1153, %v1149
  %v2158 = vpack.c.b16 %v1154, %v1150
  %v2159 = vpack.c.b16 %v1155, %v1151
  %v2160 = vpack.c.b16 %v1156, %v1152
  %v2161 = vpack.c.b16 %v1161, %v1157
  %v2162 = vpack.c.b16 %v1162, %v1158
  %v2163 = vpack.c.b16 %v1163, %v1159
  %v2164 = vpack.c.b16 %v1164, %v1160
  %v2165 = vpack.c.b16 %v1169, %v1165
  %v2166 = vpack.c.b16 %v1170, %v1166
  %v2167 = vpack.c.b16 %v1171, %v1167
  %v2168 = vpack.c.b16 %v1172, %v1168
  %v2169 = vpack.c.b16 %v1177, %v1173
  %v2170 = vpack.c.b16 %v1178, %v1174
  %v2171 = vpack.c.b16 %v1179, %v1175
  %v2172 = vpack.c.b16 %v1180, %v1176
  %v2173 = vpack.c.b16 %v1185, %v1181
  %v2174 = vpack.c.b16 %v1186, %v1182
  %v2175 = vpack.c.b16 %v1187, %v1183
  %v2176 = vpack.c.b16 %v1188, %v1184
  %v2177 = vpack.c.b16 %v1193, %v1189
  %v2178 = vpack.c.b16 %v1194, %v1190
  %v2179 = vpack.c.b16 %v1195, %v1191
  %v2180 = vpack.c.b16 %v1196, %v1192
  %v2181 = vpack.c.b16 %v1201, %v1197
  %v2182 = vpack.c.b16 %v1202, %v1198
  %v2183 = vpack.c.b16 %v1203, %v1199
  %v2184 = vpack.c.b16 %v1204, %v1200
  %v2185 = vpack.c.b16 %v1209, %v1205
  %v2186 = vpack.c.b16 %v1210, %v1206
  %v2187 = vpack.c.b16 %v1211, %v1207
  %v2188 = vpack.c.b16 %v1212, %v1208
  %v2189 = vpack.c.b16 %v1217, %v1213
  %v2190 = vpack.c.b16 %v1218, %v1214
  %v2191 = vpack.c.b16 %v1219, %v1215
  %v2192 = vpack.c.b16 %v1220, %v1216
  %v2193 = vpack.c.b16 %v1225, %v1221
  %v2194 = vpack.c.b16 %v1226, %v1222
  %v2195 = vpack.c.b16 %v1227, %v1223
  %v2196 = vpack.c.b16 %v1228, %v1224
  %v2197 = vpack.c.b16 %v1233, %v1229
  %v2198 = vpack.c.b16 %v1234, %v1230
  %v2199 = vpack.c.b16 %v1235, %v1231
  %v2200 = vpack.c.b16 %v1236, %v1232
  %v2201 = vpack.c.b16 %v1241, %v1237
  %v2202 = vpack.c.b16 %v1242, %v1238
  %v2203 = vpack.c.b16 %v1243, %v1239
  %v2204 = vpack.c.b16 %v1244, %v1240
  %v2205 = vpack.c.b16 %v1249, %v1245
  %v2206 = vpack.c.b16 %v1250, %v1246
  %v2207 = vpack.c.b16 %v1251, %v1247
  %v2208 = vpack.c.b16 %v1252, %v1248
  %v2209 = vpack.c.b16 %v1257, %v1253
  %v2210 = vpack.c.b16 %v1258, %v1254
  %v2211 = vpack.c.b16 %v1259, %v1255
  %v2212 = vpack.c.b16 %v1260, %v1256
  %v2213 = vpack.c.b16 %v1265, %v1261
  %v2214 = vpack.c.b16 %v1266, %v1262
  %v2215 = vpack.c.b16 %v1267, %v1263
  %v2216 = vpack.c.b16 %v1268, %v1264
  %v2217 = vpack.c.b16 %v1273, %v1269
  %v2218 = vpack.c.b16 %v1274, %v1270
  %v2219 = vpack.c.b16 %v1275, %v1271
  %v2220 = vpack.c.b16 %v1276, %v1272
  %v2221 = vpack.c.b16 %v1281, %v1277
  %v2222 = vpack.c.b16 %v1282, %v1278
  %v2223 = vpack.c.b16 %v1283, %v1279
  %v2224 = vpack.c.b16 %v1284, %v1280
  %v2225 = vpack.c.b16 %v1289, %v1285
  %v2226 = vpack.c.b16 %v1290, %v1286
  %v2227 = vpack.c.b16 %v1291, %v1287
  %v2228 = vpack.c.b16 %v1292, %v1288
  %v2229 = vpack.c.b16 %v1297, %v1293
  %v2230 = vpack.c.b16 %v1298, %v1294
  %v2231 = vpack.c.b16 %v1299, %v1295
  %v2232 = vpack.c.b16 %v1300, %v1296
  %v2233 = vpack.c.b16 %v1305, %v1301
  %v2234 = vpack.c.b16 %v1306, %v1302
  %v2235 = vpack.c.b16 %v1307, %v1303
  %v2236 = vpack.c.b16 %v1308, %v1304
  %v2237 = vpack.c.b16 %v1313, %v1309
  %v2238 = vpack.c.b16 %v1314, %v1310
  %v2239 = vpack.c.b16 %v1315, %v1311
  %v2240 = vpack.c.b16 %v1316, %v1312
  %v2241 = vpack.c.b16 %v1321, %v1317
  %v2242 = vpack.c.b16 %v1322, %v1318
  %v2243 = vpack.c.b16 %v1323, %v1319
  %v2244 = vpack.c.b16 %v1324, %v1320
  %v2245 = vpack.c.b16 %v1329, %v1325
  %v2246 = vpack.c.b16 %v1330, %v1326
  %v2247 = vpack.c.b16 %v1331, %v1327
  %v2248 = vpack.c.b16 %v1332, %v1328
  %v2249 = vpack.c.b16 %v1337, %v1333
  %v2250 = vpack.c.b16 %v1338, %v1334
  %v2251 = vpack.c.b16 %v1339, %v1335
  %v2252 = vpack.c.b16 %v1340, %v1336
  %v2253 = vpack.c.b16 %v1345, %v1341
  %v2254 = vpack.c.b16 %v1346, %v1342
  %v2255 = vpack.c.b16 %v1347, %v1343
  %v2256 = vpack.c.b16 %v1348, %v1344
  %v2257 = vpack.c.b16 %v1353, %v1349
  %v2258 = vpack.c.b16 %v1354, %v1350
  %v2259 = vpack.c.b16 %v1355, %v1351
  %v2260 = vpack.c.b16 %v1356, %v1352
  %v2261 = vpack.c.b16 %v1361, %v1357
  %v2262 = vpack.c.b16 %v1362, %v1358
  %v2263 = vpack.c.b16 %v1363, %v1359
  %v2264 = vpack.c.b16 %v1364, %v1360
  %v2265 = vpack.c.b16 %v1369, %v1365
  %v2266 = vpack.c.b16 %v1370, %v1366
  %v2267 = vpack.c.b16 %v1371, %v1367
  %v2268 = vpack.c.b16 %v1372, %v1368
  %v2269 = vpack.c.b16 %v1377, %v1373
  %v2270 = vpack.c.b16 %v1378, %v1374
  %v2271 = vpack.c.b16 %v1379, %v1375
  %v2272 = vpack.c.b16 %v1380, %v1376
  %v2273 = vpack.c.b16 %v1385, %v1381
  %v2274 = vpack.c.b16 %v1386, %v1382
  %v2275 = vpack.c.b16 %v1387, %v1383
  %v2276 = vpack.c.b16 %v1388, %v1384
  %v2277 = vpack.c.b16 %v1393, %v1389
  %v2278 = vpack.c.b16 %v1394, %v1390
  %v2279 = vpack.c.b16 %v1395, %v1391
  %v2280 = vpack.c.b16 %v1396, %v1392
  %v2281 = vpack.c.b16 %v1401, %v1397
  %v2282 = vpack.c.b16 %v1402, %v1398
  %v2283 = vpack.c.b16 %v1403, %v1399
  %v2284 = vpack.c.b16 %v1404, %v1400
  %v2285 = vpack.c.b16 %v1409, %v1405
  %v2286 = vpack.c.b16 %v1410, %v1406
  %v2287 = vpack.c.b16 %v1411, %v1407
  %v2288 = vpack.c.b16 %v1412, %v1408
  %v2289 = vpack.c.b16 %v1417, %v1413
  %v2290 = vpack.c.b16 %v1418, %v1414
  %v2291 = vpack.c.b16 %v1419, %v1415
  %v2292 = vpack.c.b16 %v1420, %v1416
  %v2293 = vpack.c.b16 %v1425, %v1421
  %v2294 = vpack.c.b16 %v1426, %v1422
  %v2295 = vpack.c.b16 %v1427, %v1423
  %v2296 = vpack.c.b16 %v1428, %v1424
  %v2297 = vpack.c.b16 %v1433, %v1429
  %v2298 = vpack.c.b16 %v1434, %v1430
  %v2299 = vpack.c.b16 %v1435, %v1431
  %v2300 = vpack.c.b16 %v1436, %v1432
  %v2301 = vpack.c.b16 %v1441, %v1437
  %v2302 = vpack.c.b16 %v1442, %v1438
  %v2303 = vpack.c.b16 %v1443, %v1439
  %v2304 = vpack.c.b16 %v1444, %v1440
  %v2305 = vpack.c.b16 %v1449, %v1445
  %v2306 = vpack.c.b16 %v1450, %v1446
  %v2307 = vpack.c.b16 %v1451, %v1447
  %v2308 = vpack.c.b16 %v1452, %v1448
  %v2309 = vpack.c.b16 %v1457, %v1453
  %v2310 = vpack.c.b16 %v1458, %v1454
  %v2311 = vpack.c.b16 %v1459, %v1455
  %v2312 = vpack.c.b16 %v1460, %v1456
  %v2313 = vpack.c.b16 %v1465, %v1461
  %v2314 = vpack.c.b16 %v1466, %v1462
  %v2315 = vpack.c.b16 %v1467, %v1463
  %v2316 = vpack.c.b16 %v1468, %v1464
  %v2317 = vpack.c.b16 %v1473, %v1469
  %v2318 = vpack.c.b16 %v1474, %v1470
  %v2319 = vpack.c.b16 %v1475, %v1471
  %v2320 = vpack.c.b16 %v1476, %v1472
  %v2321 = vpack.c.b16 %v1481, %v1477
  %v2322 = vpack.c.b16 %v1482, %v1478
  %v2323 = vpack.c.b16 %v1483, %v1479
  %v2324 = vpack.c.b16 %v1484, %v1480
  %v2325 = vpack.c.b16 %v1489, %v1485
  %v2326 = vpack.c.b16 %v1490, %v1486
  %v2327 = vpack.c.b16 %v1491, %v1487
  %v2328 = vpack.c.b16 %v1492, %v1488
  %v2329 = vpack.c.b16 %v1497, %v1493
  %v2330 = vpack.c.b16 %v1498, %v1494
  %v2331 = vpack.c.b16 %v1499, %v1495
  %v2332 = vpack.c.b16 %v1500, %v1496
  %v2333 = vpack.c.b16 %v1505, %v1501
  %v2334 = vpack.c.b16 %v1506, %v1502
  %v2335 = vpack.c.b16 %v1507, %v1503
  %v2336 = vpack.c.b16 %v1508, %v1504
  %v2337 = vpack.c.b16 %v1513, %v1509
  %v2338 = vpack.c.b16 %v1514, %v1510
  %v2339 = vpack.c.b16 %v1515, %v1511
  %v2340 = vpack.c.b16 %v1516, %v1512
  %v2341 = vpack.c.b16 %v1521, %v1517
  %v2342 = vpack.c.b16 %v1522, %v1518
  %v2343 = vpack.c.b16 %v1523, %v1519
  %v2344 = vpack.c.b16 %v1524, %v1520
  %v2345 = vpack.c.b16 %v1529, %v1525
  %v2346 = vpack.c.b16 %v1530, %v1526
  %v2347 = vpack.c.b16 %v1531, %v1527
  %v2348 = vpack.c.b16 %v1532, %v1528
  %v2349 = vpack.c.b16 %v1537, %v1533
  %v2350 = vpack.c.b16 %v1538, %v1534
  %v2351 = vpack.c.b16 %v1539, %v1535
  %v2352 = vpack.c.b16 %v1540, %v1536
  %v2353 = vpack.c.b16 %v1545, %v1541
  %v2354 = vpack.c.b16 %v1546, %v1542
  %v2355 = vpack.c.b16 %v1547, %v1543
  %v2356 = vpack.c.b16 %v1548, %v1544
  %v2357 = vpack.c.b16 %v1553, %v1549
  %v2358 = vpack.c.b16 %v1554, %v1550
  %v2359 = vpack.c.b16 %v1555, %v1551
  %v2360 = vpack.c.b16 %v1556, %v1552
  %v2361 = vpack.c.b16 %v1561, %v1557
  %v2362 = vpack.c.b16 %v1562, %v1558
  %v2363 = vpack.c.b16 %v1563, %v1559
  %v2364 = vpack.c.b16 %v1564, %v1560
  %v2365 = vpack.c.b16 %v1569, %v1565
  %v2366 = vpack.c.b16 %v1570, %v1566
  %v2367 = vpack.c.b16 %v1571, %v1567
  %v2368 = vpack.c.b16 %v1572, %v1568
  %v2369 = vpack.c.b16 %v1577, %v1573
  %v2370 = vpack.c.b16 %v1578, %v1574
  %v2371 = vpack.c.b16 %v1579, %v1575
  %v2372 = vpack.c.b16 %v1580, %v1576
  %v2373 = vpack.c.b16 %v1585, %v1581
  %v2374 = vpack.c.b16 %v1586, %v1582
  %v2375 = vpack.c.b16 %v1587, %v1583
  %v2376 = vpack.c.b16 %v1588, %v1584
  %v2377 = vpack.c.b16 %v1593, %v1589
  %v2378 = vpack.c.b16 %v1594, %v1590
  %v2379 = vpack.c.b16 %v1595, %v1591
  %v2380 = vpack.c.b16 %v1596, %v1592
  %v2381 = vpack.c.b16 %v1601, %v1597
  %v2382 = vpack.c.b16 %v1602, %v1598
  %v2383 = vpack.c.b16 %v1603, %v1599
  %v2384 = vpack.c.b16 %v1604, %v1600
  %v2385 = vpack.c.b16 %v1609, %v1605
  %v2386 = vpack.c.b16 %v1610, %v1606
  %v2387 = vpack.c.b16 %v1611, %v1607
  %v2388 = vpack.c.b16 %v1612, %v1608
  %v2389 = vpack.c.b16 %v1617, %v1613
  %v2390 = vpack.c.b16 %v1618, %v1614
  %v2391 = vpack.c.b16 %v1619, %v1615
  %v2392 = vpack.c.b16 %v1620, %v1616
  %v2393 = vpack.c.b16 %v1625, %v1621
  %v2394 = vpack.c.b16 %v1626, %v1622
  %v2395 = vpack.c.b16 %v1627, %v1623
  %v2396 = vpack.c.b16 %v1628, %v1624
  %v2397 = vpack.c.b16 %v1633, %v1629
  %v2398 = vpack.c.b16 %v1634, %v1630
  %v2399 = vpack.c.b16 %v1635, %v1631
  %v2400 = vpack.c.b16 %v1636, %v1632
  %v2401 = vpack.c.b16 %v1641, %v1637
  %v2402 = vpack.c.b16 %v1642, %v1638
  %v2403 = vpack.c.b16 %v1643, %v1639
  %v2404 = vpack.c.b16 %v1644, %v1640
  %v2405 = vpack.c.b16 %v1649, %v1645
  %v2406 = vpack.c.b16 %v1650, %v1646
  %v2407 = vpack.c.b16 %v1651, %v1647
  %v2408 = vpack.c.b16 %v1652, %v1648
  %v2409 = vpack.c.b16 %v1657, %v1653
  %v2410 = vpack.c.b16 %v1658, %v1654
  %v2411 = vpack.c.b16 %v1659, %v1655
  %v2412 = vpack.c.b16 %v1660, %v1656
  %v2413 = vpack.c.b16 %v1665, %v1661
  %v2414 = vpack.c.b16 %v1666, %v1662
  %v2415 = vpack.c.b16 %v1667, %v1663
  %v2416 = vpack.c.b16 %v1668, %v1664
  %v2417 = vpack.c.b16 %v1673, %v1669
  %v2418 = vpack.c.b16 %v1674, %v1670
  %v2419 = vpack.c.b16 %v1675, %v1671
  %v2420 = vpack.c.b16 %v1676, %v1672
  %v2421 = vpack.c.b16 %v1681, %v1677
  %v2422 = vpack.c.b16 %v1682, %v1678
  %v2423 = vpack.c.b16 %v1683, %v1679
  %v2424 = vpack.c.b16 %v1684, %v1680
  %v2425 = vpack.c.b16 %v1689, %v1685
  %v2426 = vpack.c.b16 %v1690, %v1686
  %v2427 = vpack.c.b16 %v1691, %v1687
  %v2428 = vpack.c.b16 %v1692, %v1688
  %v2429 = vpack.c.b16 %v1697, %v1693
  %v2430 = vpack.c.b16 %v1698, %v1694
  %v2431 = vpack.c.b16 %v1699, %v1695
  %v2432 = vpack.c.b16 %v1700, %v1696
  %v2433 = vpack.c.b16 %v1705, %v1701
  %v2434 = vpack.c.b16 %v1706, %v1702
  %v2435 = vpack.c.b16 %v1707, %v1703
  %v2436 = vpack.c.b16 %v1708, %v1704
  %v2437 = vpack.c.b16 %v1713, %v1709
  %v2438 = vpack.c.b16 %v1714, %v1710
  %v2439 = vpack.c.b16 %v1715, %v1711
  %v2440 = vpack.c.b16 %v1716, %v1712
  %v2441 = vpack.c.b16 %v1721, %v1717
  %v2442 = vpack.c.b16 %v1722, %v1718
  %v2443 = vpack.c.b16 %v1723, %v1719
  %v2444 = vpack.c.b16 %v1724, %v1720
  %v2445 = vpack.c.b16 %v1729, %v1725
  %v2446 = vpack.c.b16 %v1730, %v1726
  %v2447 = vpack.c.b16 %v1731, %v1727
  %v2448 = vpack.c.b16 %v1732, %v1728
  %v2449 = vpack.c.b16 %v1737, %v1733
  %v2450 = vpack.c.b16 %v1738, %v1734
  %v2451 = vpack.c.b16 %v1739, %v1735
  %v2452 = vpack.c.b16 %v1740, %v1736
  %v2453 = vpack.c.b16 %v1745, %v1741
  %v2454 = vpack.c.b16 %v1746, %v1742
  %v2455 = vpack.c.b16 %v1747, %v1743
  %v2456 = vpack.c.b16 %v1748, %v1744
  %v2457 = vpack.c.b16 %v1753, %v1749
  %v2458 = vpack.c.b16 %v1754, %v1750
  %v2459 = vpack.c.b16 %v1755, %v1751
  %v2460 = vpack.c.b16 %v1756, %v1752
  %v2461 = vpack.c.b16 %v1761, %v1757
  %v2462 = vpack.c.b16 %v1762, %v1758
  %v2463 = vpack.c.b16 %v1763, %v1759
  %v2464 = vpack.c.b16 %v1764, %v1760
  %v2465 = vpack.c.b16 %v1769, %v1765
  %v2466 = vpack.c.b16 %v1770, %v1766
  %v2467 = vpack.c.b16 %v1771, %v1767
  %v2468 = vpack.c.b16 %v1772, %v1768
  %v2469 = vpack.c.b16 %v1777, %v1773
  %v2470 = vpack.c.b16 %v1778, %v1774
  %v2471 = vpack.c.b16 %v1779, %v1775
  %v2472 = vpack.c.b16 %v1780, %v1776
  %v2473 = vpack.c.b16 %v1785, %v1781
  %v2474 = vpack.c.b16 %v1786, %v1782
  %v2475 = vpack.c.b16 %v1787, %v1783
  %v2476 = vpack.c.b16 %v1788, %v1784
  %v2477 = vpack.c.b16 %v1793, %v1789
  %v2478 = vpack.c.b16 %v1794, %v1790
  %v2479 = vpack.c.b16 %v1795, %v1791
  %v2480 = vpack.c.b16 %v1796, %v1792
  %v2481 = vpack.c.b16 %v1801, %v1797
  %v2482 = vpack.c.b16 %v1802, %v1798
  %v2483 = vpack.c.b16 %v1803, %v1799
  %v2484 = vpack.c.b16 %v1804, %v1800
  %v2485 = vpack.c.b16 %v1809, %v1805
  %v2486 = vpack.c.b16 %v1810, %v1806
  %v2487 = vpack.c.b16 %v1811, %v1807
  %v2488 = vpack.c.b16 %v1812, %v1808
  %v2489 = vpack.c.b16 %v1817, %v1813
  %v2490 = vpack.c.b16 %v1818, %v1814
  %v2491 = vpack.c.b16 %v1819, %v1815
  %v2492 = vpack.c.b16 %v1820, %v1816
  %v2493 = vpack.c.b16 %v1825, %v1821
  %v2494 = vpack.c.b16 %v1826, %v1822
  %v2495 = vpack.c.b16 %v1827, %v1823
  %v2496 = vpack.c.b16 %v1828, %v1824
  %v2497 = vpack.c.b16 %v1833, %v1829
  %v2498 = vpack.c.b16 %v1834, %v1830
  %v2499 = vpack.c.b16 %v1835, %v1831
  %v2500 = vpack.c.b16 %v1836, %v1832
  %v2501 = vpack.c.b16 %v1841, %v1837
  %v2502 = vpack.c.b16 %v1842, %v1838
  %v2503 = vpack.c.b16 %v1843, %v1839
  %v2504 = vpack.c.b16 %v1844, %v1840
  %v2505 = vpack.c.b16 %v1849, %v1845
  %v2506 = vpack.c.b16 %v1850, %v1846
  %v2507 = vpack.c.b16 %v1851, %v1847
  %v2508 = vpack.c.b16 %v1852, %v1848
  %v2509 = vpack.c.b16 %v1857, %v1853
  %v2510 = vpack.c.b16 %v1858, %v1854
  %v2511 = vpack.c.b16 %v1859, %v1855
  %v2512 = vpack.c.b16 %v1860, %v1856
  %v2513 = vpack.c.b16 %v1865, %v1861
  %v2514 = vpack.c.b16 %v1866, %v1862
  %v2515 = vpack.c.b16 %v1867, %v1863
  %v2516 = vpack.c.b16 %v1868, %v1864
  %v2517 = vpack.c.b16 %v1873, %v1869
  %v2518 = vpack.c.b16 %v1874, %v1870
  %v2519 = vpack.c.b16 %v1875, %v1871
  %v2520 = vpack.c.b16 %v1876, %v1872
  %v2521 = vpack.c.b16 %v1881, %v1877
  %v2522 = vpack.c.b16 %v1882, %v1878
  %v2523 = vpack.c.b16 %v1883, %v1879
  %v2524 = vpack.c.b16 %v1884, %v1880
  %v2525 = vpack.c.b16 %v1889, %v1885
  %v2526 = vpack.c.b16 %v1890, %v1886
  %v2527 = vpack.c.b16 %v1891, %v1887
  %v2528 = vpack.c.b16 %v1892, %v1888
  %v2529 = vpack.c.b16 %v1897, %v1893
  %v2530 = vpack.c.b16 %v1898, %v1894
  %v2531 = vpack.c.b16 %v1899, %v1895
  %v2532 = vpack.c.b16 %v1900, %v1896
  %v2533 = vpack.c.b16 %v1905, %v1901
  %v2534 = vpack.c.b16 %v1906, %v1902
  %v2535 = vpack.c.b16 %v1907, %v1903
  %v2536 = vpack.c.b16 %v1908, %v1904
  %v2537 = vpack.c.b16 %v1913, %v1909
  %v2538 = vpack.c.b16 %v1914, %v1910
  %v2539 = vpack.c.b16 %v1915, %v1911
  %v2540 = vpack.c.b16 %v1916, %v1912
  %v2541 = vpack.c.b16 %v1921, %v1917
  %v2542 = vpack.c.b16 %v1922, %v1918
  %v2543 = vpack.c.b16 %v1923, %v1919
  %v2544 = vpack.c.b16 %v1924, %v1920
  %v2545 = vpack.c.b16 %v1929, %v1925
  %v2546 = vpack.c.b16 %v1930, %v1926
  %v2547 = vpack.c.b16 %v1931, %v1927
  %v2548 = vpack.c.b16 %v1932, %v1928
  %v2549 = vpack.c.b16 %v1937, %v1933
  %v2550 = vpack.c.b16 %v1938, %v1934
  %v2551 = vpack.c.b16 %v1939, %v1935
  %v2552 = vpack.c.b16 %v1940, %v1936
  %v2553 = vpack.c.b16 %v1945, %v1941
  %v2554 = vpack.c.b16 %v1946, %v1942
  %v2555 = vpack.c.b16 %v1947, %v1943
  %v2556 = vpack.c.b16 %v1948, %v1944
  %v2557 = vpack.c.b16 %v1953, %v1949
  %v2558 = vpack.c.b16 %v1954, %v1950
  %v2559 = vpack.c.b16 %v1955, %v1951
  %v2560 = vpack.c.b16 %v1956, %v1952
  %v2561 = vpack.c.b16 %v1961, %v1957
  %v2562 = vpack.c.b16 %v1962, %v1958
  %v2563 = vpack.c.b16 %v1963, %v1959
  %v2564 = vpack.c.b16 %v1964, %v1960
  %v2565 = vpack.c.b16 %v1969, %v1965
  %v2566 = vpack.c.b16 %v1970, %v1966
  %v2567 = vpack.c.b16 %v1971, %v1967
  %v2568 = vpack.c.b16 %v1972, %v1968
  %v2569 = vpack.c.b16 %v1977, %v1973
  %v2570 = vpack.c.b16 %v1978, %v1974
  %v2571 = vpack.c.b16 %v1979, %v1975
  %v2572 = vpack.c.b16 %v1980, %v1976
  %v2573 = vpack.c.b16 %v1985, %v1981
  %v2574 = vpack.c.b16 %v1986, %v1982
  %v2575 = vpack.c.b16 %v1987, %v1983
  %v2576 = vpack.c.b16 %v1988, %v1984
  %v2577 = vpack.c.b16 %v1993, %v1989
  %v2578 = vpack.c.b16 %v1994, %v1990
  %v2579 = vpack.c.b16 %v1995, %v1991
  %v2580 = vpack.c.b16 %v1996, %v1992
  %v2581 = vpack.c.b16 %v2001, %v1997
  %v2582 = vpack.c.b16 %v2002, %v1998
  %v2583 = vpack.c.b16 %v2003, %v1999
  %v2584 = vpack.c.b16 %v2004, %v2000
  %v2585 = vpack.c.b16 %v2009, %v2005
  %v2586 = vpack.c.b16 %v2010, %v2006
  %v2587 = vpack.c.b16 %v2011, %v2007
  %v2588 = vpack.c.b16 %v2012, %v2008
  %v2589 = vpack.c.b16 %v2017, %v2013
  %v2590 = vpack.c.b16 %v2018, %v2014
  %v2591 = vpack.c.b16 %v2019, %v2015
  %v2592 = vpack.c.b16 %v2020, %v2016
  %v2593 = vpack.c.b16 %v2025, %v2021
  %v2594 = vpack.c.b16 %v2026, %v2022
  %v2595 = vpack.c.b16 %v2027, %v2023
  %v2596 = vpack.c.b16 %v2028, %v2024
  %v2597 = vpack.c.b16 %v2033, %v2029
  %v2598 = vpack.c.b16 %v2034, %v2030
  %v2599 = vpack.c.b16 %v2035, %v2031
  %v2600 = vpack.c.b16 %v2036, %v2032
  %v2601 = vpack.c.b16 %v2041, %v2037
  %v2602 = vpack.c.b16 %v2042, %v2038
  %v2603 = vpack.c.b16 %v2043, %v2039
  %v2604 = vpack.c.b16 %v2044, %v2040
  %v2605 = vpack.c.b16 %v2049, %v2045
  %v2606 = vpack.c.b16 %v2050, %v2046
  %v2607 = vpack.c.b16 %v2051, %v2047
  %v2608 = vpack.c.b16 %v2052, %v2048
  %v2609 = vpack.c.b16 %v2057, %v2053
  %v2610 = vpack.c.b16 %v2058, %v2054
  %v2611 = vpack.c.b16 %v2059, %v2055
  %v2612 = vpack.c.b16 %v2060, %v2056
  %v2613 = vpack.c.b16 %v2065, %v2061
  %v2614 = vpack.c.b16 %v2066, %v2062
  %v2615 = vpack.c.b16 %v2067, %v2063
  %v2616 = vpack.c.b16 %v2068, %v2064
  %v2617 = vpack.c.b16 %v2073, %v2069
  %v2618 = vpack.c.b16 %v2074, %v2070
  %v2619 = vpack.c.b16 %v2075, %v2071
  %v2620 = vpack.c.b16 %v2076, %v2072
  %v2621 = vpack.c.b16 %v2081, %v2077
  %v2622 = vpack.c.b16 %v2082, %v2078
  %v2623 = vpack.c.b16 %v2083, %v2079
  %v2624 = vpack.c.b16 %v2084, %v2080
  %v2625 = vpack.c.b16 %v2089, %v2085
  %v2626 = vpack.c.b16 %v2090, %v2086
  %v2627 = vpack.c.b16 %v2091, %v2087
  %v2628 = vpack.c.b16 %v2092, %v2088
  %v2629 = vpack.c.b16 %v2097, %v2093
  %v2630 = vpack.c.b16 %v2098, %v2094
  %v2631 = vpack.c.b16 %v2099, %v2095
  %v2632 = vpack.c.b16 %v2100, %v2096
  %v2633 = vpack.c.b16 %v2105, %v2101
  %v2634 = vpack.c.b16 %v2106, %v2102
  %v2635 = vpack.c.b16 %v2107, %v2103
  %v2636 = vpack.c.b16 %v2108, %v2104
  %v2637 = vpack.c.b16 %v2113, %v2109
  %v2638 = vpack.c.b16 %v2114, %v2110
  %v2639 = vpack.c.b16 %v2115, %v2111
  %v2640 = vpack.c.b16 %v2116, %v2112
  %v2641 = vpack.c.b16 %v2121, %v2117
  %v2642 = vpack.c.b16 %v2122, %v2118
  %v2643 = vpack.c.b16 %v2123, %v2119
  %v2644 = vpack.c.b16 %v2124, %v2120
  %v2645 = vpack.c.b16 %v2129, %v2125
  %v2646 = vpack.c.b16 %v2130, %v2126
  %v2647 = vpack.c.b16 %v2131, %v2127
  %v2648 = vpack.c.b16 %v2132, %v2128
  %v2649 = vpack.c.b16 %v2137, %v2133
  %v2650 = vpack.c.b16 %v2138, %v2134
  %v2651 = vpack.c.b16 %v2139, %v2135
  %v2652 = vpack.c.b16 %v2140, %v2136
  %3165 = vmatprep.subr.bf16.mxu0 %v2170
  %3166 = vmatpush1.bf16.msra.mxu0 %v2169
  %3167 = vmatprep.subr.bf16.mxu0 %v2166
  %3168 = vmatpush1.bf16.msra.mxu0 %v2165
  %3169 = vmatprep.subr.bf16.mxu0 %v2162
  %3170 = vmatpush1.bf16.msra.mxu0 %v2161
  %3171 = vmatprep.subr.bf16.mxu0 %v2158
  %3172 = vmatpush1.bf16.msra.mxu0 %v2157
  %3173 = vmatprep.subr.bf16.mxu0 %v2154
  %3174 = vmatpush1.bf16.msra.mxu0 %v2153
  %3175 = vmatprep.subr.bf16.mxu0 %v2150
  %3176 = vmatpush1.bf16.msra.mxu0 %v2149
  %3177 = vmatprep.subr.bf16.mxu0 %v2146
  %3178 = vmatpush1.bf16.msra.mxu0 %v2145
  %3179 = vmatprep.subr.bf16.mxu0 %v2142
  %3180 = vmatpush1.bf16.msra.mxu0 %v2141
  %3181 = vmatprep.subr.bf16.mxu0 %v2202
  %3182 = vmatpush2.bf16.msra.mxu0 %v2201
  %3183 = vmatprep.subr.bf16.mxu0 %v2198
  %3184 = vmatpush2.bf16.msra.mxu0 %v2197
  %3185 = vmatprep.subr.bf16.mxu0 %v2194
  %3186 = vmatpush2.bf16.msra.mxu0 %v2193
  %3187 = vmatprep.subr.bf16.mxu0 %v2190
  %3188 = vmatpush2.bf16.msra.mxu0 %v2189
  %3189 = vmatprep.subr.bf16.mxu0 %v2186
  %3190 = vmatpush2.bf16.msra.mxu0 %v2185
  %3191 = vmatprep.subr.bf16.mxu0 %v2182
  %3192 = vmatpush2.bf16.msra.mxu0 %v2181
  %3193 = vmatprep.subr.bf16.mxu0 %v2178
  %3194 = vmatpush2.bf16.msra.mxu0 %v2177
  %3195 = vmatprep.subr.bf16.mxu0 %v2174
  %3196 = vmatpush2.bf16.msra.mxu0 %v2173
  %3197 = vmatprep.mubr.bf16.mxu0 %v56
  %3198 = vmatmul.mubr.bf16.gmra.mxu0 %v55
  %v3199 = vpop.f32.mrf.mxu0
  %v3200 = vadd.f32 %v588, %v3199
  %v3201 = vpop.f32.mrf.mxu0
  %v3202 = vadd.f32 %v592, %v3201
  %v3203 = vpop.f32.mrf.mxu0
  %v3204 = vpop.f32.mrf.mxu0
  %3205 = vdwg.mxu0
  %3206 = vmatprep.subr.bf16.mxu0 %v2234
  %3207 = vmatpush1.bf16.msra.mxu0 %v2233
  %3208 = vmatprep.subr.bf16.mxu0 %v2230
  %3209 = vmatpush1.bf16.msra.mxu0 %v2229
  %3210 = vmatprep.subr.bf16.mxu0 %v2226
  %3211 = vmatpush1.bf16.msra.mxu0 %v2225
  %3212 = vmatprep.subr.bf16.mxu0 %v2222
  %3213 = vmatpush1.bf16.msra.mxu0 %v2221
  %3214 = vmatprep.subr.bf16.mxu0 %v2218
  %3215 = vmatpush1.bf16.msra.mxu0 %v2217
  %3216 = vmatprep.subr.bf16.mxu0 %v2214
  %3217 = vmatpush1.bf16.msra.mxu0 %v2213
  %3218 = vmatprep.subr.bf16.mxu0 %v2210
  %3219 = vmatpush1.bf16.msra.mxu0 %v2209
  %3220 = vmatprep.subr.bf16.mxu0 %v2206
  %3221 = vmatpush1.bf16.msra.mxu0 %v2205
  %3222 = vmatprep.subr.bf16.mxu0 %v2266
  %3223 = vmatpush2.bf16.msra.mxu0 %v2265
  %3224 = vmatprep.subr.bf16.mxu0 %v2262
  %3225 = vmatpush2.bf16.msra.mxu0 %v2261
  %3226 = vmatprep.subr.bf16.mxu0 %v2258
  %3227 = vmatpush2.bf16.msra.mxu0 %v2257
  %3228 = vmatprep.subr.bf16.mxu0 %v2254
  %3229 = vmatpush2.bf16.msra.mxu0 %v2253
  %3230 = vmatprep.subr.bf16.mxu0 %v2250
  %3231 = vmatpush2.bf16.msra.mxu0 %v2249
  %3232 = vmatprep.subr.bf16.mxu0 %v2246
  %3233 = vmatpush2.bf16.msra.mxu0 %v2245
  %3234 = vmatprep.subr.bf16.mxu0 %v2242
  %3235 = vmatpush2.bf16.msra.mxu0 %v2241
  %3236 = vmatprep.subr.bf16.mxu0 %v2238
  %3237 = vmatpush2.bf16.msra.mxu0 %v2237
  %3238 = vmatprep.mubr.bf16.mxu0 %v58
  %3239 = vmatmul.mubr.bf16.gmra.mxu0 %v57
  %v3240 = vpop.f32.mrf.mxu0
  %v3241 = vadd.f32 %v3200, %v3240
  %v3242 = vpop.f32.mrf.mxu0
  %v3243 = vadd.f32 %v3202, %v3242
  %v3244 = vpop.f32.mrf.mxu0
  %v3245 = vpop.f32.mrf.mxu0
  %3246 = vdwg.mxu0
  %3247 = vmatprep.subr.bf16.mxu0 %v2298
  %3248 = vmatpush1.bf16.msra.mxu0 %v2297
  %3249 = vmatprep.subr.bf16.mxu0 %v2294
  %3250 = vmatpush1.bf16.msra.mxu0 %v2293
  %3251 = vmatprep.subr.bf16.mxu0 %v2290
  %3252 = vmatpush1.bf16.msra.mxu0 %v2289
  %3253 = vmatprep.subr.bf16.mxu0 %v2286
  %3254 = vmatpush1.bf16.msra.mxu0 %v2285
  %3255 = vmatprep.subr.bf16.mxu0 %v2282
  %3256 = vmatpush1.bf16.msra.mxu0 %v2281
  %3257 = vmatprep.subr.bf16.mxu0 %v2278
  %3258 = vmatpush1.bf16.msra.mxu0 %v2277
  %3259 = vmatprep.subr.bf16.mxu0 %v2274
  %3260 = vmatpush1.bf16.msra.mxu0 %v2273
  %3261 = vmatprep.subr.bf16.mxu0 %v2270
  %3262 = vmatpush1.bf16.msra.mxu0 %v2269
  %3263 = vmatprep.subr.bf16.mxu0 %v2330
  %3264 = vmatpush2.bf16.msra.mxu0 %v2329
  %3265 = vmatprep.subr.bf16.mxu0 %v2326
  %3266 = vmatpush2.bf16.msra.mxu0 %v2325
  %3267 = vmatprep.subr.bf16.mxu0 %v2322
  %3268 = vmatpush2.bf16.msra.mxu0 %v2321
  %3269 = vmatprep.subr.bf16.mxu0 %v2318
  %3270 = vmatpush2.bf16.msra.mxu0 %v2317
  %3271 = vmatprep.subr.bf16.mxu0 %v2314
  %3272 = vmatpush2.bf16.msra.mxu0 %v2313
  %3273 = vmatprep.subr.bf16.mxu0 %v2310
  %3274 = vmatpush2.bf16.msra.mxu0 %v2309
  %3275 = vmatprep.subr.bf16.mxu0 %v2306
  %3276 = vmatpush2.bf16.msra.mxu0 %v2305
  %3277 = vmatprep.subr.bf16.mxu0 %v2302
  %3278 = vmatpush2.bf16.msra.mxu0 %v2301
  %3279 = vmatprep.mubr.bf16.mxu0 %v60
  %3280 = vmatmul.mubr.bf16.gmra.mxu0 %v59
  %v3281 = vpop.f32.mrf.mxu0
  %v3282 = vadd.f32 %v3241, %v3281
  %v3283 = vpop.f32.mrf.mxu0
  %v3284 = vadd.f32 %v3243, %v3283
  %v3285 = vpop.f32.mrf.mxu0
  %v3286 = vpop.f32.mrf.mxu0
  %3287 = vdwg.mxu0
  %3288 = vmatprep.subr.bf16.mxu0 %v2362
  %3289 = vmatpush1.bf16.msra.mxu0 %v2361
  %3290 = vmatprep.subr.bf16.mxu0 %v2358
  %3291 = vmatpush1.bf16.msra.mxu0 %v2357
  %3292 = vmatprep.subr.bf16.mxu0 %v2354
  %3293 = vmatpush1.bf16.msra.mxu0 %v2353
  %3294 = vmatprep.subr.bf16.mxu0 %v2350
  %3295 = vmatpush1.bf16.msra.mxu0 %v2349
  %3296 = vmatprep.subr.bf16.mxu0 %v2346
  %3297 = vmatpush1.bf16.msra.mxu0 %v2345
  %3298 = vmatprep.subr.bf16.mxu0 %v2342
  %3299 = vmatpush1.bf16.msra.mxu0 %v2341
  %3300 = vmatprep.subr.bf16.mxu0 %v2338
  %3301 = vmatpush1.bf16.msra.mxu0 %v2337
  %3302 = vmatprep.subr.bf16.mxu0 %v2334
  %3303 = vmatpush1.bf16.msra.mxu0 %v2333
  %3304 = vmatprep.subr.bf16.mxu0 %v2394
  %3305 = vmatpush2.bf16.msra.mxu0 %v2393
  %3306 = vmatprep.subr.bf16.mxu0 %v2390
  %3307 = vmatpush2.bf16.msra.mxu0 %v2389
  %3308 = vmatprep.subr.bf16.mxu0 %v2386
  %3309 = vmatpush2.bf16.msra.mxu0 %v2385
  %3310 = vmatprep.subr.bf16.mxu0 %v2382
  %3311 = vmatpush2.bf16.msra.mxu0 %v2381
  %3312 = vmatprep.subr.bf16.mxu0 %v2378
  %3313 = vmatpush2.bf16.msra.mxu0 %v2377
  %3314 = vmatprep.subr.bf16.mxu0 %v2374
  %3315 = vmatpush2.bf16.msra.mxu0 %v2373
  %3316 = vmatprep.subr.bf16.mxu0 %v2370
  %3317 = vmatpush2.bf16.msra.mxu0 %v2369
  %3318 = vmatprep.subr.bf16.mxu0 %v2366
  %3319 = vmatpush2.bf16.msra.mxu0 %v2365
  %3320 = vmatprep.mubr.bf16.mxu0 %v62
  %3321 = vmatmul.mubr.bf16.gmra.mxu0 %v61
  %v3322 = vpop.f32.mrf.mxu0
  %v3323 = vadd.f32 %v3282, %v3322
  %v3324 = vpop.f32.mrf.mxu0
  %v3325 = vadd.f32 %v3284, %v3324
  %v3326 = vpop.f32.mrf.mxu0
  %v3327 = vpop.f32.mrf.mxu0
  %3328 = vdwg.mxu0
  %3329 = vmatprep.subr.bf16.mxu0 %v2426
  %3330 = vmatpush1.bf16.msra.mxu0 %v2425
  %3331 = vmatprep.subr.bf16.mxu0 %v2422
  %3332 = vmatpush1.bf16.msra.mxu0 %v2421
  %3333 = vmatprep.subr.bf16.mxu0 %v2418
  %3334 = vmatpush1.bf16.msra.mxu0 %v2417
  %3335 = vmatprep.subr.bf16.mxu0 %v2414
  %3336 = vmatpush1.bf16.msra.mxu0 %v2413
  %3337 = vmatprep.subr.bf16.mxu0 %v2410
  %3338 = vmatpush1.bf16.msra.mxu0 %v2409
  %3339 = vmatprep.subr.bf16.mxu0 %v2406
  %3340 = vmatpush1.bf16.msra.mxu0 %v2405
  %3341 = vmatprep.subr.bf16.mxu0 %v2402
  %3342 = vmatpush1.bf16.msra.mxu0 %v2401
  %3343 = vmatprep.subr.bf16.mxu0 %v2398
  %3344 = vmatpush1.bf16.msra.mxu0 %v2397
  %3345 = vmatprep.subr.bf16.mxu0 %v2458
  %3346 = vmatpush2.bf16.msra.mxu0 %v2457
  %3347 = vmatprep.subr.bf16.mxu0 %v2454
  %3348 = vmatpush2.bf16.msra.mxu0 %v2453
  %3349 = vmatprep.subr.bf16.mxu0 %v2450
  %3350 = vmatpush2.bf16.msra.mxu0 %v2449
  %3351 = vmatprep.subr.bf16.mxu0 %v2446
  %3352 = vmatpush2.bf16.msra.mxu0 %v2445
  %3353 = vmatprep.subr.bf16.mxu0 %v2442
  %3354 = vmatpush2.bf16.msra.mxu0 %v2441
  %3355 = vmatprep.subr.bf16.mxu0 %v2438
  %3356 = vmatpush2.bf16.msra.mxu0 %v2437
  %3357 = vmatprep.subr.bf16.mxu0 %v2434
  %3358 = vmatpush2.bf16.msra.mxu0 %v2433
  %3359 = vmatprep.subr.bf16.mxu0 %v2430
  %3360 = vmatpush2.bf16.msra.mxu0 %v2429
  %3361 = vmatprep.mubr.bf16.mxu0 %v64
  %3362 = vmatmul.mubr.bf16.gmra.mxu0 %v63
  %v3363 = vpop.f32.mrf.mxu0
  %v3364 = vadd.f32 %v3323, %v3363
  %v3365 = vpop.f32.mrf.mxu0
  %v3366 = vadd.f32 %v3325, %v3365
  %v3367 = vpop.f32.mrf.mxu0
  %v3368 = vpop.f32.mrf.mxu0
  %3369 = vdwg.mxu0
  %3370 = vmatprep.subr.bf16.mxu0 %v2490
  %3371 = vmatpush1.bf16.msra.mxu0 %v2489
  %3372 = vmatprep.subr.bf16.mxu0 %v2486
  %3373 = vmatpush1.bf16.msra.mxu0 %v2485
  %3374 = vmatprep.subr.bf16.mxu0 %v2482
  %3375 = vmatpush1.bf16.msra.mxu0 %v2481
  %3376 = vmatprep.subr.bf16.mxu0 %v2478
  %3377 = vmatpush1.bf16.msra.mxu0 %v2477
  %3378 = vmatprep.subr.bf16.mxu0 %v2474
  %3379 = vmatpush1.bf16.msra.mxu0 %v2473
  %3380 = vmatprep.subr.bf16.mxu0 %v2470
  %3381 = vmatpush1.bf16.msra.mxu0 %v2469
  %3382 = vmatprep.subr.bf16.mxu0 %v2466
  %3383 = vmatpush1.bf16.msra.mxu0 %v2465
  %3384 = vmatprep.subr.bf16.mxu0 %v2462
  %3385 = vmatpush1.bf16.msra.mxu0 %v2461
  %3386 = vmatprep.subr.bf16.mxu0 %v2522
  %3387 = vmatpush2.bf16.msra.mxu0 %v2521
  %3388 = vmatprep.subr.bf16.mxu0 %v2518
  %3389 = vmatpush2.bf16.msra.mxu0 %v2517
  %3390 = vmatprep.subr.bf16.mxu0 %v2514
  %3391 = vmatpush2.bf16.msra.mxu0 %v2513
  %3392 = vmatprep.subr.bf16.mxu0 %v2510
  %3393 = vmatpush2.bf16.msra.mxu0 %v2509
  %3394 = vmatprep.subr.bf16.mxu0 %v2506
  %3395 = vmatpush2.bf16.msra.mxu0 %v2505
  %3396 = vmatprep.subr.bf16.mxu0 %v2502
  %3397 = vmatpush2.bf16.msra.mxu0 %v2501
  %3398 = vmatprep.subr.bf16.mxu0 %v2498
  %3399 = vmatpush2.bf16.msra.mxu0 %v2497
  %3400 = vmatprep.subr.bf16.mxu0 %v2494
  %3401 = vmatpush2.bf16.msra.mxu0 %v2493
  %3402 = vmatprep.mubr.bf16.mxu0 %v66
  %3403 = vmatmul.mubr.bf16.gmra.mxu0 %v65
  %v3404 = vpop.f32.mrf.mxu0
  %v3405 = vadd.f32 %v3364, %v3404
  %v3406 = vpop.f32.mrf.mxu0
  %v3407 = vadd.f32 %v3366, %v3406
  %v3408 = vpop.f32.mrf.mxu0
  %v3409 = vpop.f32.mrf.mxu0
  %3410 = vdwg.mxu0
  %3411 = vmatprep.subr.bf16.mxu0 %v2554
  %3412 = vmatpush1.bf16.msra.mxu0 %v2553
  %3413 = vmatprep.subr.bf16.mxu0 %v2550
  %3414 = vmatpush1.bf16.msra.mxu0 %v2549
  %3415 = vmatprep.subr.bf16.mxu0 %v2546
  %3416 = vmatpush1.bf16.msra.mxu0 %v2545
  %3417 = vmatprep.subr.bf16.mxu0 %v2542
  %3418 = vmatpush1.bf16.msra.mxu0 %v2541
  %3419 = vmatprep.subr.bf16.mxu0 %v2538
  %3420 = vmatpush1.bf16.msra.mxu0 %v2537
  %3421 = vmatprep.subr.bf16.mxu0 %v2534
  %3422 = vmatpush1.bf16.msra.mxu0 %v2533
  %3423 = vmatprep.subr.bf16.mxu0 %v2530
  %3424 = vmatpush1.bf16.msra.mxu0 %v2529
  %3425 = vmatprep.subr.bf16.mxu0 %v2526
  %3426 = vmatpush1.bf16.msra.mxu0 %v2525
  %3427 = vmatprep.subr.bf16.mxu0 %v2586
  %3428 = vmatpush2.bf16.msra.mxu0 %v2585
  %3429 = vmatprep.subr.bf16.mxu0 %v2582
  %3430 = vmatpush2.bf16.msra.mxu0 %v2581
  %3431 = vmatprep.subr.bf16.mxu0 %v2578
  %3432 = vmatpush2.bf16.msra.mxu0 %v2577
  %3433 = vmatprep.subr.bf16.mxu0 %v2574
  %3434 = vmatpush2.bf16.msra.mxu0 %v2573
  %3435 = vmatprep.subr.bf16.mxu0 %v2570
  %3436 = vmatpush2.bf16.msra.mxu0 %v2569
  %3437 = vmatprep.subr.bf16.mxu0 %v2566
  %3438 = vmatpush2.bf16.msra.mxu0 %v2565
  %3439 = vmatprep.subr.bf16.mxu0 %v2562
  %3440 = vmatpush2.bf16.msra.mxu0 %v2561
  %3441 = vmatprep.subr.bf16.mxu0 %v2558
  %3442 = vmatpush2.bf16.msra.mxu0 %v2557
  %3443 = vmatprep.mubr.bf16.mxu0 %v68
  %3444 = vmatmul.mubr.bf16.gmra.mxu0 %v67
  %v3445 = vpop.f32.mrf.mxu0
  %v3446 = vadd.f32 %v3405, %v3445
  %v3447 = vpop.f32.mrf.mxu0
  %v3448 = vadd.f32 %v3407, %v3447
  %v3449 = vpop.f32.mrf.mxu0
  %v3450 = vpop.f32.mrf.mxu0
  %3451 = vdwg.mxu0
  %3452 = vmatprep.subr.bf16.mxu0 %v2618
  %3453 = vmatpush1.bf16.msra.mxu0 %v2617
  %3454 = vmatprep.subr.bf16.mxu0 %v2614
  %3455 = vmatpush1.bf16.msra.mxu0 %v2613
  %3456 = vmatprep.subr.bf16.mxu0 %v2610
  %3457 = vmatpush1.bf16.msra.mxu0 %v2609
  %3458 = vmatprep.subr.bf16.mxu0 %v2606
  %3459 = vmatpush1.bf16.msra.mxu0 %v2605
  %3460 = vmatprep.subr.bf16.mxu0 %v2602
  %3461 = vmatpush1.bf16.msra.mxu0 %v2601
  %3462 = vmatprep.subr.bf16.mxu0 %v2598
  %3463 = vmatpush1.bf16.msra.mxu0 %v2597
  %3464 = vmatprep.subr.bf16.mxu0 %v2594
  %3465 = vmatpush1.bf16.msra.mxu0 %v2593
  %3466 = vmatprep.subr.bf16.mxu0 %v2590
  %3467 = vmatpush1.bf16.msra.mxu0 %v2589
  %3468 = vmatprep.subr.bf16.mxu0 %v2650
  %3469 = vmatpush2.bf16.msra.mxu0 %v2649
  %3470 = vmatprep.subr.bf16.mxu0 %v2646
  %3471 = vmatpush2.bf16.msra.mxu0 %v2645
  %3472 = vmatprep.subr.bf16.mxu0 %v2642
  %3473 = vmatpush2.bf16.msra.mxu0 %v2641
  %3474 = vmatprep.subr.bf16.mxu0 %v2638
  %3475 = vmatpush2.bf16.msra.mxu0 %v2637
  %3476 = vmatprep.subr.bf16.mxu0 %v2634
  %3477 = vmatpush2.bf16.msra.mxu0 %v2633
  %3478 = vmatprep.subr.bf16.mxu0 %v2630
  %3479 = vmatpush2.bf16.msra.mxu0 %v2629
  %3480 = vmatprep.subr.bf16.mxu0 %v2626
  %3481 = vmatpush2.bf16.msra.mxu0 %v2625
  %3482 = vmatprep.subr.bf16.mxu0 %v2622
  %3483 = vmatpush2.bf16.msra.mxu0 %v2621
  %3484 = vmatprep.mubr.bf16.mxu0 %v70
  %3485 = vmatmul.mubr.bf16.gmra.mxu0 %v69
  %v3486 = vpop.f32.mrf.mxu0
  %v3487 = vadd.f32 %v3446, %v3486
  %v3488 = vpop.f32.mrf.mxu0
  %v3489 = vadd.f32 %v3448, %v3488
  %v3490 = vpop.f32.mrf.mxu0
  %v3491 = vpop.f32.mrf.mxu0
  %3492 = vdwg.mxu0
  %3493 = vmatprep.subr.bf16.mxu0 %v2172
  %3494 = vmatpush1.bf16.msra.mxu0 %v2171
  %3495 = vmatprep.subr.bf16.mxu0 %v2168
  %3496 = vmatpush1.bf16.msra.mxu0 %v2167
  %3497 = vmatprep.subr.bf16.mxu0 %v2164
  %3498 = vmatpush1.bf16.msra.mxu0 %v2163
  %3499 = vmatprep.subr.bf16.mxu0 %v2160
  %3500 = vmatpush1.bf16.msra.mxu0 %v2159
  %3501 = vmatprep.subr.bf16.mxu0 %v2156
  %3502 = vmatpush1.bf16.msra.mxu0 %v2155
  %3503 = vmatprep.subr.bf16.mxu0 %v2152
  %3504 = vmatpush1.bf16.msra.mxu0 %v2151
  %3505 = vmatprep.subr.bf16.mxu0 %v2148
  %3506 = vmatpush1.bf16.msra.mxu0 %v2147
  %3507 = vmatprep.subr.bf16.mxu0 %v2144
  %3508 = vmatpush1.bf16.msra.mxu0 %v2143
  %3509 = vmatprep.subr.bf16.mxu0 %v2204
  %3510 = vmatpush2.bf16.msra.mxu0 %v2203
  %3511 = vmatprep.subr.bf16.mxu0 %v2200
  %3512 = vmatpush2.bf16.msra.mxu0 %v2199
  %3513 = vmatprep.subr.bf16.mxu0 %v2196
  %3514 = vmatpush2.bf16.msra.mxu0 %v2195
  %3515 = vmatprep.subr.bf16.mxu0 %v2192
  %3516 = vmatpush2.bf16.msra.mxu0 %v2191
  %3517 = vmatprep.subr.bf16.mxu0 %v2188
  %3518 = vmatpush2.bf16.msra.mxu0 %v2187
  %3519 = vmatprep.subr.bf16.mxu0 %v2184
  %3520 = vmatpush2.bf16.msra.mxu0 %v2183
  %3521 = vmatprep.subr.bf16.mxu0 %v2180
  %3522 = vmatpush2.bf16.msra.mxu0 %v2179
  %3523 = vmatprep.subr.bf16.mxu0 %v2176
  %3524 = vmatpush2.bf16.msra.mxu0 %v2175
  %3525 = vmatprep.mubr.bf16.mxu0 %v56
  %3526 = vmatmul.mubr.bf16.gmra.mxu0 %v55
  %v3527 = vpop.f32.mrf.mxu0
  %v3528 = vadd.f32 %v596, %v3527
  %v3529 = vpop.f32.mrf.mxu0
  %v3530 = vadd.f32 %v600, %v3529
  %v3531 = vpop.f32.mrf.mxu0
  %v3532 = vpop.f32.mrf.mxu0
  %3533 = vdwg.mxu0
  %3534 = vmatprep.subr.bf16.mxu0 %v2236
  %3535 = vmatpush1.bf16.msra.mxu0 %v2235
  %3536 = vmatprep.subr.bf16.mxu0 %v2232
  %3537 = vmatpush1.bf16.msra.mxu0 %v2231
  %3538 = vmatprep.subr.bf16.mxu0 %v2228
  %3539 = vmatpush1.bf16.msra.mxu0 %v2227
  %3540 = vmatprep.subr.bf16.mxu0 %v2224
  %3541 = vmatpush1.bf16.msra.mxu0 %v2223
  %3542 = vmatprep.subr.bf16.mxu0 %v2220
  %3543 = vmatpush1.bf16.msra.mxu0 %v2219
  %3544 = vmatprep.subr.bf16.mxu0 %v2216
  %3545 = vmatpush1.bf16.msra.mxu0 %v2215
  %3546 = vmatprep.subr.bf16.mxu0 %v2212
  %3547 = vmatpush1.bf16.msra.mxu0 %v2211
  %3548 = vmatprep.subr.bf16.mxu0 %v2208
  %3549 = vmatpush1.bf16.msra.mxu0 %v2207
  %3550 = vmatprep.subr.bf16.mxu0 %v2268
  %3551 = vmatpush2.bf16.msra.mxu0 %v2267
  %3552 = vmatprep.subr.bf16.mxu0 %v2264
  %3553 = vmatpush2.bf16.msra.mxu0 %v2263
  %3554 = vmatprep.subr.bf16.mxu0 %v2260
  %3555 = vmatpush2.bf16.msra.mxu0 %v2259
  %3556 = vmatprep.subr.bf16.mxu0 %v2256
  %3557 = vmatpush2.bf16.msra.mxu0 %v2255
  %3558 = vmatprep.subr.bf16.mxu0 %v2252
  %3559 = vmatpush2.bf16.msra.mxu0 %v2251
  %3560 = vmatprep.subr.bf16.mxu0 %v2248
  %3561 = vmatpush2.bf16.msra.mxu0 %v2247
  %3562 = vmatprep.subr.bf16.mxu0 %v2244
  %3563 = vmatpush2.bf16.msra.mxu0 %v2243
  %3564 = vmatprep.subr.bf16.mxu0 %v2240
  %3565 = vmatpush2.bf16.msra.mxu0 %v2239
  %3566 = vmatprep.mubr.bf16.mxu0 %v58
  %3567 = vmatmul.mubr.bf16.gmra.mxu0 %v57
  %v3568 = vpop.f32.mrf.mxu0
  %v3569 = vadd.f32 %v3528, %v3568
  %v3570 = vpop.f32.mrf.mxu0
  %v3571 = vadd.f32 %v3530, %v3570
  %v3572 = vpop.f32.mrf.mxu0
  %v3573 = vpop.f32.mrf.mxu0
  %3574 = vdwg.mxu0
  %3575 = vmatprep.subr.bf16.mxu0 %v2300
  %3576 = vmatpush1.bf16.msra.mxu0 %v2299
  %3577 = vmatprep.subr.bf16.mxu0 %v2296
  %3578 = vmatpush1.bf16.msra.mxu0 %v2295
  %3579 = vmatprep.subr.bf16.mxu0 %v2292
  %3580 = vmatpush1.bf16.msra.mxu0 %v2291
  %3581 = vmatprep.subr.bf16.mxu0 %v2288
  %3582 = vmatpush1.bf16.msra.mxu0 %v2287
  %3583 = vmatprep.subr.bf16.mxu0 %v2284
  %3584 = vmatpush1.bf16.msra.mxu0 %v2283
  %3585 = vmatprep.subr.bf16.mxu0 %v2280
  %3586 = vmatpush1.bf16.msra.mxu0 %v2279
  %3587 = vmatprep.subr.bf16.mxu0 %v2276
  %3588 = vmatpush1.bf16.msra.mxu0 %v2275
  %3589 = vmatprep.subr.bf16.mxu0 %v2272
  %3590 = vmatpush1.bf16.msra.mxu0 %v2271
  %3591 = vmatprep.subr.bf16.mxu0 %v2332
  %3592 = vmatpush2.bf16.msra.mxu0 %v2331
  %3593 = vmatprep.subr.bf16.mxu0 %v2328
  %3594 = vmatpush2.bf16.msra.mxu0 %v2327
  %3595 = vmatprep.subr.bf16.mxu0 %v2324
  %3596 = vmatpush2.bf16.msra.mxu0 %v2323
  %3597 = vmatprep.subr.bf16.mxu0 %v2320
  %3598 = vmatpush2.bf16.msra.mxu0 %v2319
  %3599 = vmatprep.subr.bf16.mxu0 %v2316
  %3600 = vmatpush2.bf16.msra.mxu0 %v2315
  %3601 = vmatprep.subr.bf16.mxu0 %v2312
  %3602 = vmatpush2.bf16.msra.mxu0 %v2311
  %3603 = vmatprep.subr.bf16.mxu0 %v2308
  %3604 = vmatpush2.bf16.msra.mxu0 %v2307
  %3605 = vmatprep.subr.bf16.mxu0 %v2304
  %3606 = vmatpush2.bf16.msra.mxu0 %v2303
  %3607 = vmatprep.mubr.bf16.mxu0 %v60
  %3608 = vmatmul.mubr.bf16.gmra.mxu0 %v59
  %v3609 = vpop.f32.mrf.mxu0
  %v3610 = vadd.f32 %v3569, %v3609
  %v3611 = vpop.f32.mrf.mxu0
  %v3612 = vadd.f32 %v3571, %v3611
  %v3613 = vpop.f32.mrf.mxu0
  %v3614 = vpop.f32.mrf.mxu0
  %3615 = vdwg.mxu0
  %3616 = vmatprep.subr.bf16.mxu0 %v2364
  %3617 = vmatpush1.bf16.msra.mxu0 %v2363
  %3618 = vmatprep.subr.bf16.mxu0 %v2360
  %3619 = vmatpush1.bf16.msra.mxu0 %v2359
  %3620 = vmatprep.subr.bf16.mxu0 %v2356
  %3621 = vmatpush1.bf16.msra.mxu0 %v2355
  %3622 = vmatprep.subr.bf16.mxu0 %v2352
  %3623 = vmatpush1.bf16.msra.mxu0 %v2351
  %3624 = vmatprep.subr.bf16.mxu0 %v2348
  %3625 = vmatpush1.bf16.msra.mxu0 %v2347
  %3626 = vmatprep.subr.bf16.mxu0 %v2344
  %3627 = vmatpush1.bf16.msra.mxu0 %v2343
  %3628 = vmatprep.subr.bf16.mxu0 %v2340
  %3629 = vmatpush1.bf16.msra.mxu0 %v2339
  %3630 = vmatprep.subr.bf16.mxu0 %v2336
  %3631 = vmatpush1.bf16.msra.mxu0 %v2335
  %3632 = vmatprep.subr.bf16.mxu0 %v2396
  %3633 = vmatpush2.bf16.msra.mxu0 %v2395
  %3634 = vmatprep.subr.bf16.mxu0 %v2392
  %3635 = vmatpush2.bf16.msra.mxu0 %v2391
  %3636 = vmatprep.subr.bf16.mxu0 %v2388
  %3637 = vmatpush2.bf16.msra.mxu0 %v2387
  %3638 = vmatprep.subr.bf16.mxu0 %v2384
  %3639 = vmatpush2.bf16.msra.mxu0 %v2383
  %3640 = vmatprep.subr.bf16.mxu0 %v2380
  %3641 = vmatpush2.bf16.msra.mxu0 %v2379
  %3642 = vmatprep.subr.bf16.mxu0 %v2376
  %3643 = vmatpush2.bf16.msra.mxu0 %v2375
  %3644 = vmatprep.subr.bf16.mxu0 %v2372
  %3645 = vmatpush2.bf16.msra.mxu0 %v2371
  %3646 = vmatprep.subr.bf16.mxu0 %v2368
  %3647 = vmatpush2.bf16.msra.mxu0 %v2367
  %3648 = vmatprep.mubr.bf16.mxu0 %v62
  %3649 = vmatmul.mubr.bf16.gmra.mxu0 %v61
  %v3650 = vpop.f32.mrf.mxu0
  %v3651 = vadd.f32 %v3610, %v3650
  %v3652 = vpop.f32.mrf.mxu0
  %v3653 = vadd.f32 %v3612, %v3652
  %v3654 = vpop.f32.mrf.mxu0
  %v3655 = vpop.f32.mrf.mxu0
  %3656 = vdwg.mxu0
  %3657 = vmatprep.subr.bf16.mxu0 %v2428
  %3658 = vmatpush1.bf16.msra.mxu0 %v2427
  %3659 = vmatprep.subr.bf16.mxu0 %v2424
  %3660 = vmatpush1.bf16.msra.mxu0 %v2423
  %3661 = vmatprep.subr.bf16.mxu0 %v2420
  %3662 = vmatpush1.bf16.msra.mxu0 %v2419
  %3663 = vmatprep.subr.bf16.mxu0 %v2416
  %3664 = vmatpush1.bf16.msra.mxu0 %v2415
  %3665 = vmatprep.subr.bf16.mxu0 %v2412
  %3666 = vmatpush1.bf16.msra.mxu0 %v2411
  %3667 = vmatprep.subr.bf16.mxu0 %v2408
  %3668 = vmatpush1.bf16.msra.mxu0 %v2407
  %3669 = vmatprep.subr.bf16.mxu0 %v2404
  %3670 = vmatpush1.bf16.msra.mxu0 %v2403
  %3671 = vmatprep.subr.bf16.mxu0 %v2400
  %3672 = vmatpush1.bf16.msra.mxu0 %v2399
  %3673 = vmatprep.subr.bf16.mxu0 %v2460
  %3674 = vmatpush2.bf16.msra.mxu0 %v2459
  %3675 = vmatprep.subr.bf16.mxu0 %v2456
  %3676 = vmatpush2.bf16.msra.mxu0 %v2455
  %3677 = vmatprep.subr.bf16.mxu0 %v2452
  %3678 = vmatpush2.bf16.msra.mxu0 %v2451
  %3679 = vmatprep.subr.bf16.mxu0 %v2448
  %3680 = vmatpush2.bf16.msra.mxu0 %v2447
  %3681 = vmatprep.subr.bf16.mxu0 %v2444
  %3682 = vmatpush2.bf16.msra.mxu0 %v2443
  %3683 = vmatprep.subr.bf16.mxu0 %v2440
  %3684 = vmatpush2.bf16.msra.mxu0 %v2439
  %3685 = vmatprep.subr.bf16.mxu0 %v2436
  %3686 = vmatpush2.bf16.msra.mxu0 %v2435
  %3687 = vmatprep.subr.bf16.mxu0 %v2432
  %3688 = vmatpush2.bf16.msra.mxu0 %v2431
  %3689 = vmatprep.mubr.bf16.mxu0 %v64
  %3690 = vmatmul.mubr.bf16.gmra.mxu0 %v63
  %v3691 = vpop.f32.mrf.mxu0
  %v3692 = vadd.f32 %v3651, %v3691
  %v3693 = vpop.f32.mrf.mxu0
  %v3694 = vadd.f32 %v3653, %v3693
  %v3695 = vpop.f32.mrf.mxu0
  %v3696 = vpop.f32.mrf.mxu0
  %3697 = vdwg.mxu0
  %3698 = vmatprep.subr.bf16.mxu0 %v2492
  %3699 = vmatpush1.bf16.msra.mxu0 %v2491
  %3700 = vmatprep.subr.bf16.mxu0 %v2488
  %3701 = vmatpush1.bf16.msra.mxu0 %v2487
  %3702 = vmatprep.subr.bf16.mxu0 %v2484
  %3703 = vmatpush1.bf16.msra.mxu0 %v2483
  %3704 = vmatprep.subr.bf16.mxu0 %v2480
  %3705 = vmatpush1.bf16.msra.mxu0 %v2479
  %3706 = vmatprep.subr.bf16.mxu0 %v2476
  %3707 = vmatpush1.bf16.msra.mxu0 %v2475
  %3708 = vmatprep.subr.bf16.mxu0 %v2472
  %3709 = vmatpush1.bf16.msra.mxu0 %v2471
  %3710 = vmatprep.subr.bf16.mxu0 %v2468
  %3711 = vmatpush1.bf16.msra.mxu0 %v2467
  %3712 = vmatprep.subr.bf16.mxu0 %v2464
  %3713 = vmatpush1.bf16.msra.mxu0 %v2463
  %3714 = vmatprep.subr.bf16.mxu0 %v2524
  %3715 = vmatpush2.bf16.msra.mxu0 %v2523
  %3716 = vmatprep.subr.bf16.mxu0 %v2520
  %3717 = vmatpush2.bf16.msra.mxu0 %v2519
  %3718 = vmatprep.subr.bf16.mxu0 %v2516
  %3719 = vmatpush2.bf16.msra.mxu0 %v2515
  %3720 = vmatprep.subr.bf16.mxu0 %v2512
  %3721 = vmatpush2.bf16.msra.mxu0 %v2511
  %3722 = vmatprep.subr.bf16.mxu0 %v2508
  %3723 = vmatpush2.bf16.msra.mxu0 %v2507
  %3724 = vmatprep.subr.bf16.mxu0 %v2504
  %3725 = vmatpush2.bf16.msra.mxu0 %v2503
  %3726 = vmatprep.subr.bf16.mxu0 %v2500
  %3727 = vmatpush2.bf16.msra.mxu0 %v2499
  %3728 = vmatprep.subr.bf16.mxu0 %v2496
  %3729 = vmatpush2.bf16.msra.mxu0 %v2495
  %3730 = vmatprep.mubr.bf16.mxu0 %v66
  %3731 = vmatmul.mubr.bf16.gmra.mxu0 %v65
  %v3732 = vpop.f32.mrf.mxu0
  %v3733 = vadd.f32 %v3692, %v3732
  %v3734 = vpop.f32.mrf.mxu0
  %v3735 = vadd.f32 %v3694, %v3734
  %v3736 = vpop.f32.mrf.mxu0
  %v3737 = vpop.f32.mrf.mxu0
  %3738 = vdwg.mxu0
  %3739 = vmatprep.subr.bf16.mxu0 %v2556
  %3740 = vmatpush1.bf16.msra.mxu0 %v2555
  %3741 = vmatprep.subr.bf16.mxu0 %v2552
  %3742 = vmatpush1.bf16.msra.mxu0 %v2551
  %3743 = vmatprep.subr.bf16.mxu0 %v2548
  %3744 = vmatpush1.bf16.msra.mxu0 %v2547
  %3745 = vmatprep.subr.bf16.mxu0 %v2544
  %3746 = vmatpush1.bf16.msra.mxu0 %v2543
  %3747 = vmatprep.subr.bf16.mxu0 %v2540
  %3748 = vmatpush1.bf16.msra.mxu0 %v2539
  %3749 = vmatprep.subr.bf16.mxu0 %v2536
  %3750 = vmatpush1.bf16.msra.mxu0 %v2535
  %3751 = vmatprep.subr.bf16.mxu0 %v2532
  %3752 = vmatpush1.bf16.msra.mxu0 %v2531
  %3753 = vmatprep.subr.bf16.mxu0 %v2528
  %3754 = vmatpush1.bf16.msra.mxu0 %v2527
  %3755 = vmatprep.subr.bf16.mxu0 %v2588
  %3756 = vmatpush2.bf16.msra.mxu0 %v2587
  %3757 = vmatprep.subr.bf16.mxu0 %v2584
  %3758 = vmatpush2.bf16.msra.mxu0 %v2583
  %3759 = vmatprep.subr.bf16.mxu0 %v2580
  %3760 = vmatpush2.bf16.msra.mxu0 %v2579
  %3761 = vmatprep.subr.bf16.mxu0 %v2576
  %3762 = vmatpush2.bf16.msra.mxu0 %v2575
  %3763 = vmatprep.subr.bf16.mxu0 %v2572
  %3764 = vmatpush2.bf16.msra.mxu0 %v2571
  %3765 = vmatprep.subr.bf16.mxu0 %v2568
  %3766 = vmatpush2.bf16.msra.mxu0 %v2567
  %3767 = vmatprep.subr.bf16.mxu0 %v2564
  %3768 = vmatpush2.bf16.msra.mxu0 %v2563
  %3769 = vmatprep.subr.bf16.mxu0 %v2560
  %3770 = vmatpush2.bf16.msra.mxu0 %v2559
  %3771 = vmatprep.mubr.bf16.mxu0 %v68
  %3772 = vmatmul.mubr.bf16.gmra.mxu0 %v67
  %v3773 = vpop.f32.mrf.mxu0
  %v3774 = vadd.f32 %v3733, %v3773
  %v3775 = vpop.f32.mrf.mxu0
  %v3776 = vadd.f32 %v3735, %v3775
  %v3777 = vpop.f32.mrf.mxu0
  %v3778 = vpop.f32.mrf.mxu0
  %3779 = vdwg.mxu0
  %3780 = vmatprep.subr.bf16.mxu0 %v2620
  %3781 = vmatpush1.bf16.msra.mxu0 %v2619
  %3782 = vmatprep.subr.bf16.mxu0 %v2616
  %3783 = vmatpush1.bf16.msra.mxu0 %v2615
  %3784 = vmatprep.subr.bf16.mxu0 %v2612
  %3785 = vmatpush1.bf16.msra.mxu0 %v2611
  %3786 = vmatprep.subr.bf16.mxu0 %v2608
  %3787 = vmatpush1.bf16.msra.mxu0 %v2607
  %3788 = vmatprep.subr.bf16.mxu0 %v2604
  %3789 = vmatpush1.bf16.msra.mxu0 %v2603
  %3790 = vmatprep.subr.bf16.mxu0 %v2600
  %3791 = vmatpush1.bf16.msra.mxu0 %v2599
  %3792 = vmatprep.subr.bf16.mxu0 %v2596
  %3793 = vmatpush1.bf16.msra.mxu0 %v2595
  %3794 = vmatprep.subr.bf16.mxu0 %v2592
  %3795 = vmatpush1.bf16.msra.mxu0 %v2591
  %3796 = vmatprep.subr.bf16.mxu0 %v2652
  %3797 = vmatpush2.bf16.msra.mxu0 %v2651
  %3798 = vmatprep.subr.bf16.mxu0 %v2648
  %3799 = vmatpush2.bf16.msra.mxu0 %v2647
  %3800 = vmatprep.subr.bf16.mxu0 %v2644
  %3801 = vmatpush2.bf16.msra.mxu0 %v2643
  %3802 = vmatprep.subr.bf16.mxu0 %v2640
  %3803 = vmatpush2.bf16.msra.mxu0 %v2639
  %3804 = vmatprep.subr.bf16.mxu0 %v2636
  %3805 = vmatpush2.bf16.msra.mxu0 %v2635
  %3806 = vmatprep.subr.bf16.mxu0 %v2632
  %3807 = vmatpush2.bf16.msra.mxu0 %v2631
  %3808 = vmatprep.subr.bf16.mxu0 %v2628
  %3809 = vmatpush2.bf16.msra.mxu0 %v2627
  %3810 = vmatprep.subr.bf16.mxu0 %v2624
  %3811 = vmatpush2.bf16.msra.mxu0 %v2623
  %3812 = vmatprep.mubr.bf16.mxu0 %v70
  %3813 = vmatmul.mubr.bf16.gmra.mxu0 %v69
  %v3814 = vpop.f32.mrf.mxu0
  %v3815 = vadd.f32 %v3774, %v3814
  %v3816 = vpop.f32.mrf.mxu0
  %v3817 = vadd.f32 %v3776, %v3816
  %v3818 = vpop.f32.mrf.mxu0
  %v3819 = vpop.f32.mrf.mxu0
  %3820 = vdwg.mxu0
  %v3821 = vmax.f32 %v3487, 0.0
  %v3822 = vmax.f32 %v3489, 0.0
  %v3823 = vmax.f32 %v3815, 0.0
  %v3824 = vmax.f32 %v3817, 0.0
  %v3825 = vld [vmem:[%s1] sm:$0xff]
  %v3826 = vld [vmem:[%s4] ss:$2 sm:$0x3]
  %3828 = vset.pattern.permute.xlu0 0
  %3829 = vperm.xlu0 %3828, %v3825
  %v3830 = vpop.permute.xlu0 %3829
  %v3833 = vlaneseq
  %v3834 = vshrl.u32 %v3833, 7
  %v3835 = vsub.s32 0, %v3834
  %v3836 = vrot.slane %v3826, %v3835
  %v3837 = vlaneseq
  %v3838 = vshrl.u32 %v3837, 7
  %v3839 = vsub.s32 1, %v3838
  %v3840 = vrot.slane %v3826, %v3839
  %v3843 = vmul.f32 %v3830, %v3836
  %v3844 = vmul.f32 %v3830, %v3840
  %s3845 = scalar_lea.vmem %s4, 1
  %v3846 = vld [vmem:[%s3845] ss:$2 sm:$0x3]
  %3847 = vset.pattern.permute.xlu0 1
  %3848 = vperm.xlu0 %3847, %v3825
  %v3849 = vpop.permute.xlu0 %3848
  %v3852 = vlaneseq
  %v3853 = vshrl.u32 %v3852, 7
  %v3854 = vsub.s32 0, %v3853
  %v3855 = vrot.slane %v3846, %v3854
  %v3856 = vlaneseq
  %v3857 = vshrl.u32 %v3856, 7
  %v3858 = vsub.s32 1, %v3857
  %v3859 = vrot.slane %v3846, %v3858
  %v3862 = vmul.f32 %v3849, %v3855
  %v3863 = vmul.f32 %v3849, %v3859
  %v3864 = vadd.f32 %v3843, %v3862
  %v3865 = vadd.f32 %v3844, %v3863
  %v3866 = vld [vmem:[%s5] sm:$0x3]
  %v3868 = vlaneseq
  %v3869 = vshrl.u32 %v3868, 7
  %v3870 = vsub.s32 0, %v3869
  %v3871 = vrot.slane %v3866, %v3870
  %v3872 = vlaneseq
  %v3873 = vshrl.u32 %v3872, 7
  %v3874 = vsub.s32 1, %v3873
  %v3875 = vrot.slane %v3866, %v3874
  %v3878 = vadd.f32 %v3864, %v3871
  %v3879 = vadd.f32 %v3865, %v3875
  %v3880 = vmax.f32 %v3878, 0.0
  %v3881 = vmax.f32 %v3879, 0.0
  %v3882 = vpack.c.bf16 %v3821, %v3821
  %v3883 = vpack.c.bf16 %v3822, %v3822
  %v3884 = vpack.c.bf16 %v3823, %v3823
  %v3885 = vpack.c.bf16 %v3824, %v3824
  %v3886 = vld [vmem:[%s6] sm:$0xff]
  %v3887 = vld [vmem:[%s6 + $0x8] sm:$0xff]
  %v3888 = vld [vmem:[%s6 + $0x10] sm:$0xff]
  %v3889 = vld [vmem:[%s6 + $0x18] sm:$0xff]
  %v3890 = vld [vmem:[%s6 + $0x20] sm:$0xff]
  %v3891 = vld [vmem:[%s6 + $0x28] sm:$0xff]
  %v3892 = vld [vmem:[%s6 + $0x30] sm:$0xff]
  %v3893 = vld [vmem:[%s6 + $0x38] sm:$0xff]
  %v3894 = vld [vmem:[%s6 + $0x40] sm:$0xff]
  %v3895 = vld [vmem:[%s6 + $0x48] sm:$0xff]
  %v3896 = vld [vmem:[%s6 + $0x50] sm:$0xff]
  %v3897 = vld [vmem:[%s6 + $0x58] sm:$0xff]
  %v3898 = vld [vmem:[%s6 + $0x60] sm:$0xff]
  %v3899 = vld [vmem:[%s6 + $0x68] sm:$0xff]
  %v3900 = vld [vmem:[%s6 + $0x70] sm:$0xff]
  %v3901 = vld [vmem:[%s6 + $0x78] sm:$0xff]
  %v3902 = vld [vmem:[%s6 + $0x80] sm:$0xff]
  %v3903 = vld [vmem:[%s6 + $0x88] sm:$0xff]
  %v3904 = vld [vmem:[%s6 + $0x90] sm:$0xff]
  %v3905 = vld [vmem:[%s6 + $0x98] sm:$0xff]
  %v3906 = vld [vmem:[%s6 + $0xa0] sm:$0xff]
  %v3907 = vld [vmem:[%s6 + $0xa8] sm:$0xff]
  %v3908 = vld [vmem:[%s6 + $0xb0] sm:$0xff]
  %v3909 = vld [vmem:[%s6 + $0xb8] sm:$0xff]
  %v3910 = vld [vmem:[%s6 + $0xc0] sm:$0xff]
  %v3911 = vld [vmem:[%s6 + $0xc8] sm:$0xff]
  %v3912 = vld [vmem:[%s6 + $0xd0] sm:$0xff]
  %v3913 = vld [vmem:[%s6 + $0xd8] sm:$0xff]
  %v3914 = vld [vmem:[%s6 + $0xe0] sm:$0xff]
  %v3915 = vld [vmem:[%s6 + $0xe8] sm:$0xff]
  %v3916 = vld [vmem:[%s6 + $0xf0] sm:$0xff]
  %v3917 = vld [vmem:[%s6 + $0xf8] sm:$0xff]
  %v3918 = vld [vmem:[%s6 + $0x100] sm:$0xff]
  %v3919 = vld [vmem:[%s6 + $0x108] sm:$0xff]
  %v3920 = vld [vmem:[%s6 + $0x110] sm:$0xff]
  %v3921 = vld [vmem:[%s6 + $0x118] sm:$0xff]
  %v3922 = vld [vmem:[%s6 + $0x120] sm:$0xff]
  %v3923 = vld [vmem:[%s6 + $0x128] sm:$0xff]
  %v3924 = vld [vmem:[%s6 + $0x130] sm:$0xff]
  %v3925 = vld [vmem:[%s6 + $0x138] sm:$0xff]
  %v3926 = vld [vmem:[%s6 + $0x140] sm:$0xff]
  %v3927 = vld [vmem:[%s6 + $0x148] sm:$0xff]
  %v3928 = vld [vmem:[%s6 + $0x150] sm:$0xff]
  %v3929 = vld [vmem:[%s6 + $0x158] sm:$0xff]
  %v3930 = vld [vmem:[%s6 + $0x160] sm:$0xff]
  %v3931 = vld [vmem:[%s6 + $0x168] sm:$0xff]
  %v3932 = vld [vmem:[%s6 + $0x170] sm:$0xff]
  %v3933 = vld [vmem:[%s6 + $0x178] sm:$0xff]
  %v3934 = vld [vmem:[%s6 + $0x180] sm:$0xff]
  %v3935 = vld [vmem:[%s6 + $0x188] sm:$0xff]
  %v3936 = vld [vmem:[%s6 + $0x190] sm:$0xff]
  %v3937 = vld [vmem:[%s6 + $0x198] sm:$0xff]
  %v3938 = vld [vmem:[%s6 + $0x1a0] sm:$0xff]
  %v3939 = vld [vmem:[%s6 + $0x1a8] sm:$0xff]
  %v3940 = vld [vmem:[%s6 + $0x1b0] sm:$0xff]
  %v3941 = vld [vmem:[%s6 + $0x1b8] sm:$0xff]
  %v3942 = vld [vmem:[%s6 + $0x1c0] sm:$0xff]
  %v3943 = vld [vmem:[%s6 + $0x1c8] sm:$0xff]
  %v3944 = vld [vmem:[%s6 + $0x1d0] sm:$0xff]
  %v3945 = vld [vmem:[%s6 + $0x1d8] sm:$0xff]
  %v3946 = vld [vmem:[%s6 + $0x1e0] sm:$0xff]
  %v3947 = vld [vmem:[%s6 + $0x1e8] sm:$0xff]
  %v3948 = vld [vmem:[%s6 + $0x1f0] sm:$0xff]
  %v3949 = vld [vmem:[%s6 + $0x1f8] sm:$0xff]
  %v3950 = vpack.c.bf16 %v3880, %v3880
  %v3951 = vpack.c.bf16 %v3881, %v3881
  %v3952 = vld [vmem:[%s7] sm:$0xff]
  %v3953 = vld [vmem:[%s7 + $0x8] sm:$0xff]
  %v3954 = vld [vmem:[%s7 + $0x10] sm:$0xff]
  %v3955 = vld [vmem:[%s7 + $0x18] sm:$0xff]
  %v3956 = vld [vmem:[%s7 + $0x20] sm:$0xff]
  %v3957 = vld [vmem:[%s7 + $0x28] sm:$0xff]
  %v3958 = vld [vmem:[%s7 + $0x30] sm:$0xff]
  %v3959 = vld [vmem:[%s7 + $0x38] sm:$0xff]
  %v3960 = vld [vmem:[%s7 + $0x40] sm:$0xff]
  %v3961 = vld [vmem:[%s7 + $0x48] sm:$0xff]
  %v3962 = vld [vmem:[%s7 + $0x50] sm:$0xff]
  %v3963 = vld [vmem:[%s7 + $0x58] sm:$0xff]
  %v3964 = vld [vmem:[%s7 + $0x60] sm:$0xff]
  %v3965 = vld [vmem:[%s7 + $0x68] sm:$0xff]
  %v3966 = vld [vmem:[%s7 + $0x70] sm:$0xff]
  %v3967 = vld [vmem:[%s7 + $0x78] sm:$0xff]
  %v3968 = vld [vmem:[%s7 + $0x80] sm:$0xff]
  %v3969 = vld [vmem:[%s7 + $0x88] sm:$0xff]
  %v3970 = vld [vmem:[%s7 + $0x90] sm:$0xff]
  %v3971 = vld [vmem:[%s7 + $0x98] sm:$0xff]
  %v3972 = vld [vmem:[%s7 + $0xa0] sm:$0xff]
  %v3973 = vld [vmem:[%s7 + $0xa8] sm:$0xff]
  %v3974 = vld [vmem:[%s7 + $0xb0] sm:$0xff]
  %v3975 = vld [vmem:[%s7 + $0xb8] sm:$0xff]
  %v3976 = vld [vmem:[%s7 + $0xc0] sm:$0xff]
  %v3977 = vld [vmem:[%s7 + $0xc8] sm:$0xff]
  %v3978 = vld [vmem:[%s7 + $0xd0] sm:$0xff]
  %v3979 = vld [vmem:[%s7 + $0xd8] sm:$0xff]
  %v3980 = vld [vmem:[%s7 + $0xe0] sm:$0xff]
  %v3981 = vld [vmem:[%s7 + $0xe8] sm:$0xff]
  %v3982 = vld [vmem:[%s7 + $0xf0] sm:$0xff]
  %v3983 = vld [vmem:[%s7 + $0xf8] sm:$0xff]
  %v4016 = vunpack.c.l.b16 %v3952
  %v4017 = vunpack.c.h.b16 %v3952
  %v4018 = vunpack.c.l.b16 %v3953
  %v4019 = vunpack.c.h.b16 %v3953
  %v4020 = vunpack.c.l.b16 %v3954
  %v4021 = vunpack.c.h.b16 %v3954
  %v4022 = vunpack.c.l.b16 %v3955
  %v4023 = vunpack.c.h.b16 %v3955
  %v4024 = vunpack.c.l.b16 %v3956
  %v4025 = vunpack.c.h.b16 %v3956
  %v4026 = vunpack.c.l.b16 %v3957
  %v4027 = vunpack.c.h.b16 %v3957
  %v4028 = vunpack.c.l.b16 %v3958
  %v4029 = vunpack.c.h.b16 %v3958
  %v4030 = vunpack.c.l.b16 %v3959
  %v4031 = vunpack.c.h.b16 %v3959
  %v4032 = vunpack.c.l.b16 %v3960
  %v4033 = vunpack.c.h.b16 %v3960
  %v4034 = vunpack.c.l.b16 %v3961
  %v4035 = vunpack.c.h.b16 %v3961
  %v4036 = vunpack.c.l.b16 %v3962
  %v4037 = vunpack.c.h.b16 %v3962
  %v4038 = vunpack.c.l.b16 %v3963
  %v4039 = vunpack.c.h.b16 %v3963
  %v4040 = vunpack.c.l.b16 %v3964
  %v4041 = vunpack.c.h.b16 %v3964
  %v4042 = vunpack.c.l.b16 %v3965
  %v4043 = vunpack.c.h.b16 %v3965
  %v4044 = vunpack.c.l.b16 %v3966
  %v4045 = vunpack.c.h.b16 %v3966
  %v4046 = vunpack.c.l.b16 %v3967
  %v4047 = vunpack.c.h.b16 %v3967
  %v4048 = vunpack.c.l.b16 %v3968
  %v4049 = vunpack.c.h.b16 %v3968
  %v4050 = vunpack.c.l.b16 %v3969
  %v4051 = vunpack.c.h.b16 %v3969
  %v4052 = vunpack.c.l.b16 %v3970
  %v4053 = vunpack.c.h.b16 %v3970
  %v4054 = vunpack.c.l.b16 %v3971
  %v4055 = vunpack.c.h.b16 %v3971
  %v4056 = vunpack.c.l.b16 %v3972
  %v4057 = vunpack.c.h.b16 %v3972
  %v4058 = vunpack.c.l.b16 %v3973
  %v4059 = vunpack.c.h.b16 %v3973
  %v4060 = vunpack.c.l.b16 %v3974
  %v4061 = vunpack.c.h.b16 %v3974
  %v4062 = vunpack.c.l.b16 %v3975
  %v4063 = vunpack.c.h.b16 %v3975
  %v4064 = vunpack.c.l.b16 %v3976
  %v4065 = vunpack.c.h.b16 %v3976
  %v4066 = vunpack.c.l.b16 %v3977
  %v4067 = vunpack.c.h.b16 %v3977
  %v4068 = vunpack.c.l.b16 %v3978
  %v4069 = vunpack.c.h.b16 %v3978
  %v4070 = vunpack.c.l.b16 %v3979
  %v4071 = vunpack.c.h.b16 %v3979
  %v4072 = vunpack.c.l.b16 %v3980
  %v4073 = vunpack.c.h.b16 %v3980
  %v4074 = vunpack.c.l.b16 %v3981
  %v4075 = vunpack.c.h.b16 %v3981
  %v4076 = vunpack.c.l.b16 %v3982
  %v4077 = vunpack.c.h.b16 %v3982
  %v4078 = vunpack.c.l.b16 %v3983
  %v4079 = vunpack.c.h.b16 %v3983
  %v4080 = vpack.c.b16 %v4018, %v4016
  %v4081 = vpack.c.b16 %v4019, %v4017
  %v4082 = vpack.c.b16 %v4022, %v4020
  %v4083 = vpack.c.b16 %v4023, %v4021
  %v4084 = vpack.c.b16 %v4026, %v4024
  %v4085 = vpack.c.b16 %v4027, %v4025
  %v4086 = vpack.c.b16 %v4030, %v4028
  %v4087 = vpack.c.b16 %v4031, %v4029
  %v4088 = vpack.c.b16 %v4034, %v4032
  %v4089 = vpack.c.b16 %v4035, %v4033
  %v4090 = vpack.c.b16 %v4038, %v4036
  %v4091 = vpack.c.b16 %v4039, %v4037
  %v4092 = vpack.c.b16 %v4042, %v4040
  %v4093 = vpack.c.b16 %v4043, %v4041
  %v4094 = vpack.c.b16 %v4046, %v4044
  %v4095 = vpack.c.b16 %v4047, %v4045
  %v4096 = vpack.c.b16 %v4050, %v4048
  %v4097 = vpack.c.b16 %v4051, %v4049
  %v4098 = vpack.c.b16 %v4054, %v4052
  %v4099 = vpack.c.b16 %v4055, %v4053
  %v4100 = vpack.c.b16 %v4058, %v4056
  %v4101 = vpack.c.b16 %v4059, %v4057
  %v4102 = vpack.c.b16 %v4062, %v4060
  %v4103 = vpack.c.b16 %v4063, %v4061
  %v4104 = vpack.c.b16 %v4066, %v4064
  %v4105 = vpack.c.b16 %v4067, %v4065
  %v4106 = vpack.c.b16 %v4070, %v4068
  %v4107 = vpack.c.b16 %v4071, %v4069
  %v4108 = vpack.c.b16 %v4074, %v4072
  %v4109 = vpack.c.b16 %v4075, %v4073
  %v4110 = vpack.c.b16 %v4078, %v4076
  %v4111 = vpack.c.b16 %v4079, %v4077
  %4144 = vmatprep.subr.bf16.mxu0 %v4095
  %4145 = vmatpush1.bf16.msra.mxu0 %v4094
  %4146 = vmatprep.subr.bf16.mxu0 %v4093
  %4147 = vmatpush1.bf16.msra.mxu0 %v4092
  %4148 = vmatprep.subr.bf16.mxu0 %v4091
  %4149 = vmatpush1.bf16.msra.mxu0 %v4090
  %4150 = vmatprep.subr.bf16.mxu0 %v4089
  %4151 = vmatpush1.bf16.msra.mxu0 %v4088
  %4152 = vmatprep.subr.bf16.mxu0 %v4087
  %4153 = vmatpush1.bf16.msra.mxu0 %v4086
  %4154 = vmatprep.subr.bf16.mxu0 %v4085
  %4155 = vmatpush1.bf16.msra.mxu0 %v4084
  %4156 = vmatprep.subr.bf16.mxu0 %v4083
  %4157 = vmatpush1.bf16.msra.mxu0 %v4082
  %4158 = vmatprep.subr.bf16.mxu0 %v4081
  %4159 = vmatpush1.bf16.msra.mxu0 %v4080
  %4160 = vmatprep.subr.bf16.mxu0 %v4111
  %4161 = vmatpush2.bf16.msra.mxu0 %v4110
  %4162 = vmatprep.subr.bf16.mxu0 %v4109
  %4163 = vmatpush2.bf16.msra.mxu0 %v4108
  %4164 = vmatprep.subr.bf16.mxu0 %v4107
  %4165 = vmatpush2.bf16.msra.mxu0 %v4106
  %4166 = vmatprep.subr.bf16.mxu0 %v4105
  %4167 = vmatpush2.bf16.msra.mxu0 %v4104
  %4168 = vmatprep.subr.bf16.mxu0 %v4103
  %4169 = vmatpush2.bf16.msra.mxu0 %v4102
  %4170 = vmatprep.subr.bf16.mxu0 %v4101
  %4171 = vmatpush2.bf16.msra.mxu0 %v4100
  %4172 = vmatprep.subr.bf16.mxu0 %v4099
  %4173 = vmatpush2.bf16.msra.mxu0 %v4098
  %4174 = vmatprep.subr.bf16.mxu0 %v4097
  %4175 = vmatpush2.bf16.msra.mxu0 %v4096
  %4176 = vmatprep.mubr.bf16.mxu0 %v3951
  %4177 = vmatmul.mubr.bf16.gmra.mxu0 %v3950
  %v4178 = vpop.f32.mrf.mxu0
  %v4179 = vadd.f32 0.0, %v4178
  %v4180 = vpop.f32.mrf.mxu0
  %v4181 = vadd.f32 0.0, %v4180
  %v4182 = vpop.f32.mrf.mxu0
  %v4183 = vpop.f32.mrf.mxu0
  %4184 = vdwg.mxu0
  %v4249 = vunpack.c.l.b16 %v3886
  %v4250 = vunpack.c.h.b16 %v3886
  %v4251 = vunpack.c.l.b16 %v3887
  %v4252 = vunpack.c.h.b16 %v3887
  %v4253 = vunpack.c.l.b16 %v3888
  %v4254 = vunpack.c.h.b16 %v3888
  %v4255 = vunpack.c.l.b16 %v3889
  %v4256 = vunpack.c.h.b16 %v3889
  %v4257 = vunpack.c.l.b16 %v3890
  %v4258 = vunpack.c.h.b16 %v3890
  %v4259 = vunpack.c.l.b16 %v3891
  %v4260 = vunpack.c.h.b16 %v3891
  %v4261 = vunpack.c.l.b16 %v3892
  %v4262 = vunpack.c.h.b16 %v3892
  %v4263 = vunpack.c.l.b16 %v3893
  %v4264 = vunpack.c.h.b16 %v3893
  %v4265 = vunpack.c.l.b16 %v3894
  %v4266 = vunpack.c.h.b16 %v3894
  %v4267 = vunpack.c.l.b16 %v3895
  %v4268 = vunpack.c.h.b16 %v3895
  %v4269 = vunpack.c.l.b16 %v3896
  %v4270 = vunpack.c.h.b16 %v3896
  %v4271 = vunpack.c.l.b16 %v3897
  %v4272 = vunpack.c.h.b16 %v3897
  %v4273 = vunpack.c.l.b16 %v3898
  %v4274 = vunpack.c.h.b16 %v3898
  %v4275 = vunpack.c.l.b16 %v3899
  %v4276 = vunpack.c.h.b16 %v3899
  %v4277 = vunpack.c.l.b16 %v3900
  %v4278 = vunpack.c.h.b16 %v3900
  %v4279 = vunpack.c.l.b16 %v3901
  %v4280 = vunpack.c.h.b16 %v3901
  %v4281 = vunpack.c.l.b16 %v3902
  %v4282 = vunpack.c.h.b16 %v3902
  %v4283 = vunpack.c.l.b16 %v3903
  %v4284 = vunpack.c.h.b16 %v3903
  %v4285 = vunpack.c.l.b16 %v3904
  %v4286 = vunpack.c.h.b16 %v3904
  %v4287 = vunpack.c.l.b16 %v3905
  %v4288 = vunpack.c.h.b16 %v3905
  %v4289 = vunpack.c.l.b16 %v3906
  %v4290 = vunpack.c.h.b16 %v3906
  %v4291 = vunpack.c.l.b16 %v3907
  %v4292 = vunpack.c.h.b16 %v3907
  %v4293 = vunpack.c.l.b16 %v3908
  %v4294 = vunpack.c.h.b16 %v3908
  %v4295 = vunpack.c.l.b16 %v3909
  %v4296 = vunpack.c.h.b16 %v3909
  %v4297 = vunpack.c.l.b16 %v3910
  %v4298 = vunpack.c.h.b16 %v3910
  %v4299 = vunpack.c.l.b16 %v3911
  %v4300 = vunpack.c.h.b16 %v3911
  %v4301 = vunpack.c.l.b16 %v3912
  %v4302 = vunpack.c.h.b16 %v3912
  %v4303 = vunpack.c.l.b16 %v3913
  %v4304 = vunpack.c.h.b16 %v3913
  %v4305 = vunpack.c.l.b16 %v3914
  %v4306 = vunpack.c.h.b16 %v3914
  %v4307 = vunpack.c.l.b16 %v3915
  %v4308 = vunpack.c.h.b16 %v3915
  %v4309 = vunpack.c.l.b16 %v3916
  %v4310 = vunpack.c.h.b16 %v3916
  %v4311 = vunpack.c.l.b16 %v3917
  %v4312 = vunpack.c.h.b16 %v3917
  %v4313 = vunpack.c.l.b16 %v3918
  %v4314 = vunpack.c.h.b16 %v3918
  %v4315 = vunpack.c.l.b16 %v3919
  %v4316 = vunpack.c.h.b16 %v3919
  %v4317 = vunpack.c.l.b16 %v3920
  %v4318 = vunpack.c.h.b16 %v3920
  %v4319 = vunpack.c.l.b16 %v3921
  %v4320 = vunpack.c.h.b16 %v3921
  %v4321 = vunpack.c.l.b16 %v3922
  %v4322 = vunpack.c.h.b16 %v3922
  %v4323 = vunpack.c.l.b16 %v3923
  %v4324 = vunpack.c.h.b16 %v3923
  %v4325 = vunpack.c.l.b16 %v3924
  %v4326 = vunpack.c.h.b16 %v3924
  %v4327 = vunpack.c.l.b16 %v3925
  %v4328 = vunpack.c.h.b16 %v3925
  %v4329 = vunpack.c.l.b16 %v3926
  %v4330 = vunpack.c.h.b16 %v3926
  %v4331 = vunpack.c.l.b16 %v3927
  %v4332 = vunpack.c.h.b16 %v3927
  %v4333 = vunpack.c.l.b16 %v3928
  %v4334 = vunpack.c.h.b16 %v3928
  %v4335 = vunpack.c.l.b16 %v3929
  %v4336 = vunpack.c.h.b16 %v3929
  %v4337 = vunpack.c.l.b16 %v3930
  %v4338 = vunpack.c.h.b16 %v3930
  %v4339 = vunpack.c.l.b16 %v3931
  %v4340 = vunpack.c.h.b16 %v3931
  %v4341 = vunpack.c.l.b16 %v3932
  %v4342 = vunpack.c.h.b16 %v3932
  %v4343 = vunpack.c.l.b16 %v3933
  %v4344 = vunpack.c.h.b16 %v3933
  %v4345 = vunpack.c.l.b16 %v3934
  %v4346 = vunpack.c.h.b16 %v3934
  %v4347 = vunpack.c.l.b16 %v3935
  %v4348 = vunpack.c.h.b16 %v3935
  %v4349 = vunpack.c.l.b16 %v3936
  %v4350 = vunpack.c.h.b16 %v3936
  %v4351 = vunpack.c.l.b16 %v3937
  %v4352 = vunpack.c.h.b16 %v3937
  %v4353 = vunpack.c.l.b16 %v3938
  %v4354 = vunpack.c.h.b16 %v3938
  %v4355 = vunpack.c.l.b16 %v3939
  %v4356 = vunpack.c.h.b16 %v3939
  %v4357 = vunpack.c.l.b16 %v3940
  %v4358 = vunpack.c.h.b16 %v3940
  %v4359 = vunpack.c.l.b16 %v3941
  %v4360 = vunpack.c.h.b16 %v3941
  %v4361 = vunpack.c.l.b16 %v3942
  %v4362 = vunpack.c.h.b16 %v3942
  %v4363 = vunpack.c.l.b16 %v3943
  %v4364 = vunpack.c.h.b16 %v3943
  %v4365 = vunpack.c.l.b16 %v3944
  %v4366 = vunpack.c.h.b16 %v3944
  %v4367 = vunpack.c.l.b16 %v3945
  %v4368 = vunpack.c.h.b16 %v3945
  %v4369 = vunpack.c.l.b16 %v3946
  %v4370 = vunpack.c.h.b16 %v3946
  %v4371 = vunpack.c.l.b16 %v3947
  %v4372 = vunpack.c.h.b16 %v3947
  %v4373 = vunpack.c.l.b16 %v3948
  %v4374 = vunpack.c.h.b16 %v3948
  %v4375 = vunpack.c.l.b16 %v3949
  %v4376 = vunpack.c.h.b16 %v3949
  %v4377 = vpack.c.b16 %v4251, %v4249
  %v4378 = vpack.c.b16 %v4252, %v4250
  %v4379 = vpack.c.b16 %v4255, %v4253
  %v4380 = vpack.c.b16 %v4256, %v4254
  %v4381 = vpack.c.b16 %v4259, %v4257
  %v4382 = vpack.c.b16 %v4260, %v4258
  %v4383 = vpack.c.b16 %v4263, %v4261
  %v4384 = vpack.c.b16 %v4264, %v4262
  %v4385 = vpack.c.b16 %v4267, %v4265
  %v4386 = vpack.c.b16 %v4268, %v4266
  %v4387 = vpack.c.b16 %v4271, %v4269
  %v4388 = vpack.c.b16 %v4272, %v4270
  %v4389 = vpack.c.b16 %v4275, %v4273
  %v4390 = vpack.c.b16 %v4276, %v4274
  %v4391 = vpack.c.b16 %v4279, %v4277
  %v4392 = vpack.c.b16 %v4280, %v4278
  %v4393 = vpack.c.b16 %v4283, %v4281
  %v4394 = vpack.c.b16 %v4284, %v4282
  %v4395 = vpack.c.b16 %v4287, %v4285
  %v4396 = vpack.c.b16 %v4288, %v4286
  %v4397 = vpack.c.b16 %v4291, %v4289
  %v4398 = vpack.c.b16 %v4292, %v4290
  %v4399 = vpack.c.b16 %v4295, %v4293
  %v4400 = vpack.c.b16 %v4296, %v4294
  %v4401 = vpack.c.b16 %v4299, %v4297
  %v4402 = vpack.c.b16 %v4300, %v4298
  %v4403 = vpack.c.b16 %v4303, %v4301
  %v4404 = vpack.c.b16 %v4304, %v4302
  %v4405 = vpack.c.b16 %v4307, %v4305
  %v4406 = vpack.c.b16 %v4308, %v4306
  %v4407 = vpack.c.b16 %v4311, %v4309
  %v4408 = vpack.c.b16 %v4312, %v4310
  %v4409 = vpack.c.b16 %v4315, %v4313
  %v4410 = vpack.c.b16 %v4316, %v4314
  %v4411 = vpack.c.b16 %v4319, %v4317
  %v4412 = vpack.c.b16 %v4320, %v4318
  %v4413 = vpack.c.b16 %v4323, %v4321
  %v4414 = vpack.c.b16 %v4324, %v4322
  %v4415 = vpack.c.b16 %v4327, %v4325
  %v4416 = vpack.c.b16 %v4328, %v4326
  %v4417 = vpack.c.b16 %v4331, %v4329
  %v4418 = vpack.c.b16 %v4332, %v4330
  %v4419 = vpack.c.b16 %v4335, %v4333
  %v4420 = vpack.c.b16 %v4336, %v4334
  %v4421 = vpack.c.b16 %v4339, %v4337
  %v4422 = vpack.c.b16 %v4340, %v4338
  %v4423 = vpack.c.b16 %v4343, %v4341
  %v4424 = vpack.c.b16 %v4344, %v4342
  %v4425 = vpack.c.b16 %v4347, %v4345
  %v4426 = vpack.c.b16 %v4348, %v4346
  %v4427 = vpack.c.b16 %v4351, %v4349
  %v4428 = vpack.c.b16 %v4352, %v4350
  %v4429 = vpack.c.b16 %v4355, %v4353
  %v4430 = vpack.c.b16 %v4356, %v4354
  %v4431 = vpack.c.b16 %v4359, %v4357
  %v4432 = vpack.c.b16 %v4360, %v4358
  %v4433 = vpack.c.b16 %v4363, %v4361
  %v4434 = vpack.c.b16 %v4364, %v4362
  %v4435 = vpack.c.b16 %v4367, %v4365
  %v4436 = vpack.c.b16 %v4368, %v4366
  %v4437 = vpack.c.b16 %v4371, %v4369
  %v4438 = vpack.c.b16 %v4372, %v4370
  %v4439 = vpack.c.b16 %v4375, %v4373
  %v4440 = vpack.c.b16 %v4376, %v4374
  %4505 = vmatprep.subr.bf16.mxu0 %v4392
  %4506 = vmatpush1.bf16.msra.mxu0 %v4391
  %4507 = vmatprep.subr.bf16.mxu0 %v4390
  %4508 = vmatpush1.bf16.msra.mxu0 %v4389
  %4509 = vmatprep.subr.bf16.mxu0 %v4388
  %4510 = vmatpush1.bf16.msra.mxu0 %v4387
  %4511 = vmatprep.subr.bf16.mxu0 %v4386
  %4512 = vmatpush1.bf16.msra.mxu0 %v4385
  %4513 = vmatprep.subr.bf16.mxu0 %v4384
  %4514 = vmatpush1.bf16.msra.mxu0 %v4383
  %4515 = vmatprep.subr.bf16.mxu0 %v4382
  %4516 = vmatpush1.bf16.msra.mxu0 %v4381
  %4517 = vmatprep.subr.bf16.mxu0 %v4380
  %4518 = vmatpush1.bf16.msra.mxu0 %v4379
  %4519 = vmatprep.subr.bf16.mxu0 %v4378
  %4520 = vmatpush1.bf16.msra.mxu0 %v4377
  %4521 = vmatprep.subr.bf16.mxu0 %v4408
  %4522 = vmatpush2.bf16.msra.mxu0 %v4407
  %4523 = vmatprep.subr.bf16.mxu0 %v4406
  %4524 = vmatpush2.bf16.msra.mxu0 %v4405
  %4525 = vmatprep.subr.bf16.mxu0 %v4404
  %4526 = vmatpush2.bf16.msra.mxu0 %v4403
  %4527 = vmatprep.subr.bf16.mxu0 %v4402
  %4528 = vmatpush2.bf16.msra.mxu0 %v4401
  %4529 = vmatprep.subr.bf16.mxu0 %v4400
  %4530 = vmatpush2.bf16.msra.mxu0 %v4399
  %4531 = vmatprep.subr.bf16.mxu0 %v4398
  %4532 = vmatpush2.bf16.msra.mxu0 %v4397
  %4533 = vmatprep.subr.bf16.mxu0 %v4396
  %4534 = vmatpush2.bf16.msra.mxu0 %v4395
  %4535 = vmatprep.subr.bf16.mxu0 %v4394
  %4536 = vmatpush2.bf16.msra.mxu0 %v4393
  %4537 = vmatprep.mubr.bf16.mxu0 %v3883
  %4538 = vmatmul.mubr.bf16.gmra.mxu0 %v3882
  %v4539 = vpop.f32.mrf.mxu0
  %v4540 = vadd.f32 %v4179, %v4539
  %v4541 = vpop.f32.mrf.mxu0
  %v4542 = vadd.f32 %v4181, %v4541
  %v4543 = vpop.f32.mrf.mxu0
  %v4544 = vpop.f32.mrf.mxu0
  %4545 = vdwg.mxu0
  %4546 = vmatprep.subr.bf16.mxu0 %v4424
  %4547 = vmatpush1.bf16.msra.mxu0 %v4423
  %4548 = vmatprep.subr.bf16.mxu0 %v4422
  %4549 = vmatpush1.bf16.msra.mxu0 %v4421
  %4550 = vmatprep.subr.bf16.mxu0 %v4420
  %4551 = vmatpush1.bf16.msra.mxu0 %v4419
  %4552 = vmatprep.subr.bf16.mxu0 %v4418
  %4553 = vmatpush1.bf16.msra.mxu0 %v4417
  %4554 = vmatprep.subr.bf16.mxu0 %v4416
  %4555 = vmatpush1.bf16.msra.mxu0 %v4415
  %4556 = vmatprep.subr.bf16.mxu0 %v4414
  %4557 = vmatpush1.bf16.msra.mxu0 %v4413
  %4558 = vmatprep.subr.bf16.mxu0 %v4412
  %4559 = vmatpush1.bf16.msra.mxu0 %v4411
  %4560 = vmatprep.subr.bf16.mxu0 %v4410
  %4561 = vmatpush1.bf16.msra.mxu0 %v4409
  %4562 = vmatprep.subr.bf16.mxu0 %v4440
  %4563 = vmatpush2.bf16.msra.mxu0 %v4439
  %4564 = vmatprep.subr.bf16.mxu0 %v4438
  %4565 = vmatpush2.bf16.msra.mxu0 %v4437
  %4566 = vmatprep.subr.bf16.mxu0 %v4436
  %4567 = vmatpush2.bf16.msra.mxu0 %v4435
  %4568 = vmatprep.subr.bf16.mxu0 %v4434
  %4569 = vmatpush2.bf16.msra.mxu0 %v4433
  %4570 = vmatprep.subr.bf16.mxu0 %v4432
  %4571 = vmatpush2.bf16.msra.mxu0 %v4431
  %4572 = vmatprep.subr.bf16.mxu0 %v4430
  %4573 = vmatpush2.bf16.msra.mxu0 %v4429
  %4574 = vmatprep.subr.bf16.mxu0 %v4428
  %4575 = vmatpush2.bf16.msra.mxu0 %v4427
  %4576 = vmatprep.subr.bf16.mxu0 %v4426
  %4577 = vmatpush2.bf16.msra.mxu0 %v4425
  %4578 = vmatprep.mubr.bf16.mxu0 %v3885
  %4579 = vmatmul.mubr.bf16.gmra.mxu0 %v3884
  %v4580 = vpop.f32.mrf.mxu0
  %v4581 = vadd.f32 %v4540, %v4580
  %v4582 = vpop.f32.mrf.mxu0
  %v4583 = vadd.f32 %v4542, %v4582
  %v4584 = vpop.f32.mrf.mxu0
  %v4585 = vpop.f32.mrf.mxu0
  %4586 = vdwg.mxu0
  %v4587 = vld [vmem:[%s8] sm:$0x3]
  %v4589 = vlaneseq
  %v4590 = vshrl.u32 %v4589, 7
  %v4591 = vsub.s32 0, %v4590
  %v4592 = vrot.slane %v4587, %v4591
  %v4593 = vlaneseq
  %v4594 = vshrl.u32 %v4593, 7
  %v4595 = vsub.s32 1, %v4594
  %v4596 = vrot.slane %v4587, %v4595
  %v4599 = vadd.f32 %v4581, %v4592
  %v4600 = vadd.f32 %v4583, %v4596
  %v4601 = vmax.f32 %v4599, 0.0
  %v4602 = vmax.f32 %v4600, 0.0
  %v4603 = vpack.c.bf16 %v4601, %v4601
  %v4604 = vpack.c.bf16 %v4602, %v4602
  %v4605 = vld [vmem:[%s9] sm:$0xf]
  %v4606 = vld [vmem:[%s9 + $0x4] sm:$0xf]
  %v4607 = vld [vmem:[%s9 + $0x8] sm:$0xf]
  %v4608 = vld [vmem:[%s9 + $0xc] sm:$0xf]
  %v4609 = vld [vmem:[%s9 + $0x10] sm:$0xf]
  %v4610 = vld [vmem:[%s9 + $0x14] sm:$0xf]
  %v4611 = vld [vmem:[%s9 + $0x18] sm:$0xf]
  %v4612 = vld [vmem:[%s9 + $0x1c] sm:$0xf]
  %v4613 = vld [vmem:[%s9 + $0x20] sm:$0xf]
  %v4614 = vld [vmem:[%s9 + $0x24] sm:$0xf]
  %v4615 = vld [vmem:[%s9 + $0x28] sm:$0xf]
  %v4616 = vld [vmem:[%s9 + $0x2c] sm:$0xf]
  %v4617 = vld [vmem:[%s9 + $0x30] sm:$0xf]
  %v4618 = vld [vmem:[%s9 + $0x34] sm:$0xf]
  %v4619 = vld [vmem:[%s9 + $0x38] sm:$0xf]
  %v4620 = vld [vmem:[%s9 + $0x3c] sm:$0xf]
  %v4621 = vld [vmem:[%s9 + $0x40] sm:$0xf]
  %v4622 = vld [vmem:[%s9 + $0x44] sm:$0xf]
  %v4623 = vld [vmem:[%s9 + $0x48] sm:$0xf]
  %v4624 = vld [vmem:[%s9 + $0x4c] sm:$0xf]
  %v4625 = vld [vmem:[%s9 + $0x50] sm:$0xf]
  %v4626 = vld [vmem:[%s9 + $0x54] sm:$0xf]
  %v4627 = vld [vmem:[%s9 + $0x58] sm:$0xf]
  %v4628 = vld [vmem:[%s9 + $0x5c] sm:$0xf]
  %v4629 = vld [vmem:[%s9 + $0x60] sm:$0xf]
  %v4630 = vld [vmem:[%s9 + $0x64] sm:$0xf]
  %v4631 = vld [vmem:[%s9 + $0x68] sm:$0xf]
  %v4632 = vld [vmem:[%s9 + $0x6c] sm:$0xf]
  %v4633 = vld [vmem:[%s9 + $0x70] sm:$0xf]
  %v4634 = vld [vmem:[%s9 + $0x74] sm:$0xf]
  %v4635 = vld [vmem:[%s9 + $0x78] sm:$0xf]
  %v4636 = vld [vmem:[%s9 + $0x7c] sm:$0xf]
  %v4637 = vld [vmem:[%s10] sm:$0x1]
  %v4639 = vlaneseq
  %v4640 = vshrl.u32 %v4639, 7
  %v4641 = vsub.s32 0, %v4640
  %v4642 = vrot.slane %v4637, %v4641
  %v4676 = vunpack.c.l.b16 %v4605
  %v4677 = vunpack.c.l.b16 %v4606
  %v4678 = vunpack.c.l.b16 %v4607
  %v4679 = vunpack.c.l.b16 %v4608
  %v4680 = vunpack.c.l.b16 %v4609
  %v4681 = vunpack.c.l.b16 %v4610
  %v4682 = vunpack.c.l.b16 %v4611
  %v4683 = vunpack.c.l.b16 %v4612
  %v4684 = vunpack.c.l.b16 %v4613
  %v4685 = vunpack.c.l.b16 %v4614
  %v4686 = vunpack.c.l.b16 %v4615
  %v4687 = vunpack.c.l.b16 %v4616
  %v4688 = vunpack.c.l.b16 %v4617
  %v4689 = vunpack.c.l.b16 %v4618
  %v4690 = vunpack.c.l.b16 %v4619
  %v4691 = vunpack.c.l.b16 %v4620
  %v4692 = vunpack.c.l.b16 %v4621
  %v4693 = vunpack.c.l.b16 %v4622
  %v4694 = vunpack.c.l.b16 %v4623
  %v4695 = vunpack.c.l.b16 %v4624
  %v4696 = vunpack.c.l.b16 %v4625
  %v4697 = vunpack.c.l.b16 %v4626
  %v4698 = vunpack.c.l.b16 %v4627
  %v4699 = vunpack.c.l.b16 %v4628
  %v4700 = vunpack.c.l.b16 %v4629
  %v4701 = vunpack.c.l.b16 %v4630
  %v4702 = vunpack.c.l.b16 %v4631
  %v4703 = vunpack.c.l.b16 %v4632
  %v4704 = vunpack.c.l.b16 %v4633
  %v4705 = vunpack.c.l.b16 %v4634
  %v4706 = vunpack.c.l.b16 %v4635
  %v4707 = vunpack.c.l.b16 %v4636
  %v4708 = vpack.c.b16 %v4677, %v4676
  %v4709 = vpack.c.b16 %v4679, %v4678
  %v4710 = vpack.c.b16 %v4681, %v4680
  %v4711 = vpack.c.b16 %v4683, %v4682
  %v4712 = vpack.c.b16 %v4685, %v4684
  %v4713 = vpack.c.b16 %v4687, %v4686
  %v4714 = vpack.c.b16 %v4689, %v4688
  %v4715 = vpack.c.b16 %v4691, %v4690
  %v4716 = vpack.c.b16 %v4693, %v4692
  %v4717 = vpack.c.b16 %v4695, %v4694
  %v4718 = vpack.c.b16 %v4697, %v4696
  %v4719 = vpack.c.b16 %v4699, %v4698
  %v4720 = vpack.c.b16 %v4701, %v4700
  %v4721 = vpack.c.b16 %v4703, %v4702
  %v4722 = vpack.c.b16 %v4705, %v4704
  %v4723 = vpack.c.b16 %v4707, %v4706
  %4740 = vmatprep.subr.bf16.mxu0 0
  %4741 = vmatpush1.bf16.msra.mxu0 %v4715
  %4742 = vmatprep.subr.bf16.mxu0 0
  %4743 = vmatpush1.bf16.msra.mxu0 %v4714
  %4744 = vmatprep.subr.bf16.mxu0 0
  %4745 = vmatpush1.bf16.msra.mxu0 %v4713
  %4746 = vmatprep.subr.bf16.mxu0 0
  %4747 = vmatpush1.bf16.msra.mxu0 %v4712
  %4748 = vmatprep.subr.bf16.mxu0 0
  %4749 = vmatpush1.bf16.msra.mxu0 %v4711
  %4750 = vmatprep.subr.bf16.mxu0 0
  %4751 = vmatpush1.bf16.msra.mxu0 %v4710
  %4752 = vmatprep.subr.bf16.mxu0 0
  %4753 = vmatpush1.bf16.msra.mxu0 %v4709
  %4754 = vmatprep.subr.bf16.mxu0 0
  %4755 = vmatpush1.bf16.msra.mxu0 %v4708
  %4756 = vmatprep.subr.bf16.mxu0 0
  %4757 = vmatpush2.bf16.msra.mxu0 %v4723
  %4758 = vmatprep.subr.bf16.mxu0 0
  %4759 = vmatpush2.bf16.msra.mxu0 %v4722
  %4760 = vmatprep.subr.bf16.mxu0 0
  %4761 = vmatpush2.bf16.msra.mxu0 %v4721
  %4762 = vmatprep.subr.bf16.mxu0 0
  %4763 = vmatpush2.bf16.msra.mxu0 %v4720
  %4764 = vmatprep.subr.bf16.mxu0 0
  %4765 = vmatpush2.bf16.msra.mxu0 %v4719
  %4766 = vmatprep.subr.bf16.mxu0 0
  %4767 = vmatpush2.bf16.msra.mxu0 %v4718
  %4768 = vmatprep.subr.bf16.mxu0 0
  %4769 = vmatpush2.bf16.msra.mxu0 %v4717
  %4770 = vmatprep.subr.bf16.mxu0 0
  %4771 = vmatpush2.bf16.msra.mxu0 %v4716
  %4772 = vmatprep.mubr.bf16.mxu0 %v4604
  %4773 = vmatmul.mubr.bf16.gmra.mxu0 %v4603
  %v4774 = vpop.f32.mrf.mxu0
  %v4775 = vadd.f32 %v4642, %v4774
  %v4776 = vpop.f32.mrf.mxu0
  %v4777 = vpop.f32.mrf.mxu0
  %v4778 = vpop.f32.mrf.mxu0
  %4779 = vdwg.mxu0
  %4780 = vst [vmem:[%s11] sm:$0xff] %v4775
  // Predicated region
  $region46: #{direction_net.3} parent=0 // pred_check
    _
  $region47: #{direction_net.3} parent=0 // pred_check_branch
    %4782 = sbr.rel (0) target = $region49
  $region48: #{direction_net.3} parent=0 // pred_region
    _
  $region49: #{direction_net.3} parent=0 // pred_fallthru
    _
  // Predicated region
  $region50: #{direction_net.3} parent=0 // pred_check
    _
  $region51: #{direction_net.3} parent=0 // pred_check_branch
    %4784 = sbr.rel (0) target = $region53
  $region52: #{direction_net.3} parent=0 // pred_region
    _
  $region53: #{direction_net.3} parent=0 // pred_fallthru
    _

</llo_original>
